<compile_context>
chip_gen: v7x
topology: tpu7x:2x2x1
jax: 0.10.0
libtpu: 0.0.40
codegen_flags: <defaults>
</compile_context>

<pallas_src>
import functools

import jax
import jax.numpy as jnp
from jax.experimental import pallas as pl
from jax.experimental.pallas import tpu as pltpu


_HIDDEN = (1000, 2000, 500)


def _round_up(x, m):
    return ((x + m - 1) // m) * m


def _fused_mlp_kernel(x_ref,
                      w1_ref, w2_ref, w3_ref, w4_ref,
                      b_ref, o_ref,
                      *, bias_offsets, bias_widths):
    """out = fc4(relu(fc3(relu(fc2(relu(fc1(x))))))), everything in VMEM."""

    def layer(h, w_ref, layer_idx, relu):
        off = bias_offsets[layer_idx]
        width = bias_widths[layer_idx]
        acc = jnp.dot(h, w_ref[...], preferred_element_type=jnp.float32)
        # Static, lane-aligned slice of the fused bias buffer; f32 bias add.
        acc = acc + b_ref[:, off:off + width]
        if relu:
            acc = jnp.maximum(acc, 0.0)
        return acc

    h = x_ref[...]                                            # (tm, D0) bf16
    h = layer(h, w1_ref, 0, True).astype(jnp.bfloat16)        # (tm, 1024)
    h = layer(h, w2_ref, 1, True).astype(jnp.bfloat16)        # (tm, 2048)
    # dropout (eval mode): identity
    h = layer(h, w3_ref, 2, True).astype(jnp.bfloat16)        # (tm, 512)
    # dropout (eval mode): identity
    o_ref[...] = layer(h, w4_ref, 3, False).astype(o_ref.dtype)


def prepare_params(params, input_size, num_classes, compute_dtype=jnp.bfloat16):
    """One-time prep (hoisted out of the forward):
       * transpose torch (out,in) -> (in,out)
       * zero-pad hidden/output feature dims to multiples of 128
       * cast weights to bf16 (biases stay f32)
       * concatenate all biases into a single (1, sum(padded_out)) buffer."""
    dims = [input_size, *_HIDDEN, num_classes]
    # Input dim stays unpadded (full-array blocks are exempt from the 128 rule);
    # hidden/output dims padded for lane-dense MXU tiles and unmasked stores.
    padded = [dims[0]] + [_round_up(d, 128) for d in dims[1:]]

    weights = []
    total_bias = sum(padded[1:])
    b_all = jnp.zeros((1, total_bias), jnp.float32)
    off = 0
    for idx in range(1, 5):
        d_in, d_out = dims[idx - 1], dims[idx]
        p_in, p_out = padded[idx - 1], padded[idx]
        w = params[f"w{idx}"]  # (out, in), torch nn.Linear layout
        b = params[f"b{idx}"]  # (out,)
        wt = jnp.zeros((p_in, p_out), jnp.float32).at[:d_in, :d_out].set(w.T)
        weights.append(wt.astype(compute_dtype))
        b_all = b_all.at[0, off:off + d_out].set(b)   # padded tail stays 0
        off += p_out
    return tuple(weights), b_all, tuple(padded)


def classifier_forward(x, weights, b_all, padded_dims, num_classes,
                       compute_dtype=jnp.bfloat16, block_m=256):
    """x: (batch, input_size) f32 -> (batch, num_classes) f32."""
    M, D0 = x.shape
    assert D0 == padded_dims[0]
    NCp = padded_dims[-1]

    Mp = _round_up(M, 8)
    if Mp <= block_m:
        tm = Mp                      # single grid step (the M=8 case)
    else:
        tm = block_m                 # grid over M-blocks; weights fetched once
        Mp = _round_up(M, tm)

    if Mp == M:
        xp = x.astype(compute_dtype)           # no separate pad op
    else:
        xp = jnp.zeros((Mp, D0), compute_dtype).at[:M, :].set(
            x.astype(compute_dtype))

    widths = tuple(padded_dims[1:])                              # (1024,2048,512,128)
    offsets = tuple(int(sum(widths[:i])) for i in range(4))      # (0,1024,3072,3584)

    kernel = functools.partial(_fused_mlp_kernel,
                               bias_offsets=offsets, bias_widths=widths)

    in_specs = [pl.BlockSpec((tm, D0), lambda i: (i, 0))]
    for w in weights:
        # Constant index_map: fetched once, revisited across all M-blocks.
        in_specs.append(pl.BlockSpec(w.shape, lambda i: (0, 0)))
    in_specs.append(pl.BlockSpec(b_all.shape, lambda i: (0, 0)))

    out = pl.pallas_call(
        kernel,
        out_shape=jax.ShapeDtypeStruct((Mp, NCp), jnp.float32),
        grid_spec=pltpu.PrefetchScalarGridSpec(
            num_scalar_prefetch=0,
            grid=(Mp // tm,),
            in_specs=in_specs,
            out_specs=pl.BlockSpec((tm, NCp), lambda i: (i, 0)),
        ),
        compiler_params=pltpu.CompilerParams(
            # "arbitrary" keeps the weights fetched exactly once across the
            # M-block loop; for very large batches on v7x a "parallel" axis
            # would engage the second TensorCore instead.
            dimension_semantics=("arbitrary",),
            # Double-buffered footprint is ~12.7 MiB; 28 MiB clears v5e's
            # 16 MiB default scoped limit without starving v7x's 64 MiB VMEM.
            vmem_limit_bytes=28 * 1024 * 1024,
        ),
    )(xp, *weights, b_all)
    return out[:M, :num_classes]


def init_params(key, input_size, num_classes):
    """torch nn.Linear-style init: w (out, in), b (out,), U(-1/sqrt(fan_in), ...)."""
    dims = [(input_size, 1000), (1000, 2000), (2000, 500), (500, num_classes)]
    params = {}
    for idx, (fan_in, fan_out) in enumerate(dims, start=1):
        key, kw, kb = jax.random.split(key, 3)
        bound = 1.0 / jnp.sqrt(fan_in)
        params[f"w{idx}"] = jax.random.uniform(
            kw, (fan_out, fan_in), jnp.float32, -bound, bound)
        params[f"b{idx}"] = jax.random.uniform(
            kb, (fan_out,), jnp.float32, -bound, bound)
    return params


def reference_forward(x, params, compute_dtype=jnp.bfloat16):
    """Plain-JAX reference with the same bf16-matmul / f32-accumulate math."""
    h = x
    for idx, relu in ((1, True), (2, True), (3, True), (4, False)):
        w = params[f"w{idx}"].T.astype(compute_dtype)
        b = params[f"b{idx}"].astype(jnp.float32)
        acc = jnp.dot(h.astype(compute_dtype), w,
                      preferred_element_type=jnp.float32) + b
        h = jnp.maximum(acc, 0.0) if relu else acc
    return h


if __name__ == "__main__":
    batch, input_size, num_classes = 8, 32, 10
    key = jax.random.PRNGKey(0)
    key, kx = jax.random.split(key)
    x = jax.random.normal(kx, (batch, input_size), jnp.float32)
    params = init_params(key, input_size, num_classes)

    # One-time parameter preparation (transpose / pad / bf16 cast / bias fuse).
    weights, b_all, padded_dims = prepare_params(params, input_size, num_classes)

    fwd = jax.jit(functools.partial(
        classifier_forward, padded_dims=padded_dims, num_classes=num_classes))
    out = jax.block_until_ready(fwd(x, weights, b_all))
    assert out.shape == (batch, num_classes), out.shape

    ref = reference_forward(x, params)
    max_err = float(jnp.max(jnp.abs(out - ref)))
    assert jnp.allclose(out, ref, atol=1e-2, rtol=1e-2), max_err

    print("KERNEL_OK")
</pallas_src>

<mosaic_0001>
module attributes {stable_mosaic.version = 11 : i64} {
  func.func @_fused_mlp_kernel(%arg0: i32, %arg1: memref<8x32xbf16, #tpu.memory_space<vmem>>, %arg2: memref<32x1024xbf16, #tpu.memory_space<vmem>>, %arg3: memref<1024x2048xbf16, #tpu.memory_space<vmem>>, %arg4: memref<2048x512xbf16, #tpu.memory_space<vmem>>, %arg5: memref<512x128xbf16, #tpu.memory_space<vmem>>, %arg6: memref<1x3712xf32, #tpu.memory_space<vmem>>, %arg7: memref<8x128xf32, #tpu.memory_space<vmem>>) attributes {dimension_semantics = [#tpu.dimension_semantics<arbitrary>], iteration_bounds = array<i64: 1>, scalar_prefetch = 0 : i64, scratch_operands = 0 : i64, tpu.core_type = #tpu.core_type<tc>, window_params = [{transform_indices = @transform_0, window_bounds = array<i64: 8, 32>}, {pipeline_mode = #tpu.pipeline_mode<synchronous>, transform_indices = @transform_1, window_bounds = array<i64: 32, 1024>}, {pipeline_mode = #tpu.pipeline_mode<synchronous>, transform_indices = @transform_2, window_bounds = array<i64: 1024, 2048>}, {pipeline_mode = #tpu.pipeline_mode<synchronous>, transform_indices = @transform_3, window_bounds = array<i64: 2048, 512>}, {pipeline_mode = #tpu.pipeline_mode<synchronous>, transform_indices = @transform_4, window_bounds = array<i64: 512, 128>}, {pipeline_mode = #tpu.pipeline_mode<synchronous>, transform_indices = @transform_5, window_bounds = array<i64: 1, 3712>}, {transform_indices = @transform_6, window_bounds = array<i64: 8, 128>}]} {
    %c0 = arith.constant 0 : index
    %c0_0 = arith.constant 0 : index
    %0 = vector.load %arg1[%c0, %c0_0] : memref<8x32xbf16, #tpu.memory_space<vmem>>, vector<8x32xbf16>
    %c0_1 = arith.constant 0 : index
    %c0_2 = arith.constant 0 : index
    %1 = vector.load %arg2[%c0_1, %c0_2] : memref<32x1024xbf16, #tpu.memory_space<vmem>>, vector<32x1024xbf16>
    %cst = arith.constant dense<0.000000e+00> : vector<8x1024xf32>
    %2 = tpu.matmul %0, %1, %cst {dimension_numbers = #tpu.dot_dimension_numbers<[1], [0], [0], [1], [0, 0, 1, 1], [], []>} : vector<8x32xbf16>, vector<32x1024xbf16>, vector<8x1024xf32> -> vector<8x1024xf32>
    %c0_3 = arith.constant 0 : index
    %c0_4 = arith.constant 0 : index
    %3 = vector.load %arg6[%c0_3, %c0_4] : memref<1x3712xf32, #tpu.memory_space<vmem>>, vector<1x1024xf32>
    %4 = vector.broadcast %3 : vector<1x1024xf32> to vector<8x1024xf32>
    %5 = arith.addf %2, %4 : vector<8x1024xf32>
    %cst_5 = arith.constant 0.000000e+00 : f32
    %6 = vector.broadcast %cst_5 : f32 to vector<8x1024xf32>
    %7 = arith.maximumf %5, %6 : vector<8x1024xf32>
    %8 = arith.truncf %7 : vector<8x1024xf32> to vector<8x1024xbf16>
    %c0_6 = arith.constant 0 : index
    %c0_7 = arith.constant 0 : index
    %9 = vector.load %arg3[%c0_6, %c0_7] : memref<1024x2048xbf16, #tpu.memory_space<vmem>>, vector<1024x2048xbf16>
    %cst_8 = arith.constant dense<0.000000e+00> : vector<8x2048xf32>
    %10 = tpu.matmul %8, %9, %cst_8 {dimension_numbers = #tpu.dot_dimension_numbers<[1], [0], [0], [1], [0, 0, 1, 1], [], []>} : vector<8x1024xbf16>, vector<1024x2048xbf16>, vector<8x2048xf32> -> vector<8x2048xf32>
    %c0_9 = arith.constant 0 : index
    %c1024 = arith.constant 1024 : index
    %11 = vector.load %arg6[%c0_9, %c1024] : memref<1x3712xf32, #tpu.memory_space<vmem>>, vector<1x2048xf32>
    %12 = vector.broadcast %11 : vector<1x2048xf32> to vector<8x2048xf32>
    %13 = arith.addf %10, %12 : vector<8x2048xf32>
    %cst_10 = arith.constant 0.000000e+00 : f32
    %14 = vector.broadcast %cst_10 : f32 to vector<8x2048xf32>
    %15 = arith.maximumf %13, %14 : vector<8x2048xf32>
    %16 = arith.truncf %15 : vector<8x2048xf32> to vector<8x2048xbf16>
    %c0_11 = arith.constant 0 : index
    %c0_12 = arith.constant 0 : index
    %17 = vector.load %arg4[%c0_11, %c0_12] : memref<2048x512xbf16, #tpu.memory_space<vmem>>, vector<2048x512xbf16>
    %cst_13 = arith.constant dense<0.000000e+00> : vector<8x512xf32>
    %18 = tpu.matmul %16, %17, %cst_13 {dimension_numbers = #tpu.dot_dimension_numbers<[1], [0], [0], [1], [0, 0, 1, 1], [], []>} : vector<8x2048xbf16>, vector<2048x512xbf16>, vector<8x512xf32> -> vector<8x512xf32>
    %c0_14 = arith.constant 0 : index
    %c3072 = arith.constant 3072 : index
    %19 = vector.load %arg6[%c0_14, %c3072] : memref<1x3712xf32, #tpu.memory_space<vmem>>, vector<1x512xf32>
    %20 = vector.broadcast %19 : vector<1x512xf32> to vector<8x512xf32>
    %21 = arith.addf %18, %20 : vector<8x512xf32>
    %cst_15 = arith.constant 0.000000e+00 : f32
    %22 = vector.broadcast %cst_15 : f32 to vector<8x512xf32>
    %23 = arith.maximumf %21, %22 : vector<8x512xf32>
    %24 = arith.truncf %23 : vector<8x512xf32> to vector<8x512xbf16>
    %c0_16 = arith.constant 0 : index
    %c0_17 = arith.constant 0 : index
    %25 = vector.load %arg5[%c0_16, %c0_17] : memref<512x128xbf16, #tpu.memory_space<vmem>>, vector<512x128xbf16>
    %cst_18 = arith.constant dense<0.000000e+00> : vector<8x128xf32>
    %26 = tpu.matmul %24, %25, %cst_18 {dimension_numbers = #tpu.dot_dimension_numbers<[1], [0], [0], [1], [0, 0, 1, 1], [], []>} : vector<8x512xbf16>, vector<512x128xbf16>, vector<8x128xf32> -> vector<8x128xf32>
    %c0_19 = arith.constant 0 : index
    %c3584 = arith.constant 3584 : index
    %27 = vector.load %arg6[%c0_19, %c3584] : memref<1x3712xf32, #tpu.memory_space<vmem>>, vector<1x128xf32>
    %28 = vector.broadcast %27 : vector<1x128xf32> to vector<8x128xf32>
    %29 = arith.addf %26, %28 : vector<8x128xf32>
    %c0_20 = arith.constant 0 : index
    %c0_21 = arith.constant 0 : index
    %30 = vector.load %arg7[%c0_20, %c0_21] : memref<8x128xf32, #tpu.memory_space<vmem>>, vector<8x128xf32>
    tpu.vector_store %arg7[%c0_20, %c0_21], %29 {strides = array<i32>} : memref<8x128xf32, #tpu.memory_space<vmem>>, vector<8x128xf32>,
    return
  }
  func.func @transform_0(%arg0: i32) -> (i32, i32) {
    %c0_i32 = arith.constant 0 : i32
    %c0_i32_0 = arith.constant 0 : i32
    return %arg0, %c0_i32 : i32, i32
  }
  func.func @transform_1(%arg0: i32) -> (i32, i32) {
    %c0_i32 = arith.constant 0 : i32
    %c0_i32_0 = arith.constant 0 : i32
    %c0_i32_1 = arith.constant 0 : i32
    return %c0_i32, %c0_i32_0 : i32, i32
  }
  func.func @transform_2(%arg0: i32) -> (i32, i32) {
    %c0_i32 = arith.constant 0 : i32
    %c0_i32_0 = arith.constant 0 : i32
    %c0_i32_1 = arith.constant 0 : i32
    return %c0_i32, %c0_i32_0 : i32, i32
  }
  func.func @transform_3(%arg0: i32) -> (i32, i32) {
    %c0_i32 = arith.constant 0 : i32
    %c0_i32_0 = arith.constant 0 : i32
    %c0_i32_1 = arith.constant 0 : i32
    return %c0_i32, %c0_i32_0 : i32, i32
  }
  func.func @transform_4(%arg0: i32) -> (i32, i32) {
    %c0_i32 = arith.constant 0 : i32
    %c0_i32_0 = arith.constant 0 : i32
    %c0_i32_1 = arith.constant 0 : i32
    return %c0_i32, %c0_i32_0 : i32, i32
  }
  func.func @transform_5(%arg0: i32) -> (i32, i32) {
    %c0_i32 = arith.constant 0 : i32
    %c0_i32_0 = arith.constant 0 : i32
    %c0_i32_1 = arith.constant 0 : i32
    return %c0_i32, %c0_i32_0 : i32, i32
  }
  func.func @transform_6(%arg0: i32) -> (i32, i32) {
    %c0_i32 = arith.constant 0 : i32
    %c0_i32_0 = arith.constant 0 : i32
    return %arg0, %c0_i32 : i32, i32
  }
}

</mosaic_0001>

<llo_original>
// kernel: classifier_forward.1
$region0: #{classifier_forward.1}
  #allocation0 [shape = 'u32[]', space=smem, size = 0x4, offset = 0x4, fixed_abs, tag = 'smem constant byte address 0x4 - core index']
  #allocation1 [shape = 'u32[144,128]{1,0:T(1,128)}', space=vmem, size = 0x12000, scoped, tag = 'internal scratch']
  %s0 = inlined_call_operand.vmem [shape: bf16[8,32], index: 0, kind: input, shape index: {}]
  %s1 = inlined_call_operand.hbm [shape: bf16[32,1024], index: 1, kind: input, shape index: {}]
  %s2 = inlined_call_operand.hbm [shape: bf16[1024,2048], index: 2, kind: input, shape index: {}]
  %s3 = inlined_call_operand.hbm [shape: bf16[2048,512], index: 3, kind: input, shape index: {}]
  %s4 = inlined_call_operand.hbm [shape: bf16[512,128], index: 4, kind: input, shape index: {}]
  %s5 = inlined_call_operand.hbm [shape: f32[1,3712], index: 5, kind: input, shape index: {}]
  %s6 = inlined_call_operand.hbm [shape: f32[8,128], index: 6, kind: output, shape index: {}]
  %s7 = sld [smem:[#allocation0]]
  $region54: #{classifier_forward.1} parent=0
    _
  %s9 = ssub.s32 1, %s7
  %s10 = scalar_select 0, %s9, %s7
  $region1: #{classifier_forward.1} parent=0
    #allocation2 [shape = 'u8[65536]{0}', space=vmem, size = 0x10000, scoped, tag = 'input window, operand 1, single buffered']
    #allocation3 [shape = 's32[1]{0}', space=sflag, size = 0x4, scoped, tag = 'scoped memory for classifier_forward.1']
    #allocation4 [shape = 's32[1]{0}', space=sflag, size = 0x4, scoped, tag = 'scoped memory for classifier_forward.1']
    #allocation5 [shape = 'u8[4194304]{0}', space=vmem, size = 0x400000, scoped, tag = 'input window, operand 2, single buffered']
    #allocation6 [shape = 's32[1]{0}', space=sflag, size = 0x4, scoped, tag = 'scoped memory for classifier_forward.1']
    #allocation7 [shape = 'u8[2097152]{0}', space=vmem, size = 0x200000, scoped, tag = 'input window, operand 3, single buffered']
    #allocation8 [shape = 'u8[131072]{0}', space=vmem, size = 0x20000, scoped, tag = 'input window, operand 4, single buffered']
    #allocation9 [shape = 's32[1]{0}', space=sflag, size = 0x4, scoped, tag = 'scoped memory for classifier_forward.1']
    #allocation10 [shape = 'u8[14848]{0}', space=vmem, size = 0x3c00, scoped, tag = 'input window, operand 5, single buffered']
    #allocation11 [shape = 'u8[4096]{0}', space=vmem, size = 0x1000, scoped, tag = 'output window, operand 0, single buffered']
    %11 = vsyncpa [#allocation3], 0
    %12 = vsyncpa [#allocation6], 0
    %13 = vsyncpa [#allocation9], 0
    %14 = vsyncpa [#allocation4], 0
    // Predicated region
    $region2: #{classifier_forward.1} parent=1 // pred_check
      _
    $region3: #{classifier_forward.1} parent=1 // pred_check_branch
      %16 = sbr.rel (0) target = $region5
    $region4: #{classifier_forward.1} parent=1 // pred_region
      _
    $region5: #{classifier_forward.1} parent=1 // pred_fallthru
      _
    // Predicated region
    $region6: #{classifier_forward.1} parent=1 // pred_check
      _
    $region7: #{classifier_forward.1} parent=1 // pred_check_branch
      %18 = sbr.rel (0) target = $region9
    $region8: #{classifier_forward.1} parent=1 // pred_region
      %s20 = ssub.s32 2048, 2048
      %21 = vsyncadd [#allocation3], %s20
      %s22 = sshll.u32 [#allocation2], 4
      %s23 = int_to_ptr.vmem [resolvable:$true] %s22
      %28 = dma.hbm_to_vmem [thread:$0]  %s1, 2048, %s23, [#allocation3], 512, 512, 32
    $region9: #{classifier_forward.1} parent=1 // pred_fallthru
      _
    // Predicated region
    $region10: #{classifier_forward.1} parent=1 // pred_check
      _
    $region11: #{classifier_forward.1} parent=1 // pred_check_branch
      %30 = sbr.rel (0) target = $region13
    $region12: #{classifier_forward.1} parent=1 // pred_region
      %s32 = ssub.s32 131072, 131072
      %33 = vsyncadd [#allocation6], %s32
      %s34 = sshll.u32 [#allocation5], 4
      %s35 = int_to_ptr.vmem [resolvable:$true] %s34
      %40 = dma.hbm_to_vmem [thread:$0]  %s2, 131072, %s35, [#allocation6], 1024, 1024, 64
    $region13: #{classifier_forward.1} parent=1 // pred_fallthru
      _
    // Predicated region
    $region14: #{classifier_forward.1} parent=1 // pred_check
      _
    $region15: #{classifier_forward.1} parent=1 // pred_check_branch
      %42 = sbr.rel (0) target = $region17
    $region16: #{classifier_forward.1} parent=1 // pred_region
      %s44 = ssub.s32 65536, 65536
      %45 = vsyncadd [#allocation6], %s44
      %s46 = sshll.u32 [#allocation7], 4
      %s47 = int_to_ptr.vmem [resolvable:$true] %s46
      %52 = dma.hbm_to_vmem [thread:$0]  %s3, 65536, %s47, [#allocation6], 256, 256, 16
    $region17: #{classifier_forward.1} parent=1 // pred_fallthru
      _
    // Predicated region
    $region18: #{classifier_forward.1} parent=1 // pred_check
      _
    $region19: #{classifier_forward.1} parent=1 // pred_check_branch
      %54 = sbr.rel (0) target = $region21
    $region20: #{classifier_forward.1} parent=1 // pred_region
      %s56 = ssub.s32 4096, 4096
      %57 = vsyncadd [#allocation9], %s56
      %s58 = sshll.u32 [#allocation8], 4
      %s59 = int_to_ptr.vmem [resolvable:$true] %s58
      %64 = dma.hbm_to_vmem [thread:$0]  %s4, 4096, %s59, [#allocation9], 64, 64, 4
    $region21: #{classifier_forward.1} parent=1 // pred_fallthru
      _
    // Predicated region
    $region22: #{classifier_forward.1} parent=1 // pred_check
      _
    $region23: #{classifier_forward.1} parent=1 // pred_check_branch
      %66 = sbr.rel (0) target = $region25
    $region24: #{classifier_forward.1} parent=1 // pred_region
      %s68 = ssub.s32 464, 464
      %69 = vsyncadd [#allocation9], %s68
      %s71 = sshll.u32 [#allocation10], 4
      %s72 = int_to_ptr.vmem [resolvable:$true] %s71
      %74 = dma.hbm_to_vmem [thread:$0]  %s5, 464, %s72, [#allocation9]
    $region25: #{classifier_forward.1} parent=1 // pred_fallthru
      _
    // Predicated region
    $region26: #{classifier_forward.1} parent=1 // pred_check
      _
    $region27: #{classifier_forward.1} parent=1 // pred_check_branch
      %76 = sbr.rel (0) target = $region29
    $region28: #{classifier_forward.1} parent=1 // pred_region
      %77 = dma.done [#allocation3], 2048
    $region29: #{classifier_forward.1} parent=1 // pred_fallthru
      _
    // Predicated region
    $region30: #{classifier_forward.1} parent=1 // pred_check
      _
    $region31: #{classifier_forward.1} parent=1 // pred_check_branch
      %79 = sbr.rel (0) target = $region33
    $region32: #{classifier_forward.1} parent=1 // pred_region
      %80 = dma.done [#allocation6], 131072
    $region33: #{classifier_forward.1} parent=1 // pred_fallthru
      _
    // Predicated region
    $region34: #{classifier_forward.1} parent=1 // pred_check
      _
    $region35: #{classifier_forward.1} parent=1 // pred_check_branch
      %82 = sbr.rel (0) target = $region37
    $region36: #{classifier_forward.1} parent=1 // pred_region
      %83 = dma.done [#allocation6], 65536
    $region37: #{classifier_forward.1} parent=1 // pred_fallthru
      _
    // Predicated region
    $region38: #{classifier_forward.1} parent=1 // pred_check
      _
    $region39: #{classifier_forward.1} parent=1 // pred_check_branch
      %85 = sbr.rel (0) target = $region41
    $region40: #{classifier_forward.1} parent=1 // pred_region
      %86 = dma.done [#allocation9], 4096
    $region41: #{classifier_forward.1} parent=1 // pred_fallthru
      _
    // Predicated region
    $region42: #{classifier_forward.1} parent=1 // pred_check
      _
    $region43: #{classifier_forward.1} parent=1 // pred_check_branch
      %88 = sbr.rel (0) target = $region45
    $region44: #{classifier_forward.1} parent=1 // pred_region
      %89 = dma.done [#allocation9], 464
    $region45: #{classifier_forward.1} parent=1 // pred_fallthru
      _
    %v91 = vld [vmem:[%s0] sm:$0xf]
    %v92 = vld [vmem:[#allocation2] sm:$0xff]
    %v93 = vld [vmem:[#allocation2 + $0x8] sm:$0xff]
    %v94 = vld [vmem:[#allocation2 + $0x10] sm:$0xff]
    %v95 = vld [vmem:[#allocation2 + $0x18] sm:$0xff]
    %v96 = vld [vmem:[#allocation2 + $0x20] sm:$0xff]
    %v97 = vld [vmem:[#allocation2 + $0x28] sm:$0xff]
    %v98 = vld [vmem:[#allocation2 + $0x30] sm:$0xff]
    %v99 = vld [vmem:[#allocation2 + $0x38] sm:$0xff]
    %v100 = vld [vmem:[#allocation2 + $0x40] sm:$0xff]
    %v101 = vld [vmem:[#allocation2 + $0x48] sm:$0xff]
    %v102 = vld [vmem:[#allocation2 + $0x50] sm:$0xff]
    %v103 = vld [vmem:[#allocation2 + $0x58] sm:$0xff]
    %v104 = vld [vmem:[#allocation2 + $0x60] sm:$0xff]
    %v105 = vld [vmem:[#allocation2 + $0x68] sm:$0xff]
    %v106 = vld [vmem:[#allocation2 + $0x70] sm:$0xff]
    %v107 = vld [vmem:[#allocation2 + $0x78] sm:$0xff]
    %v108 = vld [vmem:[#allocation10] sm:$0xff]
    %v110 = vlaneseq
    %v111 = vshrl.u32 %v110, 7
    %v112 = vsub.s32 0, %v111
    %v113 = vrot.slane %v108, %v112
    %v114 = vlaneseq
    %v115 = vshrl.u32 %v114, 7
    %v116 = vsub.s32 1, %v115
    %v117 = vrot.slane %v108, %v116
    %v118 = vlaneseq
    %v119 = vshrl.u32 %v118, 7
    %v120 = vsub.s32 2, %v119
    %v121 = vrot.slane %v108, %v120
    %v122 = vlaneseq
    %v123 = vshrl.u32 %v122, 7
    %v124 = vsub.s32 3, %v123
    %v125 = vrot.slane %v108, %v124
    %v126 = vlaneseq
    %v127 = vshrl.u32 %v126, 7
    %v128 = vsub.s32 4, %v127
    %v129 = vrot.slane %v108, %v128
    %v130 = vlaneseq
    %v131 = vshrl.u32 %v130, 7
    %v132 = vsub.s32 5, %v131
    %v133 = vrot.slane %v108, %v132
    %v134 = vlaneseq
    %v135 = vshrl.u32 %v134, 7
    %v136 = vsub.s32 6, %v135
    %v137 = vrot.slane %v108, %v136
    %v138 = vlaneseq
    %v139 = vshrl.u32 %v138, 7
    %v140 = vsub.s32 7, %v139
    %v141 = vrot.slane %v108, %v140
    %v166 = vunpack.c.l.b16 %v92
    %v167 = vunpack.c.h.b16 %v92
    %v168 = vunpack.c.l.b16 %v93
    %v169 = vunpack.c.h.b16 %v93
    %v170 = vunpack.c.l.b16 %v94
    %v171 = vunpack.c.h.b16 %v94
    %v172 = vunpack.c.l.b16 %v95
    %v173 = vunpack.c.h.b16 %v95
    %v174 = vunpack.c.l.b16 %v96
    %v175 = vunpack.c.h.b16 %v96
    %v176 = vunpack.c.l.b16 %v97
    %v177 = vunpack.c.h.b16 %v97
    %v178 = vunpack.c.l.b16 %v98
    %v179 = vunpack.c.h.b16 %v98
    %v180 = vunpack.c.l.b16 %v99
    %v181 = vunpack.c.h.b16 %v99
    %v182 = vunpack.c.l.b16 %v100
    %v183 = vunpack.c.h.b16 %v100
    %v184 = vunpack.c.l.b16 %v101
    %v185 = vunpack.c.h.b16 %v101
    %v186 = vunpack.c.l.b16 %v102
    %v187 = vunpack.c.h.b16 %v102
    %v188 = vunpack.c.l.b16 %v103
    %v189 = vunpack.c.h.b16 %v103
    %v190 = vunpack.c.l.b16 %v104
    %v191 = vunpack.c.h.b16 %v104
    %v192 = vunpack.c.l.b16 %v105
    %v193 = vunpack.c.h.b16 %v105
    %v194 = vunpack.c.l.b16 %v106
    %v195 = vunpack.c.h.b16 %v106
    %v196 = vunpack.c.l.b16 %v107
    %v197 = vunpack.c.h.b16 %v107
    %v198 = vpack.c.b16 %v174, %v166
    %v199 = vpack.c.b16 %v175, %v167
    %v200 = vpack.c.b16 %v176, %v168
    %v201 = vpack.c.b16 %v177, %v169
    %v202 = vpack.c.b16 %v178, %v170
    %v203 = vpack.c.b16 %v179, %v171
    %v204 = vpack.c.b16 %v180, %v172
    %v205 = vpack.c.b16 %v181, %v173
    %v206 = vpack.c.b16 %v190, %v182
    %v207 = vpack.c.b16 %v191, %v183
    %v208 = vpack.c.b16 %v192, %v184
    %v209 = vpack.c.b16 %v193, %v185
    %v210 = vpack.c.b16 %v194, %v186
    %v211 = vpack.c.b16 %v195, %v187
    %v212 = vpack.c.b16 %v196, %v188
    %v213 = vpack.c.b16 %v197, %v189
    %vm230 = vcmask 261120
    %v232 = vsel %vm230, %v91, 0
    %234 = vmatprep.subr.bf16.mxu0 %v199
    %235 = vmatpush1.bf16.msra.mxu0 %v198
    %236 = vmatprep.subr.bf16.mxu0 %v207
    %237 = vmatpush1.bf16.msra.mxu0 %v206
    %238 = vmatprep.subr.bf16.mxu0 0
    %239 = vmatpush1.bf16.msra.mxu0 0
    %240 = vmatprep.subr.bf16.mxu0 0
    %241 = vmatpush1.bf16.msra.mxu0 0
    %242 = vmatprep.subr.bf16.mxu0 0
    %243 = vmatpush1.bf16.msra.mxu0 0
    %244 = vmatprep.subr.bf16.mxu0 0
    %245 = vmatpush1.bf16.msra.mxu0 0
    %246 = vmatprep.subr.bf16.mxu0 0
    %247 = vmatpush1.bf16.msra.mxu0 0
    %248 = vmatprep.subr.bf16.mxu0 0
    %249 = vmatpush1.bf16.msra.mxu0 0
    %250 = vmatprep.subr.bf16.mxu0 0
    %251 = vmatpush1.bf16.msra.mxu0 0
    %252 = vmatprep.subr.bf16.mxu0 0
    %253 = vmatpush1.bf16.msra.mxu0 0
    %254 = vmatprep.subr.bf16.mxu0 0
    %255 = vmatpush1.bf16.msra.mxu0 0
    %256 = vmatprep.subr.bf16.mxu0 0
    %257 = vmatpush1.bf16.msra.mxu0 0
    %258 = vmatprep.subr.bf16.mxu0 0
    %259 = vmatpush1.bf16.msra.mxu0 0
    %260 = vmatprep.subr.bf16.mxu0 0
    %261 = vmatpush1.bf16.msra.mxu0 0
    %262 = vmatprep.subr.bf16.mxu0 0
    %263 = vmatpush1.bf16.msra.mxu0 0
    %264 = vmatprep.subr.bf16.mxu0 0
    %265 = vmatpush1.bf16.msra.mxu0 0
    %266 = vmatprep.mubr.bf16.mxu0 0
    %267 = vmatmul.mubr.bf16.gmra.mrb[0].mxu0 %v232
    %v268 = vpop.f32.mrb[0].mxu0
    %v269 = vadd.f32 %v113, %v268
    %v270 = vpop.f32.mrb[0].mxu0
    %v271 = vadd.f32 %v117, %v270
    %v272 = vpop.f32.mrb[0].mxu0
    %v273 = vpop.f32.mrb[0].mxu0
    %274 = vdwg.mxu0
    %275 = vmatprep.subr.bf16.mxu0 %v201
    %276 = vmatpush1.bf16.msra.mxu0 %v200
    %277 = vmatprep.subr.bf16.mxu0 %v209
    %278 = vmatpush1.bf16.msra.mxu0 %v208
    %279 = vmatprep.subr.bf16.mxu0 0
    %280 = vmatpush1.bf16.msra.mxu0 0
    %281 = vmatprep.subr.bf16.mxu0 0
    %282 = vmatpush1.bf16.msra.mxu0 0
    %283 = vmatprep.subr.bf16.mxu0 0
    %284 = vmatpush1.bf16.msra.mxu0 0
    %285 = vmatprep.subr.bf16.mxu0 0
    %286 = vmatpush1.bf16.msra.mxu0 0
    %287 = vmatprep.subr.bf16.mxu0 0
    %288 = vmatpush1.bf16.msra.mxu0 0
    %289 = vmatprep.subr.bf16.mxu0 0
    %290 = vmatpush1.bf16.msra.mxu0 0
    %291 = vmatprep.subr.bf16.mxu0 0
    %292 = vmatpush1.bf16.msra.mxu0 0
    %293 = vmatprep.subr.bf16.mxu0 0
    %294 = vmatpush1.bf16.msra.mxu0 0
    %295 = vmatprep.subr.bf16.mxu0 0
    %296 = vmatpush1.bf16.msra.mxu0 0
    %297 = vmatprep.subr.bf16.mxu0 0
    %298 = vmatpush1.bf16.msra.mxu0 0
    %299 = vmatprep.subr.bf16.mxu0 0
    %300 = vmatpush1.bf16.msra.mxu0 0
    %301 = vmatprep.subr.bf16.mxu0 0
    %302 = vmatpush1.bf16.msra.mxu0 0
    %303 = vmatprep.subr.bf16.mxu0 0
    %304 = vmatpush1.bf16.msra.mxu0 0
    %305 = vmatprep.subr.bf16.mxu0 0
    %306 = vmatpush1.bf16.msra.mxu0 0
    %307 = vmatprep.mubr.bf16.mxu0 0
    %308 = vmatmul.mubr.bf16.gmra.mrb[0].mxu0 %v232
    %v309 = vpop.f32.mrb[0].mxu0
    %v310 = vadd.f32 %v121, %v309
    %v311 = vpop.f32.mrb[0].mxu0
    %v312 = vadd.f32 %v125, %v311
    %v313 = vpop.f32.mrb[0].mxu0
    %v314 = vpop.f32.mrb[0].mxu0
    %315 = vdwg.mxu0
    %316 = vmatprep.subr.bf16.mxu0 %v203
    %317 = vmatpush1.bf16.msra.mxu0 %v202
    %318 = vmatprep.subr.bf16.mxu0 %v211
    %319 = vmatpush1.bf16.msra.mxu0 %v210
    %320 = vmatprep.subr.bf16.mxu0 0
    %321 = vmatpush1.bf16.msra.mxu0 0
    %322 = vmatprep.subr.bf16.mxu0 0
    %323 = vmatpush1.bf16.msra.mxu0 0
    %324 = vmatprep.subr.bf16.mxu0 0
    %325 = vmatpush1.bf16.msra.mxu0 0
    %326 = vmatprep.subr.bf16.mxu0 0
    %327 = vmatpush1.bf16.msra.mxu0 0
    %328 = vmatprep.subr.bf16.mxu0 0
    %329 = vmatpush1.bf16.msra.mxu0 0
    %330 = vmatprep.subr.bf16.mxu0 0
    %331 = vmatpush1.bf16.msra.mxu0 0
    %332 = vmatprep.subr.bf16.mxu0 0
    %333 = vmatpush1.bf16.msra.mxu0 0
    %334 = vmatprep.subr.bf16.mxu0 0
    %335 = vmatpush1.bf16.msra.mxu0 0
    %336 = vmatprep.subr.bf16.mxu0 0
    %337 = vmatpush1.bf16.msra.mxu0 0
    %338 = vmatprep.subr.bf16.mxu0 0
    %339 = vmatpush1.bf16.msra.mxu0 0
    %340 = vmatprep.subr.bf16.mxu0 0
    %341 = vmatpush1.bf16.msra.mxu0 0
    %342 = vmatprep.subr.bf16.mxu0 0
    %343 = vmatpush1.bf16.msra.mxu0 0
    %344 = vmatprep.subr.bf16.mxu0 0
    %345 = vmatpush1.bf16.msra.mxu0 0
    %346 = vmatprep.subr.bf16.mxu0 0
    %347 = vmatpush1.bf16.msra.mxu0 0
    %348 = vmatprep.mubr.bf16.mxu0 0
    %349 = vmatmul.mubr.bf16.gmra.mrb[0].mxu0 %v232
    %v350 = vpop.f32.mrb[0].mxu0
    %v351 = vadd.f32 %v129, %v350
    %v352 = vpop.f32.mrb[0].mxu0
    %v353 = vadd.f32 %v133, %v352
    %v354 = vpop.f32.mrb[0].mxu0
    %v355 = vpop.f32.mrb[0].mxu0
    %356 = vdwg.mxu0
    %357 = vmatprep.subr.bf16.mxu0 %v205
    %358 = vmatpush1.bf16.msra.mxu0 %v204
    %359 = vmatprep.subr.bf16.mxu0 %v213
    %360 = vmatpush1.bf16.msra.mxu0 %v212
    %361 = vmatprep.subr.bf16.mxu0 0
    %362 = vmatpush1.bf16.msra.mxu0 0
    %363 = vmatprep.subr.bf16.mxu0 0
    %364 = vmatpush1.bf16.msra.mxu0 0
    %365 = vmatprep.subr.bf16.mxu0 0
    %366 = vmatpush1.bf16.msra.mxu0 0
    %367 = vmatprep.subr.bf16.mxu0 0
    %368 = vmatpush1.bf16.msra.mxu0 0
    %369 = vmatprep.subr.bf16.mxu0 0
    %370 = vmatpush1.bf16.msra.mxu0 0
    %371 = vmatprep.subr.bf16.mxu0 0
    %372 = vmatpush1.bf16.msra.mxu0 0
    %373 = vmatprep.subr.bf16.mxu0 0
    %374 = vmatpush1.bf16.msra.mxu0 0
    %375 = vmatprep.subr.bf16.mxu0 0
    %376 = vmatpush1.bf16.msra.mxu0 0
    %377 = vmatprep.subr.bf16.mxu0 0
    %378 = vmatpush1.bf16.msra.mxu0 0
    %379 = vmatprep.subr.bf16.mxu0 0
    %380 = vmatpush1.bf16.msra.mxu0 0
    %381 = vmatprep.subr.bf16.mxu0 0
    %382 = vmatpush1.bf16.msra.mxu0 0
    %383 = vmatprep.subr.bf16.mxu0 0
    %384 = vmatpush1.bf16.msra.mxu0 0
    %385 = vmatprep.subr.bf16.mxu0 0
    %386 = vmatpush1.bf16.msra.mxu0 0
    %387 = vmatprep.subr.bf16.mxu0 0
    %388 = vmatpush1.bf16.msra.mxu0 0
    %389 = vmatprep.mubr.bf16.mxu0 0
    %390 = vmatmul.mubr.bf16.gmra.mrb[0].mxu0 %v232
    %v391 = vpop.f32.mrb[0].mxu0
    %v392 = vadd.f32 %v137, %v391
    %v393 = vpop.f32.mrb[0].mxu0
    %v394 = vadd.f32 %v141, %v393
    %v395 = vpop.f32.mrb[0].mxu0
    %v396 = vpop.f32.mrb[0].mxu0
    %397 = vdwg.mxu0
    %v398 = vmax.f32 %v269, 0.0
    %v399 = vmax.f32 %v271, 0.0
    %v400 = vmax.f32 %v310, 0.0
    %v401 = vmax.f32 %v312, 0.0
    %v402 = vmax.f32 %v351, 0.0
    %v403 = vmax.f32 %v353, 0.0
    %v404 = vmax.f32 %v392, 0.0
    %v405 = vmax.f32 %v394, 0.0
    %v406 = vpack.c.bf16 %v398, %v398
    %v407 = vpack.c.bf16 %v399, %v399
    %v408 = vpack.c.bf16 %v400, %v400
    %v409 = vpack.c.bf16 %v401, %v401
    %v410 = vpack.c.bf16 %v402, %v402
    %v411 = vpack.c.bf16 %v403, %v403
    %v412 = vpack.c.bf16 %v404, %v404
    %v413 = vpack.c.bf16 %v405, %v405
    %v414 = vld [vmem:[#allocation5] sm:$0xff]
    %v415 = vld [vmem:[#allocation5 + $0x8] sm:$0xff]
    %v416 = vld [vmem:[#allocation5 + $0x10] sm:$0xff]
    %v417 = vld [vmem:[#allocation5 + $0x18] sm:$0xff]
    %v418 = vld [vmem:[#allocation5 + $0x20] sm:$0xff]
    %v419 = vld [vmem:[#allocation5 + $0x28] sm:$0xff]
    %v420 = vld [vmem:[#allocation5 + $0x30] sm:$0xff]
    %v421 = vld [vmem:[#allocation5 + $0x38] sm:$0xff]
    %v422 = vld [vmem:[#allocation5 + $0x40] sm:$0xff]
    %v423 = vld [vmem:[#allocation5 + $0x48] sm:$0xff]
    %v424 = vld [vmem:[#allocation5 + $0x50] sm:$0xff]
    %v425 = vld [vmem:[#allocation5 + $0x58] sm:$0xff]
    %v426 = vld [vmem:[#allocation5 + $0x60] sm:$0xff]
    %v427 = vld [vmem:[#allocation5 + $0x68] sm:$0xff]
    %v428 = vld [vmem:[#allocation5 + $0x70] sm:$0xff]
    %v429 = vld [vmem:[#allocation5 + $0x78] sm:$0xff]
    %v430 = vld [vmem:[#allocation5 + $0x80] sm:$0xff]
    %v431 = vld [vmem:[#allocation5 + $0x88] sm:$0xff]
    %v432 = vld [vmem:[#allocation5 + $0x90] sm:$0xff]
    %v433 = vld [vmem:[#allocation5 + $0x98] sm:$0xff]
    %v434 = vld [vmem:[#allocation5 + $0xa0] sm:$0xff]
    %v435 = vld [vmem:[#allocation5 + $0xa8] sm:$0xff]
    %v436 = vld [vmem:[#allocation5 + $0xb0] sm:$0xff]
    %v437 = vld [vmem:[#allocation5 + $0xb8] sm:$0xff]
    %v438 = vld [vmem:[#allocation5 + $0xc0] sm:$0xff]
    %v439 = vld [vmem:[#allocation5 + $0xc8] sm:$0xff]
    %v440 = vld [vmem:[#allocation5 + $0xd0] sm:$0xff]
    %v441 = vld [vmem:[#allocation5 + $0xd8] sm:$0xff]
    %v442 = vld [vmem:[#allocation5 + $0xe0] sm:$0xff]
    %v443 = vld [vmem:[#allocation5 + $0xe8] sm:$0xff]
    %v444 = vld [vmem:[#allocation5 + $0xf0] sm:$0xff]
    %v445 = vld [vmem:[#allocation5 + $0xf8] sm:$0xff]
    %v446 = vld [vmem:[#allocation5 + $0x100] sm:$0xff]
    %v447 = vld [vmem:[#allocation5 + $0x108] sm:$0xff]
    %v448 = vld [vmem:[#allocation5 + $0x110] sm:$0xff]
    %v449 = vld [vmem:[#allocation5 + $0x118] sm:$0xff]
    %v450 = vld [vmem:[#allocation5 + $0x120] sm:$0xff]
    %v451 = vld [vmem:[#allocation5 + $0x128] sm:$0xff]
    %v452 = vld [vmem:[#allocation5 + $0x130] sm:$0xff]
    %v453 = vld [vmem:[#allocation5 + $0x138] sm:$0xff]
    %v454 = vld [vmem:[#allocation5 + $0x140] sm:$0xff]
    %v455 = vld [vmem:[#allocation5 + $0x148] sm:$0xff]
    %v456 = vld [vmem:[#allocation5 + $0x150] sm:$0xff]
    %v457 = vld [vmem:[#allocation5 + $0x158] sm:$0xff]
    %v458 = vld [vmem:[#allocation5 + $0x160] sm:$0xff]
    %v459 = vld [vmem:[#allocation5 + $0x168] sm:$0xff]
    %v460 = vld [vmem:[#allocation5 + $0x170] sm:$0xff]
    %v461 = vld [vmem:[#allocation5 + $0x178] sm:$0xff]
    %v462 = vld [vmem:[#allocation5 + $0x180] sm:$0xff]
    %v463 = vld [vmem:[#allocation5 + $0x188] sm:$0xff]
    %v464 = vld [vmem:[#allocation5 + $0x190] sm:$0xff]
    %v465 = vld [vmem:[#allocation5 + $0x198] sm:$0xff]
    %v466 = vld [vmem:[#allocation5 + $0x1a0] sm:$0xff]
    %v467 = vld [vmem:[#allocation5 + $0x1a8] sm:$0xff]
    %v468 = vld [vmem:[#allocation5 + $0x1b0] sm:$0xff]
    %v469 = vld [vmem:[#allocation5 + $0x1b8] sm:$0xff]
    %v470 = vld [vmem:[#allocation5 + $0x1c0] sm:$0xff]
    %v471 = vld [vmem:[#allocation5 + $0x1c8] sm:$0xff]
    %v472 = vld [vmem:[#allocation5 + $0x1d0] sm:$0xff]
    %v473 = vld [vmem:[#allocation5 + $0x1d8] sm:$0xff]
    %v474 = vld [vmem:[#allocation5 + $0x1e0] sm:$0xff]
    %v475 = vld [vmem:[#allocation5 + $0x1e8] sm:$0xff]
    %v476 = vld [vmem:[#allocation5 + $0x1f0] sm:$0xff]
    %v477 = vld [vmem:[#allocation5 + $0x1f8] sm:$0xff]
    %v478 = vld [vmem:[#allocation5 + $0x200] sm:$0xff]
    %v479 = vld [vmem:[#allocation5 + $0x208] sm:$0xff]
    %v480 = vld [vmem:[#allocation5 + $0x210] sm:$0xff]
    %v481 = vld [vmem:[#allocation5 + $0x218] sm:$0xff]
    %v482 = vld [vmem:[#allocation5 + $0x220] sm:$0xff]
    %v483 = vld [vmem:[#allocation5 + $0x228] sm:$0xff]
    %v484 = vld [vmem:[#allocation5 + $0x230] sm:$0xff]
    %v485 = vld [vmem:[#allocation5 + $0x238] sm:$0xff]
    %v486 = vld [vmem:[#allocation5 + $0x240] sm:$0xff]
    %v487 = vld [vmem:[#allocation5 + $0x248] sm:$0xff]
    %v488 = vld [vmem:[#allocation5 + $0x250] sm:$0xff]
    %v489 = vld [vmem:[#allocation5 + $0x258] sm:$0xff]
    %v490 = vld [vmem:[#allocation5 + $0x260] sm:$0xff]
    %v491 = vld [vmem:[#allocation5 + $0x268] sm:$0xff]
    %v492 = vld [vmem:[#allocation5 + $0x270] sm:$0xff]
    %v493 = vld [vmem:[#allocation5 + $0x278] sm:$0xff]
    %v494 = vld [vmem:[#allocation5 + $0x280] sm:$0xff]
    %v495 = vld [vmem:[#allocation5 + $0x288] sm:$0xff]
    %v496 = vld [vmem:[#allocation5 + $0x290] sm:$0xff]
    %v497 = vld [vmem:[#allocation5 + $0x298] sm:$0xff]
    %v498 = vld [vmem:[#allocation5 + $0x2a0] sm:$0xff]
    %v499 = vld [vmem:[#allocation5 + $0x2a8] sm:$0xff]
    %v500 = vld [vmem:[#allocation5 + $0x2b0] sm:$0xff]
    %v501 = vld [vmem:[#allocation5 + $0x2b8] sm:$0xff]
    %v502 = vld [vmem:[#allocation5 + $0x2c0] sm:$0xff]
    %v503 = vld [vmem:[#allocation5 + $0x2c8] sm:$0xff]
    %v504 = vld [vmem:[#allocation5 + $0x2d0] sm:$0xff]
    %v505 = vld [vmem:[#allocation5 + $0x2d8] sm:$0xff]
    %v506 = vld [vmem:[#allocation5 + $0x2e0] sm:$0xff]
    %v507 = vld [vmem:[#allocation5 + $0x2e8] sm:$0xff]
    %v508 = vld [vmem:[#allocation5 + $0x2f0] sm:$0xff]
    %v509 = vld [vmem:[#allocation5 + $0x2f8] sm:$0xff]
    %v510 = vld [vmem:[#allocation5 + $0x300] sm:$0xff]
    %v511 = vld [vmem:[#allocation5 + $0x308] sm:$0xff]
    %v512 = vld [vmem:[#allocation5 + $0x310] sm:$0xff]
    %v513 = vld [vmem:[#allocation5 + $0x318] sm:$0xff]
    %v514 = vld [vmem:[#allocation5 + $0x320] sm:$0xff]
    %v515 = vld [vmem:[#allocation5 + $0x328] sm:$0xff]
    %v516 = vld [vmem:[#allocation5 + $0x330] sm:$0xff]
    %v517 = vld [vmem:[#allocation5 + $0x338] sm:$0xff]
    %v518 = vld [vmem:[#allocation5 + $0x340] sm:$0xff]
    %v519 = vld [vmem:[#allocation5 + $0x348] sm:$0xff]
    %v520 = vld [vmem:[#allocation5 + $0x350] sm:$0xff]
    %v521 = vld [vmem:[#allocation5 + $0x358] sm:$0xff]
    %v522 = vld [vmem:[#allocation5 + $0x360] sm:$0xff]
    %v523 = vld [vmem:[#allocation5 + $0x368] sm:$0xff]
    %v524 = vld [vmem:[#allocation5 + $0x370] sm:$0xff]
    %v525 = vld [vmem:[#allocation5 + $0x378] sm:$0xff]
    %v526 = vld [vmem:[#allocation5 + $0x380] sm:$0xff]
    %v527 = vld [vmem:[#allocation5 + $0x388] sm:$0xff]
    %v528 = vld [vmem:[#allocation5 + $0x390] sm:$0xff]
    %v529 = vld [vmem:[#allocation5 + $0x398] sm:$0xff]
    %v530 = vld [vmem:[#allocation5 + $0x3a0] sm:$0xff]
    %v531 = vld [vmem:[#allocation5 + $0x3a8] sm:$0xff]
    %v532 = vld [vmem:[#allocation5 + $0x3b0] sm:$0xff]
    %v533 = vld [vmem:[#allocation5 + $0x3b8] sm:$0xff]
    %v534 = vld [vmem:[#allocation5 + $0x3c0] sm:$0xff]
    %v535 = vld [vmem:[#allocation5 + $0x3c8] sm:$0xff]
    %v536 = vld [vmem:[#allocation5 + $0x3d0] sm:$0xff]
    %v537 = vld [vmem:[#allocation5 + $0x3d8] sm:$0xff]
    %v538 = vld [vmem:[#allocation5 + $0x3e0] sm:$0xff]
    %v539 = vld [vmem:[#allocation5 + $0x3e8] sm:$0xff]
    %v540 = vld [vmem:[#allocation5 + $0x3f0] sm:$0xff]
    %v541 = vld [vmem:[#allocation5 + $0x3f8] sm:$0xff]
    %v542 = vld [vmem:[#allocation5 + $0x400] sm:$0xff]
    %v543 = vld [vmem:[#allocation5 + $0x408] sm:$0xff]
    %v544 = vld [vmem:[#allocation5 + $0x410] sm:$0xff]
    %v545 = vld [vmem:[#allocation5 + $0x418] sm:$0xff]
    %v546 = vld [vmem:[#allocation5 + $0x420] sm:$0xff]
    %v547 = vld [vmem:[#allocation5 + $0x428] sm:$0xff]
    %v548 = vld [vmem:[#allocation5 + $0x430] sm:$0xff]
    %v549 = vld [vmem:[#allocation5 + $0x438] sm:$0xff]
    %v550 = vld [vmem:[#allocation5 + $0x440] sm:$0xff]
    %v551 = vld [vmem:[#allocation5 + $0x448] sm:$0xff]
    %v552 = vld [vmem:[#allocation5 + $0x450] sm:$0xff]
    %v553 = vld [vmem:[#allocation5 + $0x458] sm:$0xff]
    %v554 = vld [vmem:[#allocation5 + $0x460] sm:$0xff]
    %v555 = vld [vmem:[#allocation5 + $0x468] sm:$0xff]
    %v556 = vld [vmem:[#allocation5 + $0x470] sm:$0xff]
    %v557 = vld [vmem:[#allocation5 + $0x478] sm:$0xff]
    %v558 = vld [vmem:[#allocation5 + $0x480] sm:$0xff]
    %v559 = vld [vmem:[#allocation5 + $0x488] sm:$0xff]
    %v560 = vld [vmem:[#allocation5 + $0x490] sm:$0xff]
    %v561 = vld [vmem:[#allocation5 + $0x498] sm:$0xff]
    %v562 = vld [vmem:[#allocation5 + $0x4a0] sm:$0xff]
    %v563 = vld [vmem:[#allocation5 + $0x4a8] sm:$0xff]
    %v564 = vld [vmem:[#allocation5 + $0x4b0] sm:$0xff]
    %v565 = vld [vmem:[#allocation5 + $0x4b8] sm:$0xff]
    %v566 = vld [vmem:[#allocation5 + $0x4c0] sm:$0xff]
    %v567 = vld [vmem:[#allocation5 + $0x4c8] sm:$0xff]
    %v568 = vld [vmem:[#allocation5 + $0x4d0] sm:$0xff]
    %v569 = vld [vmem:[#allocation5 + $0x4d8] sm:$0xff]
    %v570 = vld [vmem:[#allocation5 + $0x4e0] sm:$0xff]
    %v571 = vld [vmem:[#allocation5 + $0x4e8] sm:$0xff]
    %v572 = vld [vmem:[#allocation5 + $0x4f0] sm:$0xff]
    %v573 = vld [vmem:[#allocation5 + $0x4f8] sm:$0xff]
    %v574 = vld [vmem:[#allocation5 + $0x500] sm:$0xff]
    %v575 = vld [vmem:[#allocation5 + $0x508] sm:$0xff]
    %v576 = vld [vmem:[#allocation5 + $0x510] sm:$0xff]
    %v577 = vld [vmem:[#allocation5 + $0x518] sm:$0xff]
    %v578 = vld [vmem:[#allocation5 + $0x520] sm:$0xff]
    %v579 = vld [vmem:[#allocation5 + $0x528] sm:$0xff]
    %v580 = vld [vmem:[#allocation5 + $0x530] sm:$0xff]
    %v581 = vld [vmem:[#allocation5 + $0x538] sm:$0xff]
    %v582 = vld [vmem:[#allocation5 + $0x540] sm:$0xff]
    %v583 = vld [vmem:[#allocation5 + $0x548] sm:$0xff]
    %v584 = vld [vmem:[#allocation5 + $0x550] sm:$0xff]
    %v585 = vld [vmem:[#allocation5 + $0x558] sm:$0xff]
    %v586 = vld [vmem:[#allocation5 + $0x560] sm:$0xff]
    %v587 = vld [vmem:[#allocation5 + $0x568] sm:$0xff]
    %v588 = vld [vmem:[#allocation5 + $0x570] sm:$0xff]
    %v589 = vld [vmem:[#allocation5 + $0x578] sm:$0xff]
    %v590 = vld [vmem:[#allocation5 + $0x580] sm:$0xff]
    %v591 = vld [vmem:[#allocation5 + $0x588] sm:$0xff]
    %v592 = vld [vmem:[#allocation5 + $0x590] sm:$0xff]
    %v593 = vld [vmem:[#allocation5 + $0x598] sm:$0xff]
    %v594 = vld [vmem:[#allocation5 + $0x5a0] sm:$0xff]
    %v595 = vld [vmem:[#allocation5 + $0x5a8] sm:$0xff]
    %v596 = vld [vmem:[#allocation5 + $0x5b0] sm:$0xff]
    %v597 = vld [vmem:[#allocation5 + $0x5b8] sm:$0xff]
    %v598 = vld [vmem:[#allocation5 + $0x5c0] sm:$0xff]
    %v599 = vld [vmem:[#allocation5 + $0x5c8] sm:$0xff]
    %v600 = vld [vmem:[#allocation5 + $0x5d0] sm:$0xff]
    %v601 = vld [vmem:[#allocation5 + $0x5d8] sm:$0xff]
    %v602 = vld [vmem:[#allocation5 + $0x5e0] sm:$0xff]
    %v603 = vld [vmem:[#allocation5 + $0x5e8] sm:$0xff]
    %v604 = vld [vmem:[#allocation5 + $0x5f0] sm:$0xff]
    %v605 = vld [vmem:[#allocation5 + $0x5f8] sm:$0xff]
    %v606 = vld [vmem:[#allocation5 + $0x600] sm:$0xff]
    %v607 = vld [vmem:[#allocation5 + $0x608] sm:$0xff]
    %v608 = vld [vmem:[#allocation5 + $0x610] sm:$0xff]
    %v609 = vld [vmem:[#allocation5 + $0x618] sm:$0xff]
    %v610 = vld [vmem:[#allocation5 + $0x620] sm:$0xff]
    %v611 = vld [vmem:[#allocation5 + $0x628] sm:$0xff]
    %v612 = vld [vmem:[#allocation5 + $0x630] sm:$0xff]
    %v613 = vld [vmem:[#allocation5 + $0x638] sm:$0xff]
    %v614 = vld [vmem:[#allocation5 + $0x640] sm:$0xff]
    %v615 = vld [vmem:[#allocation5 + $0x648] sm:$0xff]
    %v616 = vld [vmem:[#allocation5 + $0x650] sm:$0xff]
    %v617 = vld [vmem:[#allocation5 + $0x658] sm:$0xff]
    %v618 = vld [vmem:[#allocation5 + $0x660] sm:$0xff]
    %v619 = vld [vmem:[#allocation5 + $0x668] sm:$0xff]
    %v620 = vld [vmem:[#allocation5 + $0x670] sm:$0xff]
    %v621 = vld [vmem:[#allocation5 + $0x678] sm:$0xff]
    %v622 = vld [vmem:[#allocation5 + $0x680] sm:$0xff]
    %v623 = vld [vmem:[#allocation5 + $0x688] sm:$0xff]
    %v624 = vld [vmem:[#allocation5 + $0x690] sm:$0xff]
    %v625 = vld [vmem:[#allocation5 + $0x698] sm:$0xff]
    %v626 = vld [vmem:[#allocation5 + $0x6a0] sm:$0xff]
    %v627 = vld [vmem:[#allocation5 + $0x6a8] sm:$0xff]
    %v628 = vld [vmem:[#allocation5 + $0x6b0] sm:$0xff]
    %v629 = vld [vmem:[#allocation5 + $0x6b8] sm:$0xff]
    %v630 = vld [vmem:[#allocation5 + $0x6c0] sm:$0xff]
    %v631 = vld [vmem:[#allocation5 + $0x6c8] sm:$0xff]
    %v632 = vld [vmem:[#allocation5 + $0x6d0] sm:$0xff]
    %v633 = vld [vmem:[#allocation5 + $0x6d8] sm:$0xff]
    %v634 = vld [vmem:[#allocation5 + $0x6e0] sm:$0xff]
    %v635 = vld [vmem:[#allocation5 + $0x6e8] sm:$0xff]
    %v636 = vld [vmem:[#allocation5 + $0x6f0] sm:$0xff]
    %v637 = vld [vmem:[#allocation5 + $0x6f8] sm:$0xff]
    %v638 = vld [vmem:[#allocation5 + $0x700] sm:$0xff]
    %v639 = vld [vmem:[#allocation5 + $0x708] sm:$0xff]
    %v640 = vld [vmem:[#allocation5 + $0x710] sm:$0xff]
    %v641 = vld [vmem:[#allocation5 + $0x718] sm:$0xff]
    %v642 = vld [vmem:[#allocation5 + $0x720] sm:$0xff]
    %v643 = vld [vmem:[#allocation5 + $0x728] sm:$0xff]
    %v644 = vld [vmem:[#allocation5 + $0x730] sm:$0xff]
    %v645 = vld [vmem:[#allocation5 + $0x738] sm:$0xff]
    %v646 = vld [vmem:[#allocation5 + $0x740] sm:$0xff]
    %v647 = vld [vmem:[#allocation5 + $0x748] sm:$0xff]
    %v648 = vld [vmem:[#allocation5 + $0x750] sm:$0xff]
    %v649 = vld [vmem:[#allocation5 + $0x758] sm:$0xff]
    %v650 = vld [vmem:[#allocation5 + $0x760] sm:$0xff]
    %v651 = vld [vmem:[#allocation5 + $0x768] sm:$0xff]
    %v652 = vld [vmem:[#allocation5 + $0x770] sm:$0xff]
    %v653 = vld [vmem:[#allocation5 + $0x778] sm:$0xff]
    %v654 = vld [vmem:[#allocation5 + $0x780] sm:$0xff]
    %v655 = vld [vmem:[#allocation5 + $0x788] sm:$0xff]
    %v656 = vld [vmem:[#allocation5 + $0x790] sm:$0xff]
    %v657 = vld [vmem:[#allocation5 + $0x798] sm:$0xff]
    %v658 = vld [vmem:[#allocation5 + $0x7a0] sm:$0xff]
    %v659 = vld [vmem:[#allocation5 + $0x7a8] sm:$0xff]
    %v660 = vld [vmem:[#allocation5 + $0x7b0] sm:$0xff]
    %v661 = vld [vmem:[#allocation5 + $0x7b8] sm:$0xff]
    %v662 = vld [vmem:[#allocation5 + $0x7c0] sm:$0xff]
    %v663 = vld [vmem:[#allocation5 + $0x7c8] sm:$0xff]
    %v664 = vld [vmem:[#allocation5 + $0x7d0] sm:$0xff]
    %v665 = vld [vmem:[#allocation5 + $0x7d8] sm:$0xff]
    %v666 = vld [vmem:[#allocation5 + $0x7e0] sm:$0xff]
    %v667 = vld [vmem:[#allocation5 + $0x7e8] sm:$0xff]
    %v668 = vld [vmem:[#allocation5 + $0x7f0] sm:$0xff]
    %v669 = vld [vmem:[#allocation5 + $0x7f8] sm:$0xff]
    %v670 = vld [vmem:[#allocation5 + $0x800] sm:$0xff]
    %v671 = vld [vmem:[#allocation5 + $0x808] sm:$0xff]
    %v672 = vld [vmem:[#allocation5 + $0x810] sm:$0xff]
    %v673 = vld [vmem:[#allocation5 + $0x818] sm:$0xff]
    %v674 = vld [vmem:[#allocation5 + $0x820] sm:$0xff]
    %v675 = vld [vmem:[#allocation5 + $0x828] sm:$0xff]
    %v676 = vld [vmem:[#allocation5 + $0x830] sm:$0xff]
    %v677 = vld [vmem:[#allocation5 + $0x838] sm:$0xff]
    %v678 = vld [vmem:[#allocation5 + $0x840] sm:$0xff]
    %v679 = vld [vmem:[#allocation5 + $0x848] sm:$0xff]
    %v680 = vld [vmem:[#allocation5 + $0x850] sm:$0xff]
    %v681 = vld [vmem:[#allocation5 + $0x858] sm:$0xff]
    %v682 = vld [vmem:[#allocation5 + $0x860] sm:$0xff]
    %v683 = vld [vmem:[#allocation5 + $0x868] sm:$0xff]
    %v684 = vld [vmem:[#allocation5 + $0x870] sm:$0xff]
    %v685 = vld [vmem:[#allocation5 + $0x878] sm:$0xff]
    %v686 = vld [vmem:[#allocation5 + $0x880] sm:$0xff]
    %v687 = vld [vmem:[#allocation5 + $0x888] sm:$0xff]
    %v688 = vld [vmem:[#allocation5 + $0x890] sm:$0xff]
    %v689 = vld [vmem:[#allocation5 + $0x898] sm:$0xff]
    %v690 = vld [vmem:[#allocation5 + $0x8a0] sm:$0xff]
    %v691 = vld [vmem:[#allocation5 + $0x8a8] sm:$0xff]
    %v692 = vld [vmem:[#allocation5 + $0x8b0] sm:$0xff]
    %v693 = vld [vmem:[#allocation5 + $0x8b8] sm:$0xff]
    %v694 = vld [vmem:[#allocation5 + $0x8c0] sm:$0xff]
    %v695 = vld [vmem:[#allocation5 + $0x8c8] sm:$0xff]
    %v696 = vld [vmem:[#allocation5 + $0x8d0] sm:$0xff]
    %v697 = vld [vmem:[#allocation5 + $0x8d8] sm:$0xff]
    %v698 = vld [vmem:[#allocation5 + $0x8e0] sm:$0xff]
    %v699 = vld [vmem:[#allocation5 + $0x8e8] sm:$0xff]
    %v700 = vld [vmem:[#allocation5 + $0x8f0] sm:$0xff]
    %v701 = vld [vmem:[#allocation5 + $0x8f8] sm:$0xff]
    %v702 = vld [vmem:[#allocation5 + $0x900] sm:$0xff]
    %v703 = vld [vmem:[#allocation5 + $0x908] sm:$0xff]
    %v704 = vld [vmem:[#allocation5 + $0x910] sm:$0xff]
    %v705 = vld [vmem:[#allocation5 + $0x918] sm:$0xff]
    %v706 = vld [vmem:[#allocation5 + $0x920] sm:$0xff]
    %v707 = vld [vmem:[#allocation5 + $0x928] sm:$0xff]
    %v708 = vld [vmem:[#allocation5 + $0x930] sm:$0xff]
    %v709 = vld [vmem:[#allocation5 + $0x938] sm:$0xff]
    %v710 = vld [vmem:[#allocation5 + $0x940] sm:$0xff]
    %v711 = vld [vmem:[#allocation5 + $0x948] sm:$0xff]
    %v712 = vld [vmem:[#allocation5 + $0x950] sm:$0xff]
    %v713 = vld [vmem:[#allocation5 + $0x958] sm:$0xff]
    %v714 = vld [vmem:[#allocation5 + $0x960] sm:$0xff]
    %v715 = vld [vmem:[#allocation5 + $0x968] sm:$0xff]
    %v716 = vld [vmem:[#allocation5 + $0x970] sm:$0xff]
    %v717 = vld [vmem:[#allocation5 + $0x978] sm:$0xff]
    %v718 = vld [vmem:[#allocation5 + $0x980] sm:$0xff]
    %v719 = vld [vmem:[#allocation5 + $0x988] sm:$0xff]
    %v720 = vld [vmem:[#allocation5 + $0x990] sm:$0xff]
    %v721 = vld [vmem:[#allocation5 + $0x998] sm:$0xff]
    %v722 = vld [vmem:[#allocation5 + $0x9a0] sm:$0xff]
    %v723 = vld [vmem:[#allocation5 + $0x9a8] sm:$0xff]
    %v724 = vld [vmem:[#allocation5 + $0x9b0] sm:$0xff]
    %v725 = vld [vmem:[#allocation5 + $0x9b8] sm:$0xff]
    %v726 = vld [vmem:[#allocation5 + $0x9c0] sm:$0xff]
    %v727 = vld [vmem:[#allocation5 + $0x9c8] sm:$0xff]
    %v728 = vld [vmem:[#allocation5 + $0x9d0] sm:$0xff]
    %v729 = vld [vmem:[#allocation5 + $0x9d8] sm:$0xff]
    %v730 = vld [vmem:[#allocation5 + $0x9e0] sm:$0xff]
    %v731 = vld [vmem:[#allocation5 + $0x9e8] sm:$0xff]
    %v732 = vld [vmem:[#allocation5 + $0x9f0] sm:$0xff]
    %v733 = vld [vmem:[#allocation5 + $0x9f8] sm:$0xff]
    %v734 = vld [vmem:[#allocation5 + $0xa00] sm:$0xff]
    %v735 = vld [vmem:[#allocation5 + $0xa08] sm:$0xff]
    %v736 = vld [vmem:[#allocation5 + $0xa10] sm:$0xff]
    %v737 = vld [vmem:[#allocation5 + $0xa18] sm:$0xff]
    %v738 = vld [vmem:[#allocation5 + $0xa20] sm:$0xff]
    %v739 = vld [vmem:[#allocation5 + $0xa28] sm:$0xff]
    %v740 = vld [vmem:[#allocation5 + $0xa30] sm:$0xff]
    %v741 = vld [vmem:[#allocation5 + $0xa38] sm:$0xff]
    %v742 = vld [vmem:[#allocation5 + $0xa40] sm:$0xff]
    %v743 = vld [vmem:[#allocation5 + $0xa48] sm:$0xff]
    %v744 = vld [vmem:[#allocation5 + $0xa50] sm:$0xff]
    %v745 = vld [vmem:[#allocation5 + $0xa58] sm:$0xff]
    %v746 = vld [vmem:[#allocation5 + $0xa60] sm:$0xff]
    %v747 = vld [vmem:[#allocation5 + $0xa68] sm:$0xff]
    %v748 = vld [vmem:[#allocation5 + $0xa70] sm:$0xff]
    %v749 = vld [vmem:[#allocation5 + $0xa78] sm:$0xff]
    %v750 = vld [vmem:[#allocation5 + $0xa80] sm:$0xff]
    %v751 = vld [vmem:[#allocation5 + $0xa88] sm:$0xff]
    %v752 = vld [vmem:[#allocation5 + $0xa90] sm:$0xff]
    %v753 = vld [vmem:[#allocation5 + $0xa98] sm:$0xff]
    %v754 = vld [vmem:[#allocation5 + $0xaa0] sm:$0xff]
    %v755 = vld [vmem:[#allocation5 + $0xaa8] sm:$0xff]
    %v756 = vld [vmem:[#allocation5 + $0xab0] sm:$0xff]
    %v757 = vld [vmem:[#allocation5 + $0xab8] sm:$0xff]
    %v758 = vld [vmem:[#allocation5 + $0xac0] sm:$0xff]
    %v759 = vld [vmem:[#allocation5 + $0xac8] sm:$0xff]
    %v760 = vld [vmem:[#allocation5 + $0xad0] sm:$0xff]
    %v761 = vld [vmem:[#allocation5 + $0xad8] sm:$0xff]
    %v762 = vld [vmem:[#allocation5 + $0xae0] sm:$0xff]
    %v763 = vld [vmem:[#allocation5 + $0xae8] sm:$0xff]
    %v764 = vld [vmem:[#allocation5 + $0xaf0] sm:$0xff]
    %v765 = vld [vmem:[#allocation5 + $0xaf8] sm:$0xff]
    %v766 = vld [vmem:[#allocation5 + $0xb00] sm:$0xff]
    %v767 = vld [vmem:[#allocation5 + $0xb08] sm:$0xff]
    %v768 = vld [vmem:[#allocation5 + $0xb10] sm:$0xff]
    %v769 = vld [vmem:[#allocation5 + $0xb18] sm:$0xff]
    %v770 = vld [vmem:[#allocation5 + $0xb20] sm:$0xff]
    %v771 = vld [vmem:[#allocation5 + $0xb28] sm:$0xff]
    %v772 = vld [vmem:[#allocation5 + $0xb30] sm:$0xff]
    %v773 = vld [vmem:[#allocation5 + $0xb38] sm:$0xff]
    %v774 = vld [vmem:[#allocation5 + $0xb40] sm:$0xff]
    %v775 = vld [vmem:[#allocation5 + $0xb48] sm:$0xff]
    %v776 = vld [vmem:[#allocation5 + $0xb50] sm:$0xff]
    %v777 = vld [vmem:[#allocation5 + $0xb58] sm:$0xff]
    %v778 = vld [vmem:[#allocation5 + $0xb60] sm:$0xff]
    %v779 = vld [vmem:[#allocation5 + $0xb68] sm:$0xff]
    %v780 = vld [vmem:[#allocation5 + $0xb70] sm:$0xff]
    %v781 = vld [vmem:[#allocation5 + $0xb78] sm:$0xff]
    %v782 = vld [vmem:[#allocation5 + $0xb80] sm:$0xff]
    %v783 = vld [vmem:[#allocation5 + $0xb88] sm:$0xff]
    %v784 = vld [vmem:[#allocation5 + $0xb90] sm:$0xff]
    %v785 = vld [vmem:[#allocation5 + $0xb98] sm:$0xff]
    %v786 = vld [vmem:[#allocation5 + $0xba0] sm:$0xff]
    %v787 = vld [vmem:[#allocation5 + $0xba8] sm:$0xff]
    %v788 = vld [vmem:[#allocation5 + $0xbb0] sm:$0xff]
    %v789 = vld [vmem:[#allocation5 + $0xbb8] sm:$0xff]
    %v790 = vld [vmem:[#allocation5 + $0xbc0] sm:$0xff]
    %v791 = vld [vmem:[#allocation5 + $0xbc8] sm:$0xff]
    %v792 = vld [vmem:[#allocation5 + $0xbd0] sm:$0xff]
    %v793 = vld [vmem:[#allocation5 + $0xbd8] sm:$0xff]
    %v794 = vld [vmem:[#allocation5 + $0xbe0] sm:$0xff]
    %v795 = vld [vmem:[#allocation5 + $0xbe8] sm:$0xff]
    %v796 = vld [vmem:[#allocation5 + $0xbf0] sm:$0xff]
    %v797 = vld [vmem:[#allocation5 + $0xbf8] sm:$0xff]
    %v798 = vld [vmem:[#allocation5 + $0xc00] sm:$0xff]
    %v799 = vld [vmem:[#allocation5 + $0xc08] sm:$0xff]
    %v800 = vld [vmem:[#allocation5 + $0xc10] sm:$0xff]
    %v801 = vld [vmem:[#allocation5 + $0xc18] sm:$0xff]
    %v802 = vld [vmem:[#allocation5 + $0xc20] sm:$0xff]
    %v803 = vld [vmem:[#allocation5 + $0xc28] sm:$0xff]
    %v804 = vld [vmem:[#allocation5 + $0xc30] sm:$0xff]
    %v805 = vld [vmem:[#allocation5 + $0xc38] sm:$0xff]
    %v806 = vld [vmem:[#allocation5 + $0xc40] sm:$0xff]
    %v807 = vld [vmem:[#allocation5 + $0xc48] sm:$0xff]
    %v808 = vld [vmem:[#allocation5 + $0xc50] sm:$0xff]
    %v809 = vld [vmem:[#allocation5 + $0xc58] sm:$0xff]
    %v810 = vld [vmem:[#allocation5 + $0xc60] sm:$0xff]
    %v811 = vld [vmem:[#allocation5 + $0xc68] sm:$0xff]
    %v812 = vld [vmem:[#allocation5 + $0xc70] sm:$0xff]
    %v813 = vld [vmem:[#allocation5 + $0xc78] sm:$0xff]
    %v814 = vld [vmem:[#allocation5 + $0xc80] sm:$0xff]
    %v815 = vld [vmem:[#allocation5 + $0xc88] sm:$0xff]
    %v816 = vld [vmem:[#allocation5 + $0xc90] sm:$0xff]
    %v817 = vld [vmem:[#allocation5 + $0xc98] sm:$0xff]
    %v818 = vld [vmem:[#allocation5 + $0xca0] sm:$0xff]
    %v819 = vld [vmem:[#allocation5 + $0xca8] sm:$0xff]
    %v820 = vld [vmem:[#allocation5 + $0xcb0] sm:$0xff]
    %v821 = vld [vmem:[#allocation5 + $0xcb8] sm:$0xff]
    %v822 = vld [vmem:[#allocation5 + $0xcc0] sm:$0xff]
    %v823 = vld [vmem:[#allocation5 + $0xcc8] sm:$0xff]
    %v824 = vld [vmem:[#allocation5 + $0xcd0] sm:$0xff]
    %v825 = vld [vmem:[#allocation5 + $0xcd8] sm:$0xff]
    %v826 = vld [vmem:[#allocation5 + $0xce0] sm:$0xff]
    %v827 = vld [vmem:[#allocation5 + $0xce8] sm:$0xff]
    %v828 = vld [vmem:[#allocation5 + $0xcf0] sm:$0xff]
    %v829 = vld [vmem:[#allocation5 + $0xcf8] sm:$0xff]
    %v830 = vld [vmem:[#allocation5 + $0xd00] sm:$0xff]
    %v831 = vld [vmem:[#allocation5 + $0xd08] sm:$0xff]
    %v832 = vld [vmem:[#allocation5 + $0xd10] sm:$0xff]
    %v833 = vld [vmem:[#allocation5 + $0xd18] sm:$0xff]
    %v834 = vld [vmem:[#allocation5 + $0xd20] sm:$0xff]
    %v835 = vld [vmem:[#allocation5 + $0xd28] sm:$0xff]
    %v836 = vld [vmem:[#allocation5 + $0xd30] sm:$0xff]
    %v837 = vld [vmem:[#allocation5 + $0xd38] sm:$0xff]
    %v838 = vld [vmem:[#allocation5 + $0xd40] sm:$0xff]
    %v839 = vld [vmem:[#allocation5 + $0xd48] sm:$0xff]
    %v840 = vld [vmem:[#allocation5 + $0xd50] sm:$0xff]
    %v841 = vld [vmem:[#allocation5 + $0xd58] sm:$0xff]
    %v842 = vld [vmem:[#allocation5 + $0xd60] sm:$0xff]
    %v843 = vld [vmem:[#allocation5 + $0xd68] sm:$0xff]
    %v844 = vld [vmem:[#allocation5 + $0xd70] sm:$0xff]
    %v845 = vld [vmem:[#allocation5 + $0xd78] sm:$0xff]
    %v846 = vld [vmem:[#allocation5 + $0xd80] sm:$0xff]
    %v847 = vld [vmem:[#allocation5 + $0xd88] sm:$0xff]
    %v848 = vld [vmem:[#allocation5 + $0xd90] sm:$0xff]
    %v849 = vld [vmem:[#allocation5 + $0xd98] sm:$0xff]
    %v850 = vld [vmem:[#allocation5 + $0xda0] sm:$0xff]
    %v851 = vld [vmem:[#allocation5 + $0xda8] sm:$0xff]
    %v852 = vld [vmem:[#allocation5 + $0xdb0] sm:$0xff]
    %v853 = vld [vmem:[#allocation5 + $0xdb8] sm:$0xff]
    %v854 = vld [vmem:[#allocation5 + $0xdc0] sm:$0xff]
    %v855 = vld [vmem:[#allocation5 + $0xdc8] sm:$0xff]
    %v856 = vld [vmem:[#allocation5 + $0xdd0] sm:$0xff]
    %v857 = vld [vmem:[#allocation5 + $0xdd8] sm:$0xff]
    %v858 = vld [vmem:[#allocation5 + $0xde0] sm:$0xff]
    %v859 = vld [vmem:[#allocation5 + $0xde8] sm:$0xff]
    %v860 = vld [vmem:[#allocation5 + $0xdf0] sm:$0xff]
    %v861 = vld [vmem:[#allocation5 + $0xdf8] sm:$0xff]
    %v862 = vld [vmem:[#allocation5 + $0xe00] sm:$0xff]
    %v863 = vld [vmem:[#allocation5 + $0xe08] sm:$0xff]
    %v864 = vld [vmem:[#allocation5 + $0xe10] sm:$0xff]
    %v865 = vld [vmem:[#allocation5 + $0xe18] sm:$0xff]
    %v866 = vld [vmem:[#allocation5 + $0xe20] sm:$0xff]
    %v867 = vld [vmem:[#allocation5 + $0xe28] sm:$0xff]
    %v868 = vld [vmem:[#allocation5 + $0xe30] sm:$0xff]
    %v869 = vld [vmem:[#allocation5 + $0xe38] sm:$0xff]
    %v870 = vld [vmem:[#allocation5 + $0xe40] sm:$0xff]
    %v871 = vld [vmem:[#allocation5 + $0xe48] sm:$0xff]
    %v872 = vld [vmem:[#allocation5 + $0xe50] sm:$0xff]
    %v873 = vld [vmem:[#allocation5 + $0xe58] sm:$0xff]
    %v874 = vld [vmem:[#allocation5 + $0xe60] sm:$0xff]
    %v875 = vld [vmem:[#allocation5 + $0xe68] sm:$0xff]
    %v876 = vld [vmem:[#allocation5 + $0xe70] sm:$0xff]
    %v877 = vld [vmem:[#allocation5 + $0xe78] sm:$0xff]
    %v878 = vld [vmem:[#allocation5 + $0xe80] sm:$0xff]
    %v879 = vld [vmem:[#allocation5 + $0xe88] sm:$0xff]
    %v880 = vld [vmem:[#allocation5 + $0xe90] sm:$0xff]
    %v881 = vld [vmem:[#allocation5 + $0xe98] sm:$0xff]
    %v882 = vld [vmem:[#allocation5 + $0xea0] sm:$0xff]
    %v883 = vld [vmem:[#allocation5 + $0xea8] sm:$0xff]
    %v884 = vld [vmem:[#allocation5 + $0xeb0] sm:$0xff]
    %v885 = vld [vmem:[#allocation5 + $0xeb8] sm:$0xff]
    %v886 = vld [vmem:[#allocation5 + $0xec0] sm:$0xff]
    %v887 = vld [vmem:[#allocation5 + $0xec8] sm:$0xff]
    %v888 = vld [vmem:[#allocation5 + $0xed0] sm:$0xff]
    %v889 = vld [vmem:[#allocation5 + $0xed8] sm:$0xff]
    %v890 = vld [vmem:[#allocation5 + $0xee0] sm:$0xff]
    %v891 = vld [vmem:[#allocation5 + $0xee8] sm:$0xff]
    %v892 = vld [vmem:[#allocation5 + $0xef0] sm:$0xff]
    %v893 = vld [vmem:[#allocation5 + $0xef8] sm:$0xff]
    %v894 = vld [vmem:[#allocation5 + $0xf00] sm:$0xff]
    %v895 = vld [vmem:[#allocation5 + $0xf08] sm:$0xff]
    %v896 = vld [vmem:[#allocation5 + $0xf10] sm:$0xff]
    %v897 = vld [vmem:[#allocation5 + $0xf18] sm:$0xff]
    %v898 = vld [vmem:[#allocation5 + $0xf20] sm:$0xff]
    %v899 = vld [vmem:[#allocation5 + $0xf28] sm:$0xff]
    %v900 = vld [vmem:[#allocation5 + $0xf30] sm:$0xff]
    %v901 = vld [vmem:[#allocation5 + $0xf38] sm:$0xff]
    %v902 = vld [vmem:[#allocation5 + $0xf40] sm:$0xff]
    %v903 = vld [vmem:[#allocation5 + $0xf48] sm:$0xff]
    %v904 = vld [vmem:[#allocation5 + $0xf50] sm:$0xff]
    %v905 = vld [vmem:[#allocation5 + $0xf58] sm:$0xff]
    %v906 = vld [vmem:[#allocation5 + $0xf60] sm:$0xff]
    %v907 = vld [vmem:[#allocation5 + $0xf68] sm:$0xff]
    %v908 = vld [vmem:[#allocation5 + $0xf70] sm:$0xff]
    %v909 = vld [vmem:[#allocation5 + $0xf78] sm:$0xff]
    %v910 = vld [vmem:[#allocation5 + $0xf80] sm:$0xff]
    %v911 = vld [vmem:[#allocation5 + $0xf88] sm:$0xff]
    %v912 = vld [vmem:[#allocation5 + $0xf90] sm:$0xff]
    %v913 = vld [vmem:[#allocation5 + $0xf98] sm:$0xff]
    %v914 = vld [vmem:[#allocation5 + $0xfa0] sm:$0xff]
    %v915 = vld [vmem:[#allocation5 + $0xfa8] sm:$0xff]
    %v916 = vld [vmem:[#allocation5 + $0xfb0] sm:$0xff]
    %v917 = vld [vmem:[#allocation5 + $0xfb8] sm:$0xff]
    %v918 = vld [vmem:[#allocation5 + $0xfc0] sm:$0xff]
    %v919 = vld [vmem:[#allocation5 + $0xfc8] sm:$0xff]
    %v920 = vld [vmem:[#allocation5 + $0xfd0] sm:$0xff]
    %v921 = vld [vmem:[#allocation5 + $0xfd8] sm:$0xff]
    %v922 = vld [vmem:[#allocation5 + $0xfe0] sm:$0xff]
    %v923 = vld [vmem:[#allocation5 + $0xfe8] sm:$0xff]
    %v924 = vld [vmem:[#allocation5 + $0xff0] sm:$0xff]
    %v925 = vld [vmem:[#allocation5 + $0xff8] sm:$0xff]
    %v926 = vld [vmem:[#allocation5 + $0x1000] sm:$0xff]
    %v927 = vld [vmem:[#allocation5 + $0x1008] sm:$0xff]
    %v928 = vld [vmem:[#allocation5 + $0x1010] sm:$0xff]
    %v929 = vld [vmem:[#allocation5 + $0x1018] sm:$0xff]
    %v930 = vld [vmem:[#allocation5 + $0x1020] sm:$0xff]
    %v931 = vld [vmem:[#allocation5 + $0x1028] sm:$0xff]
    %v932 = vld [vmem:[#allocation5 + $0x1030] sm:$0xff]
    %v933 = vld [vmem:[#allocation5 + $0x1038] sm:$0xff]
    %v934 = vld [vmem:[#allocation5 + $0x1040] sm:$0xff]
    %v935 = vld [vmem:[#allocation5 + $0x1048] sm:$0xff]
    %v936 = vld [vmem:[#allocation5 + $0x1050] sm:$0xff]
    %v937 = vld [vmem:[#allocation5 + $0x1058] sm:$0xff]
    %v938 = vld [vmem:[#allocation5 + $0x1060] sm:$0xff]
    %v939 = vld [vmem:[#allocation5 + $0x1068] sm:$0xff]
    %v940 = vld [vmem:[#allocation5 + $0x1070] sm:$0xff]
    %v941 = vld [vmem:[#allocation5 + $0x1078] sm:$0xff]
    %v942 = vld [vmem:[#allocation5 + $0x1080] sm:$0xff]
    %v943 = vld [vmem:[#allocation5 + $0x1088] sm:$0xff]
    %v944 = vld [vmem:[#allocation5 + $0x1090] sm:$0xff]
    %v945 = vld [vmem:[#allocation5 + $0x1098] sm:$0xff]
    %v946 = vld [vmem:[#allocation5 + $0x10a0] sm:$0xff]
    %v947 = vld [vmem:[#allocation5 + $0x10a8] sm:$0xff]
    %v948 = vld [vmem:[#allocation5 + $0x10b0] sm:$0xff]
    %v949 = vld [vmem:[#allocation5 + $0x10b8] sm:$0xff]
    %v950 = vld [vmem:[#allocation5 + $0x10c0] sm:$0xff]
    %v951 = vld [vmem:[#allocation5 + $0x10c8] sm:$0xff]
    %v952 = vld [vmem:[#allocation5 + $0x10d0] sm:$0xff]
    %v953 = vld [vmem:[#allocation5 + $0x10d8] sm:$0xff]
    %v954 = vld [vmem:[#allocation5 + $0x10e0] sm:$0xff]
    %v955 = vld [vmem:[#allocation5 + $0x10e8] sm:$0xff]
    %v956 = vld [vmem:[#allocation5 + $0x10f0] sm:$0xff]
    %v957 = vld [vmem:[#allocation5 + $0x10f8] sm:$0xff]
    %v958 = vld [vmem:[#allocation5 + $0x1100] sm:$0xff]
    %v959 = vld [vmem:[#allocation5 + $0x1108] sm:$0xff]
    %v960 = vld [vmem:[#allocation5 + $0x1110] sm:$0xff]
    %v961 = vld [vmem:[#allocation5 + $0x1118] sm:$0xff]
    %v962 = vld [vmem:[#allocation5 + $0x1120] sm:$0xff]
    %v963 = vld [vmem:[#allocation5 + $0x1128] sm:$0xff]
    %v964 = vld [vmem:[#allocation5 + $0x1130] sm:$0xff]
    %v965 = vld [vmem:[#allocation5 + $0x1138] sm:$0xff]
    %v966 = vld [vmem:[#allocation5 + $0x1140] sm:$0xff]
    %v967 = vld [vmem:[#allocation5 + $0x1148] sm:$0xff]
    %v968 = vld [vmem:[#allocation5 + $0x1150] sm:$0xff]
    %v969 = vld [vmem:[#allocation5 + $0x1158] sm:$0xff]
    %v970 = vld [vmem:[#allocation5 + $0x1160] sm:$0xff]
    %v971 = vld [vmem:[#allocation5 + $0x1168] sm:$0xff]
    %v972 = vld [vmem:[#allocation5 + $0x1170] sm:$0xff]
    %v973 = vld [vmem:[#allocation5 + $0x1178] sm:$0xff]
    %v974 = vld [vmem:[#allocation5 + $0x1180] sm:$0xff]
    %v975 = vld [vmem:[#allocation5 + $0x1188] sm:$0xff]
    %v976 = vld [vmem:[#allocation5 + $0x1190] sm:$0xff]
    %v977 = vld [vmem:[#allocation5 + $0x1198] sm:$0xff]
    %v978 = vld [vmem:[#allocation5 + $0x11a0] sm:$0xff]
    %v979 = vld [vmem:[#allocation5 + $0x11a8] sm:$0xff]
    %v980 = vld [vmem:[#allocation5 + $0x11b0] sm:$0xff]
    %v981 = vld [vmem:[#allocation5 + $0x11b8] sm:$0xff]
    %v982 = vld [vmem:[#allocation5 + $0x11c0] sm:$0xff]
    %v983 = vld [vmem:[#allocation5 + $0x11c8] sm:$0xff]
    %v984 = vld [vmem:[#allocation5 + $0x11d0] sm:$0xff]
    %v985 = vld [vmem:[#allocation5 + $0x11d8] sm:$0xff]
    %v986 = vld [vmem:[#allocation5 + $0x11e0] sm:$0xff]
    %v987 = vld [vmem:[#allocation5 + $0x11e8] sm:$0xff]
    %v988 = vld [vmem:[#allocation5 + $0x11f0] sm:$0xff]
    %v989 = vld [vmem:[#allocation5 + $0x11f8] sm:$0xff]
    %v990 = vld [vmem:[#allocation5 + $0x1200] sm:$0xff]
    %v991 = vld [vmem:[#allocation5 + $0x1208] sm:$0xff]
    %v992 = vld [vmem:[#allocation5 + $0x1210] sm:$0xff]
    %v993 = vld [vmem:[#allocation5 + $0x1218] sm:$0xff]
    %v994 = vld [vmem:[#allocation5 + $0x1220] sm:$0xff]
    %v995 = vld [vmem:[#allocation5 + $0x1228] sm:$0xff]
    %v996 = vld [vmem:[#allocation5 + $0x1230] sm:$0xff]
    %v997 = vld [vmem:[#allocation5 + $0x1238] sm:$0xff]
    %v998 = vld [vmem:[#allocation5 + $0x1240] sm:$0xff]
    %v999 = vld [vmem:[#allocation5 + $0x1248] sm:$0xff]
    %v1000 = vld [vmem:[#allocation5 + $0x1250] sm:$0xff]
    %v1001 = vld [vmem:[#allocation5 + $0x1258] sm:$0xff]
    %v1002 = vld [vmem:[#allocation5 + $0x1260] sm:$0xff]
    %v1003 = vld [vmem:[#allocation5 + $0x1268] sm:$0xff]
    %v1004 = vld [vmem:[#allocation5 + $0x1270] sm:$0xff]
    %v1005 = vld [vmem:[#allocation5 + $0x1278] sm:$0xff]
    %v1006 = vld [vmem:[#allocation5 + $0x1280] sm:$0xff]
    %v1007 = vld [vmem:[#allocation5 + $0x1288] sm:$0xff]
    %v1008 = vld [vmem:[#allocation5 + $0x1290] sm:$0xff]
    %v1009 = vld [vmem:[#allocation5 + $0x1298] sm:$0xff]
    %v1010 = vld [vmem:[#allocation5 + $0x12a0] sm:$0xff]
    %v1011 = vld [vmem:[#allocation5 + $0x12a8] sm:$0xff]
    %v1012 = vld [vmem:[#allocation5 + $0x12b0] sm:$0xff]
    %v1013 = vld [vmem:[#allocation5 + $0x12b8] sm:$0xff]
    %v1014 = vld [vmem:[#allocation5 + $0x12c0] sm:$0xff]
    %v1015 = vld [vmem:[#allocation5 + $0x12c8] sm:$0xff]
    %v1016 = vld [vmem:[#allocation5 + $0x12d0] sm:$0xff]
    %v1017 = vld [vmem:[#allocation5 + $0x12d8] sm:$0xff]
    %v1018 = vld [vmem:[#allocation5 + $0x12e0] sm:$0xff]
    %v1019 = vld [vmem:[#allocation5 + $0x12e8] sm:$0xff]
    %v1020 = vld [vmem:[#allocation5 + $0x12f0] sm:$0xff]
    %v1021 = vld [vmem:[#allocation5 + $0x12f8] sm:$0xff]
    %v1022 = vld [vmem:[#allocation5 + $0x1300] sm:$0xff]
    %v1023 = vld [vmem:[#allocation5 + $0x1308] sm:$0xff]
    %v1024 = vld [vmem:[#allocation5 + $0x1310] sm:$0xff]
    %v1025 = vld [vmem:[#allocation5 + $0x1318] sm:$0xff]
    %v1026 = vld [vmem:[#allocation5 + $0x1320] sm:$0xff]
    %v1027 = vld [vmem:[#allocation5 + $0x1328] sm:$0xff]
    %v1028 = vld [vmem:[#allocation5 + $0x1330] sm:$0xff]
    %v1029 = vld [vmem:[#allocation5 + $0x1338] sm:$0xff]
    %v1030 = vld [vmem:[#allocation5 + $0x1340] sm:$0xff]
    %v1031 = vld [vmem:[#allocation5 + $0x1348] sm:$0xff]
    %v1032 = vld [vmem:[#allocation5 + $0x1350] sm:$0xff]
    %v1033 = vld [vmem:[#allocation5 + $0x1358] sm:$0xff]
    %v1034 = vld [vmem:[#allocation5 + $0x1360] sm:$0xff]
    %v1035 = vld [vmem:[#allocation5 + $0x1368] sm:$0xff]
    %v1036 = vld [vmem:[#allocation5 + $0x1370] sm:$0xff]
    %v1037 = vld [vmem:[#allocation5 + $0x1378] sm:$0xff]
    %v1038 = vld [vmem:[#allocation5 + $0x1380] sm:$0xff]
    %v1039 = vld [vmem:[#allocation5 + $0x1388] sm:$0xff]
    %v1040 = vld [vmem:[#allocation5 + $0x1390] sm:$0xff]
    %v1041 = vld [vmem:[#allocation5 + $0x1398] sm:$0xff]
    %v1042 = vld [vmem:[#allocation5 + $0x13a0] sm:$0xff]
    %v1043 = vld [vmem:[#allocation5 + $0x13a8] sm:$0xff]
    %v1044 = vld [vmem:[#allocation5 + $0x13b0] sm:$0xff]
    %v1045 = vld [vmem:[#allocation5 + $0x13b8] sm:$0xff]
    %v1046 = vld [vmem:[#allocation5 + $0x13c0] sm:$0xff]
    %v1047 = vld [vmem:[#allocation5 + $0x13c8] sm:$0xff]
    %v1048 = vld [vmem:[#allocation5 + $0x13d0] sm:$0xff]
    %v1049 = vld [vmem:[#allocation5 + $0x13d8] sm:$0xff]
    %v1050 = vld [vmem:[#allocation5 + $0x13e0] sm:$0xff]
    %v1051 = vld [vmem:[#allocation5 + $0x13e8] sm:$0xff]
    %v1052 = vld [vmem:[#allocation5 + $0x13f0] sm:$0xff]
    %v1053 = vld [vmem:[#allocation5 + $0x13f8] sm:$0xff]
    %v1054 = vld [vmem:[#allocation5 + $0x1400] sm:$0xff]
    %v1055 = vld [vmem:[#allocation5 + $0x1408] sm:$0xff]
    %v1056 = vld [vmem:[#allocation5 + $0x1410] sm:$0xff]
    %v1057 = vld [vmem:[#allocation5 + $0x1418] sm:$0xff]
    %v1058 = vld [vmem:[#allocation5 + $0x1420] sm:$0xff]
    %v1059 = vld [vmem:[#allocation5 + $0x1428] sm:$0xff]
    %v1060 = vld [vmem:[#allocation5 + $0x1430] sm:$0xff]
    %v1061 = vld [vmem:[#allocation5 + $0x1438] sm:$0xff]
    %v1062 = vld [vmem:[#allocation5 + $0x1440] sm:$0xff]
    %v1063 = vld [vmem:[#allocation5 + $0x1448] sm:$0xff]
    %v1064 = vld [vmem:[#allocation5 + $0x1450] sm:$0xff]
    %v1065 = vld [vmem:[#allocation5 + $0x1458] sm:$0xff]
    %v1066 = vld [vmem:[#allocation5 + $0x1460] sm:$0xff]
    %v1067 = vld [vmem:[#allocation5 + $0x1468] sm:$0xff]
    %v1068 = vld [vmem:[#allocation5 + $0x1470] sm:$0xff]
    %v1069 = vld [vmem:[#allocation5 + $0x1478] sm:$0xff]
    %v1070 = vld [vmem:[#allocation5 + $0x1480] sm:$0xff]
    %v1071 = vld [vmem:[#allocation5 + $0x1488] sm:$0xff]
    %v1072 = vld [vmem:[#allocation5 + $0x1490] sm:$0xff]
    %v1073 = vld [vmem:[#allocation5 + $0x1498] sm:$0xff]
    %v1074 = vld [vmem:[#allocation5 + $0x14a0] sm:$0xff]
    %v1075 = vld [vmem:[#allocation5 + $0x14a8] sm:$0xff]
    %v1076 = vld [vmem:[#allocation5 + $0x14b0] sm:$0xff]
    %v1077 = vld [vmem:[#allocation5 + $0x14b8] sm:$0xff]
    %v1078 = vld [vmem:[#allocation5 + $0x14c0] sm:$0xff]
    %v1079 = vld [vmem:[#allocation5 + $0x14c8] sm:$0xff]
    %v1080 = vld [vmem:[#allocation5 + $0x14d0] sm:$0xff]
    %v1081 = vld [vmem:[#allocation5 + $0x14d8] sm:$0xff]
    %v1082 = vld [vmem:[#allocation5 + $0x14e0] sm:$0xff]
    %v1083 = vld [vmem:[#allocation5 + $0x14e8] sm:$0xff]
    %v1084 = vld [vmem:[#allocation5 + $0x14f0] sm:$0xff]
    %v1085 = vld [vmem:[#allocation5 + $0x14f8] sm:$0xff]
    %v1086 = vld [vmem:[#allocation5 + $0x1500] sm:$0xff]
    %v1087 = vld [vmem:[#allocation5 + $0x1508] sm:$0xff]
    %v1088 = vld [vmem:[#allocation5 + $0x1510] sm:$0xff]
    %v1089 = vld [vmem:[#allocation5 + $0x1518] sm:$0xff]
    %v1090 = vld [vmem:[#allocation5 + $0x1520] sm:$0xff]
    %v1091 = vld [vmem:[#allocation5 + $0x1528] sm:$0xff]
    %v1092 = vld [vmem:[#allocation5 + $0x1530] sm:$0xff]
    %v1093 = vld [vmem:[#allocation5 + $0x1538] sm:$0xff]
    %v1094 = vld [vmem:[#allocation5 + $0x1540] sm:$0xff]
    %v1095 = vld [vmem:[#allocation5 + $0x1548] sm:$0xff]
    %v1096 = vld [vmem:[#allocation5 + $0x1550] sm:$0xff]
    %v1097 = vld [vmem:[#allocation5 + $0x1558] sm:$0xff]
    %v1098 = vld [vmem:[#allocation5 + $0x1560] sm:$0xff]
    %v1099 = vld [vmem:[#allocation5 + $0x1568] sm:$0xff]
    %v1100 = vld [vmem:[#allocation5 + $0x1570] sm:$0xff]
    %v1101 = vld [vmem:[#allocation5 + $0x1578] sm:$0xff]
    %v1102 = vld [vmem:[#allocation5 + $0x1580] sm:$0xff]
    %v1103 = vld [vmem:[#allocation5 + $0x1588] sm:$0xff]
    %v1104 = vld [vmem:[#allocation5 + $0x1590] sm:$0xff]
    %v1105 = vld [vmem:[#allocation5 + $0x1598] sm:$0xff]
    %v1106 = vld [vmem:[#allocation5 + $0x15a0] sm:$0xff]
    %v1107 = vld [vmem:[#allocation5 + $0x15a8] sm:$0xff]
    %v1108 = vld [vmem:[#allocation5 + $0x15b0] sm:$0xff]
    %v1109 = vld [vmem:[#allocation5 + $0x15b8] sm:$0xff]
    %v1110 = vld [vmem:[#allocation5 + $0x15c0] sm:$0xff]
    %v1111 = vld [vmem:[#allocation5 + $0x15c8] sm:$0xff]
    %v1112 = vld [vmem:[#allocation5 + $0x15d0] sm:$0xff]
    %v1113 = vld [vmem:[#allocation5 + $0x15d8] sm:$0xff]
    %v1114 = vld [vmem:[#allocation5 + $0x15e0] sm:$0xff]
    %v1115 = vld [vmem:[#allocation5 + $0x15e8] sm:$0xff]
    %v1116 = vld [vmem:[#allocation5 + $0x15f0] sm:$0xff]
    %v1117 = vld [vmem:[#allocation5 + $0x15f8] sm:$0xff]
    %v1118 = vld [vmem:[#allocation5 + $0x1600] sm:$0xff]
    %v1119 = vld [vmem:[#allocation5 + $0x1608] sm:$0xff]
    %v1120 = vld [vmem:[#allocation5 + $0x1610] sm:$0xff]
    %v1121 = vld [vmem:[#allocation5 + $0x1618] sm:$0xff]
    %v1122 = vld [vmem:[#allocation5 + $0x1620] sm:$0xff]
    %v1123 = vld [vmem:[#allocation5 + $0x1628] sm:$0xff]
    %v1124 = vld [vmem:[#allocation5 + $0x1630] sm:$0xff]
    %v1125 = vld [vmem:[#allocation5 + $0x1638] sm:$0xff]
    %v1126 = vld [vmem:[#allocation5 + $0x1640] sm:$0xff]
    %v1127 = vld [vmem:[#allocation5 + $0x1648] sm:$0xff]
    %v1128 = vld [vmem:[#allocation5 + $0x1650] sm:$0xff]
    %v1129 = vld [vmem:[#allocation5 + $0x1658] sm:$0xff]
    %v1130 = vld [vmem:[#allocation5 + $0x1660] sm:$0xff]
    %v1131 = vld [vmem:[#allocation5 + $0x1668] sm:$0xff]
    %v1132 = vld [vmem:[#allocation5 + $0x1670] sm:$0xff]
    %v1133 = vld [vmem:[#allocation5 + $0x1678] sm:$0xff]
    %v1134 = vld [vmem:[#allocation5 + $0x1680] sm:$0xff]
    %v1135 = vld [vmem:[#allocation5 + $0x1688] sm:$0xff]
    %v1136 = vld [vmem:[#allocation5 + $0x1690] sm:$0xff]
    %v1137 = vld [vmem:[#allocation5 + $0x1698] sm:$0xff]
    %v1138 = vld [vmem:[#allocation5 + $0x16a0] sm:$0xff]
    %v1139 = vld [vmem:[#allocation5 + $0x16a8] sm:$0xff]
    %v1140 = vld [vmem:[#allocation5 + $0x16b0] sm:$0xff]
    %v1141 = vld [vmem:[#allocation5 + $0x16b8] sm:$0xff]
    %v1142 = vld [vmem:[#allocation5 + $0x16c0] sm:$0xff]
    %v1143 = vld [vmem:[#allocation5 + $0x16c8] sm:$0xff]
    %v1144 = vld [vmem:[#allocation5 + $0x16d0] sm:$0xff]
    %v1145 = vld [vmem:[#allocation5 + $0x16d8] sm:$0xff]
    %v1146 = vld [vmem:[#allocation5 + $0x16e0] sm:$0xff]
    %v1147 = vld [vmem:[#allocation5 + $0x16e8] sm:$0xff]
    %v1148 = vld [vmem:[#allocation5 + $0x16f0] sm:$0xff]
    %v1149 = vld [vmem:[#allocation5 + $0x16f8] sm:$0xff]
    %v1150 = vld [vmem:[#allocation5 + $0x1700] sm:$0xff]
    %v1151 = vld [vmem:[#allocation5 + $0x1708] sm:$0xff]
    %v1152 = vld [vmem:[#allocation5 + $0x1710] sm:$0xff]
    %v1153 = vld [vmem:[#allocation5 + $0x1718] sm:$0xff]
    %v1154 = vld [vmem:[#allocation5 + $0x1720] sm:$0xff]
    %v1155 = vld [vmem:[#allocation5 + $0x1728] sm:$0xff]
    %v1156 = vld [vmem:[#allocation5 + $0x1730] sm:$0xff]
    %v1157 = vld [vmem:[#allocation5 + $0x1738] sm:$0xff]
    %v1158 = vld [vmem:[#allocation5 + $0x1740] sm:$0xff]
    %v1159 = vld [vmem:[#allocation5 + $0x1748] sm:$0xff]
    %v1160 = vld [vmem:[#allocation5 + $0x1750] sm:$0xff]
    %v1161 = vld [vmem:[#allocation5 + $0x1758] sm:$0xff]
    %v1162 = vld [vmem:[#allocation5 + $0x1760] sm:$0xff]
    %v1163 = vld [vmem:[#allocation5 + $0x1768] sm:$0xff]
    %v1164 = vld [vmem:[#allocation5 + $0x1770] sm:$0xff]
    %v1165 = vld [vmem:[#allocation5 + $0x1778] sm:$0xff]
    %v1166 = vld [vmem:[#allocation5 + $0x1780] sm:$0xff]
    %v1167 = vld [vmem:[#allocation5 + $0x1788] sm:$0xff]
    %v1168 = vld [vmem:[#allocation5 + $0x1790] sm:$0xff]
    %v1169 = vld [vmem:[#allocation5 + $0x1798] sm:$0xff]
    %v1170 = vld [vmem:[#allocation5 + $0x17a0] sm:$0xff]
    %v1171 = vld [vmem:[#allocation5 + $0x17a8] sm:$0xff]
    %v1172 = vld [vmem:[#allocation5 + $0x17b0] sm:$0xff]
    %v1173 = vld [vmem:[#allocation5 + $0x17b8] sm:$0xff]
    %v1174 = vld [vmem:[#allocation5 + $0x17c0] sm:$0xff]
    %v1175 = vld [vmem:[#allocation5 + $0x17c8] sm:$0xff]
    %v1176 = vld [vmem:[#allocation5 + $0x17d0] sm:$0xff]
    %v1177 = vld [vmem:[#allocation5 + $0x17d8] sm:$0xff]
    %v1178 = vld [vmem:[#allocation5 + $0x17e0] sm:$0xff]
    %v1179 = vld [vmem:[#allocation5 + $0x17e8] sm:$0xff]
    %v1180 = vld [vmem:[#allocation5 + $0x17f0] sm:$0xff]
    %v1181 = vld [vmem:[#allocation5 + $0x17f8] sm:$0xff]
    %v1182 = vld [vmem:[#allocation5 + $0x1800] sm:$0xff]
    %v1183 = vld [vmem:[#allocation5 + $0x1808] sm:$0xff]
    %v1184 = vld [vmem:[#allocation5 + $0x1810] sm:$0xff]
    %v1185 = vld [vmem:[#allocation5 + $0x1818] sm:$0xff]
    %v1186 = vld [vmem:[#allocation5 + $0x1820] sm:$0xff]
    %v1187 = vld [vmem:[#allocation5 + $0x1828] sm:$0xff]
    %v1188 = vld [vmem:[#allocation5 + $0x1830] sm:$0xff]
    %v1189 = vld [vmem:[#allocation5 + $0x1838] sm:$0xff]
    %v1190 = vld [vmem:[#allocation5 + $0x1840] sm:$0xff]
    %v1191 = vld [vmem:[#allocation5 + $0x1848] sm:$0xff]
    %v1192 = vld [vmem:[#allocation5 + $0x1850] sm:$0xff]
    %v1193 = vld [vmem:[#allocation5 + $0x1858] sm:$0xff]
    %v1194 = vld [vmem:[#allocation5 + $0x1860] sm:$0xff]
    %v1195 = vld [vmem:[#allocation5 + $0x1868] sm:$0xff]
    %v1196 = vld [vmem:[#allocation5 + $0x1870] sm:$0xff]
    %v1197 = vld [vmem:[#allocation5 + $0x1878] sm:$0xff]
    %v1198 = vld [vmem:[#allocation5 + $0x1880] sm:$0xff]
    %v1199 = vld [vmem:[#allocation5 + $0x1888] sm:$0xff]
    %v1200 = vld [vmem:[#allocation5 + $0x1890] sm:$0xff]
    %v1201 = vld [vmem:[#allocation5 + $0x1898] sm:$0xff]
    %v1202 = vld [vmem:[#allocation5 + $0x18a0] sm:$0xff]
    %v1203 = vld [vmem:[#allocation5 + $0x18a8] sm:$0xff]
    %v1204 = vld [vmem:[#allocation5 + $0x18b0] sm:$0xff]
    %v1205 = vld [vmem:[#allocation5 + $0x18b8] sm:$0xff]
    %v1206 = vld [vmem:[#allocation5 + $0x18c0] sm:$0xff]
    %v1207 = vld [vmem:[#allocation5 + $0x18c8] sm:$0xff]
    %v1208 = vld [vmem:[#allocation5 + $0x18d0] sm:$0xff]
    %v1209 = vld [vmem:[#allocation5 + $0x18d8] sm:$0xff]
    %v1210 = vld [vmem:[#allocation5 + $0x18e0] sm:$0xff]
    %v1211 = vld [vmem:[#allocation5 + $0x18e8] sm:$0xff]
    %v1212 = vld [vmem:[#allocation5 + $0x18f0] sm:$0xff]
    %v1213 = vld [vmem:[#allocation5 + $0x18f8] sm:$0xff]
    %v1214 = vld [vmem:[#allocation5 + $0x1900] sm:$0xff]
    %v1215 = vld [vmem:[#allocation5 + $0x1908] sm:$0xff]
    %v1216 = vld [vmem:[#allocation5 + $0x1910] sm:$0xff]
    %v1217 = vld [vmem:[#allocation5 + $0x1918] sm:$0xff]
    %v1218 = vld [vmem:[#allocation5 + $0x1920] sm:$0xff]
    %v1219 = vld [vmem:[#allocation5 + $0x1928] sm:$0xff]
    %v1220 = vld [vmem:[#allocation5 + $0x1930] sm:$0xff]
    %v1221 = vld [vmem:[#allocation5 + $0x1938] sm:$0xff]
    %v1222 = vld [vmem:[#allocation5 + $0x1940] sm:$0xff]
    %v1223 = vld [vmem:[#allocation5 + $0x1948] sm:$0xff]
    %v1224 = vld [vmem:[#allocation5 + $0x1950] sm:$0xff]
    %v1225 = vld [vmem:[#allocation5 + $0x1958] sm:$0xff]
    %v1226 = vld [vmem:[#allocation5 + $0x1960] sm:$0xff]
    %v1227 = vld [vmem:[#allocation5 + $0x1968] sm:$0xff]
    %v1228 = vld [vmem:[#allocation5 + $0x1970] sm:$0xff]
    %v1229 = vld [vmem:[#allocation5 + $0x1978] sm:$0xff]
    %v1230 = vld [vmem:[#allocation5 + $0x1980] sm:$0xff]
    %v1231 = vld [vmem:[#allocation5 + $0x1988] sm:$0xff]
    %v1232 = vld [vmem:[#allocation5 + $0x1990] sm:$0xff]
    %v1233 = vld [vmem:[#allocation5 + $0x1998] sm:$0xff]
    %v1234 = vld [vmem:[#allocation5 + $0x19a0] sm:$0xff]
    %v1235 = vld [vmem:[#allocation5 + $0x19a8] sm:$0xff]
    %v1236 = vld [vmem:[#allocation5 + $0x19b0] sm:$0xff]
    %v1237 = vld [vmem:[#allocation5 + $0x19b8] sm:$0xff]
    %v1238 = vld [vmem:[#allocation5 + $0x19c0] sm:$0xff]
    %v1239 = vld [vmem:[#allocation5 + $0x19c8] sm:$0xff]
    %v1240 = vld [vmem:[#allocation5 + $0x19d0] sm:$0xff]
    %v1241 = vld [vmem:[#allocation5 + $0x19d8] sm:$0xff]
    %v1242 = vld [vmem:[#allocation5 + $0x19e0] sm:$0xff]
    %v1243 = vld [vmem:[#allocation5 + $0x19e8] sm:$0xff]
    %v1244 = vld [vmem:[#allocation5 + $0x19f0] sm:$0xff]
    %v1245 = vld [vmem:[#allocation5 + $0x19f8] sm:$0xff]
    %v1246 = vld [vmem:[#allocation5 + $0x1a00] sm:$0xff]
    %v1247 = vld [vmem:[#allocation5 + $0x1a08] sm:$0xff]
    %v1248 = vld [vmem:[#allocation5 + $0x1a10] sm:$0xff]
    %v1249 = vld [vmem:[#allocation5 + $0x1a18] sm:$0xff]
    %v1250 = vld [vmem:[#allocation5 + $0x1a20] sm:$0xff]
    %v1251 = vld [vmem:[#allocation5 + $0x1a28] sm:$0xff]
    %v1252 = vld [vmem:[#allocation5 + $0x1a30] sm:$0xff]
    %v1253 = vld [vmem:[#allocation5 + $0x1a38] sm:$0xff]
    %v1254 = vld [vmem:[#allocation5 + $0x1a40] sm:$0xff]
    %v1255 = vld [vmem:[#allocation5 + $0x1a48] sm:$0xff]
    %v1256 = vld [vmem:[#allocation5 + $0x1a50] sm:$0xff]
    %v1257 = vld [vmem:[#allocation5 + $0x1a58] sm:$0xff]
    %v1258 = vld [vmem:[#allocation5 + $0x1a60] sm:$0xff]
    %v1259 = vld [vmem:[#allocation5 + $0x1a68] sm:$0xff]
    %v1260 = vld [vmem:[#allocation5 + $0x1a70] sm:$0xff]
    %v1261 = vld [vmem:[#allocation5 + $0x1a78] sm:$0xff]
    %v1262 = vld [vmem:[#allocation5 + $0x1a80] sm:$0xff]
    %v1263 = vld [vmem:[#allocation5 + $0x1a88] sm:$0xff]
    %v1264 = vld [vmem:[#allocation5 + $0x1a90] sm:$0xff]
    %v1265 = vld [vmem:[#allocation5 + $0x1a98] sm:$0xff]
    %v1266 = vld [vmem:[#allocation5 + $0x1aa0] sm:$0xff]
    %v1267 = vld [vmem:[#allocation5 + $0x1aa8] sm:$0xff]
    %v1268 = vld [vmem:[#allocation5 + $0x1ab0] sm:$0xff]
    %v1269 = vld [vmem:[#allocation5 + $0x1ab8] sm:$0xff]
    %v1270 = vld [vmem:[#allocation5 + $0x1ac0] sm:$0xff]
    %v1271 = vld [vmem:[#allocation5 + $0x1ac8] sm:$0xff]
    %v1272 = vld [vmem:[#allocation5 + $0x1ad0] sm:$0xff]
    %v1273 = vld [vmem:[#allocation5 + $0x1ad8] sm:$0xff]
    %v1274 = vld [vmem:[#allocation5 + $0x1ae0] sm:$0xff]
    %v1275 = vld [vmem:[#allocation5 + $0x1ae8] sm:$0xff]
    %v1276 = vld [vmem:[#allocation5 + $0x1af0] sm:$0xff]
    %v1277 = vld [vmem:[#allocation5 + $0x1af8] sm:$0xff]
    %v1278 = vld [vmem:[#allocation5 + $0x1b00] sm:$0xff]
    %v1279 = vld [vmem:[#allocation5 + $0x1b08] sm:$0xff]
    %v1280 = vld [vmem:[#allocation5 + $0x1b10] sm:$0xff]
    %v1281 = vld [vmem:[#allocation5 + $0x1b18] sm:$0xff]
    %v1282 = vld [vmem:[#allocation5 + $0x1b20] sm:$0xff]
    %v1283 = vld [vmem:[#allocation5 + $0x1b28] sm:$0xff]
    %v1284 = vld [vmem:[#allocation5 + $0x1b30] sm:$0xff]
    %v1285 = vld [vmem:[#allocation5 + $0x1b38] sm:$0xff]
    %v1286 = vld [vmem:[#allocation5 + $0x1b40] sm:$0xff]
    %v1287 = vld [vmem:[#allocation5 + $0x1b48] sm:$0xff]
    %v1288 = vld [vmem:[#allocation5 + $0x1b50] sm:$0xff]
    %v1289 = vld [vmem:[#allocation5 + $0x1b58] sm:$0xff]
    %v1290 = vld [vmem:[#allocation5 + $0x1b60] sm:$0xff]
    %v1291 = vld [vmem:[#allocation5 + $0x1b68] sm:$0xff]
    %v1292 = vld [vmem:[#allocation5 + $0x1b70] sm:$0xff]
    %v1293 = vld [vmem:[#allocation5 + $0x1b78] sm:$0xff]
    %v1294 = vld [vmem:[#allocation5 + $0x1b80] sm:$0xff]
    %v1295 = vld [vmem:[#allocation5 + $0x1b88] sm:$0xff]
    %v1296 = vld [vmem:[#allocation5 + $0x1b90] sm:$0xff]
    %v1297 = vld [vmem:[#allocation5 + $0x1b98] sm:$0xff]
    %v1298 = vld [vmem:[#allocation5 + $0x1ba0] sm:$0xff]
    %v1299 = vld [vmem:[#allocation5 + $0x1ba8] sm:$0xff]
    %v1300 = vld [vmem:[#allocation5 + $0x1bb0] sm:$0xff]
    %v1301 = vld [vmem:[#allocation5 + $0x1bb8] sm:$0xff]
    %v1302 = vld [vmem:[#allocation5 + $0x1bc0] sm:$0xff]
    %v1303 = vld [vmem:[#allocation5 + $0x1bc8] sm:$0xff]
    %v1304 = vld [vmem:[#allocation5 + $0x1bd0] sm:$0xff]
    %v1305 = vld [vmem:[#allocation5 + $0x1bd8] sm:$0xff]
    %v1306 = vld [vmem:[#allocation5 + $0x1be0] sm:$0xff]
    %v1307 = vld [vmem:[#allocation5 + $0x1be8] sm:$0xff]
    %v1308 = vld [vmem:[#allocation5 + $0x1bf0] sm:$0xff]
    %v1309 = vld [vmem:[#allocation5 + $0x1bf8] sm:$0xff]
    %v1310 = vld [vmem:[#allocation5 + $0x1c00] sm:$0xff]
    %v1311 = vld [vmem:[#allocation5 + $0x1c08] sm:$0xff]
    %v1312 = vld [vmem:[#allocation5 + $0x1c10] sm:$0xff]
    %v1313 = vld [vmem:[#allocation5 + $0x1c18] sm:$0xff]
    %v1314 = vld [vmem:[#allocation5 + $0x1c20] sm:$0xff]
    %v1315 = vld [vmem:[#allocation5 + $0x1c28] sm:$0xff]
    %v1316 = vld [vmem:[#allocation5 + $0x1c30] sm:$0xff]
    %v1317 = vld [vmem:[#allocation5 + $0x1c38] sm:$0xff]
    %v1318 = vld [vmem:[#allocation5 + $0x1c40] sm:$0xff]
    %v1319 = vld [vmem:[#allocation5 + $0x1c48] sm:$0xff]
    %v1320 = vld [vmem:[#allocation5 + $0x1c50] sm:$0xff]
    %v1321 = vld [vmem:[#allocation5 + $0x1c58] sm:$0xff]
    %v1322 = vld [vmem:[#allocation5 + $0x1c60] sm:$0xff]
    %v1323 = vld [vmem:[#allocation5 + $0x1c68] sm:$0xff]
    %v1324 = vld [vmem:[#allocation5 + $0x1c70] sm:$0xff]
    %v1325 = vld [vmem:[#allocation5 + $0x1c78] sm:$0xff]
    %v1326 = vld [vmem:[#allocation5 + $0x1c80] sm:$0xff]
    %v1327 = vld [vmem:[#allocation5 + $0x1c88] sm:$0xff]
    %v1328 = vld [vmem:[#allocation5 + $0x1c90] sm:$0xff]
    %v1329 = vld [vmem:[#allocation5 + $0x1c98] sm:$0xff]
    %v1330 = vld [vmem:[#allocation5 + $0x1ca0] sm:$0xff]
    %v1331 = vld [vmem:[#allocation5 + $0x1ca8] sm:$0xff]
    %v1332 = vld [vmem:[#allocation5 + $0x1cb0] sm:$0xff]
    %v1333 = vld [vmem:[#allocation5 + $0x1cb8] sm:$0xff]
    %v1334 = vld [vmem:[#allocation5 + $0x1cc0] sm:$0xff]
    %v1335 = vld [vmem:[#allocation5 + $0x1cc8] sm:$0xff]
    %v1336 = vld [vmem:[#allocation5 + $0x1cd0] sm:$0xff]
    %v1337 = vld [vmem:[#allocation5 + $0x1cd8] sm:$0xff]
    %v1338 = vld [vmem:[#allocation5 + $0x1ce0] sm:$0xff]
    %v1339 = vld [vmem:[#allocation5 + $0x1ce8] sm:$0xff]
    %v1340 = vld [vmem:[#allocation5 + $0x1cf0] sm:$0xff]
    %v1341 = vld [vmem:[#allocation5 + $0x1cf8] sm:$0xff]
    %v1342 = vld [vmem:[#allocation5 + $0x1d00] sm:$0xff]
    %v1343 = vld [vmem:[#allocation5 + $0x1d08] sm:$0xff]
    %v1344 = vld [vmem:[#allocation5 + $0x1d10] sm:$0xff]
    %v1345 = vld [vmem:[#allocation5 + $0x1d18] sm:$0xff]
    %v1346 = vld [vmem:[#allocation5 + $0x1d20] sm:$0xff]
    %v1347 = vld [vmem:[#allocation5 + $0x1d28] sm:$0xff]
    %v1348 = vld [vmem:[#allocation5 + $0x1d30] sm:$0xff]
    %v1349 = vld [vmem:[#allocation5 + $0x1d38] sm:$0xff]
    %v1350 = vld [vmem:[#allocation5 + $0x1d40] sm:$0xff]
    %v1351 = vld [vmem:[#allocation5 + $0x1d48] sm:$0xff]
    %v1352 = vld [vmem:[#allocation5 + $0x1d50] sm:$0xff]
    %v1353 = vld [vmem:[#allocation5 + $0x1d58] sm:$0xff]
    %v1354 = vld [vmem:[#allocation5 + $0x1d60] sm:$0xff]
    %v1355 = vld [vmem:[#allocation5 + $0x1d68] sm:$0xff]
    %v1356 = vld [vmem:[#allocation5 + $0x1d70] sm:$0xff]
    %v1357 = vld [vmem:[#allocation5 + $0x1d78] sm:$0xff]
    %v1358 = vld [vmem:[#allocation5 + $0x1d80] sm:$0xff]
    %v1359 = vld [vmem:[#allocation5 + $0x1d88] sm:$0xff]
    %v1360 = vld [vmem:[#allocation5 + $0x1d90] sm:$0xff]
    %v1361 = vld [vmem:[#allocation5 + $0x1d98] sm:$0xff]
    %v1362 = vld [vmem:[#allocation5 + $0x1da0] sm:$0xff]
    %v1363 = vld [vmem:[#allocation5 + $0x1da8] sm:$0xff]
    %v1364 = vld [vmem:[#allocation5 + $0x1db0] sm:$0xff]
    %v1365 = vld [vmem:[#allocation5 + $0x1db8] sm:$0xff]
    %v1366 = vld [vmem:[#allocation5 + $0x1dc0] sm:$0xff]
    %v1367 = vld [vmem:[#allocation5 + $0x1dc8] sm:$0xff]
    %v1368 = vld [vmem:[#allocation5 + $0x1dd0] sm:$0xff]
    %v1369 = vld [vmem:[#allocation5 + $0x1dd8] sm:$0xff]
    %v1370 = vld [vmem:[#allocation5 + $0x1de0] sm:$0xff]
    %v1371 = vld [vmem:[#allocation5 + $0x1de8] sm:$0xff]
    %v1372 = vld [vmem:[#allocation5 + $0x1df0] sm:$0xff]
    %v1373 = vld [vmem:[#allocation5 + $0x1df8] sm:$0xff]
    %v1374 = vld [vmem:[#allocation5 + $0x1e00] sm:$0xff]
    %v1375 = vld [vmem:[#allocation5 + $0x1e08] sm:$0xff]
    %v1376 = vld [vmem:[#allocation5 + $0x1e10] sm:$0xff]
    %v1377 = vld [vmem:[#allocation5 + $0x1e18] sm:$0xff]
    %v1378 = vld [vmem:[#allocation5 + $0x1e20] sm:$0xff]
    %v1379 = vld [vmem:[#allocation5 + $0x1e28] sm:$0xff]
    %v1380 = vld [vmem:[#allocation5 + $0x1e30] sm:$0xff]
    %v1381 = vld [vmem:[#allocation5 + $0x1e38] sm:$0xff]
    %v1382 = vld [vmem:[#allocation5 + $0x1e40] sm:$0xff]
    %v1383 = vld [vmem:[#allocation5 + $0x1e48] sm:$0xff]
    %v1384 = vld [vmem:[#allocation5 + $0x1e50] sm:$0xff]
    %v1385 = vld [vmem:[#allocation5 + $0x1e58] sm:$0xff]
    %v1386 = vld [vmem:[#allocation5 + $0x1e60] sm:$0xff]
    %v1387 = vld [vmem:[#allocation5 + $0x1e68] sm:$0xff]
    %v1388 = vld [vmem:[#allocation5 + $0x1e70] sm:$0xff]
    %v1389 = vld [vmem:[#allocation5 + $0x1e78] sm:$0xff]
    %v1390 = vld [vmem:[#allocation5 + $0x1e80] sm:$0xff]
    %v1391 = vld [vmem:[#allocation5 + $0x1e88] sm:$0xff]
    %v1392 = vld [vmem:[#allocation5 + $0x1e90] sm:$0xff]
    %v1393 = vld [vmem:[#allocation5 + $0x1e98] sm:$0xff]
    %v1394 = vld [vmem:[#allocation5 + $0x1ea0] sm:$0xff]
    %v1395 = vld [vmem:[#allocation5 + $0x1ea8] sm:$0xff]
    %v1396 = vld [vmem:[#allocation5 + $0x1eb0] sm:$0xff]
    %v1397 = vld [vmem:[#allocation5 + $0x1eb8] sm:$0xff]
    %v1398 = vld [vmem:[#allocation5 + $0x1ec0] sm:$0xff]
    %v1399 = vld [vmem:[#allocation5 + $0x1ec8] sm:$0xff]
    %v1400 = vld [vmem:[#allocation5 + $0x1ed0] sm:$0xff]
    %v1401 = vld [vmem:[#allocation5 + $0x1ed8] sm:$0xff]
    %v1402 = vld [vmem:[#allocation5 + $0x1ee0] sm:$0xff]
    %v1403 = vld [vmem:[#allocation5 + $0x1ee8] sm:$0xff]
    %v1404 = vld [vmem:[#allocation5 + $0x1ef0] sm:$0xff]
    %v1405 = vld [vmem:[#allocation5 + $0x1ef8] sm:$0xff]
    %v1406 = vld [vmem:[#allocation5 + $0x1f00] sm:$0xff]
    %v1407 = vld [vmem:[#allocation5 + $0x1f08] sm:$0xff]
    %v1408 = vld [vmem:[#allocation5 + $0x1f10] sm:$0xff]
    %v1409 = vld [vmem:[#allocation5 + $0x1f18] sm:$0xff]
    %v1410 = vld [vmem:[#allocation5 + $0x1f20] sm:$0xff]
    %v1411 = vld [vmem:[#allocation5 + $0x1f28] sm:$0xff]
    %v1412 = vld [vmem:[#allocation5 + $0x1f30] sm:$0xff]
    %v1413 = vld [vmem:[#allocation5 + $0x1f38] sm:$0xff]
    %v1414 = vld [vmem:[#allocation5 + $0x1f40] sm:$0xff]
    %v1415 = vld [vmem:[#allocation5 + $0x1f48] sm:$0xff]
    %v1416 = vld [vmem:[#allocation5 + $0x1f50] sm:$0xff]
    %v1417 = vld [vmem:[#allocation5 + $0x1f58] sm:$0xff]
    %v1418 = vld [vmem:[#allocation5 + $0x1f60] sm:$0xff]
    %v1419 = vld [vmem:[#allocation5 + $0x1f68] sm:$0xff]
    %v1420 = vld [vmem:[#allocation5 + $0x1f70] sm:$0xff]
    %v1421 = vld [vmem:[#allocation5 + $0x1f78] sm:$0xff]
    %v1422 = vld [vmem:[#allocation5 + $0x1f80] sm:$0xff]
    %v1423 = vld [vmem:[#allocation5 + $0x1f88] sm:$0xff]
    %v1424 = vld [vmem:[#allocation5 + $0x1f90] sm:$0xff]
    %v1425 = vld [vmem:[#allocation5 + $0x1f98] sm:$0xff]
    %v1426 = vld [vmem:[#allocation5 + $0x1fa0] sm:$0xff]
    %v1427 = vld [vmem:[#allocation5 + $0x1fa8] sm:$0xff]
    %v1428 = vld [vmem:[#allocation5 + $0x1fb0] sm:$0xff]
    %v1429 = vld [vmem:[#allocation5 + $0x1fb8] sm:$0xff]
    %v1430 = vld [vmem:[#allocation5 + $0x1fc0] sm:$0xff]
    %v1431 = vld [vmem:[#allocation5 + $0x1fc8] sm:$0xff]
    %v1432 = vld [vmem:[#allocation5 + $0x1fd0] sm:$0xff]
    %v1433 = vld [vmem:[#allocation5 + $0x1fd8] sm:$0xff]
    %v1434 = vld [vmem:[#allocation5 + $0x1fe0] sm:$0xff]
    %v1435 = vld [vmem:[#allocation5 + $0x1fe8] sm:$0xff]
    %v1436 = vld [vmem:[#allocation5 + $0x1ff0] sm:$0xff]
    %v1437 = vld [vmem:[#allocation5 + $0x1ff8] sm:$0xff]
    %v1438 = vld [vmem:[#allocation10 + $0x8] sm:$0xff]
    %v1439 = vld [vmem:[#allocation10 + $0x10] sm:$0xff]
    %v1442 = vlaneseq
    %v1443 = vshrl.u32 %v1442, 7
    %v1444 = vsub.s32 0, %v1443
    %v1445 = vrot.slane %v1438, %v1444
    %v1446 = vlaneseq
    %v1447 = vshrl.u32 %v1446, 7
    %v1448 = vsub.s32 1, %v1447
    %v1449 = vrot.slane %v1438, %v1448
    %v1450 = vlaneseq
    %v1451 = vshrl.u32 %v1450, 7
    %v1452 = vsub.s32 2, %v1451
    %v1453 = vrot.slane %v1438, %v1452
    %v1454 = vlaneseq
    %v1455 = vshrl.u32 %v1454, 7
    %v1456 = vsub.s32 3, %v1455
    %v1457 = vrot.slane %v1438, %v1456
    %v1458 = vlaneseq
    %v1459 = vshrl.u32 %v1458, 7
    %v1460 = vsub.s32 4, %v1459
    %v1461 = vrot.slane %v1438, %v1460
    %v1462 = vlaneseq
    %v1463 = vshrl.u32 %v1462, 7
    %v1464 = vsub.s32 5, %v1463
    %v1465 = vrot.slane %v1438, %v1464
    %v1466 = vlaneseq
    %v1467 = vshrl.u32 %v1466, 7
    %v1468 = vsub.s32 6, %v1467
    %v1469 = vrot.slane %v1438, %v1468
    %v1470 = vlaneseq
    %v1471 = vshrl.u32 %v1470, 7
    %v1472 = vsub.s32 7, %v1471
    %v1473 = vrot.slane %v1438, %v1472
    %v1474 = vlaneseq
    %v1475 = vshrl.u32 %v1474, 7
    %v1476 = vsub.s32 0, %v1475
    %v1477 = vrot.slane %v1439, %v1476
    %v1478 = vlaneseq
    %v1479 = vshrl.u32 %v1478, 7
    %v1480 = vsub.s32 1, %v1479
    %v1481 = vrot.slane %v1439, %v1480
    %v1482 = vlaneseq
    %v1483 = vshrl.u32 %v1482, 7
    %v1484 = vsub.s32 2, %v1483
    %v1485 = vrot.slane %v1439, %v1484
    %v1486 = vlaneseq
    %v1487 = vshrl.u32 %v1486, 7
    %v1488 = vsub.s32 3, %v1487
    %v1489 = vrot.slane %v1439, %v1488
    %v1490 = vlaneseq
    %v1491 = vshrl.u32 %v1490, 7
    %v1492 = vsub.s32 4, %v1491
    %v1493 = vrot.slane %v1439, %v1492
    %v1494 = vlaneseq
    %v1495 = vshrl.u32 %v1494, 7
    %v1496 = vsub.s32 5, %v1495
    %v1497 = vrot.slane %v1439, %v1496
    %v1498 = vlaneseq
    %v1499 = vshrl.u32 %v1498, 7
    %v1500 = vsub.s32 6, %v1499
    %v1501 = vrot.slane %v1439, %v1500
    %v1502 = vlaneseq
    %v1503 = vshrl.u32 %v1502, 7
    %v1504 = vsub.s32 7, %v1503
    %v1505 = vrot.slane %v1439, %v1504
    %v2546 = vunpack.c.l.b16 %v414
    %v2547 = vunpack.c.h.b16 %v414
    %v2548 = vunpack.c.l.b16 %v415
    %v2549 = vunpack.c.h.b16 %v415
    %v2550 = vunpack.c.l.b16 %v416
    %v2551 = vunpack.c.h.b16 %v416
    %v2552 = vunpack.c.l.b16 %v417
    %v2553 = vunpack.c.h.b16 %v417
    %v2554 = vunpack.c.l.b16 %v418
    %v2555 = vunpack.c.h.b16 %v418
    %v2556 = vunpack.c.l.b16 %v419
    %v2557 = vunpack.c.h.b16 %v419
    %v2558 = vunpack.c.l.b16 %v420
    %v2559 = vunpack.c.h.b16 %v420
    %v2560 = vunpack.c.l.b16 %v421
    %v2561 = vunpack.c.h.b16 %v421
    %v2562 = vunpack.c.l.b16 %v422
    %v2563 = vunpack.c.h.b16 %v422
    %v2564 = vunpack.c.l.b16 %v423
    %v2565 = vunpack.c.h.b16 %v423
    %v2566 = vunpack.c.l.b16 %v424
    %v2567 = vunpack.c.h.b16 %v424
    %v2568 = vunpack.c.l.b16 %v425
    %v2569 = vunpack.c.h.b16 %v425
    %v2570 = vunpack.c.l.b16 %v426
    %v2571 = vunpack.c.h.b16 %v426
    %v2572 = vunpack.c.l.b16 %v427
    %v2573 = vunpack.c.h.b16 %v427
    %v2574 = vunpack.c.l.b16 %v428
    %v2575 = vunpack.c.h.b16 %v428
    %v2576 = vunpack.c.l.b16 %v429
    %v2577 = vunpack.c.h.b16 %v429
    %v2578 = vunpack.c.l.b16 %v430
    %v2579 = vunpack.c.h.b16 %v430
    %v2580 = vunpack.c.l.b16 %v431
    %v2581 = vunpack.c.h.b16 %v431
    %v2582 = vunpack.c.l.b16 %v432
    %v2583 = vunpack.c.h.b16 %v432
    %v2584 = vunpack.c.l.b16 %v433
    %v2585 = vunpack.c.h.b16 %v433
    %v2586 = vunpack.c.l.b16 %v434
    %v2587 = vunpack.c.h.b16 %v434
    %v2588 = vunpack.c.l.b16 %v435
    %v2589 = vunpack.c.h.b16 %v435
    %v2590 = vunpack.c.l.b16 %v436
    %v2591 = vunpack.c.h.b16 %v436
    %v2592 = vunpack.c.l.b16 %v437
    %v2593 = vunpack.c.h.b16 %v437
    %v2594 = vunpack.c.l.b16 %v438
    %v2595 = vunpack.c.h.b16 %v438
    %v2596 = vunpack.c.l.b16 %v439
    %v2597 = vunpack.c.h.b16 %v439
    %v2598 = vunpack.c.l.b16 %v440
    %v2599 = vunpack.c.h.b16 %v440
    %v2600 = vunpack.c.l.b16 %v441
    %v2601 = vunpack.c.h.b16 %v441
    %v2602 = vunpack.c.l.b16 %v442
    %v2603 = vunpack.c.h.b16 %v442
    %v2604 = vunpack.c.l.b16 %v443
    %v2605 = vunpack.c.h.b16 %v443
    %v2606 = vunpack.c.l.b16 %v444
    %v2607 = vunpack.c.h.b16 %v444
    %v2608 = vunpack.c.l.b16 %v445
    %v2609 = vunpack.c.h.b16 %v445
    %v2610 = vunpack.c.l.b16 %v446
    %v2611 = vunpack.c.h.b16 %v446
    %v2612 = vunpack.c.l.b16 %v447
    %v2613 = vunpack.c.h.b16 %v447
    %v2614 = vunpack.c.l.b16 %v448
    %v2615 = vunpack.c.h.b16 %v448
    %v2616 = vunpack.c.l.b16 %v449
    %v2617 = vunpack.c.h.b16 %v449
    %v2618 = vunpack.c.l.b16 %v450
    %v2619 = vunpack.c.h.b16 %v450
    %v2620 = vunpack.c.l.b16 %v451
    %v2621 = vunpack.c.h.b16 %v451
    %v2622 = vunpack.c.l.b16 %v452
    %v2623 = vunpack.c.h.b16 %v452
    %v2624 = vunpack.c.l.b16 %v453
    %v2625 = vunpack.c.h.b16 %v453
    %v2626 = vunpack.c.l.b16 %v454
    %v2627 = vunpack.c.h.b16 %v454
    %v2628 = vunpack.c.l.b16 %v455
    %v2629 = vunpack.c.h.b16 %v455
    %v2630 = vunpack.c.l.b16 %v456
    %v2631 = vunpack.c.h.b16 %v456
    %v2632 = vunpack.c.l.b16 %v457
    %v2633 = vunpack.c.h.b16 %v457
    %v2634 = vunpack.c.l.b16 %v458
    %v2635 = vunpack.c.h.b16 %v458
    %v2636 = vunpack.c.l.b16 %v459
    %v2637 = vunpack.c.h.b16 %v459
    %v2638 = vunpack.c.l.b16 %v460
    %v2639 = vunpack.c.h.b16 %v460
    %v2640 = vunpack.c.l.b16 %v461
    %v2641 = vunpack.c.h.b16 %v461
    %v2642 = vunpack.c.l.b16 %v462
    %v2643 = vunpack.c.h.b16 %v462
    %v2644 = vunpack.c.l.b16 %v463
    %v2645 = vunpack.c.h.b16 %v463
    %v2646 = vunpack.c.l.b16 %v464
    %v2647 = vunpack.c.h.b16 %v464
    %v2648 = vunpack.c.l.b16 %v465
    %v2649 = vunpack.c.h.b16 %v465
    %v2650 = vunpack.c.l.b16 %v466
    %v2651 = vunpack.c.h.b16 %v466
    %v2652 = vunpack.c.l.b16 %v467
    %v2653 = vunpack.c.h.b16 %v467
    %v2654 = vunpack.c.l.b16 %v468
    %v2655 = vunpack.c.h.b16 %v468
    %v2656 = vunpack.c.l.b16 %v469
    %v2657 = vunpack.c.h.b16 %v469
    %v2658 = vunpack.c.l.b16 %v470
    %v2659 = vunpack.c.h.b16 %v470
    %v2660 = vunpack.c.l.b16 %v471
    %v2661 = vunpack.c.h.b16 %v471
    %v2662 = vunpack.c.l.b16 %v472
    %v2663 = vunpack.c.h.b16 %v472
    %v2664 = vunpack.c.l.b16 %v473
    %v2665 = vunpack.c.h.b16 %v473
    %v2666 = vunpack.c.l.b16 %v474
    %v2667 = vunpack.c.h.b16 %v474
    %v2668 = vunpack.c.l.b16 %v475
    %v2669 = vunpack.c.h.b16 %v475
    %v2670 = vunpack.c.l.b16 %v476
    %v2671 = vunpack.c.h.b16 %v476
    %v2672 = vunpack.c.l.b16 %v477
    %v2673 = vunpack.c.h.b16 %v477
    %v2674 = vunpack.c.l.b16 %v478
    %v2675 = vunpack.c.h.b16 %v478
    %v2676 = vunpack.c.l.b16 %v479
    %v2677 = vunpack.c.h.b16 %v479
    %v2678 = vunpack.c.l.b16 %v480
    %v2679 = vunpack.c.h.b16 %v480
    %v2680 = vunpack.c.l.b16 %v481
    %v2681 = vunpack.c.h.b16 %v481
    %v2682 = vunpack.c.l.b16 %v482
    %v2683 = vunpack.c.h.b16 %v482
    %v2684 = vunpack.c.l.b16 %v483
    %v2685 = vunpack.c.h.b16 %v483
    %v2686 = vunpack.c.l.b16 %v484
    %v2687 = vunpack.c.h.b16 %v484
    %v2688 = vunpack.c.l.b16 %v485
    %v2689 = vunpack.c.h.b16 %v485
    %v2690 = vunpack.c.l.b16 %v486
    %v2691 = vunpack.c.h.b16 %v486
    %v2692 = vunpack.c.l.b16 %v487
    %v2693 = vunpack.c.h.b16 %v487
    %v2694 = vunpack.c.l.b16 %v488
    %v2695 = vunpack.c.h.b16 %v488
    %v2696 = vunpack.c.l.b16 %v489
    %v2697 = vunpack.c.h.b16 %v489
    %v2698 = vunpack.c.l.b16 %v490
    %v2699 = vunpack.c.h.b16 %v490
    %v2700 = vunpack.c.l.b16 %v491
    %v2701 = vunpack.c.h.b16 %v491
    %v2702 = vunpack.c.l.b16 %v492
    %v2703 = vunpack.c.h.b16 %v492
    %v2704 = vunpack.c.l.b16 %v493
    %v2705 = vunpack.c.h.b16 %v493
    %v2706 = vunpack.c.l.b16 %v494
    %v2707 = vunpack.c.h.b16 %v494
    %v2708 = vunpack.c.l.b16 %v495
    %v2709 = vunpack.c.h.b16 %v495
    %v2710 = vunpack.c.l.b16 %v496
    %v2711 = vunpack.c.h.b16 %v496
    %v2712 = vunpack.c.l.b16 %v497
    %v2713 = vunpack.c.h.b16 %v497
    %v2714 = vunpack.c.l.b16 %v498
    %v2715 = vunpack.c.h.b16 %v498
    %v2716 = vunpack.c.l.b16 %v499
    %v2717 = vunpack.c.h.b16 %v499
    %v2718 = vunpack.c.l.b16 %v500
    %v2719 = vunpack.c.h.b16 %v500
    %v2720 = vunpack.c.l.b16 %v501
    %v2721 = vunpack.c.h.b16 %v501
    %v2722 = vunpack.c.l.b16 %v502
    %v2723 = vunpack.c.h.b16 %v502
    %v2724 = vunpack.c.l.b16 %v503
    %v2725 = vunpack.c.h.b16 %v503
    %v2726 = vunpack.c.l.b16 %v504
    %v2727 = vunpack.c.h.b16 %v504
    %v2728 = vunpack.c.l.b16 %v505
    %v2729 = vunpack.c.h.b16 %v505
    %v2730 = vunpack.c.l.b16 %v506
    %v2731 = vunpack.c.h.b16 %v506
    %v2732 = vunpack.c.l.b16 %v507
    %v2733 = vunpack.c.h.b16 %v507
    %v2734 = vunpack.c.l.b16 %v508
    %v2735 = vunpack.c.h.b16 %v508
    %v2736 = vunpack.c.l.b16 %v509
    %v2737 = vunpack.c.h.b16 %v509
    %v2738 = vunpack.c.l.b16 %v510
    %v2739 = vunpack.c.h.b16 %v510
    %v2740 = vunpack.c.l.b16 %v511
    %v2741 = vunpack.c.h.b16 %v511
    %v2742 = vunpack.c.l.b16 %v512
    %v2743 = vunpack.c.h.b16 %v512
    %v2744 = vunpack.c.l.b16 %v513
    %v2745 = vunpack.c.h.b16 %v513
    %v2746 = vunpack.c.l.b16 %v514
    %v2747 = vunpack.c.h.b16 %v514
    %v2748 = vunpack.c.l.b16 %v515
    %v2749 = vunpack.c.h.b16 %v515
    %v2750 = vunpack.c.l.b16 %v516
    %v2751 = vunpack.c.h.b16 %v516
    %v2752 = vunpack.c.l.b16 %v517
    %v2753 = vunpack.c.h.b16 %v517
    %v2754 = vunpack.c.l.b16 %v518
    %v2755 = vunpack.c.h.b16 %v518
    %v2756 = vunpack.c.l.b16 %v519
    %v2757 = vunpack.c.h.b16 %v519
    %v2758 = vunpack.c.l.b16 %v520
    %v2759 = vunpack.c.h.b16 %v520
    %v2760 = vunpack.c.l.b16 %v521
    %v2761 = vunpack.c.h.b16 %v521
    %v2762 = vunpack.c.l.b16 %v522
    %v2763 = vunpack.c.h.b16 %v522
    %v2764 = vunpack.c.l.b16 %v523
    %v2765 = vunpack.c.h.b16 %v523
    %v2766 = vunpack.c.l.b16 %v524
    %v2767 = vunpack.c.h.b16 %v524
    %v2768 = vunpack.c.l.b16 %v525
    %v2769 = vunpack.c.h.b16 %v525
    %v2770 = vunpack.c.l.b16 %v526
    %v2771 = vunpack.c.h.b16 %v526
    %v2772 = vunpack.c.l.b16 %v527
    %v2773 = vunpack.c.h.b16 %v527
    %v2774 = vunpack.c.l.b16 %v528
    %v2775 = vunpack.c.h.b16 %v528
    %v2776 = vunpack.c.l.b16 %v529
    %v2777 = vunpack.c.h.b16 %v529
    %v2778 = vunpack.c.l.b16 %v530
    %v2779 = vunpack.c.h.b16 %v530
    %v2780 = vunpack.c.l.b16 %v531
    %v2781 = vunpack.c.h.b16 %v531
    %v2782 = vunpack.c.l.b16 %v532
    %v2783 = vunpack.c.h.b16 %v532
    %v2784 = vunpack.c.l.b16 %v533
    %v2785 = vunpack.c.h.b16 %v533
    %v2786 = vunpack.c.l.b16 %v534
    %v2787 = vunpack.c.h.b16 %v534
    %v2788 = vunpack.c.l.b16 %v535
    %v2789 = vunpack.c.h.b16 %v535
    %v2790 = vunpack.c.l.b16 %v536
    %v2791 = vunpack.c.h.b16 %v536
    %v2792 = vunpack.c.l.b16 %v537
    %v2793 = vunpack.c.h.b16 %v537
    %v2794 = vunpack.c.l.b16 %v538
    %v2795 = vunpack.c.h.b16 %v538
    %v2796 = vunpack.c.l.b16 %v539
    %v2797 = vunpack.c.h.b16 %v539
    %v2798 = vunpack.c.l.b16 %v540
    %v2799 = vunpack.c.h.b16 %v540
    %v2800 = vunpack.c.l.b16 %v541
    %v2801 = vunpack.c.h.b16 %v541
    %v2802 = vunpack.c.l.b16 %v542
    %v2803 = vunpack.c.h.b16 %v542
    %v2804 = vunpack.c.l.b16 %v543
    %v2805 = vunpack.c.h.b16 %v543
    %v2806 = vunpack.c.l.b16 %v544
    %v2807 = vunpack.c.h.b16 %v544
    %v2808 = vunpack.c.l.b16 %v545
    %v2809 = vunpack.c.h.b16 %v545
    %v2810 = vunpack.c.l.b16 %v546
    %v2811 = vunpack.c.h.b16 %v546
    %v2812 = vunpack.c.l.b16 %v547
    %v2813 = vunpack.c.h.b16 %v547
    %v2814 = vunpack.c.l.b16 %v548
    %v2815 = vunpack.c.h.b16 %v548
    %v2816 = vunpack.c.l.b16 %v549
    %v2817 = vunpack.c.h.b16 %v549
    %v2818 = vunpack.c.l.b16 %v550
    %v2819 = vunpack.c.h.b16 %v550
    %v2820 = vunpack.c.l.b16 %v551
    %v2821 = vunpack.c.h.b16 %v551
    %v2822 = vunpack.c.l.b16 %v552
    %v2823 = vunpack.c.h.b16 %v552
    %v2824 = vunpack.c.l.b16 %v553
    %v2825 = vunpack.c.h.b16 %v553
    %v2826 = vunpack.c.l.b16 %v554
    %v2827 = vunpack.c.h.b16 %v554
    %v2828 = vunpack.c.l.b16 %v555
    %v2829 = vunpack.c.h.b16 %v555
    %v2830 = vunpack.c.l.b16 %v556
    %v2831 = vunpack.c.h.b16 %v556
    %v2832 = vunpack.c.l.b16 %v557
    %v2833 = vunpack.c.h.b16 %v557
    %v2834 = vunpack.c.l.b16 %v558
    %v2835 = vunpack.c.h.b16 %v558
    %v2836 = vunpack.c.l.b16 %v559
    %v2837 = vunpack.c.h.b16 %v559
    %v2838 = vunpack.c.l.b16 %v560
    %v2839 = vunpack.c.h.b16 %v560
    %v2840 = vunpack.c.l.b16 %v561
    %v2841 = vunpack.c.h.b16 %v561
    %v2842 = vunpack.c.l.b16 %v562
    %v2843 = vunpack.c.h.b16 %v562
    %v2844 = vunpack.c.l.b16 %v563
    %v2845 = vunpack.c.h.b16 %v563
    %v2846 = vunpack.c.l.b16 %v564
    %v2847 = vunpack.c.h.b16 %v564
    %v2848 = vunpack.c.l.b16 %v565
    %v2849 = vunpack.c.h.b16 %v565
    %v2850 = vunpack.c.l.b16 %v566
    %v2851 = vunpack.c.h.b16 %v566
    %v2852 = vunpack.c.l.b16 %v567
    %v2853 = vunpack.c.h.b16 %v567
    %v2854 = vunpack.c.l.b16 %v568
    %v2855 = vunpack.c.h.b16 %v568
    %v2856 = vunpack.c.l.b16 %v569
    %v2857 = vunpack.c.h.b16 %v569
    %v2858 = vunpack.c.l.b16 %v570
    %v2859 = vunpack.c.h.b16 %v570
    %v2860 = vunpack.c.l.b16 %v571
    %v2861 = vunpack.c.h.b16 %v571
    %v2862 = vunpack.c.l.b16 %v572
    %v2863 = vunpack.c.h.b16 %v572
    %v2864 = vunpack.c.l.b16 %v573
    %v2865 = vunpack.c.h.b16 %v573
    %v2866 = vunpack.c.l.b16 %v574
    %v2867 = vunpack.c.h.b16 %v574
    %v2868 = vunpack.c.l.b16 %v575
    %v2869 = vunpack.c.h.b16 %v575
    %v2870 = vunpack.c.l.b16 %v576
    %v2871 = vunpack.c.h.b16 %v576
    %v2872 = vunpack.c.l.b16 %v577
    %v2873 = vunpack.c.h.b16 %v577
    %v2874 = vunpack.c.l.b16 %v578
    %v2875 = vunpack.c.h.b16 %v578
    %v2876 = vunpack.c.l.b16 %v579
    %v2877 = vunpack.c.h.b16 %v579
    %v2878 = vunpack.c.l.b16 %v580
    %v2879 = vunpack.c.h.b16 %v580
    %v2880 = vunpack.c.l.b16 %v581
    %v2881 = vunpack.c.h.b16 %v581
    %v2882 = vunpack.c.l.b16 %v582
    %v2883 = vunpack.c.h.b16 %v582
    %v2884 = vunpack.c.l.b16 %v583
    %v2885 = vunpack.c.h.b16 %v583
    %v2886 = vunpack.c.l.b16 %v584
    %v2887 = vunpack.c.h.b16 %v584
    %v2888 = vunpack.c.l.b16 %v585
    %v2889 = vunpack.c.h.b16 %v585
    %v2890 = vunpack.c.l.b16 %v586
    %v2891 = vunpack.c.h.b16 %v586
    %v2892 = vunpack.c.l.b16 %v587
    %v2893 = vunpack.c.h.b16 %v587
    %v2894 = vunpack.c.l.b16 %v588
    %v2895 = vunpack.c.h.b16 %v588
    %v2896 = vunpack.c.l.b16 %v589
    %v2897 = vunpack.c.h.b16 %v589
    %v2898 = vunpack.c.l.b16 %v590
    %v2899 = vunpack.c.h.b16 %v590
    %v2900 = vunpack.c.l.b16 %v591
    %v2901 = vunpack.c.h.b16 %v591
    %v2902 = vunpack.c.l.b16 %v592
    %v2903 = vunpack.c.h.b16 %v592
    %v2904 = vunpack.c.l.b16 %v593
    %v2905 = vunpack.c.h.b16 %v593
    %v2906 = vunpack.c.l.b16 %v594
    %v2907 = vunpack.c.h.b16 %v594
    %v2908 = vunpack.c.l.b16 %v595
    %v2909 = vunpack.c.h.b16 %v595
    %v2910 = vunpack.c.l.b16 %v596
    %v2911 = vunpack.c.h.b16 %v596
    %v2912 = vunpack.c.l.b16 %v597
    %v2913 = vunpack.c.h.b16 %v597
    %v2914 = vunpack.c.l.b16 %v598
    %v2915 = vunpack.c.h.b16 %v598
    %v2916 = vunpack.c.l.b16 %v599
    %v2917 = vunpack.c.h.b16 %v599
    %v2918 = vunpack.c.l.b16 %v600
    %v2919 = vunpack.c.h.b16 %v600
    %v2920 = vunpack.c.l.b16 %v601
    %v2921 = vunpack.c.h.b16 %v601
    %v2922 = vunpack.c.l.b16 %v602
    %v2923 = vunpack.c.h.b16 %v602
    %v2924 = vunpack.c.l.b16 %v603
    %v2925 = vunpack.c.h.b16 %v603
    %v2926 = vunpack.c.l.b16 %v604
    %v2927 = vunpack.c.h.b16 %v604
    %v2928 = vunpack.c.l.b16 %v605
    %v2929 = vunpack.c.h.b16 %v605
    %v2930 = vunpack.c.l.b16 %v606
    %v2931 = vunpack.c.h.b16 %v606
    %v2932 = vunpack.c.l.b16 %v607
    %v2933 = vunpack.c.h.b16 %v607
    %v2934 = vunpack.c.l.b16 %v608
    %v2935 = vunpack.c.h.b16 %v608
    %v2936 = vunpack.c.l.b16 %v609
    %v2937 = vunpack.c.h.b16 %v609
    %v2938 = vunpack.c.l.b16 %v610
    %v2939 = vunpack.c.h.b16 %v610
    %v2940 = vunpack.c.l.b16 %v611
    %v2941 = vunpack.c.h.b16 %v611
    %v2942 = vunpack.c.l.b16 %v612
    %v2943 = vunpack.c.h.b16 %v612
    %v2944 = vunpack.c.l.b16 %v613
    %v2945 = vunpack.c.h.b16 %v613
    %v2946 = vunpack.c.l.b16 %v614
    %v2947 = vunpack.c.h.b16 %v614
    %v2948 = vunpack.c.l.b16 %v615
    %v2949 = vunpack.c.h.b16 %v615
    %v2950 = vunpack.c.l.b16 %v616
    %v2951 = vunpack.c.h.b16 %v616
    %v2952 = vunpack.c.l.b16 %v617
    %v2953 = vunpack.c.h.b16 %v617
    %v2954 = vunpack.c.l.b16 %v618
    %v2955 = vunpack.c.h.b16 %v618
    %v2956 = vunpack.c.l.b16 %v619
    %v2957 = vunpack.c.h.b16 %v619
    %v2958 = vunpack.c.l.b16 %v620
    %v2959 = vunpack.c.h.b16 %v620
    %v2960 = vunpack.c.l.b16 %v621
    %v2961 = vunpack.c.h.b16 %v621
    %v2962 = vunpack.c.l.b16 %v622
    %v2963 = vunpack.c.h.b16 %v622
    %v2964 = vunpack.c.l.b16 %v623
    %v2965 = vunpack.c.h.b16 %v623
    %v2966 = vunpack.c.l.b16 %v624
    %v2967 = vunpack.c.h.b16 %v624
    %v2968 = vunpack.c.l.b16 %v625
    %v2969 = vunpack.c.h.b16 %v625
    %v2970 = vunpack.c.l.b16 %v626
    %v2971 = vunpack.c.h.b16 %v626
    %v2972 = vunpack.c.l.b16 %v627
    %v2973 = vunpack.c.h.b16 %v627
    %v2974 = vunpack.c.l.b16 %v628
    %v2975 = vunpack.c.h.b16 %v628
    %v2976 = vunpack.c.l.b16 %v629
    %v2977 = vunpack.c.h.b16 %v629
    %v2978 = vunpack.c.l.b16 %v630
    %v2979 = vunpack.c.h.b16 %v630
    %v2980 = vunpack.c.l.b16 %v631
    %v2981 = vunpack.c.h.b16 %v631
    %v2982 = vunpack.c.l.b16 %v632
    %v2983 = vunpack.c.h.b16 %v632
    %v2984 = vunpack.c.l.b16 %v633
    %v2985 = vunpack.c.h.b16 %v633
    %v2986 = vunpack.c.l.b16 %v634
    %v2987 = vunpack.c.h.b16 %v634
    %v2988 = vunpack.c.l.b16 %v635
    %v2989 = vunpack.c.h.b16 %v635
    %v2990 = vunpack.c.l.b16 %v636
    %v2991 = vunpack.c.h.b16 %v636
    %v2992 = vunpack.c.l.b16 %v637
    %v2993 = vunpack.c.h.b16 %v637
    %v2994 = vunpack.c.l.b16 %v638
    %v2995 = vunpack.c.h.b16 %v638
    %v2996 = vunpack.c.l.b16 %v639
    %v2997 = vunpack.c.h.b16 %v639
    %v2998 = vunpack.c.l.b16 %v640
    %v2999 = vunpack.c.h.b16 %v640
    %v3000 = vunpack.c.l.b16 %v641
    %v3001 = vunpack.c.h.b16 %v641
    %v3002 = vunpack.c.l.b16 %v642
    %v3003 = vunpack.c.h.b16 %v642
    %v3004 = vunpack.c.l.b16 %v643
    %v3005 = vunpack.c.h.b16 %v643
    %v3006 = vunpack.c.l.b16 %v644
    %v3007 = vunpack.c.h.b16 %v644
    %v3008 = vunpack.c.l.b16 %v645
    %v3009 = vunpack.c.h.b16 %v645
    %v3010 = vunpack.c.l.b16 %v646
    %v3011 = vunpack.c.h.b16 %v646
    %v3012 = vunpack.c.l.b16 %v647
    %v3013 = vunpack.c.h.b16 %v647
    %v3014 = vunpack.c.l.b16 %v648
    %v3015 = vunpack.c.h.b16 %v648
    %v3016 = vunpack.c.l.b16 %v649
    %v3017 = vunpack.c.h.b16 %v649
    %v3018 = vunpack.c.l.b16 %v650
    %v3019 = vunpack.c.h.b16 %v650
    %v3020 = vunpack.c.l.b16 %v651
    %v3021 = vunpack.c.h.b16 %v651
    %v3022 = vunpack.c.l.b16 %v652
    %v3023 = vunpack.c.h.b16 %v652
    %v3024 = vunpack.c.l.b16 %v653
    %v3025 = vunpack.c.h.b16 %v653
    %v3026 = vunpack.c.l.b16 %v654
    %v3027 = vunpack.c.h.b16 %v654
    %v3028 = vunpack.c.l.b16 %v655
    %v3029 = vunpack.c.h.b16 %v655
    %v3030 = vunpack.c.l.b16 %v656
    %v3031 = vunpack.c.h.b16 %v656
    %v3032 = vunpack.c.l.b16 %v657
    %v3033 = vunpack.c.h.b16 %v657
    %v3034 = vunpack.c.l.b16 %v658
    %v3035 = vunpack.c.h.b16 %v658
    %v3036 = vunpack.c.l.b16 %v659
    %v3037 = vunpack.c.h.b16 %v659
    %v3038 = vunpack.c.l.b16 %v660
    %v3039 = vunpack.c.h.b16 %v660
    %v3040 = vunpack.c.l.b16 %v661
    %v3041 = vunpack.c.h.b16 %v661
    %v3042 = vunpack.c.l.b16 %v662
    %v3043 = vunpack.c.h.b16 %v662
    %v3044 = vunpack.c.l.b16 %v663
    %v3045 = vunpack.c.h.b16 %v663
    %v3046 = vunpack.c.l.b16 %v664
    %v3047 = vunpack.c.h.b16 %v664
    %v3048 = vunpack.c.l.b16 %v665
    %v3049 = vunpack.c.h.b16 %v665
    %v3050 = vunpack.c.l.b16 %v666
    %v3051 = vunpack.c.h.b16 %v666
    %v3052 = vunpack.c.l.b16 %v667
    %v3053 = vunpack.c.h.b16 %v667
    %v3054 = vunpack.c.l.b16 %v668
    %v3055 = vunpack.c.h.b16 %v668
    %v3056 = vunpack.c.l.b16 %v669
    %v3057 = vunpack.c.h.b16 %v669
    %v3058 = vunpack.c.l.b16 %v670
    %v3059 = vunpack.c.h.b16 %v670
    %v3060 = vunpack.c.l.b16 %v671
    %v3061 = vunpack.c.h.b16 %v671
    %v3062 = vunpack.c.l.b16 %v672
    %v3063 = vunpack.c.h.b16 %v672
    %v3064 = vunpack.c.l.b16 %v673
    %v3065 = vunpack.c.h.b16 %v673
    %v3066 = vunpack.c.l.b16 %v674
    %v3067 = vunpack.c.h.b16 %v674
    %v3068 = vunpack.c.l.b16 %v675
    %v3069 = vunpack.c.h.b16 %v675
    %v3070 = vunpack.c.l.b16 %v676
    %v3071 = vunpack.c.h.b16 %v676
    %v3072 = vunpack.c.l.b16 %v677
    %v3073 = vunpack.c.h.b16 %v677
    %v3074 = vunpack.c.l.b16 %v678
    %v3075 = vunpack.c.h.b16 %v678
    %v3076 = vunpack.c.l.b16 %v679
    %v3077 = vunpack.c.h.b16 %v679
    %v3078 = vunpack.c.l.b16 %v680
    %v3079 = vunpack.c.h.b16 %v680
    %v3080 = vunpack.c.l.b16 %v681
    %v3081 = vunpack.c.h.b16 %v681
    %v3082 = vunpack.c.l.b16 %v682
    %v3083 = vunpack.c.h.b16 %v682
    %v3084 = vunpack.c.l.b16 %v683
    %v3085 = vunpack.c.h.b16 %v683
    %v3086 = vunpack.c.l.b16 %v684
    %v3087 = vunpack.c.h.b16 %v684
    %v3088 = vunpack.c.l.b16 %v685
    %v3089 = vunpack.c.h.b16 %v685
    %v3090 = vunpack.c.l.b16 %v686
    %v3091 = vunpack.c.h.b16 %v686
    %v3092 = vunpack.c.l.b16 %v687
    %v3093 = vunpack.c.h.b16 %v687
    %v3094 = vunpack.c.l.b16 %v688
    %v3095 = vunpack.c.h.b16 %v688
    %v3096 = vunpack.c.l.b16 %v689
    %v3097 = vunpack.c.h.b16 %v689
    %v3098 = vunpack.c.l.b16 %v690
    %v3099 = vunpack.c.h.b16 %v690
    %v3100 = vunpack.c.l.b16 %v691
    %v3101 = vunpack.c.h.b16 %v691
    %v3102 = vunpack.c.l.b16 %v692
    %v3103 = vunpack.c.h.b16 %v692
    %v3104 = vunpack.c.l.b16 %v693
    %v3105 = vunpack.c.h.b16 %v693
    %v3106 = vunpack.c.l.b16 %v694
    %v3107 = vunpack.c.h.b16 %v694
    %v3108 = vunpack.c.l.b16 %v695
    %v3109 = vunpack.c.h.b16 %v695
    %v3110 = vunpack.c.l.b16 %v696
    %v3111 = vunpack.c.h.b16 %v696
    %v3112 = vunpack.c.l.b16 %v697
    %v3113 = vunpack.c.h.b16 %v697
    %v3114 = vunpack.c.l.b16 %v698
    %v3115 = vunpack.c.h.b16 %v698
    %v3116 = vunpack.c.l.b16 %v699
    %v3117 = vunpack.c.h.b16 %v699
    %v3118 = vunpack.c.l.b16 %v700
    %v3119 = vunpack.c.h.b16 %v700
    %v3120 = vunpack.c.l.b16 %v701
    %v3121 = vunpack.c.h.b16 %v701
    %v3122 = vunpack.c.l.b16 %v702
    %v3123 = vunpack.c.h.b16 %v702
    %v3124 = vunpack.c.l.b16 %v703
    %v3125 = vunpack.c.h.b16 %v703
    %v3126 = vunpack.c.l.b16 %v704
    %v3127 = vunpack.c.h.b16 %v704
    %v3128 = vunpack.c.l.b16 %v705
    %v3129 = vunpack.c.h.b16 %v705
    %v3130 = vunpack.c.l.b16 %v706
    %v3131 = vunpack.c.h.b16 %v706
    %v3132 = vunpack.c.l.b16 %v707
    %v3133 = vunpack.c.h.b16 %v707
    %v3134 = vunpack.c.l.b16 %v708
    %v3135 = vunpack.c.h.b16 %v708
    %v3136 = vunpack.c.l.b16 %v709
    %v3137 = vunpack.c.h.b16 %v709
    %v3138 = vunpack.c.l.b16 %v710
    %v3139 = vunpack.c.h.b16 %v710
    %v3140 = vunpack.c.l.b16 %v711
    %v3141 = vunpack.c.h.b16 %v711
    %v3142 = vunpack.c.l.b16 %v712
    %v3143 = vunpack.c.h.b16 %v712
    %v3144 = vunpack.c.l.b16 %v713
    %v3145 = vunpack.c.h.b16 %v713
    %v3146 = vunpack.c.l.b16 %v714
    %v3147 = vunpack.c.h.b16 %v714
    %v3148 = vunpack.c.l.b16 %v715
    %v3149 = vunpack.c.h.b16 %v715
    %v3150 = vunpack.c.l.b16 %v716
    %v3151 = vunpack.c.h.b16 %v716
    %v3152 = vunpack.c.l.b16 %v717
    %v3153 = vunpack.c.h.b16 %v717
    %v3154 = vunpack.c.l.b16 %v718
    %v3155 = vunpack.c.h.b16 %v718
    %v3156 = vunpack.c.l.b16 %v719
    %v3157 = vunpack.c.h.b16 %v719
    %v3158 = vunpack.c.l.b16 %v720
    %v3159 = vunpack.c.h.b16 %v720
    %v3160 = vunpack.c.l.b16 %v721
    %v3161 = vunpack.c.h.b16 %v721
    %v3162 = vunpack.c.l.b16 %v722
    %v3163 = vunpack.c.h.b16 %v722
    %v3164 = vunpack.c.l.b16 %v723
    %v3165 = vunpack.c.h.b16 %v723
    %v3166 = vunpack.c.l.b16 %v724
    %v3167 = vunpack.c.h.b16 %v724
    %v3168 = vunpack.c.l.b16 %v725
    %v3169 = vunpack.c.h.b16 %v725
    %v3170 = vunpack.c.l.b16 %v726
    %v3171 = vunpack.c.h.b16 %v726
    %v3172 = vunpack.c.l.b16 %v727
    %v3173 = vunpack.c.h.b16 %v727
    %v3174 = vunpack.c.l.b16 %v728
    %v3175 = vunpack.c.h.b16 %v728
    %v3176 = vunpack.c.l.b16 %v729
    %v3177 = vunpack.c.h.b16 %v729
    %v3178 = vunpack.c.l.b16 %v730
    %v3179 = vunpack.c.h.b16 %v730
    %v3180 = vunpack.c.l.b16 %v731
    %v3181 = vunpack.c.h.b16 %v731
    %v3182 = vunpack.c.l.b16 %v732
    %v3183 = vunpack.c.h.b16 %v732
    %v3184 = vunpack.c.l.b16 %v733
    %v3185 = vunpack.c.h.b16 %v733
    %v3186 = vunpack.c.l.b16 %v734
    %v3187 = vunpack.c.h.b16 %v734
    %v3188 = vunpack.c.l.b16 %v735
    %v3189 = vunpack.c.h.b16 %v735
    %v3190 = vunpack.c.l.b16 %v736
    %v3191 = vunpack.c.h.b16 %v736
    %v3192 = vunpack.c.l.b16 %v737
    %v3193 = vunpack.c.h.b16 %v737
    %v3194 = vunpack.c.l.b16 %v738
    %v3195 = vunpack.c.h.b16 %v738
    %v3196 = vunpack.c.l.b16 %v739
    %v3197 = vunpack.c.h.b16 %v739
    %v3198 = vunpack.c.l.b16 %v740
    %v3199 = vunpack.c.h.b16 %v740
    %v3200 = vunpack.c.l.b16 %v741
    %v3201 = vunpack.c.h.b16 %v741
    %v3202 = vunpack.c.l.b16 %v742
    %v3203 = vunpack.c.h.b16 %v742
    %v3204 = vunpack.c.l.b16 %v743
    %v3205 = vunpack.c.h.b16 %v743
    %v3206 = vunpack.c.l.b16 %v744
    %v3207 = vunpack.c.h.b16 %v744
    %v3208 = vunpack.c.l.b16 %v745
    %v3209 = vunpack.c.h.b16 %v745
    %v3210 = vunpack.c.l.b16 %v746
    %v3211 = vunpack.c.h.b16 %v746
    %v3212 = vunpack.c.l.b16 %v747
    %v3213 = vunpack.c.h.b16 %v747
    %v3214 = vunpack.c.l.b16 %v748
    %v3215 = vunpack.c.h.b16 %v748
    %v3216 = vunpack.c.l.b16 %v749
    %v3217 = vunpack.c.h.b16 %v749
    %v3218 = vunpack.c.l.b16 %v750
    %v3219 = vunpack.c.h.b16 %v750
    %v3220 = vunpack.c.l.b16 %v751
    %v3221 = vunpack.c.h.b16 %v751
    %v3222 = vunpack.c.l.b16 %v752
    %v3223 = vunpack.c.h.b16 %v752
    %v3224 = vunpack.c.l.b16 %v753
    %v3225 = vunpack.c.h.b16 %v753
    %v3226 = vunpack.c.l.b16 %v754
    %v3227 = vunpack.c.h.b16 %v754
    %v3228 = vunpack.c.l.b16 %v755
    %v3229 = vunpack.c.h.b16 %v755
    %v3230 = vunpack.c.l.b16 %v756
    %v3231 = vunpack.c.h.b16 %v756
    %v3232 = vunpack.c.l.b16 %v757
    %v3233 = vunpack.c.h.b16 %v757
    %v3234 = vunpack.c.l.b16 %v758
    %v3235 = vunpack.c.h.b16 %v758
    %v3236 = vunpack.c.l.b16 %v759
    %v3237 = vunpack.c.h.b16 %v759
    %v3238 = vunpack.c.l.b16 %v760
    %v3239 = vunpack.c.h.b16 %v760
    %v3240 = vunpack.c.l.b16 %v761
    %v3241 = vunpack.c.h.b16 %v761
    %v3242 = vunpack.c.l.b16 %v762
    %v3243 = vunpack.c.h.b16 %v762
    %v3244 = vunpack.c.l.b16 %v763
    %v3245 = vunpack.c.h.b16 %v763
    %v3246 = vunpack.c.l.b16 %v764
    %v3247 = vunpack.c.h.b16 %v764
    %v3248 = vunpack.c.l.b16 %v765
    %v3249 = vunpack.c.h.b16 %v765
    %v3250 = vunpack.c.l.b16 %v766
    %v3251 = vunpack.c.h.b16 %v766
    %v3252 = vunpack.c.l.b16 %v767
    %v3253 = vunpack.c.h.b16 %v767
    %v3254 = vunpack.c.l.b16 %v768
    %v3255 = vunpack.c.h.b16 %v768
    %v3256 = vunpack.c.l.b16 %v769
    %v3257 = vunpack.c.h.b16 %v769
    %v3258 = vunpack.c.l.b16 %v770
    %v3259 = vunpack.c.h.b16 %v770
    %v3260 = vunpack.c.l.b16 %v771
    %v3261 = vunpack.c.h.b16 %v771
    %v3262 = vunpack.c.l.b16 %v772
    %v3263 = vunpack.c.h.b16 %v772
    %v3264 = vunpack.c.l.b16 %v773
    %v3265 = vunpack.c.h.b16 %v773
    %v3266 = vunpack.c.l.b16 %v774
    %v3267 = vunpack.c.h.b16 %v774
    %v3268 = vunpack.c.l.b16 %v775
    %v3269 = vunpack.c.h.b16 %v775
    %v3270 = vunpack.c.l.b16 %v776
    %v3271 = vunpack.c.h.b16 %v776
    %v3272 = vunpack.c.l.b16 %v777
    %v3273 = vunpack.c.h.b16 %v777
    %v3274 = vunpack.c.l.b16 %v778
    %v3275 = vunpack.c.h.b16 %v778
    %v3276 = vunpack.c.l.b16 %v779
    %v3277 = vunpack.c.h.b16 %v779
    %v3278 = vunpack.c.l.b16 %v780
    %v3279 = vunpack.c.h.b16 %v780
    %v3280 = vunpack.c.l.b16 %v781
    %v3281 = vunpack.c.h.b16 %v781
    %v3282 = vunpack.c.l.b16 %v782
    %v3283 = vunpack.c.h.b16 %v782
    %v3284 = vunpack.c.l.b16 %v783
    %v3285 = vunpack.c.h.b16 %v783
    %v3286 = vunpack.c.l.b16 %v784
    %v3287 = vunpack.c.h.b16 %v784
    %v3288 = vunpack.c.l.b16 %v785
    %v3289 = vunpack.c.h.b16 %v785
    %v3290 = vunpack.c.l.b16 %v786
    %v3291 = vunpack.c.h.b16 %v786
    %v3292 = vunpack.c.l.b16 %v787
    %v3293 = vunpack.c.h.b16 %v787
    %v3294 = vunpack.c.l.b16 %v788
    %v3295 = vunpack.c.h.b16 %v788
    %v3296 = vunpack.c.l.b16 %v789
    %v3297 = vunpack.c.h.b16 %v789
    %v3298 = vunpack.c.l.b16 %v790
    %v3299 = vunpack.c.h.b16 %v790
    %v3300 = vunpack.c.l.b16 %v791
    %v3301 = vunpack.c.h.b16 %v791
    %v3302 = vunpack.c.l.b16 %v792
    %v3303 = vunpack.c.h.b16 %v792
    %v3304 = vunpack.c.l.b16 %v793
    %v3305 = vunpack.c.h.b16 %v793
    %v3306 = vunpack.c.l.b16 %v794
    %v3307 = vunpack.c.h.b16 %v794
    %v3308 = vunpack.c.l.b16 %v795
    %v3309 = vunpack.c.h.b16 %v795
    %v3310 = vunpack.c.l.b16 %v796
    %v3311 = vunpack.c.h.b16 %v796
    %v3312 = vunpack.c.l.b16 %v797
    %v3313 = vunpack.c.h.b16 %v797
    %v3314 = vunpack.c.l.b16 %v798
    %v3315 = vunpack.c.h.b16 %v798
    %v3316 = vunpack.c.l.b16 %v799
    %v3317 = vunpack.c.h.b16 %v799
    %v3318 = vunpack.c.l.b16 %v800
    %v3319 = vunpack.c.h.b16 %v800
    %v3320 = vunpack.c.l.b16 %v801
    %v3321 = vunpack.c.h.b16 %v801
    %v3322 = vunpack.c.l.b16 %v802
    %v3323 = vunpack.c.h.b16 %v802
    %v3324 = vunpack.c.l.b16 %v803
    %v3325 = vunpack.c.h.b16 %v803
    %v3326 = vunpack.c.l.b16 %v804
    %v3327 = vunpack.c.h.b16 %v804
    %v3328 = vunpack.c.l.b16 %v805
    %v3329 = vunpack.c.h.b16 %v805
    %v3330 = vunpack.c.l.b16 %v806
    %v3331 = vunpack.c.h.b16 %v806
    %v3332 = vunpack.c.l.b16 %v807
    %v3333 = vunpack.c.h.b16 %v807
    %v3334 = vunpack.c.l.b16 %v808
    %v3335 = vunpack.c.h.b16 %v808
    %v3336 = vunpack.c.l.b16 %v809
    %v3337 = vunpack.c.h.b16 %v809
    %v3338 = vunpack.c.l.b16 %v810
    %v3339 = vunpack.c.h.b16 %v810
    %v3340 = vunpack.c.l.b16 %v811
    %v3341 = vunpack.c.h.b16 %v811
    %v3342 = vunpack.c.l.b16 %v812
    %v3343 = vunpack.c.h.b16 %v812
    %v3344 = vunpack.c.l.b16 %v813
    %v3345 = vunpack.c.h.b16 %v813
    %v3346 = vunpack.c.l.b16 %v814
    %v3347 = vunpack.c.h.b16 %v814
    %v3348 = vunpack.c.l.b16 %v815
    %v3349 = vunpack.c.h.b16 %v815
    %v3350 = vunpack.c.l.b16 %v816
    %v3351 = vunpack.c.h.b16 %v816
    %v3352 = vunpack.c.l.b16 %v817
    %v3353 = vunpack.c.h.b16 %v817
    %v3354 = vunpack.c.l.b16 %v818
    %v3355 = vunpack.c.h.b16 %v818
    %v3356 = vunpack.c.l.b16 %v819
    %v3357 = vunpack.c.h.b16 %v819
    %v3358 = vunpack.c.l.b16 %v820
    %v3359 = vunpack.c.h.b16 %v820
    %v3360 = vunpack.c.l.b16 %v821
    %v3361 = vunpack.c.h.b16 %v821
    %v3362 = vunpack.c.l.b16 %v822
    %v3363 = vunpack.c.h.b16 %v822
    %v3364 = vunpack.c.l.b16 %v823
    %v3365 = vunpack.c.h.b16 %v823
    %v3366 = vunpack.c.l.b16 %v824
    %v3367 = vunpack.c.h.b16 %v824
    %v3368 = vunpack.c.l.b16 %v825
    %v3369 = vunpack.c.h.b16 %v825
    %v3370 = vunpack.c.l.b16 %v826
    %v3371 = vunpack.c.h.b16 %v826
    %v3372 = vunpack.c.l.b16 %v827
    %v3373 = vunpack.c.h.b16 %v827
    %v3374 = vunpack.c.l.b16 %v828
    %v3375 = vunpack.c.h.b16 %v828
    %v3376 = vunpack.c.l.b16 %v829
    %v3377 = vunpack.c.h.b16 %v829
    %v3378 = vunpack.c.l.b16 %v830
    %v3379 = vunpack.c.h.b16 %v830
    %v3380 = vunpack.c.l.b16 %v831
    %v3381 = vunpack.c.h.b16 %v831
    %v3382 = vunpack.c.l.b16 %v832
    %v3383 = vunpack.c.h.b16 %v832
    %v3384 = vunpack.c.l.b16 %v833
    %v3385 = vunpack.c.h.b16 %v833
    %v3386 = vunpack.c.l.b16 %v834
    %v3387 = vunpack.c.h.b16 %v834
    %v3388 = vunpack.c.l.b16 %v835
    %v3389 = vunpack.c.h.b16 %v835
    %v3390 = vunpack.c.l.b16 %v836
    %v3391 = vunpack.c.h.b16 %v836
    %v3392 = vunpack.c.l.b16 %v837
    %v3393 = vunpack.c.h.b16 %v837
    %v3394 = vunpack.c.l.b16 %v838
    %v3395 = vunpack.c.h.b16 %v838
    %v3396 = vunpack.c.l.b16 %v839
    %v3397 = vunpack.c.h.b16 %v839
    %v3398 = vunpack.c.l.b16 %v840
    %v3399 = vunpack.c.h.b16 %v840
    %v3400 = vunpack.c.l.b16 %v841
    %v3401 = vunpack.c.h.b16 %v841
    %v3402 = vunpack.c.l.b16 %v842
    %v3403 = vunpack.c.h.b16 %v842
    %v3404 = vunpack.c.l.b16 %v843
    %v3405 = vunpack.c.h.b16 %v843
    %v3406 = vunpack.c.l.b16 %v844
    %v3407 = vunpack.c.h.b16 %v844
    %v3408 = vunpack.c.l.b16 %v845
    %v3409 = vunpack.c.h.b16 %v845
    %v3410 = vunpack.c.l.b16 %v846
    %v3411 = vunpack.c.h.b16 %v846
    %v3412 = vunpack.c.l.b16 %v847
    %v3413 = vunpack.c.h.b16 %v847
    %v3414 = vunpack.c.l.b16 %v848
    %v3415 = vunpack.c.h.b16 %v848
    %v3416 = vunpack.c.l.b16 %v849
    %v3417 = vunpack.c.h.b16 %v849
    %v3418 = vunpack.c.l.b16 %v850
    %v3419 = vunpack.c.h.b16 %v850
    %v3420 = vunpack.c.l.b16 %v851
    %v3421 = vunpack.c.h.b16 %v851
    %v3422 = vunpack.c.l.b16 %v852
    %v3423 = vunpack.c.h.b16 %v852
    %v3424 = vunpack.c.l.b16 %v853
    %v3425 = vunpack.c.h.b16 %v853
    %v3426 = vunpack.c.l.b16 %v854
    %v3427 = vunpack.c.h.b16 %v854
    %v3428 = vunpack.c.l.b16 %v855
    %v3429 = vunpack.c.h.b16 %v855
    %v3430 = vunpack.c.l.b16 %v856
    %v3431 = vunpack.c.h.b16 %v856
    %v3432 = vunpack.c.l.b16 %v857
    %v3433 = vunpack.c.h.b16 %v857
    %v3434 = vunpack.c.l.b16 %v858
    %v3435 = vunpack.c.h.b16 %v858
    %v3436 = vunpack.c.l.b16 %v859
    %v3437 = vunpack.c.h.b16 %v859
    %v3438 = vunpack.c.l.b16 %v860
    %v3439 = vunpack.c.h.b16 %v860
    %v3440 = vunpack.c.l.b16 %v861
    %v3441 = vunpack.c.h.b16 %v861
    %v3442 = vunpack.c.l.b16 %v862
    %v3443 = vunpack.c.h.b16 %v862
    %v3444 = vunpack.c.l.b16 %v863
    %v3445 = vunpack.c.h.b16 %v863
    %v3446 = vunpack.c.l.b16 %v864
    %v3447 = vunpack.c.h.b16 %v864
    %v3448 = vunpack.c.l.b16 %v865
    %v3449 = vunpack.c.h.b16 %v865
    %v3450 = vunpack.c.l.b16 %v866
    %v3451 = vunpack.c.h.b16 %v866
    %v3452 = vunpack.c.l.b16 %v867
    %v3453 = vunpack.c.h.b16 %v867
    %v3454 = vunpack.c.l.b16 %v868
    %v3455 = vunpack.c.h.b16 %v868
    %v3456 = vunpack.c.l.b16 %v869
    %v3457 = vunpack.c.h.b16 %v869
    %v3458 = vunpack.c.l.b16 %v870
    %v3459 = vunpack.c.h.b16 %v870
    %v3460 = vunpack.c.l.b16 %v871
    %v3461 = vunpack.c.h.b16 %v871
    %v3462 = vunpack.c.l.b16 %v872
    %v3463 = vunpack.c.h.b16 %v872
    %v3464 = vunpack.c.l.b16 %v873
    %v3465 = vunpack.c.h.b16 %v873
    %v3466 = vunpack.c.l.b16 %v874
    %v3467 = vunpack.c.h.b16 %v874
    %v3468 = vunpack.c.l.b16 %v875
    %v3469 = vunpack.c.h.b16 %v875
    %v3470 = vunpack.c.l.b16 %v876
    %v3471 = vunpack.c.h.b16 %v876
    %v3472 = vunpack.c.l.b16 %v877
    %v3473 = vunpack.c.h.b16 %v877
    %v3474 = vunpack.c.l.b16 %v878
    %v3475 = vunpack.c.h.b16 %v878
    %v3476 = vunpack.c.l.b16 %v879
    %v3477 = vunpack.c.h.b16 %v879
    %v3478 = vunpack.c.l.b16 %v880
    %v3479 = vunpack.c.h.b16 %v880
    %v3480 = vunpack.c.l.b16 %v881
    %v3481 = vunpack.c.h.b16 %v881
    %v3482 = vunpack.c.l.b16 %v882
    %v3483 = vunpack.c.h.b16 %v882
    %v3484 = vunpack.c.l.b16 %v883
    %v3485 = vunpack.c.h.b16 %v883
    %v3486 = vunpack.c.l.b16 %v884
    %v3487 = vunpack.c.h.b16 %v884
    %v3488 = vunpack.c.l.b16 %v885
    %v3489 = vunpack.c.h.b16 %v885
    %v3490 = vunpack.c.l.b16 %v886
    %v3491 = vunpack.c.h.b16 %v886
    %v3492 = vunpack.c.l.b16 %v887
    %v3493 = vunpack.c.h.b16 %v887
    %v3494 = vunpack.c.l.b16 %v888
    %v3495 = vunpack.c.h.b16 %v888
    %v3496 = vunpack.c.l.b16 %v889
    %v3497 = vunpack.c.h.b16 %v889
    %v3498 = vunpack.c.l.b16 %v890
    %v3499 = vunpack.c.h.b16 %v890
    %v3500 = vunpack.c.l.b16 %v891
    %v3501 = vunpack.c.h.b16 %v891
    %v3502 = vunpack.c.l.b16 %v892
    %v3503 = vunpack.c.h.b16 %v892
    %v3504 = vunpack.c.l.b16 %v893
    %v3505 = vunpack.c.h.b16 %v893
    %v3506 = vunpack.c.l.b16 %v894
    %v3507 = vunpack.c.h.b16 %v894
    %v3508 = vunpack.c.l.b16 %v895
    %v3509 = vunpack.c.h.b16 %v895
    %v3510 = vunpack.c.l.b16 %v896
    %v3511 = vunpack.c.h.b16 %v896
    %v3512 = vunpack.c.l.b16 %v897
    %v3513 = vunpack.c.h.b16 %v897
    %v3514 = vunpack.c.l.b16 %v898
    %v3515 = vunpack.c.h.b16 %v898
    %v3516 = vunpack.c.l.b16 %v899
    %v3517 = vunpack.c.h.b16 %v899
    %v3518 = vunpack.c.l.b16 %v900
    %v3519 = vunpack.c.h.b16 %v900
    %v3520 = vunpack.c.l.b16 %v901
    %v3521 = vunpack.c.h.b16 %v901
    %v3522 = vunpack.c.l.b16 %v902
    %v3523 = vunpack.c.h.b16 %v902
    %v3524 = vunpack.c.l.b16 %v903
    %v3525 = vunpack.c.h.b16 %v903
    %v3526 = vunpack.c.l.b16 %v904
    %v3527 = vunpack.c.h.b16 %v904
    %v3528 = vunpack.c.l.b16 %v905
    %v3529 = vunpack.c.h.b16 %v905
    %v3530 = vunpack.c.l.b16 %v906
    %v3531 = vunpack.c.h.b16 %v906
    %v3532 = vunpack.c.l.b16 %v907
    %v3533 = vunpack.c.h.b16 %v907
    %v3534 = vunpack.c.l.b16 %v908
    %v3535 = vunpack.c.h.b16 %v908
    %v3536 = vunpack.c.l.b16 %v909
    %v3537 = vunpack.c.h.b16 %v909
    %v3538 = vunpack.c.l.b16 %v910
    %v3539 = vunpack.c.h.b16 %v910
    %v3540 = vunpack.c.l.b16 %v911
    %v3541 = vunpack.c.h.b16 %v911
    %v3542 = vunpack.c.l.b16 %v912
    %v3543 = vunpack.c.h.b16 %v912
    %v3544 = vunpack.c.l.b16 %v913
    %v3545 = vunpack.c.h.b16 %v913
    %v3546 = vunpack.c.l.b16 %v914
    %v3547 = vunpack.c.h.b16 %v914
    %v3548 = vunpack.c.l.b16 %v915
    %v3549 = vunpack.c.h.b16 %v915
    %v3550 = vunpack.c.l.b16 %v916
    %v3551 = vunpack.c.h.b16 %v916
    %v3552 = vunpack.c.l.b16 %v917
    %v3553 = vunpack.c.h.b16 %v917
    %v3554 = vunpack.c.l.b16 %v918
    %v3555 = vunpack.c.h.b16 %v918
    %v3556 = vunpack.c.l.b16 %v919
    %v3557 = vunpack.c.h.b16 %v919
    %v3558 = vunpack.c.l.b16 %v920
    %v3559 = vunpack.c.h.b16 %v920
    %v3560 = vunpack.c.l.b16 %v921
    %v3561 = vunpack.c.h.b16 %v921
    %v3562 = vunpack.c.l.b16 %v922
    %v3563 = vunpack.c.h.b16 %v922
    %v3564 = vunpack.c.l.b16 %v923
    %v3565 = vunpack.c.h.b16 %v923
    %v3566 = vunpack.c.l.b16 %v924
    %v3567 = vunpack.c.h.b16 %v924
    %v3568 = vunpack.c.l.b16 %v925
    %v3569 = vunpack.c.h.b16 %v925
    %v3570 = vunpack.c.l.b16 %v926
    %v3571 = vunpack.c.h.b16 %v926
    %v3572 = vunpack.c.l.b16 %v927
    %v3573 = vunpack.c.h.b16 %v927
    %v3574 = vunpack.c.l.b16 %v928
    %v3575 = vunpack.c.h.b16 %v928
    %v3576 = vunpack.c.l.b16 %v929
    %v3577 = vunpack.c.h.b16 %v929
    %v3578 = vunpack.c.l.b16 %v930
    %v3579 = vunpack.c.h.b16 %v930
    %v3580 = vunpack.c.l.b16 %v931
    %v3581 = vunpack.c.h.b16 %v931
    %v3582 = vunpack.c.l.b16 %v932
    %v3583 = vunpack.c.h.b16 %v932
    %v3584 = vunpack.c.l.b16 %v933
    %v3585 = vunpack.c.h.b16 %v933
    %v3586 = vunpack.c.l.b16 %v934
    %v3587 = vunpack.c.h.b16 %v934
    %v3588 = vunpack.c.l.b16 %v935
    %v3589 = vunpack.c.h.b16 %v935
    %v3590 = vunpack.c.l.b16 %v936
    %v3591 = vunpack.c.h.b16 %v936
    %v3592 = vunpack.c.l.b16 %v937
    %v3593 = vunpack.c.h.b16 %v937
    %v3594 = vunpack.c.l.b16 %v938
    %v3595 = vunpack.c.h.b16 %v938
    %v3596 = vunpack.c.l.b16 %v939
    %v3597 = vunpack.c.h.b16 %v939
    %v3598 = vunpack.c.l.b16 %v940
    %v3599 = vunpack.c.h.b16 %v940
    %v3600 = vunpack.c.l.b16 %v941
    %v3601 = vunpack.c.h.b16 %v941
    %v3602 = vunpack.c.l.b16 %v942
    %v3603 = vunpack.c.h.b16 %v942
    %v3604 = vunpack.c.l.b16 %v943
    %v3605 = vunpack.c.h.b16 %v943
    %v3606 = vunpack.c.l.b16 %v944
    %v3607 = vunpack.c.h.b16 %v944
    %v3608 = vunpack.c.l.b16 %v945
    %v3609 = vunpack.c.h.b16 %v945
    %v3610 = vunpack.c.l.b16 %v946
    %v3611 = vunpack.c.h.b16 %v946
    %v3612 = vunpack.c.l.b16 %v947
    %v3613 = vunpack.c.h.b16 %v947
    %v3614 = vunpack.c.l.b16 %v948
    %v3615 = vunpack.c.h.b16 %v948
    %v3616 = vunpack.c.l.b16 %v949
    %v3617 = vunpack.c.h.b16 %v949
    %v3618 = vunpack.c.l.b16 %v950
    %v3619 = vunpack.c.h.b16 %v950
    %v3620 = vunpack.c.l.b16 %v951
    %v3621 = vunpack.c.h.b16 %v951
    %v3622 = vunpack.c.l.b16 %v952
    %v3623 = vunpack.c.h.b16 %v952
    %v3624 = vunpack.c.l.b16 %v953
    %v3625 = vunpack.c.h.b16 %v953
    %v3626 = vunpack.c.l.b16 %v954
    %v3627 = vunpack.c.h.b16 %v954
    %v3628 = vunpack.c.l.b16 %v955
    %v3629 = vunpack.c.h.b16 %v955
    %v3630 = vunpack.c.l.b16 %v956
    %v3631 = vunpack.c.h.b16 %v956
    %v3632 = vunpack.c.l.b16 %v957
    %v3633 = vunpack.c.h.b16 %v957
    %v3634 = vunpack.c.l.b16 %v958
    %v3635 = vunpack.c.h.b16 %v958
    %v3636 = vunpack.c.l.b16 %v959
    %v3637 = vunpack.c.h.b16 %v959
    %v3638 = vunpack.c.l.b16 %v960
    %v3639 = vunpack.c.h.b16 %v960
    %v3640 = vunpack.c.l.b16 %v961
    %v3641 = vunpack.c.h.b16 %v961
    %v3642 = vunpack.c.l.b16 %v962
    %v3643 = vunpack.c.h.b16 %v962
    %v3644 = vunpack.c.l.b16 %v963
    %v3645 = vunpack.c.h.b16 %v963
    %v3646 = vunpack.c.l.b16 %v964
    %v3647 = vunpack.c.h.b16 %v964
    %v3648 = vunpack.c.l.b16 %v965
    %v3649 = vunpack.c.h.b16 %v965
    %v3650 = vunpack.c.l.b16 %v966
    %v3651 = vunpack.c.h.b16 %v966
    %v3652 = vunpack.c.l.b16 %v967
    %v3653 = vunpack.c.h.b16 %v967
    %v3654 = vunpack.c.l.b16 %v968
    %v3655 = vunpack.c.h.b16 %v968
    %v3656 = vunpack.c.l.b16 %v969
    %v3657 = vunpack.c.h.b16 %v969
    %v3658 = vunpack.c.l.b16 %v970
    %v3659 = vunpack.c.h.b16 %v970
    %v3660 = vunpack.c.l.b16 %v971
    %v3661 = vunpack.c.h.b16 %v971
    %v3662 = vunpack.c.l.b16 %v972
    %v3663 = vunpack.c.h.b16 %v972
    %v3664 = vunpack.c.l.b16 %v973
    %v3665 = vunpack.c.h.b16 %v973
    %v3666 = vunpack.c.l.b16 %v974
    %v3667 = vunpack.c.h.b16 %v974
    %v3668 = vunpack.c.l.b16 %v975
    %v3669 = vunpack.c.h.b16 %v975
    %v3670 = vunpack.c.l.b16 %v976
    %v3671 = vunpack.c.h.b16 %v976
    %v3672 = vunpack.c.l.b16 %v977
    %v3673 = vunpack.c.h.b16 %v977
    %v3674 = vunpack.c.l.b16 %v978
    %v3675 = vunpack.c.h.b16 %v978
    %v3676 = vunpack.c.l.b16 %v979
    %v3677 = vunpack.c.h.b16 %v979
    %v3678 = vunpack.c.l.b16 %v980
    %v3679 = vunpack.c.h.b16 %v980
    %v3680 = vunpack.c.l.b16 %v981
    %v3681 = vunpack.c.h.b16 %v981
    %v3682 = vunpack.c.l.b16 %v982
    %v3683 = vunpack.c.h.b16 %v982
    %v3684 = vunpack.c.l.b16 %v983
    %v3685 = vunpack.c.h.b16 %v983
    %v3686 = vunpack.c.l.b16 %v984
    %v3687 = vunpack.c.h.b16 %v984
    %v3688 = vunpack.c.l.b16 %v985
    %v3689 = vunpack.c.h.b16 %v985
    %v3690 = vunpack.c.l.b16 %v986
    %v3691 = vunpack.c.h.b16 %v986
    %v3692 = vunpack.c.l.b16 %v987
    %v3693 = vunpack.c.h.b16 %v987
    %v3694 = vunpack.c.l.b16 %v988
    %v3695 = vunpack.c.h.b16 %v988
    %v3696 = vunpack.c.l.b16 %v989
    %v3697 = vunpack.c.h.b16 %v989
    %v3698 = vunpack.c.l.b16 %v990
    %v3699 = vunpack.c.h.b16 %v990
    %v3700 = vunpack.c.l.b16 %v991
    %v3701 = vunpack.c.h.b16 %v991
    %v3702 = vunpack.c.l.b16 %v992
    %v3703 = vunpack.c.h.b16 %v992
    %v3704 = vunpack.c.l.b16 %v993
    %v3705 = vunpack.c.h.b16 %v993
    %v3706 = vunpack.c.l.b16 %v994
    %v3707 = vunpack.c.h.b16 %v994
    %v3708 = vunpack.c.l.b16 %v995
    %v3709 = vunpack.c.h.b16 %v995
    %v3710 = vunpack.c.l.b16 %v996
    %v3711 = vunpack.c.h.b16 %v996
    %v3712 = vunpack.c.l.b16 %v997
    %v3713 = vunpack.c.h.b16 %v997
    %v3714 = vunpack.c.l.b16 %v998
    %v3715 = vunpack.c.h.b16 %v998
    %v3716 = vunpack.c.l.b16 %v999
    %v3717 = vunpack.c.h.b16 %v999
    %v3718 = vunpack.c.l.b16 %v1000
    %v3719 = vunpack.c.h.b16 %v1000
    %v3720 = vunpack.c.l.b16 %v1001
    %v3721 = vunpack.c.h.b16 %v1001
    %v3722 = vunpack.c.l.b16 %v1002
    %v3723 = vunpack.c.h.b16 %v1002
    %v3724 = vunpack.c.l.b16 %v1003
    %v3725 = vunpack.c.h.b16 %v1003
    %v3726 = vunpack.c.l.b16 %v1004
    %v3727 = vunpack.c.h.b16 %v1004
    %v3728 = vunpack.c.l.b16 %v1005
    %v3729 = vunpack.c.h.b16 %v1005
    %v3730 = vunpack.c.l.b16 %v1006
    %v3731 = vunpack.c.h.b16 %v1006
    %v3732 = vunpack.c.l.b16 %v1007
    %v3733 = vunpack.c.h.b16 %v1007
    %v3734 = vunpack.c.l.b16 %v1008
    %v3735 = vunpack.c.h.b16 %v1008
    %v3736 = vunpack.c.l.b16 %v1009
    %v3737 = vunpack.c.h.b16 %v1009
    %v3738 = vunpack.c.l.b16 %v1010
    %v3739 = vunpack.c.h.b16 %v1010
    %v3740 = vunpack.c.l.b16 %v1011
    %v3741 = vunpack.c.h.b16 %v1011
    %v3742 = vunpack.c.l.b16 %v1012
    %v3743 = vunpack.c.h.b16 %v1012
    %v3744 = vunpack.c.l.b16 %v1013
    %v3745 = vunpack.c.h.b16 %v1013
    %v3746 = vunpack.c.l.b16 %v1014
    %v3747 = vunpack.c.h.b16 %v1014
    %v3748 = vunpack.c.l.b16 %v1015
    %v3749 = vunpack.c.h.b16 %v1015
    %v3750 = vunpack.c.l.b16 %v1016
    %v3751 = vunpack.c.h.b16 %v1016
    %v3752 = vunpack.c.l.b16 %v1017
    %v3753 = vunpack.c.h.b16 %v1017
    %v3754 = vunpack.c.l.b16 %v1018
    %v3755 = vunpack.c.h.b16 %v1018
    %v3756 = vunpack.c.l.b16 %v1019
    %v3757 = vunpack.c.h.b16 %v1019
    %v3758 = vunpack.c.l.b16 %v1020
    %v3759 = vunpack.c.h.b16 %v1020
    %v3760 = vunpack.c.l.b16 %v1021
    %v3761 = vunpack.c.h.b16 %v1021
    %v3762 = vunpack.c.l.b16 %v1022
    %v3763 = vunpack.c.h.b16 %v1022
    %v3764 = vunpack.c.l.b16 %v1023
    %v3765 = vunpack.c.h.b16 %v1023
    %v3766 = vunpack.c.l.b16 %v1024
    %v3767 = vunpack.c.h.b16 %v1024
    %v3768 = vunpack.c.l.b16 %v1025
    %v3769 = vunpack.c.h.b16 %v1025
    %v3770 = vunpack.c.l.b16 %v1026
    %v3771 = vunpack.c.h.b16 %v1026
    %v3772 = vunpack.c.l.b16 %v1027
    %v3773 = vunpack.c.h.b16 %v1027
    %v3774 = vunpack.c.l.b16 %v1028
    %v3775 = vunpack.c.h.b16 %v1028
    %v3776 = vunpack.c.l.b16 %v1029
    %v3777 = vunpack.c.h.b16 %v1029
    %v3778 = vunpack.c.l.b16 %v1030
    %v3779 = vunpack.c.h.b16 %v1030
    %v3780 = vunpack.c.l.b16 %v1031
    %v3781 = vunpack.c.h.b16 %v1031
    %v3782 = vunpack.c.l.b16 %v1032
    %v3783 = vunpack.c.h.b16 %v1032
    %v3784 = vunpack.c.l.b16 %v1033
    %v3785 = vunpack.c.h.b16 %v1033
    %v3786 = vunpack.c.l.b16 %v1034
    %v3787 = vunpack.c.h.b16 %v1034
    %v3788 = vunpack.c.l.b16 %v1035
    %v3789 = vunpack.c.h.b16 %v1035
    %v3790 = vunpack.c.l.b16 %v1036
    %v3791 = vunpack.c.h.b16 %v1036
    %v3792 = vunpack.c.l.b16 %v1037
    %v3793 = vunpack.c.h.b16 %v1037
    %v3794 = vunpack.c.l.b16 %v1038
    %v3795 = vunpack.c.h.b16 %v1038
    %v3796 = vunpack.c.l.b16 %v1039
    %v3797 = vunpack.c.h.b16 %v1039
    %v3798 = vunpack.c.l.b16 %v1040
    %v3799 = vunpack.c.h.b16 %v1040
    %v3800 = vunpack.c.l.b16 %v1041
    %v3801 = vunpack.c.h.b16 %v1041
    %v3802 = vunpack.c.l.b16 %v1042
    %v3803 = vunpack.c.h.b16 %v1042
    %v3804 = vunpack.c.l.b16 %v1043
    %v3805 = vunpack.c.h.b16 %v1043
    %v3806 = vunpack.c.l.b16 %v1044
    %v3807 = vunpack.c.h.b16 %v1044
    %v3808 = vunpack.c.l.b16 %v1045
    %v3809 = vunpack.c.h.b16 %v1045
    %v3810 = vunpack.c.l.b16 %v1046
    %v3811 = vunpack.c.h.b16 %v1046
    %v3812 = vunpack.c.l.b16 %v1047
    %v3813 = vunpack.c.h.b16 %v1047
    %v3814 = vunpack.c.l.b16 %v1048
    %v3815 = vunpack.c.h.b16 %v1048
    %v3816 = vunpack.c.l.b16 %v1049
    %v3817 = vunpack.c.h.b16 %v1049
    %v3818 = vunpack.c.l.b16 %v1050
    %v3819 = vunpack.c.h.b16 %v1050
    %v3820 = vunpack.c.l.b16 %v1051
    %v3821 = vunpack.c.h.b16 %v1051
    %v3822 = vunpack.c.l.b16 %v1052
    %v3823 = vunpack.c.h.b16 %v1052
    %v3824 = vunpack.c.l.b16 %v1053
    %v3825 = vunpack.c.h.b16 %v1053
    %v3826 = vunpack.c.l.b16 %v1054
    %v3827 = vunpack.c.h.b16 %v1054
    %v3828 = vunpack.c.l.b16 %v1055
    %v3829 = vunpack.c.h.b16 %v1055
    %v3830 = vunpack.c.l.b16 %v1056
    %v3831 = vunpack.c.h.b16 %v1056
    %v3832 = vunpack.c.l.b16 %v1057
    %v3833 = vunpack.c.h.b16 %v1057
    %v3834 = vunpack.c.l.b16 %v1058
    %v3835 = vunpack.c.h.b16 %v1058
    %v3836 = vunpack.c.l.b16 %v1059
    %v3837 = vunpack.c.h.b16 %v1059
    %v3838 = vunpack.c.l.b16 %v1060
    %v3839 = vunpack.c.h.b16 %v1060
    %v3840 = vunpack.c.l.b16 %v1061
    %v3841 = vunpack.c.h.b16 %v1061
    %v3842 = vunpack.c.l.b16 %v1062
    %v3843 = vunpack.c.h.b16 %v1062
    %v3844 = vunpack.c.l.b16 %v1063
    %v3845 = vunpack.c.h.b16 %v1063
    %v3846 = vunpack.c.l.b16 %v1064
    %v3847 = vunpack.c.h.b16 %v1064
    %v3848 = vunpack.c.l.b16 %v1065
    %v3849 = vunpack.c.h.b16 %v1065
    %v3850 = vunpack.c.l.b16 %v1066
    %v3851 = vunpack.c.h.b16 %v1066
    %v3852 = vunpack.c.l.b16 %v1067
    %v3853 = vunpack.c.h.b16 %v1067
    %v3854 = vunpack.c.l.b16 %v1068
    %v3855 = vunpack.c.h.b16 %v1068
    %v3856 = vunpack.c.l.b16 %v1069
    %v3857 = vunpack.c.h.b16 %v1069
    %v3858 = vunpack.c.l.b16 %v1070
    %v3859 = vunpack.c.h.b16 %v1070
    %v3860 = vunpack.c.l.b16 %v1071
    %v3861 = vunpack.c.h.b16 %v1071
    %v3862 = vunpack.c.l.b16 %v1072
    %v3863 = vunpack.c.h.b16 %v1072
    %v3864 = vunpack.c.l.b16 %v1073
    %v3865 = vunpack.c.h.b16 %v1073
    %v3866 = vunpack.c.l.b16 %v1074
    %v3867 = vunpack.c.h.b16 %v1074
    %v3868 = vunpack.c.l.b16 %v1075
    %v3869 = vunpack.c.h.b16 %v1075
    %v3870 = vunpack.c.l.b16 %v1076
    %v3871 = vunpack.c.h.b16 %v1076
    %v3872 = vunpack.c.l.b16 %v1077
    %v3873 = vunpack.c.h.b16 %v1077
    %v3874 = vunpack.c.l.b16 %v1078
    %v3875 = vunpack.c.h.b16 %v1078
    %v3876 = vunpack.c.l.b16 %v1079
    %v3877 = vunpack.c.h.b16 %v1079
    %v3878 = vunpack.c.l.b16 %v1080
    %v3879 = vunpack.c.h.b16 %v1080
    %v3880 = vunpack.c.l.b16 %v1081
    %v3881 = vunpack.c.h.b16 %v1081
    %v3882 = vunpack.c.l.b16 %v1082
    %v3883 = vunpack.c.h.b16 %v1082
    %v3884 = vunpack.c.l.b16 %v1083
    %v3885 = vunpack.c.h.b16 %v1083
    %v3886 = vunpack.c.l.b16 %v1084
    %v3887 = vunpack.c.h.b16 %v1084
    %v3888 = vunpack.c.l.b16 %v1085
    %v3889 = vunpack.c.h.b16 %v1085
    %v3890 = vunpack.c.l.b16 %v1086
    %v3891 = vunpack.c.h.b16 %v1086
    %v3892 = vunpack.c.l.b16 %v1087
    %v3893 = vunpack.c.h.b16 %v1087
    %v3894 = vunpack.c.l.b16 %v1088
    %v3895 = vunpack.c.h.b16 %v1088
    %v3896 = vunpack.c.l.b16 %v1089
    %v3897 = vunpack.c.h.b16 %v1089
    %v3898 = vunpack.c.l.b16 %v1090
    %v3899 = vunpack.c.h.b16 %v1090
    %v3900 = vunpack.c.l.b16 %v1091
    %v3901 = vunpack.c.h.b16 %v1091
    %v3902 = vunpack.c.l.b16 %v1092
    %v3903 = vunpack.c.h.b16 %v1092
    %v3904 = vunpack.c.l.b16 %v1093
    %v3905 = vunpack.c.h.b16 %v1093
    %v3906 = vunpack.c.l.b16 %v1094
    %v3907 = vunpack.c.h.b16 %v1094
    %v3908 = vunpack.c.l.b16 %v1095
    %v3909 = vunpack.c.h.b16 %v1095
    %v3910 = vunpack.c.l.b16 %v1096
    %v3911 = vunpack.c.h.b16 %v1096
    %v3912 = vunpack.c.l.b16 %v1097
    %v3913 = vunpack.c.h.b16 %v1097
    %v3914 = vunpack.c.l.b16 %v1098
    %v3915 = vunpack.c.h.b16 %v1098
    %v3916 = vunpack.c.l.b16 %v1099
    %v3917 = vunpack.c.h.b16 %v1099
    %v3918 = vunpack.c.l.b16 %v1100
    %v3919 = vunpack.c.h.b16 %v1100
    %v3920 = vunpack.c.l.b16 %v1101
    %v3921 = vunpack.c.h.b16 %v1101
    %v3922 = vunpack.c.l.b16 %v1102
    %v3923 = vunpack.c.h.b16 %v1102
    %v3924 = vunpack.c.l.b16 %v1103
    %v3925 = vunpack.c.h.b16 %v1103
    %v3926 = vunpack.c.l.b16 %v1104
    %v3927 = vunpack.c.h.b16 %v1104
    %v3928 = vunpack.c.l.b16 %v1105
    %v3929 = vunpack.c.h.b16 %v1105
    %v3930 = vunpack.c.l.b16 %v1106
    %v3931 = vunpack.c.h.b16 %v1106
    %v3932 = vunpack.c.l.b16 %v1107
    %v3933 = vunpack.c.h.b16 %v1107
    %v3934 = vunpack.c.l.b16 %v1108
    %v3935 = vunpack.c.h.b16 %v1108
    %v3936 = vunpack.c.l.b16 %v1109
    %v3937 = vunpack.c.h.b16 %v1109
    %v3938 = vunpack.c.l.b16 %v1110
    %v3939 = vunpack.c.h.b16 %v1110
    %v3940 = vunpack.c.l.b16 %v1111
    %v3941 = vunpack.c.h.b16 %v1111
    %v3942 = vunpack.c.l.b16 %v1112
    %v3943 = vunpack.c.h.b16 %v1112
    %v3944 = vunpack.c.l.b16 %v1113
    %v3945 = vunpack.c.h.b16 %v1113
    %v3946 = vunpack.c.l.b16 %v1114
    %v3947 = vunpack.c.h.b16 %v1114
    %v3948 = vunpack.c.l.b16 %v1115
    %v3949 = vunpack.c.h.b16 %v1115
    %v3950 = vunpack.c.l.b16 %v1116
    %v3951 = vunpack.c.h.b16 %v1116
    %v3952 = vunpack.c.l.b16 %v1117
    %v3953 = vunpack.c.h.b16 %v1117
    %v3954 = vunpack.c.l.b16 %v1118
    %v3955 = vunpack.c.h.b16 %v1118
    %v3956 = vunpack.c.l.b16 %v1119
    %v3957 = vunpack.c.h.b16 %v1119
    %v3958 = vunpack.c.l.b16 %v1120
    %v3959 = vunpack.c.h.b16 %v1120
    %v3960 = vunpack.c.l.b16 %v1121
    %v3961 = vunpack.c.h.b16 %v1121
    %v3962 = vunpack.c.l.b16 %v1122
    %v3963 = vunpack.c.h.b16 %v1122
    %v3964 = vunpack.c.l.b16 %v1123
    %v3965 = vunpack.c.h.b16 %v1123
    %v3966 = vunpack.c.l.b16 %v1124
    %v3967 = vunpack.c.h.b16 %v1124
    %v3968 = vunpack.c.l.b16 %v1125
    %v3969 = vunpack.c.h.b16 %v1125
    %v3970 = vunpack.c.l.b16 %v1126
    %v3971 = vunpack.c.h.b16 %v1126
    %v3972 = vunpack.c.l.b16 %v1127
    %v3973 = vunpack.c.h.b16 %v1127
    %v3974 = vunpack.c.l.b16 %v1128
    %v3975 = vunpack.c.h.b16 %v1128
    %v3976 = vunpack.c.l.b16 %v1129
    %v3977 = vunpack.c.h.b16 %v1129
    %v3978 = vunpack.c.l.b16 %v1130
    %v3979 = vunpack.c.h.b16 %v1130
    %v3980 = vunpack.c.l.b16 %v1131
    %v3981 = vunpack.c.h.b16 %v1131
    %v3982 = vunpack.c.l.b16 %v1132
    %v3983 = vunpack.c.h.b16 %v1132
    %v3984 = vunpack.c.l.b16 %v1133
    %v3985 = vunpack.c.h.b16 %v1133
    %v3986 = vunpack.c.l.b16 %v1134
    %v3987 = vunpack.c.h.b16 %v1134
    %v3988 = vunpack.c.l.b16 %v1135
    %v3989 = vunpack.c.h.b16 %v1135
    %v3990 = vunpack.c.l.b16 %v1136
    %v3991 = vunpack.c.h.b16 %v1136
    %v3992 = vunpack.c.l.b16 %v1137
    %v3993 = vunpack.c.h.b16 %v1137
    %v3994 = vunpack.c.l.b16 %v1138
    %v3995 = vunpack.c.h.b16 %v1138
    %v3996 = vunpack.c.l.b16 %v1139
    %v3997 = vunpack.c.h.b16 %v1139
    %v3998 = vunpack.c.l.b16 %v1140
    %v3999 = vunpack.c.h.b16 %v1140
    %v4000 = vunpack.c.l.b16 %v1141
    %v4001 = vunpack.c.h.b16 %v1141
    %v4002 = vunpack.c.l.b16 %v1142
    %v4003 = vunpack.c.h.b16 %v1142
    %v4004 = vunpack.c.l.b16 %v1143
    %v4005 = vunpack.c.h.b16 %v1143
    %v4006 = vunpack.c.l.b16 %v1144
    %v4007 = vunpack.c.h.b16 %v1144
    %v4008 = vunpack.c.l.b16 %v1145
    %v4009 = vunpack.c.h.b16 %v1145
    %v4010 = vunpack.c.l.b16 %v1146
    %v4011 = vunpack.c.h.b16 %v1146
    %v4012 = vunpack.c.l.b16 %v1147
    %v4013 = vunpack.c.h.b16 %v1147
    %v4014 = vunpack.c.l.b16 %v1148
    %v4015 = vunpack.c.h.b16 %v1148
    %v4016 = vunpack.c.l.b16 %v1149
    %v4017 = vunpack.c.h.b16 %v1149
    %v4018 = vunpack.c.l.b16 %v1150
    %v4019 = vunpack.c.h.b16 %v1150
    %v4020 = vunpack.c.l.b16 %v1151
    %v4021 = vunpack.c.h.b16 %v1151
    %v4022 = vunpack.c.l.b16 %v1152
    %v4023 = vunpack.c.h.b16 %v1152
    %v4024 = vunpack.c.l.b16 %v1153
    %v4025 = vunpack.c.h.b16 %v1153
    %v4026 = vunpack.c.l.b16 %v1154
    %v4027 = vunpack.c.h.b16 %v1154
    %v4028 = vunpack.c.l.b16 %v1155
    %v4029 = vunpack.c.h.b16 %v1155
    %v4030 = vunpack.c.l.b16 %v1156
    %v4031 = vunpack.c.h.b16 %v1156
    %v4032 = vunpack.c.l.b16 %v1157
    %v4033 = vunpack.c.h.b16 %v1157
    %v4034 = vunpack.c.l.b16 %v1158
    %v4035 = vunpack.c.h.b16 %v1158
    %v4036 = vunpack.c.l.b16 %v1159
    %v4037 = vunpack.c.h.b16 %v1159
    %v4038 = vunpack.c.l.b16 %v1160
    %v4039 = vunpack.c.h.b16 %v1160
    %v4040 = vunpack.c.l.b16 %v1161
    %v4041 = vunpack.c.h.b16 %v1161
    %v4042 = vunpack.c.l.b16 %v1162
    %v4043 = vunpack.c.h.b16 %v1162
    %v4044 = vunpack.c.l.b16 %v1163
    %v4045 = vunpack.c.h.b16 %v1163
    %v4046 = vunpack.c.l.b16 %v1164
    %v4047 = vunpack.c.h.b16 %v1164
    %v4048 = vunpack.c.l.b16 %v1165
    %v4049 = vunpack.c.h.b16 %v1165
    %v4050 = vunpack.c.l.b16 %v1166
    %v4051 = vunpack.c.h.b16 %v1166
    %v4052 = vunpack.c.l.b16 %v1167
    %v4053 = vunpack.c.h.b16 %v1167
    %v4054 = vunpack.c.l.b16 %v1168
    %v4055 = vunpack.c.h.b16 %v1168
    %v4056 = vunpack.c.l.b16 %v1169
    %v4057 = vunpack.c.h.b16 %v1169
    %v4058 = vunpack.c.l.b16 %v1170
    %v4059 = vunpack.c.h.b16 %v1170
    %v4060 = vunpack.c.l.b16 %v1171
    %v4061 = vunpack.c.h.b16 %v1171
    %v4062 = vunpack.c.l.b16 %v1172
    %v4063 = vunpack.c.h.b16 %v1172
    %v4064 = vunpack.c.l.b16 %v1173
    %v4065 = vunpack.c.h.b16 %v1173
    %v4066 = vunpack.c.l.b16 %v1174
    %v4067 = vunpack.c.h.b16 %v1174
    %v4068 = vunpack.c.l.b16 %v1175
    %v4069 = vunpack.c.h.b16 %v1175
    %v4070 = vunpack.c.l.b16 %v1176
    %v4071 = vunpack.c.h.b16 %v1176
    %v4072 = vunpack.c.l.b16 %v1177
    %v4073 = vunpack.c.h.b16 %v1177
    %v4074 = vunpack.c.l.b16 %v1178
    %v4075 = vunpack.c.h.b16 %v1178
    %v4076 = vunpack.c.l.b16 %v1179
    %v4077 = vunpack.c.h.b16 %v1179
    %v4078 = vunpack.c.l.b16 %v1180
    %v4079 = vunpack.c.h.b16 %v1180
    %v4080 = vunpack.c.l.b16 %v1181
    %v4081 = vunpack.c.h.b16 %v1181
    %v4082 = vunpack.c.l.b16 %v1182
    %v4083 = vunpack.c.h.b16 %v1182
    %v4084 = vunpack.c.l.b16 %v1183
    %v4085 = vunpack.c.h.b16 %v1183
    %v4086 = vunpack.c.l.b16 %v1184
    %v4087 = vunpack.c.h.b16 %v1184
    %v4088 = vunpack.c.l.b16 %v1185
    %v4089 = vunpack.c.h.b16 %v1185
    %v4090 = vunpack.c.l.b16 %v1186
    %v4091 = vunpack.c.h.b16 %v1186
    %v4092 = vunpack.c.l.b16 %v1187
    %v4093 = vunpack.c.h.b16 %v1187
    %v4094 = vunpack.c.l.b16 %v1188
    %v4095 = vunpack.c.h.b16 %v1188
    %v4096 = vunpack.c.l.b16 %v1189
    %v4097 = vunpack.c.h.b16 %v1189
    %v4098 = vunpack.c.l.b16 %v1190
    %v4099 = vunpack.c.h.b16 %v1190
    %v4100 = vunpack.c.l.b16 %v1191
    %v4101 = vunpack.c.h.b16 %v1191
    %v4102 = vunpack.c.l.b16 %v1192
    %v4103 = vunpack.c.h.b16 %v1192
    %v4104 = vunpack.c.l.b16 %v1193
    %v4105 = vunpack.c.h.b16 %v1193
    %v4106 = vunpack.c.l.b16 %v1194
    %v4107 = vunpack.c.h.b16 %v1194
    %v4108 = vunpack.c.l.b16 %v1195
    %v4109 = vunpack.c.h.b16 %v1195
    %v4110 = vunpack.c.l.b16 %v1196
    %v4111 = vunpack.c.h.b16 %v1196
    %v4112 = vunpack.c.l.b16 %v1197
    %v4113 = vunpack.c.h.b16 %v1197
    %v4114 = vunpack.c.l.b16 %v1198
    %v4115 = vunpack.c.h.b16 %v1198
    %v4116 = vunpack.c.l.b16 %v1199
    %v4117 = vunpack.c.h.b16 %v1199
    %v4118 = vunpack.c.l.b16 %v1200
    %v4119 = vunpack.c.h.b16 %v1200
    %v4120 = vunpack.c.l.b16 %v1201
    %v4121 = vunpack.c.h.b16 %v1201
    %v4122 = vunpack.c.l.b16 %v1202
    %v4123 = vunpack.c.h.b16 %v1202
    %v4124 = vunpack.c.l.b16 %v1203
    %v4125 = vunpack.c.h.b16 %v1203
    %v4126 = vunpack.c.l.b16 %v1204
    %v4127 = vunpack.c.h.b16 %v1204
    %v4128 = vunpack.c.l.b16 %v1205
    %v4129 = vunpack.c.h.b16 %v1205
    %v4130 = vunpack.c.l.b16 %v1206
    %v4131 = vunpack.c.h.b16 %v1206
    %v4132 = vunpack.c.l.b16 %v1207
    %v4133 = vunpack.c.h.b16 %v1207
    %v4134 = vunpack.c.l.b16 %v1208
    %v4135 = vunpack.c.h.b16 %v1208
    %v4136 = vunpack.c.l.b16 %v1209
    %v4137 = vunpack.c.h.b16 %v1209
    %v4138 = vunpack.c.l.b16 %v1210
    %v4139 = vunpack.c.h.b16 %v1210
    %v4140 = vunpack.c.l.b16 %v1211
    %v4141 = vunpack.c.h.b16 %v1211
    %v4142 = vunpack.c.l.b16 %v1212
    %v4143 = vunpack.c.h.b16 %v1212
    %v4144 = vunpack.c.l.b16 %v1213
    %v4145 = vunpack.c.h.b16 %v1213
    %v4146 = vunpack.c.l.b16 %v1214
    %v4147 = vunpack.c.h.b16 %v1214
    %v4148 = vunpack.c.l.b16 %v1215
    %v4149 = vunpack.c.h.b16 %v1215
    %v4150 = vunpack.c.l.b16 %v1216
    %v4151 = vunpack.c.h.b16 %v1216
    %v4152 = vunpack.c.l.b16 %v1217
    %v4153 = vunpack.c.h.b16 %v1217
    %v4154 = vunpack.c.l.b16 %v1218
    %v4155 = vunpack.c.h.b16 %v1218
    %v4156 = vunpack.c.l.b16 %v1219
    %v4157 = vunpack.c.h.b16 %v1219
    %v4158 = vunpack.c.l.b16 %v1220
    %v4159 = vunpack.c.h.b16 %v1220
    %v4160 = vunpack.c.l.b16 %v1221
    %v4161 = vunpack.c.h.b16 %v1221
    %v4162 = vunpack.c.l.b16 %v1222
    %v4163 = vunpack.c.h.b16 %v1222
    %v4164 = vunpack.c.l.b16 %v1223
    %v4165 = vunpack.c.h.b16 %v1223
    %v4166 = vunpack.c.l.b16 %v1224
    %v4167 = vunpack.c.h.b16 %v1224
    %v4168 = vunpack.c.l.b16 %v1225
    %v4169 = vunpack.c.h.b16 %v1225
    %v4170 = vunpack.c.l.b16 %v1226
    %v4171 = vunpack.c.h.b16 %v1226
    %v4172 = vunpack.c.l.b16 %v1227
    %v4173 = vunpack.c.h.b16 %v1227
    %v4174 = vunpack.c.l.b16 %v1228
    %v4175 = vunpack.c.h.b16 %v1228
    %v4176 = vunpack.c.l.b16 %v1229
    %v4177 = vunpack.c.h.b16 %v1229
    %v4178 = vunpack.c.l.b16 %v1230
    %v4179 = vunpack.c.h.b16 %v1230
    %v4180 = vunpack.c.l.b16 %v1231
    %v4181 = vunpack.c.h.b16 %v1231
    %v4182 = vunpack.c.l.b16 %v1232
    %v4183 = vunpack.c.h.b16 %v1232
    %v4184 = vunpack.c.l.b16 %v1233
    %v4185 = vunpack.c.h.b16 %v1233
    %v4186 = vunpack.c.l.b16 %v1234
    %v4187 = vunpack.c.h.b16 %v1234
    %v4188 = vunpack.c.l.b16 %v1235
    %v4189 = vunpack.c.h.b16 %v1235
    %v4190 = vunpack.c.l.b16 %v1236
    %v4191 = vunpack.c.h.b16 %v1236
    %v4192 = vunpack.c.l.b16 %v1237
    %v4193 = vunpack.c.h.b16 %v1237
    %v4194 = vunpack.c.l.b16 %v1238
    %v4195 = vunpack.c.h.b16 %v1238
    %v4196 = vunpack.c.l.b16 %v1239
    %v4197 = vunpack.c.h.b16 %v1239
    %v4198 = vunpack.c.l.b16 %v1240
    %v4199 = vunpack.c.h.b16 %v1240
    %v4200 = vunpack.c.l.b16 %v1241
    %v4201 = vunpack.c.h.b16 %v1241
    %v4202 = vunpack.c.l.b16 %v1242
    %v4203 = vunpack.c.h.b16 %v1242
    %v4204 = vunpack.c.l.b16 %v1243
    %v4205 = vunpack.c.h.b16 %v1243
    %v4206 = vunpack.c.l.b16 %v1244
    %v4207 = vunpack.c.h.b16 %v1244
    %v4208 = vunpack.c.l.b16 %v1245
    %v4209 = vunpack.c.h.b16 %v1245
    %v4210 = vunpack.c.l.b16 %v1246
    %v4211 = vunpack.c.h.b16 %v1246
    %v4212 = vunpack.c.l.b16 %v1247
    %v4213 = vunpack.c.h.b16 %v1247
    %v4214 = vunpack.c.l.b16 %v1248
    %v4215 = vunpack.c.h.b16 %v1248
    %v4216 = vunpack.c.l.b16 %v1249
    %v4217 = vunpack.c.h.b16 %v1249
    %v4218 = vunpack.c.l.b16 %v1250
    %v4219 = vunpack.c.h.b16 %v1250
    %v4220 = vunpack.c.l.b16 %v1251
    %v4221 = vunpack.c.h.b16 %v1251
    %v4222 = vunpack.c.l.b16 %v1252
    %v4223 = vunpack.c.h.b16 %v1252
    %v4224 = vunpack.c.l.b16 %v1253
    %v4225 = vunpack.c.h.b16 %v1253
    %v4226 = vunpack.c.l.b16 %v1254
    %v4227 = vunpack.c.h.b16 %v1254
    %v4228 = vunpack.c.l.b16 %v1255
    %v4229 = vunpack.c.h.b16 %v1255
    %v4230 = vunpack.c.l.b16 %v1256
    %v4231 = vunpack.c.h.b16 %v1256
    %v4232 = vunpack.c.l.b16 %v1257
    %v4233 = vunpack.c.h.b16 %v1257
    %v4234 = vunpack.c.l.b16 %v1258
    %v4235 = vunpack.c.h.b16 %v1258
    %v4236 = vunpack.c.l.b16 %v1259
    %v4237 = vunpack.c.h.b16 %v1259
    %v4238 = vunpack.c.l.b16 %v1260
    %v4239 = vunpack.c.h.b16 %v1260
    %v4240 = vunpack.c.l.b16 %v1261
    %v4241 = vunpack.c.h.b16 %v1261
    %v4242 = vunpack.c.l.b16 %v1262
    %v4243 = vunpack.c.h.b16 %v1262
    %v4244 = vunpack.c.l.b16 %v1263
    %v4245 = vunpack.c.h.b16 %v1263
    %v4246 = vunpack.c.l.b16 %v1264
    %v4247 = vunpack.c.h.b16 %v1264
    %v4248 = vunpack.c.l.b16 %v1265
    %v4249 = vunpack.c.h.b16 %v1265
    %v4250 = vunpack.c.l.b16 %v1266
    %v4251 = vunpack.c.h.b16 %v1266
    %v4252 = vunpack.c.l.b16 %v1267
    %v4253 = vunpack.c.h.b16 %v1267
    %v4254 = vunpack.c.l.b16 %v1268
    %v4255 = vunpack.c.h.b16 %v1268
    %v4256 = vunpack.c.l.b16 %v1269
    %v4257 = vunpack.c.h.b16 %v1269
    %v4258 = vunpack.c.l.b16 %v1270
    %v4259 = vunpack.c.h.b16 %v1270
    %v4260 = vunpack.c.l.b16 %v1271
    %v4261 = vunpack.c.h.b16 %v1271
    %v4262 = vunpack.c.l.b16 %v1272
    %v4263 = vunpack.c.h.b16 %v1272
    %v4264 = vunpack.c.l.b16 %v1273
    %v4265 = vunpack.c.h.b16 %v1273
    %v4266 = vunpack.c.l.b16 %v1274
    %v4267 = vunpack.c.h.b16 %v1274
    %v4268 = vunpack.c.l.b16 %v1275
    %v4269 = vunpack.c.h.b16 %v1275
    %v4270 = vunpack.c.l.b16 %v1276
    %v4271 = vunpack.c.h.b16 %v1276
    %v4272 = vunpack.c.l.b16 %v1277
    %v4273 = vunpack.c.h.b16 %v1277
    %v4274 = vunpack.c.l.b16 %v1278
    %v4275 = vunpack.c.h.b16 %v1278
    %v4276 = vunpack.c.l.b16 %v1279
    %v4277 = vunpack.c.h.b16 %v1279
    %v4278 = vunpack.c.l.b16 %v1280
    %v4279 = vunpack.c.h.b16 %v1280
    %v4280 = vunpack.c.l.b16 %v1281
    %v4281 = vunpack.c.h.b16 %v1281
    %v4282 = vunpack.c.l.b16 %v1282
    %v4283 = vunpack.c.h.b16 %v1282
    %v4284 = vunpack.c.l.b16 %v1283
    %v4285 = vunpack.c.h.b16 %v1283
    %v4286 = vunpack.c.l.b16 %v1284
    %v4287 = vunpack.c.h.b16 %v1284
    %v4288 = vunpack.c.l.b16 %v1285
    %v4289 = vunpack.c.h.b16 %v1285
    %v4290 = vunpack.c.l.b16 %v1286
    %v4291 = vunpack.c.h.b16 %v1286
    %v4292 = vunpack.c.l.b16 %v1287
    %v4293 = vunpack.c.h.b16 %v1287
    %v4294 = vunpack.c.l.b16 %v1288
    %v4295 = vunpack.c.h.b16 %v1288
    %v4296 = vunpack.c.l.b16 %v1289
    %v4297 = vunpack.c.h.b16 %v1289
    %v4298 = vunpack.c.l.b16 %v1290
    %v4299 = vunpack.c.h.b16 %v1290
    %v4300 = vunpack.c.l.b16 %v1291
    %v4301 = vunpack.c.h.b16 %v1291
    %v4302 = vunpack.c.l.b16 %v1292
    %v4303 = vunpack.c.h.b16 %v1292
    %v4304 = vunpack.c.l.b16 %v1293
    %v4305 = vunpack.c.h.b16 %v1293
    %v4306 = vunpack.c.l.b16 %v1294
    %v4307 = vunpack.c.h.b16 %v1294
    %v4308 = vunpack.c.l.b16 %v1295
    %v4309 = vunpack.c.h.b16 %v1295
    %v4310 = vunpack.c.l.b16 %v1296
    %v4311 = vunpack.c.h.b16 %v1296
    %v4312 = vunpack.c.l.b16 %v1297
    %v4313 = vunpack.c.h.b16 %v1297
    %v4314 = vunpack.c.l.b16 %v1298
    %v4315 = vunpack.c.h.b16 %v1298
    %v4316 = vunpack.c.l.b16 %v1299
    %v4317 = vunpack.c.h.b16 %v1299
    %v4318 = vunpack.c.l.b16 %v1300
    %v4319 = vunpack.c.h.b16 %v1300
    %v4320 = vunpack.c.l.b16 %v1301
    %v4321 = vunpack.c.h.b16 %v1301
    %v4322 = vunpack.c.l.b16 %v1302
    %v4323 = vunpack.c.h.b16 %v1302
    %v4324 = vunpack.c.l.b16 %v1303
    %v4325 = vunpack.c.h.b16 %v1303
    %v4326 = vunpack.c.l.b16 %v1304
    %v4327 = vunpack.c.h.b16 %v1304
    %v4328 = vunpack.c.l.b16 %v1305
    %v4329 = vunpack.c.h.b16 %v1305
    %v4330 = vunpack.c.l.b16 %v1306
    %v4331 = vunpack.c.h.b16 %v1306
    %v4332 = vunpack.c.l.b16 %v1307
    %v4333 = vunpack.c.h.b16 %v1307
    %v4334 = vunpack.c.l.b16 %v1308
    %v4335 = vunpack.c.h.b16 %v1308
    %v4336 = vunpack.c.l.b16 %v1309
    %v4337 = vunpack.c.h.b16 %v1309
    %v4338 = vunpack.c.l.b16 %v1310
    %v4339 = vunpack.c.h.b16 %v1310
    %v4340 = vunpack.c.l.b16 %v1311
    %v4341 = vunpack.c.h.b16 %v1311
    %v4342 = vunpack.c.l.b16 %v1312
    %v4343 = vunpack.c.h.b16 %v1312
    %v4344 = vunpack.c.l.b16 %v1313
    %v4345 = vunpack.c.h.b16 %v1313
    %v4346 = vunpack.c.l.b16 %v1314
    %v4347 = vunpack.c.h.b16 %v1314
    %v4348 = vunpack.c.l.b16 %v1315
    %v4349 = vunpack.c.h.b16 %v1315
    %v4350 = vunpack.c.l.b16 %v1316
    %v4351 = vunpack.c.h.b16 %v1316
    %v4352 = vunpack.c.l.b16 %v1317
    %v4353 = vunpack.c.h.b16 %v1317
    %v4354 = vunpack.c.l.b16 %v1318
    %v4355 = vunpack.c.h.b16 %v1318
    %v4356 = vunpack.c.l.b16 %v1319
    %v4357 = vunpack.c.h.b16 %v1319
    %v4358 = vunpack.c.l.b16 %v1320
    %v4359 = vunpack.c.h.b16 %v1320
    %v4360 = vunpack.c.l.b16 %v1321
    %v4361 = vunpack.c.h.b16 %v1321
    %v4362 = vunpack.c.l.b16 %v1322
    %v4363 = vunpack.c.h.b16 %v1322
    %v4364 = vunpack.c.l.b16 %v1323
    %v4365 = vunpack.c.h.b16 %v1323
    %v4366 = vunpack.c.l.b16 %v1324
    %v4367 = vunpack.c.h.b16 %v1324
    %v4368 = vunpack.c.l.b16 %v1325
    %v4369 = vunpack.c.h.b16 %v1325
    %v4370 = vunpack.c.l.b16 %v1326
    %v4371 = vunpack.c.h.b16 %v1326
    %v4372 = vunpack.c.l.b16 %v1327
    %v4373 = vunpack.c.h.b16 %v1327
    %v4374 = vunpack.c.l.b16 %v1328
    %v4375 = vunpack.c.h.b16 %v1328
    %v4376 = vunpack.c.l.b16 %v1329
    %v4377 = vunpack.c.h.b16 %v1329
    %v4378 = vunpack.c.l.b16 %v1330
    %v4379 = vunpack.c.h.b16 %v1330
    %v4380 = vunpack.c.l.b16 %v1331
    %v4381 = vunpack.c.h.b16 %v1331
    %v4382 = vunpack.c.l.b16 %v1332
    %v4383 = vunpack.c.h.b16 %v1332
    %v4384 = vunpack.c.l.b16 %v1333
    %v4385 = vunpack.c.h.b16 %v1333
    %v4386 = vunpack.c.l.b16 %v1334
    %v4387 = vunpack.c.h.b16 %v1334
    %v4388 = vunpack.c.l.b16 %v1335
    %v4389 = vunpack.c.h.b16 %v1335
    %v4390 = vunpack.c.l.b16 %v1336
    %v4391 = vunpack.c.h.b16 %v1336
    %v4392 = vunpack.c.l.b16 %v1337
    %v4393 = vunpack.c.h.b16 %v1337
    %v4394 = vunpack.c.l.b16 %v1338
    %v4395 = vunpack.c.h.b16 %v1338
    %v4396 = vunpack.c.l.b16 %v1339
    %v4397 = vunpack.c.h.b16 %v1339
    %v4398 = vunpack.c.l.b16 %v1340
    %v4399 = vunpack.c.h.b16 %v1340
    %v4400 = vunpack.c.l.b16 %v1341
    %v4401 = vunpack.c.h.b16 %v1341
    %v4402 = vunpack.c.l.b16 %v1342
    %v4403 = vunpack.c.h.b16 %v1342
    %v4404 = vunpack.c.l.b16 %v1343
    %v4405 = vunpack.c.h.b16 %v1343
    %v4406 = vunpack.c.l.b16 %v1344
    %v4407 = vunpack.c.h.b16 %v1344
    %v4408 = vunpack.c.l.b16 %v1345
    %v4409 = vunpack.c.h.b16 %v1345
    %v4410 = vunpack.c.l.b16 %v1346
    %v4411 = vunpack.c.h.b16 %v1346
    %v4412 = vunpack.c.l.b16 %v1347
    %v4413 = vunpack.c.h.b16 %v1347
    %v4414 = vunpack.c.l.b16 %v1348
    %v4415 = vunpack.c.h.b16 %v1348
    %v4416 = vunpack.c.l.b16 %v1349
    %v4417 = vunpack.c.h.b16 %v1349
    %v4418 = vunpack.c.l.b16 %v1350
    %v4419 = vunpack.c.h.b16 %v1350
    %v4420 = vunpack.c.l.b16 %v1351
    %v4421 = vunpack.c.h.b16 %v1351
    %v4422 = vunpack.c.l.b16 %v1352
    %v4423 = vunpack.c.h.b16 %v1352
    %v4424 = vunpack.c.l.b16 %v1353
    %v4425 = vunpack.c.h.b16 %v1353
    %v4426 = vunpack.c.l.b16 %v1354
    %v4427 = vunpack.c.h.b16 %v1354
    %v4428 = vunpack.c.l.b16 %v1355
    %v4429 = vunpack.c.h.b16 %v1355
    %v4430 = vunpack.c.l.b16 %v1356
    %v4431 = vunpack.c.h.b16 %v1356
    %v4432 = vunpack.c.l.b16 %v1357
    %v4433 = vunpack.c.h.b16 %v1357
    %v4434 = vunpack.c.l.b16 %v1358
    %v4435 = vunpack.c.h.b16 %v1358
    %v4436 = vunpack.c.l.b16 %v1359
    %v4437 = vunpack.c.h.b16 %v1359
    %v4438 = vunpack.c.l.b16 %v1360
    %v4439 = vunpack.c.h.b16 %v1360
    %v4440 = vunpack.c.l.b16 %v1361
    %v4441 = vunpack.c.h.b16 %v1361
    %v4442 = vunpack.c.l.b16 %v1362
    %v4443 = vunpack.c.h.b16 %v1362
    %v4444 = vunpack.c.l.b16 %v1363
    %v4445 = vunpack.c.h.b16 %v1363
    %v4446 = vunpack.c.l.b16 %v1364
    %v4447 = vunpack.c.h.b16 %v1364
    %v4448 = vunpack.c.l.b16 %v1365
    %v4449 = vunpack.c.h.b16 %v1365
    %v4450 = vunpack.c.l.b16 %v1366
    %v4451 = vunpack.c.h.b16 %v1366
    %v4452 = vunpack.c.l.b16 %v1367
    %v4453 = vunpack.c.h.b16 %v1367
    %v4454 = vunpack.c.l.b16 %v1368
    %v4455 = vunpack.c.h.b16 %v1368
    %v4456 = vunpack.c.l.b16 %v1369
    %v4457 = vunpack.c.h.b16 %v1369
    %v4458 = vunpack.c.l.b16 %v1370
    %v4459 = vunpack.c.h.b16 %v1370
    %v4460 = vunpack.c.l.b16 %v1371
    %v4461 = vunpack.c.h.b16 %v1371
    %v4462 = vunpack.c.l.b16 %v1372
    %v4463 = vunpack.c.h.b16 %v1372
    %v4464 = vunpack.c.l.b16 %v1373
    %v4465 = vunpack.c.h.b16 %v1373
    %v4466 = vunpack.c.l.b16 %v1374
    %v4467 = vunpack.c.h.b16 %v1374
    %v4468 = vunpack.c.l.b16 %v1375
    %v4469 = vunpack.c.h.b16 %v1375
    %v4470 = vunpack.c.l.b16 %v1376
    %v4471 = vunpack.c.h.b16 %v1376
    %v4472 = vunpack.c.l.b16 %v1377
    %v4473 = vunpack.c.h.b16 %v1377
    %v4474 = vunpack.c.l.b16 %v1378
    %v4475 = vunpack.c.h.b16 %v1378
    %v4476 = vunpack.c.l.b16 %v1379
    %v4477 = vunpack.c.h.b16 %v1379
    %v4478 = vunpack.c.l.b16 %v1380
    %v4479 = vunpack.c.h.b16 %v1380
    %v4480 = vunpack.c.l.b16 %v1381
    %v4481 = vunpack.c.h.b16 %v1381
    %v4482 = vunpack.c.l.b16 %v1382
    %v4483 = vunpack.c.h.b16 %v1382
    %v4484 = vunpack.c.l.b16 %v1383
    %v4485 = vunpack.c.h.b16 %v1383
    %v4486 = vunpack.c.l.b16 %v1384
    %v4487 = vunpack.c.h.b16 %v1384
    %v4488 = vunpack.c.l.b16 %v1385
    %v4489 = vunpack.c.h.b16 %v1385
    %v4490 = vunpack.c.l.b16 %v1386
    %v4491 = vunpack.c.h.b16 %v1386
    %v4492 = vunpack.c.l.b16 %v1387
    %v4493 = vunpack.c.h.b16 %v1387
    %v4494 = vunpack.c.l.b16 %v1388
    %v4495 = vunpack.c.h.b16 %v1388
    %v4496 = vunpack.c.l.b16 %v1389
    %v4497 = vunpack.c.h.b16 %v1389
    %v4498 = vunpack.c.l.b16 %v1390
    %v4499 = vunpack.c.h.b16 %v1390
    %v4500 = vunpack.c.l.b16 %v1391
    %v4501 = vunpack.c.h.b16 %v1391
    %v4502 = vunpack.c.l.b16 %v1392
    %v4503 = vunpack.c.h.b16 %v1392
    %v4504 = vunpack.c.l.b16 %v1393
    %v4505 = vunpack.c.h.b16 %v1393
    %v4506 = vunpack.c.l.b16 %v1394
    %v4507 = vunpack.c.h.b16 %v1394
    %v4508 = vunpack.c.l.b16 %v1395
    %v4509 = vunpack.c.h.b16 %v1395
    %v4510 = vunpack.c.l.b16 %v1396
    %v4511 = vunpack.c.h.b16 %v1396
    %v4512 = vunpack.c.l.b16 %v1397
    %v4513 = vunpack.c.h.b16 %v1397
    %v4514 = vunpack.c.l.b16 %v1398
    %v4515 = vunpack.c.h.b16 %v1398
    %v4516 = vunpack.c.l.b16 %v1399
    %v4517 = vunpack.c.h.b16 %v1399
    %v4518 = vunpack.c.l.b16 %v1400
    %v4519 = vunpack.c.h.b16 %v1400
    %v4520 = vunpack.c.l.b16 %v1401
    %v4521 = vunpack.c.h.b16 %v1401
    %v4522 = vunpack.c.l.b16 %v1402
    %v4523 = vunpack.c.h.b16 %v1402
    %v4524 = vunpack.c.l.b16 %v1403
    %v4525 = vunpack.c.h.b16 %v1403
    %v4526 = vunpack.c.l.b16 %v1404
    %v4527 = vunpack.c.h.b16 %v1404
    %v4528 = vunpack.c.l.b16 %v1405
    %v4529 = vunpack.c.h.b16 %v1405
    %v4530 = vunpack.c.l.b16 %v1406
    %v4531 = vunpack.c.h.b16 %v1406
    %v4532 = vunpack.c.l.b16 %v1407
    %v4533 = vunpack.c.h.b16 %v1407
    %v4534 = vunpack.c.l.b16 %v1408
    %v4535 = vunpack.c.h.b16 %v1408
    %v4536 = vunpack.c.l.b16 %v1409
    %v4537 = vunpack.c.h.b16 %v1409
    %v4538 = vunpack.c.l.b16 %v1410
    %v4539 = vunpack.c.h.b16 %v1410
    %v4540 = vunpack.c.l.b16 %v1411
    %v4541 = vunpack.c.h.b16 %v1411
    %v4542 = vunpack.c.l.b16 %v1412
    %v4543 = vunpack.c.h.b16 %v1412
    %v4544 = vunpack.c.l.b16 %v1413
    %v4545 = vunpack.c.h.b16 %v1413
    %v4546 = vunpack.c.l.b16 %v1414
    %v4547 = vunpack.c.h.b16 %v1414
    %v4548 = vunpack.c.l.b16 %v1415
    %v4549 = vunpack.c.h.b16 %v1415
    %v4550 = vunpack.c.l.b16 %v1416
    %v4551 = vunpack.c.h.b16 %v1416
    %v4552 = vunpack.c.l.b16 %v1417
    %v4553 = vunpack.c.h.b16 %v1417
    %v4554 = vunpack.c.l.b16 %v1418
    %v4555 = vunpack.c.h.b16 %v1418
    %v4556 = vunpack.c.l.b16 %v1419
    %v4557 = vunpack.c.h.b16 %v1419
    %v4558 = vunpack.c.l.b16 %v1420
    %v4559 = vunpack.c.h.b16 %v1420
    %v4560 = vunpack.c.l.b16 %v1421
    %v4561 = vunpack.c.h.b16 %v1421
    %v4562 = vunpack.c.l.b16 %v1422
    %v4563 = vunpack.c.h.b16 %v1422
    %v4564 = vunpack.c.l.b16 %v1423
    %v4565 = vunpack.c.h.b16 %v1423
    %v4566 = vunpack.c.l.b16 %v1424
    %v4567 = vunpack.c.h.b16 %v1424
    %v4568 = vunpack.c.l.b16 %v1425
    %v4569 = vunpack.c.h.b16 %v1425
    %v4570 = vunpack.c.l.b16 %v1426
    %v4571 = vunpack.c.h.b16 %v1426
    %v4572 = vunpack.c.l.b16 %v1427
    %v4573 = vunpack.c.h.b16 %v1427
    %v4574 = vunpack.c.l.b16 %v1428
    %v4575 = vunpack.c.h.b16 %v1428
    %v4576 = vunpack.c.l.b16 %v1429
    %v4577 = vunpack.c.h.b16 %v1429
    %v4578 = vunpack.c.l.b16 %v1430
    %v4579 = vunpack.c.h.b16 %v1430
    %v4580 = vunpack.c.l.b16 %v1431
    %v4581 = vunpack.c.h.b16 %v1431
    %v4582 = vunpack.c.l.b16 %v1432
    %v4583 = vunpack.c.h.b16 %v1432
    %v4584 = vunpack.c.l.b16 %v1433
    %v4585 = vunpack.c.h.b16 %v1433
    %v4586 = vunpack.c.l.b16 %v1434
    %v4587 = vunpack.c.h.b16 %v1434
    %v4588 = vunpack.c.l.b16 %v1435
    %v4589 = vunpack.c.h.b16 %v1435
    %v4590 = vunpack.c.l.b16 %v1436
    %v4591 = vunpack.c.h.b16 %v1436
    %v4592 = vunpack.c.l.b16 %v1437
    %v4593 = vunpack.c.h.b16 %v1437
    %v4594 = vpack.c.b16 %v2562, %v2546
    %v4595 = vpack.c.b16 %v2563, %v2547
    %v4596 = vpack.c.b16 %v2564, %v2548
    %v4597 = vpack.c.b16 %v2565, %v2549
    %v4598 = vpack.c.b16 %v2566, %v2550
    %v4599 = vpack.c.b16 %v2567, %v2551
    %v4600 = vpack.c.b16 %v2568, %v2552
    %v4601 = vpack.c.b16 %v2569, %v2553
    %v4602 = vpack.c.b16 %v2570, %v2554
    %v4603 = vpack.c.b16 %v2571, %v2555
    %v4604 = vpack.c.b16 %v2572, %v2556
    %v4605 = vpack.c.b16 %v2573, %v2557
    %v4606 = vpack.c.b16 %v2574, %v2558
    %v4607 = vpack.c.b16 %v2575, %v2559
    %v4608 = vpack.c.b16 %v2576, %v2560
    %v4609 = vpack.c.b16 %v2577, %v2561
    %v4610 = vpack.c.b16 %v2594, %v2578
    %v4611 = vpack.c.b16 %v2595, %v2579
    %v4612 = vpack.c.b16 %v2596, %v2580
    %v4613 = vpack.c.b16 %v2597, %v2581
    %v4614 = vpack.c.b16 %v2598, %v2582
    %v4615 = vpack.c.b16 %v2599, %v2583
    %v4616 = vpack.c.b16 %v2600, %v2584
    %v4617 = vpack.c.b16 %v2601, %v2585
    %v4618 = vpack.c.b16 %v2602, %v2586
    %v4619 = vpack.c.b16 %v2603, %v2587
    %v4620 = vpack.c.b16 %v2604, %v2588
    %v4621 = vpack.c.b16 %v2605, %v2589
    %v4622 = vpack.c.b16 %v2606, %v2590
    %v4623 = vpack.c.b16 %v2607, %v2591
    %v4624 = vpack.c.b16 %v2608, %v2592
    %v4625 = vpack.c.b16 %v2609, %v2593
    %v4626 = vpack.c.b16 %v2626, %v2610
    %v4627 = vpack.c.b16 %v2627, %v2611
    %v4628 = vpack.c.b16 %v2628, %v2612
    %v4629 = vpack.c.b16 %v2629, %v2613
    %v4630 = vpack.c.b16 %v2630, %v2614
    %v4631 = vpack.c.b16 %v2631, %v2615
    %v4632 = vpack.c.b16 %v2632, %v2616
    %v4633 = vpack.c.b16 %v2633, %v2617
    %v4634 = vpack.c.b16 %v2634, %v2618
    %v4635 = vpack.c.b16 %v2635, %v2619
    %v4636 = vpack.c.b16 %v2636, %v2620
    %v4637 = vpack.c.b16 %v2637, %v2621
    %v4638 = vpack.c.b16 %v2638, %v2622
    %v4639 = vpack.c.b16 %v2639, %v2623
    %v4640 = vpack.c.b16 %v2640, %v2624
    %v4641 = vpack.c.b16 %v2641, %v2625
    %v4642 = vpack.c.b16 %v2658, %v2642
    %v4643 = vpack.c.b16 %v2659, %v2643
    %v4644 = vpack.c.b16 %v2660, %v2644
    %v4645 = vpack.c.b16 %v2661, %v2645
    %v4646 = vpack.c.b16 %v2662, %v2646
    %v4647 = vpack.c.b16 %v2663, %v2647
    %v4648 = vpack.c.b16 %v2664, %v2648
    %v4649 = vpack.c.b16 %v2665, %v2649
    %v4650 = vpack.c.b16 %v2666, %v2650
    %v4651 = vpack.c.b16 %v2667, %v2651
    %v4652 = vpack.c.b16 %v2668, %v2652
    %v4653 = vpack.c.b16 %v2669, %v2653
    %v4654 = vpack.c.b16 %v2670, %v2654
    %v4655 = vpack.c.b16 %v2671, %v2655
    %v4656 = vpack.c.b16 %v2672, %v2656
    %v4657 = vpack.c.b16 %v2673, %v2657
    %v4658 = vpack.c.b16 %v2690, %v2674
    %v4659 = vpack.c.b16 %v2691, %v2675
    %v4660 = vpack.c.b16 %v2692, %v2676
    %v4661 = vpack.c.b16 %v2693, %v2677
    %v4662 = vpack.c.b16 %v2694, %v2678
    %v4663 = vpack.c.b16 %v2695, %v2679
    %v4664 = vpack.c.b16 %v2696, %v2680
    %v4665 = vpack.c.b16 %v2697, %v2681
    %v4666 = vpack.c.b16 %v2698, %v2682
    %v4667 = vpack.c.b16 %v2699, %v2683
    %v4668 = vpack.c.b16 %v2700, %v2684
    %v4669 = vpack.c.b16 %v2701, %v2685
    %v4670 = vpack.c.b16 %v2702, %v2686
    %v4671 = vpack.c.b16 %v2703, %v2687
    %v4672 = vpack.c.b16 %v2704, %v2688
    %v4673 = vpack.c.b16 %v2705, %v2689
    %v4674 = vpack.c.b16 %v2722, %v2706
    %v4675 = vpack.c.b16 %v2723, %v2707
    %v4676 = vpack.c.b16 %v2724, %v2708
    %v4677 = vpack.c.b16 %v2725, %v2709
    %v4678 = vpack.c.b16 %v2726, %v2710
    %v4679 = vpack.c.b16 %v2727, %v2711
    %v4680 = vpack.c.b16 %v2728, %v2712
    %v4681 = vpack.c.b16 %v2729, %v2713
    %v4682 = vpack.c.b16 %v2730, %v2714
    %v4683 = vpack.c.b16 %v2731, %v2715
    %v4684 = vpack.c.b16 %v2732, %v2716
    %v4685 = vpack.c.b16 %v2733, %v2717
    %v4686 = vpack.c.b16 %v2734, %v2718
    %v4687 = vpack.c.b16 %v2735, %v2719
    %v4688 = vpack.c.b16 %v2736, %v2720
    %v4689 = vpack.c.b16 %v2737, %v2721
    %v4690 = vpack.c.b16 %v2754, %v2738
    %v4691 = vpack.c.b16 %v2755, %v2739
    %v4692 = vpack.c.b16 %v2756, %v2740
    %v4693 = vpack.c.b16 %v2757, %v2741
    %v4694 = vpack.c.b16 %v2758, %v2742
    %v4695 = vpack.c.b16 %v2759, %v2743
    %v4696 = vpack.c.b16 %v2760, %v2744
    %v4697 = vpack.c.b16 %v2761, %v2745
    %v4698 = vpack.c.b16 %v2762, %v2746
    %v4699 = vpack.c.b16 %v2763, %v2747
    %v4700 = vpack.c.b16 %v2764, %v2748
    %v4701 = vpack.c.b16 %v2765, %v2749
    %v4702 = vpack.c.b16 %v2766, %v2750
    %v4703 = vpack.c.b16 %v2767, %v2751
    %v4704 = vpack.c.b16 %v2768, %v2752
    %v4705 = vpack.c.b16 %v2769, %v2753
    %v4706 = vpack.c.b16 %v2786, %v2770
    %v4707 = vpack.c.b16 %v2787, %v2771
    %v4708 = vpack.c.b16 %v2788, %v2772
    %v4709 = vpack.c.b16 %v2789, %v2773
    %v4710 = vpack.c.b16 %v2790, %v2774
    %v4711 = vpack.c.b16 %v2791, %v2775
    %v4712 = vpack.c.b16 %v2792, %v2776
    %v4713 = vpack.c.b16 %v2793, %v2777
    %v4714 = vpack.c.b16 %v2794, %v2778
    %v4715 = vpack.c.b16 %v2795, %v2779
    %v4716 = vpack.c.b16 %v2796, %v2780
    %v4717 = vpack.c.b16 %v2797, %v2781
    %v4718 = vpack.c.b16 %v2798, %v2782
    %v4719 = vpack.c.b16 %v2799, %v2783
    %v4720 = vpack.c.b16 %v2800, %v2784
    %v4721 = vpack.c.b16 %v2801, %v2785
    %v4722 = vpack.c.b16 %v2818, %v2802
    %v4723 = vpack.c.b16 %v2819, %v2803
    %v4724 = vpack.c.b16 %v2820, %v2804
    %v4725 = vpack.c.b16 %v2821, %v2805
    %v4726 = vpack.c.b16 %v2822, %v2806
    %v4727 = vpack.c.b16 %v2823, %v2807
    %v4728 = vpack.c.b16 %v2824, %v2808
    %v4729 = vpack.c.b16 %v2825, %v2809
    %v4730 = vpack.c.b16 %v2826, %v2810
    %v4731 = vpack.c.b16 %v2827, %v2811
    %v4732 = vpack.c.b16 %v2828, %v2812
    %v4733 = vpack.c.b16 %v2829, %v2813
    %v4734 = vpack.c.b16 %v2830, %v2814
    %v4735 = vpack.c.b16 %v2831, %v2815
    %v4736 = vpack.c.b16 %v2832, %v2816
    %v4737 = vpack.c.b16 %v2833, %v2817
    %v4738 = vpack.c.b16 %v2850, %v2834
    %v4739 = vpack.c.b16 %v2851, %v2835
    %v4740 = vpack.c.b16 %v2852, %v2836
    %v4741 = vpack.c.b16 %v2853, %v2837
    %v4742 = vpack.c.b16 %v2854, %v2838
    %v4743 = vpack.c.b16 %v2855, %v2839
    %v4744 = vpack.c.b16 %v2856, %v2840
    %v4745 = vpack.c.b16 %v2857, %v2841
    %v4746 = vpack.c.b16 %v2858, %v2842
    %v4747 = vpack.c.b16 %v2859, %v2843
    %v4748 = vpack.c.b16 %v2860, %v2844
    %v4749 = vpack.c.b16 %v2861, %v2845
    %v4750 = vpack.c.b16 %v2862, %v2846
    %v4751 = vpack.c.b16 %v2863, %v2847
    %v4752 = vpack.c.b16 %v2864, %v2848
    %v4753 = vpack.c.b16 %v2865, %v2849
    %v4754 = vpack.c.b16 %v2882, %v2866
    %v4755 = vpack.c.b16 %v2883, %v2867
    %v4756 = vpack.c.b16 %v2884, %v2868
    %v4757 = vpack.c.b16 %v2885, %v2869
    %v4758 = vpack.c.b16 %v2886, %v2870
    %v4759 = vpack.c.b16 %v2887, %v2871
    %v4760 = vpack.c.b16 %v2888, %v2872
    %v4761 = vpack.c.b16 %v2889, %v2873
    %v4762 = vpack.c.b16 %v2890, %v2874
    %v4763 = vpack.c.b16 %v2891, %v2875
    %v4764 = vpack.c.b16 %v2892, %v2876
    %v4765 = vpack.c.b16 %v2893, %v2877
    %v4766 = vpack.c.b16 %v2894, %v2878
    %v4767 = vpack.c.b16 %v2895, %v2879
    %v4768 = vpack.c.b16 %v2896, %v2880
    %v4769 = vpack.c.b16 %v2897, %v2881
    %v4770 = vpack.c.b16 %v2914, %v2898
    %v4771 = vpack.c.b16 %v2915, %v2899
    %v4772 = vpack.c.b16 %v2916, %v2900
    %v4773 = vpack.c.b16 %v2917, %v2901
    %v4774 = vpack.c.b16 %v2918, %v2902
    %v4775 = vpack.c.b16 %v2919, %v2903
    %v4776 = vpack.c.b16 %v2920, %v2904
    %v4777 = vpack.c.b16 %v2921, %v2905
    %v4778 = vpack.c.b16 %v2922, %v2906
    %v4779 = vpack.c.b16 %v2923, %v2907
    %v4780 = vpack.c.b16 %v2924, %v2908
    %v4781 = vpack.c.b16 %v2925, %v2909
    %v4782 = vpack.c.b16 %v2926, %v2910
    %v4783 = vpack.c.b16 %v2927, %v2911
    %v4784 = vpack.c.b16 %v2928, %v2912
    %v4785 = vpack.c.b16 %v2929, %v2913
    %v4786 = vpack.c.b16 %v2946, %v2930
    %v4787 = vpack.c.b16 %v2947, %v2931
    %v4788 = vpack.c.b16 %v2948, %v2932
    %v4789 = vpack.c.b16 %v2949, %v2933
    %v4790 = vpack.c.b16 %v2950, %v2934
    %v4791 = vpack.c.b16 %v2951, %v2935
    %v4792 = vpack.c.b16 %v2952, %v2936
    %v4793 = vpack.c.b16 %v2953, %v2937
    %v4794 = vpack.c.b16 %v2954, %v2938
    %v4795 = vpack.c.b16 %v2955, %v2939
    %v4796 = vpack.c.b16 %v2956, %v2940
    %v4797 = vpack.c.b16 %v2957, %v2941
    %v4798 = vpack.c.b16 %v2958, %v2942
    %v4799 = vpack.c.b16 %v2959, %v2943
    %v4800 = vpack.c.b16 %v2960, %v2944
    %v4801 = vpack.c.b16 %v2961, %v2945
    %v4802 = vpack.c.b16 %v2978, %v2962
    %v4803 = vpack.c.b16 %v2979, %v2963
    %v4804 = vpack.c.b16 %v2980, %v2964
    %v4805 = vpack.c.b16 %v2981, %v2965
    %v4806 = vpack.c.b16 %v2982, %v2966
    %v4807 = vpack.c.b16 %v2983, %v2967
    %v4808 = vpack.c.b16 %v2984, %v2968
    %v4809 = vpack.c.b16 %v2985, %v2969
    %v4810 = vpack.c.b16 %v2986, %v2970
    %v4811 = vpack.c.b16 %v2987, %v2971
    %v4812 = vpack.c.b16 %v2988, %v2972
    %v4813 = vpack.c.b16 %v2989, %v2973
    %v4814 = vpack.c.b16 %v2990, %v2974
    %v4815 = vpack.c.b16 %v2991, %v2975
    %v4816 = vpack.c.b16 %v2992, %v2976
    %v4817 = vpack.c.b16 %v2993, %v2977
    %v4818 = vpack.c.b16 %v3010, %v2994
    %v4819 = vpack.c.b16 %v3011, %v2995
    %v4820 = vpack.c.b16 %v3012, %v2996
    %v4821 = vpack.c.b16 %v3013, %v2997
    %v4822 = vpack.c.b16 %v3014, %v2998
    %v4823 = vpack.c.b16 %v3015, %v2999
    %v4824 = vpack.c.b16 %v3016, %v3000
    %v4825 = vpack.c.b16 %v3017, %v3001
    %v4826 = vpack.c.b16 %v3018, %v3002
    %v4827 = vpack.c.b16 %v3019, %v3003
    %v4828 = vpack.c.b16 %v3020, %v3004
    %v4829 = vpack.c.b16 %v3021, %v3005
    %v4830 = vpack.c.b16 %v3022, %v3006
    %v4831 = vpack.c.b16 %v3023, %v3007
    %v4832 = vpack.c.b16 %v3024, %v3008
    %v4833 = vpack.c.b16 %v3025, %v3009
    %v4834 = vpack.c.b16 %v3042, %v3026
    %v4835 = vpack.c.b16 %v3043, %v3027
    %v4836 = vpack.c.b16 %v3044, %v3028
    %v4837 = vpack.c.b16 %v3045, %v3029
    %v4838 = vpack.c.b16 %v3046, %v3030
    %v4839 = vpack.c.b16 %v3047, %v3031
    %v4840 = vpack.c.b16 %v3048, %v3032
    %v4841 = vpack.c.b16 %v3049, %v3033
    %v4842 = vpack.c.b16 %v3050, %v3034
    %v4843 = vpack.c.b16 %v3051, %v3035
    %v4844 = vpack.c.b16 %v3052, %v3036
    %v4845 = vpack.c.b16 %v3053, %v3037
    %v4846 = vpack.c.b16 %v3054, %v3038
    %v4847 = vpack.c.b16 %v3055, %v3039
    %v4848 = vpack.c.b16 %v3056, %v3040
    %v4849 = vpack.c.b16 %v3057, %v3041
    %v4850 = vpack.c.b16 %v3074, %v3058
    %v4851 = vpack.c.b16 %v3075, %v3059
    %v4852 = vpack.c.b16 %v3076, %v3060
    %v4853 = vpack.c.b16 %v3077, %v3061
    %v4854 = vpack.c.b16 %v3078, %v3062
    %v4855 = vpack.c.b16 %v3079, %v3063
    %v4856 = vpack.c.b16 %v3080, %v3064
    %v4857 = vpack.c.b16 %v3081, %v3065
    %v4858 = vpack.c.b16 %v3082, %v3066
    %v4859 = vpack.c.b16 %v3083, %v3067
    %v4860 = vpack.c.b16 %v3084, %v3068
    %v4861 = vpack.c.b16 %v3085, %v3069
    %v4862 = vpack.c.b16 %v3086, %v3070
    %v4863 = vpack.c.b16 %v3087, %v3071
    %v4864 = vpack.c.b16 %v3088, %v3072
    %v4865 = vpack.c.b16 %v3089, %v3073
    %v4866 = vpack.c.b16 %v3106, %v3090
    %v4867 = vpack.c.b16 %v3107, %v3091
    %v4868 = vpack.c.b16 %v3108, %v3092
    %v4869 = vpack.c.b16 %v3109, %v3093
    %v4870 = vpack.c.b16 %v3110, %v3094
    %v4871 = vpack.c.b16 %v3111, %v3095
    %v4872 = vpack.c.b16 %v3112, %v3096
    %v4873 = vpack.c.b16 %v3113, %v3097
    %v4874 = vpack.c.b16 %v3114, %v3098
    %v4875 = vpack.c.b16 %v3115, %v3099
    %v4876 = vpack.c.b16 %v3116, %v3100
    %v4877 = vpack.c.b16 %v3117, %v3101
    %v4878 = vpack.c.b16 %v3118, %v3102
    %v4879 = vpack.c.b16 %v3119, %v3103
    %v4880 = vpack.c.b16 %v3120, %v3104
    %v4881 = vpack.c.b16 %v3121, %v3105
    %v4882 = vpack.c.b16 %v3138, %v3122
    %v4883 = vpack.c.b16 %v3139, %v3123
    %v4884 = vpack.c.b16 %v3140, %v3124
    %v4885 = vpack.c.b16 %v3141, %v3125
    %v4886 = vpack.c.b16 %v3142, %v3126
    %v4887 = vpack.c.b16 %v3143, %v3127
    %v4888 = vpack.c.b16 %v3144, %v3128
    %v4889 = vpack.c.b16 %v3145, %v3129
    %v4890 = vpack.c.b16 %v3146, %v3130
    %v4891 = vpack.c.b16 %v3147, %v3131
    %v4892 = vpack.c.b16 %v3148, %v3132
    %v4893 = vpack.c.b16 %v3149, %v3133
    %v4894 = vpack.c.b16 %v3150, %v3134
    %v4895 = vpack.c.b16 %v3151, %v3135
    %v4896 = vpack.c.b16 %v3152, %v3136
    %v4897 = vpack.c.b16 %v3153, %v3137
    %v4898 = vpack.c.b16 %v3170, %v3154
    %v4899 = vpack.c.b16 %v3171, %v3155
    %v4900 = vpack.c.b16 %v3172, %v3156
    %v4901 = vpack.c.b16 %v3173, %v3157
    %v4902 = vpack.c.b16 %v3174, %v3158
    %v4903 = vpack.c.b16 %v3175, %v3159
    %v4904 = vpack.c.b16 %v3176, %v3160
    %v4905 = vpack.c.b16 %v3177, %v3161
    %v4906 = vpack.c.b16 %v3178, %v3162
    %v4907 = vpack.c.b16 %v3179, %v3163
    %v4908 = vpack.c.b16 %v3180, %v3164
    %v4909 = vpack.c.b16 %v3181, %v3165
    %v4910 = vpack.c.b16 %v3182, %v3166
    %v4911 = vpack.c.b16 %v3183, %v3167
    %v4912 = vpack.c.b16 %v3184, %v3168
    %v4913 = vpack.c.b16 %v3185, %v3169
    %v4914 = vpack.c.b16 %v3202, %v3186
    %v4915 = vpack.c.b16 %v3203, %v3187
    %v4916 = vpack.c.b16 %v3204, %v3188
    %v4917 = vpack.c.b16 %v3205, %v3189
    %v4918 = vpack.c.b16 %v3206, %v3190
    %v4919 = vpack.c.b16 %v3207, %v3191
    %v4920 = vpack.c.b16 %v3208, %v3192
    %v4921 = vpack.c.b16 %v3209, %v3193
    %v4922 = vpack.c.b16 %v3210, %v3194
    %v4923 = vpack.c.b16 %v3211, %v3195
    %v4924 = vpack.c.b16 %v3212, %v3196
    %v4925 = vpack.c.b16 %v3213, %v3197
    %v4926 = vpack.c.b16 %v3214, %v3198
    %v4927 = vpack.c.b16 %v3215, %v3199
    %v4928 = vpack.c.b16 %v3216, %v3200
    %v4929 = vpack.c.b16 %v3217, %v3201
    %v4930 = vpack.c.b16 %v3234, %v3218
    %v4931 = vpack.c.b16 %v3235, %v3219
    %v4932 = vpack.c.b16 %v3236, %v3220
    %v4933 = vpack.c.b16 %v3237, %v3221
    %v4934 = vpack.c.b16 %v3238, %v3222
    %v4935 = vpack.c.b16 %v3239, %v3223
    %v4936 = vpack.c.b16 %v3240, %v3224
    %v4937 = vpack.c.b16 %v3241, %v3225
    %v4938 = vpack.c.b16 %v3242, %v3226
    %v4939 = vpack.c.b16 %v3243, %v3227
    %v4940 = vpack.c.b16 %v3244, %v3228
    %v4941 = vpack.c.b16 %v3245, %v3229
    %v4942 = vpack.c.b16 %v3246, %v3230
    %v4943 = vpack.c.b16 %v3247, %v3231
    %v4944 = vpack.c.b16 %v3248, %v3232
    %v4945 = vpack.c.b16 %v3249, %v3233
    %v4946 = vpack.c.b16 %v3266, %v3250
    %v4947 = vpack.c.b16 %v3267, %v3251
    %v4948 = vpack.c.b16 %v3268, %v3252
    %v4949 = vpack.c.b16 %v3269, %v3253
    %v4950 = vpack.c.b16 %v3270, %v3254
    %v4951 = vpack.c.b16 %v3271, %v3255
    %v4952 = vpack.c.b16 %v3272, %v3256
    %v4953 = vpack.c.b16 %v3273, %v3257
    %v4954 = vpack.c.b16 %v3274, %v3258
    %v4955 = vpack.c.b16 %v3275, %v3259
    %v4956 = vpack.c.b16 %v3276, %v3260
    %v4957 = vpack.c.b16 %v3277, %v3261
    %v4958 = vpack.c.b16 %v3278, %v3262
    %v4959 = vpack.c.b16 %v3279, %v3263
    %v4960 = vpack.c.b16 %v3280, %v3264
    %v4961 = vpack.c.b16 %v3281, %v3265
    %v4962 = vpack.c.b16 %v3298, %v3282
    %v4963 = vpack.c.b16 %v3299, %v3283
    %v4964 = vpack.c.b16 %v3300, %v3284
    %v4965 = vpack.c.b16 %v3301, %v3285
    %v4966 = vpack.c.b16 %v3302, %v3286
    %v4967 = vpack.c.b16 %v3303, %v3287
    %v4968 = vpack.c.b16 %v3304, %v3288
    %v4969 = vpack.c.b16 %v3305, %v3289
    %v4970 = vpack.c.b16 %v3306, %v3290
    %v4971 = vpack.c.b16 %v3307, %v3291
    %v4972 = vpack.c.b16 %v3308, %v3292
    %v4973 = vpack.c.b16 %v3309, %v3293
    %v4974 = vpack.c.b16 %v3310, %v3294
    %v4975 = vpack.c.b16 %v3311, %v3295
    %v4976 = vpack.c.b16 %v3312, %v3296
    %v4977 = vpack.c.b16 %v3313, %v3297
    %v4978 = vpack.c.b16 %v3330, %v3314
    %v4979 = vpack.c.b16 %v3331, %v3315
    %v4980 = vpack.c.b16 %v3332, %v3316
    %v4981 = vpack.c.b16 %v3333, %v3317
    %v4982 = vpack.c.b16 %v3334, %v3318
    %v4983 = vpack.c.b16 %v3335, %v3319
    %v4984 = vpack.c.b16 %v3336, %v3320
    %v4985 = vpack.c.b16 %v3337, %v3321
    %v4986 = vpack.c.b16 %v3338, %v3322
    %v4987 = vpack.c.b16 %v3339, %v3323
    %v4988 = vpack.c.b16 %v3340, %v3324
    %v4989 = vpack.c.b16 %v3341, %v3325
    %v4990 = vpack.c.b16 %v3342, %v3326
    %v4991 = vpack.c.b16 %v3343, %v3327
    %v4992 = vpack.c.b16 %v3344, %v3328
    %v4993 = vpack.c.b16 %v3345, %v3329
    %v4994 = vpack.c.b16 %v3362, %v3346
    %v4995 = vpack.c.b16 %v3363, %v3347
    %v4996 = vpack.c.b16 %v3364, %v3348
    %v4997 = vpack.c.b16 %v3365, %v3349
    %v4998 = vpack.c.b16 %v3366, %v3350
    %v4999 = vpack.c.b16 %v3367, %v3351
    %v5000 = vpack.c.b16 %v3368, %v3352
    %v5001 = vpack.c.b16 %v3369, %v3353
    %v5002 = vpack.c.b16 %v3370, %v3354
    %v5003 = vpack.c.b16 %v3371, %v3355
    %v5004 = vpack.c.b16 %v3372, %v3356
    %v5005 = vpack.c.b16 %v3373, %v3357
    %v5006 = vpack.c.b16 %v3374, %v3358
    %v5007 = vpack.c.b16 %v3375, %v3359
    %v5008 = vpack.c.b16 %v3376, %v3360
    %v5009 = vpack.c.b16 %v3377, %v3361
    %v5010 = vpack.c.b16 %v3394, %v3378
    %v5011 = vpack.c.b16 %v3395, %v3379
    %v5012 = vpack.c.b16 %v3396, %v3380
    %v5013 = vpack.c.b16 %v3397, %v3381
    %v5014 = vpack.c.b16 %v3398, %v3382
    %v5015 = vpack.c.b16 %v3399, %v3383
    %v5016 = vpack.c.b16 %v3400, %v3384
    %v5017 = vpack.c.b16 %v3401, %v3385
    %v5018 = vpack.c.b16 %v3402, %v3386
    %v5019 = vpack.c.b16 %v3403, %v3387
    %v5020 = vpack.c.b16 %v3404, %v3388
    %v5021 = vpack.c.b16 %v3405, %v3389
    %v5022 = vpack.c.b16 %v3406, %v3390
    %v5023 = vpack.c.b16 %v3407, %v3391
    %v5024 = vpack.c.b16 %v3408, %v3392
    %v5025 = vpack.c.b16 %v3409, %v3393
    %v5026 = vpack.c.b16 %v3426, %v3410
    %v5027 = vpack.c.b16 %v3427, %v3411
    %v5028 = vpack.c.b16 %v3428, %v3412
    %v5029 = vpack.c.b16 %v3429, %v3413
    %v5030 = vpack.c.b16 %v3430, %v3414
    %v5031 = vpack.c.b16 %v3431, %v3415
    %v5032 = vpack.c.b16 %v3432, %v3416
    %v5033 = vpack.c.b16 %v3433, %v3417
    %v5034 = vpack.c.b16 %v3434, %v3418
    %v5035 = vpack.c.b16 %v3435, %v3419
    %v5036 = vpack.c.b16 %v3436, %v3420
    %v5037 = vpack.c.b16 %v3437, %v3421
    %v5038 = vpack.c.b16 %v3438, %v3422
    %v5039 = vpack.c.b16 %v3439, %v3423
    %v5040 = vpack.c.b16 %v3440, %v3424
    %v5041 = vpack.c.b16 %v3441, %v3425
    %v5042 = vpack.c.b16 %v3458, %v3442
    %v5043 = vpack.c.b16 %v3459, %v3443
    %v5044 = vpack.c.b16 %v3460, %v3444
    %v5045 = vpack.c.b16 %v3461, %v3445
    %v5046 = vpack.c.b16 %v3462, %v3446
    %v5047 = vpack.c.b16 %v3463, %v3447
    %v5048 = vpack.c.b16 %v3464, %v3448
    %v5049 = vpack.c.b16 %v3465, %v3449
    %v5050 = vpack.c.b16 %v3466, %v3450
    %v5051 = vpack.c.b16 %v3467, %v3451
    %v5052 = vpack.c.b16 %v3468, %v3452
    %v5053 = vpack.c.b16 %v3469, %v3453
    %v5054 = vpack.c.b16 %v3470, %v3454
    %v5055 = vpack.c.b16 %v3471, %v3455
    %v5056 = vpack.c.b16 %v3472, %v3456
    %v5057 = vpack.c.b16 %v3473, %v3457
    %v5058 = vpack.c.b16 %v3490, %v3474
    %v5059 = vpack.c.b16 %v3491, %v3475
    %v5060 = vpack.c.b16 %v3492, %v3476
    %v5061 = vpack.c.b16 %v3493, %v3477
    %v5062 = vpack.c.b16 %v3494, %v3478
    %v5063 = vpack.c.b16 %v3495, %v3479
    %v5064 = vpack.c.b16 %v3496, %v3480
    %v5065 = vpack.c.b16 %v3497, %v3481
    %v5066 = vpack.c.b16 %v3498, %v3482
    %v5067 = vpack.c.b16 %v3499, %v3483
    %v5068 = vpack.c.b16 %v3500, %v3484
    %v5069 = vpack.c.b16 %v3501, %v3485
    %v5070 = vpack.c.b16 %v3502, %v3486
    %v5071 = vpack.c.b16 %v3503, %v3487
    %v5072 = vpack.c.b16 %v3504, %v3488
    %v5073 = vpack.c.b16 %v3505, %v3489
    %v5074 = vpack.c.b16 %v3522, %v3506
    %v5075 = vpack.c.b16 %v3523, %v3507
    %v5076 = vpack.c.b16 %v3524, %v3508
    %v5077 = vpack.c.b16 %v3525, %v3509
    %v5078 = vpack.c.b16 %v3526, %v3510
    %v5079 = vpack.c.b16 %v3527, %v3511
    %v5080 = vpack.c.b16 %v3528, %v3512
    %v5081 = vpack.c.b16 %v3529, %v3513
    %v5082 = vpack.c.b16 %v3530, %v3514
    %v5083 = vpack.c.b16 %v3531, %v3515
    %v5084 = vpack.c.b16 %v3532, %v3516
    %v5085 = vpack.c.b16 %v3533, %v3517
    %v5086 = vpack.c.b16 %v3534, %v3518
    %v5087 = vpack.c.b16 %v3535, %v3519
    %v5088 = vpack.c.b16 %v3536, %v3520
    %v5089 = vpack.c.b16 %v3537, %v3521
    %v5090 = vpack.c.b16 %v3554, %v3538
    %v5091 = vpack.c.b16 %v3555, %v3539
    %v5092 = vpack.c.b16 %v3556, %v3540
    %v5093 = vpack.c.b16 %v3557, %v3541
    %v5094 = vpack.c.b16 %v3558, %v3542
    %v5095 = vpack.c.b16 %v3559, %v3543
    %v5096 = vpack.c.b16 %v3560, %v3544
    %v5097 = vpack.c.b16 %v3561, %v3545
    %v5098 = vpack.c.b16 %v3562, %v3546
    %v5099 = vpack.c.b16 %v3563, %v3547
    %v5100 = vpack.c.b16 %v3564, %v3548
    %v5101 = vpack.c.b16 %v3565, %v3549
    %v5102 = vpack.c.b16 %v3566, %v3550
    %v5103 = vpack.c.b16 %v3567, %v3551
    %v5104 = vpack.c.b16 %v3568, %v3552
    %v5105 = vpack.c.b16 %v3569, %v3553
    %v5106 = vpack.c.b16 %v3586, %v3570
    %v5107 = vpack.c.b16 %v3587, %v3571
    %v5108 = vpack.c.b16 %v3588, %v3572
    %v5109 = vpack.c.b16 %v3589, %v3573
    %v5110 = vpack.c.b16 %v3590, %v3574
    %v5111 = vpack.c.b16 %v3591, %v3575
    %v5112 = vpack.c.b16 %v3592, %v3576
    %v5113 = vpack.c.b16 %v3593, %v3577
    %v5114 = vpack.c.b16 %v3594, %v3578
    %v5115 = vpack.c.b16 %v3595, %v3579
    %v5116 = vpack.c.b16 %v3596, %v3580
    %v5117 = vpack.c.b16 %v3597, %v3581
    %v5118 = vpack.c.b16 %v3598, %v3582
    %v5119 = vpack.c.b16 %v3599, %v3583
    %v5120 = vpack.c.b16 %v3600, %v3584
    %v5121 = vpack.c.b16 %v3601, %v3585
    %v5122 = vpack.c.b16 %v3618, %v3602
    %v5123 = vpack.c.b16 %v3619, %v3603
    %v5124 = vpack.c.b16 %v3620, %v3604
    %v5125 = vpack.c.b16 %v3621, %v3605
    %v5126 = vpack.c.b16 %v3622, %v3606
    %v5127 = vpack.c.b16 %v3623, %v3607
    %v5128 = vpack.c.b16 %v3624, %v3608
    %v5129 = vpack.c.b16 %v3625, %v3609
    %v5130 = vpack.c.b16 %v3626, %v3610
    %v5131 = vpack.c.b16 %v3627, %v3611
    %v5132 = vpack.c.b16 %v3628, %v3612
    %v5133 = vpack.c.b16 %v3629, %v3613
    %v5134 = vpack.c.b16 %v3630, %v3614
    %v5135 = vpack.c.b16 %v3631, %v3615
    %v5136 = vpack.c.b16 %v3632, %v3616
    %v5137 = vpack.c.b16 %v3633, %v3617
    %v5138 = vpack.c.b16 %v3650, %v3634
    %v5139 = vpack.c.b16 %v3651, %v3635
    %v5140 = vpack.c.b16 %v3652, %v3636
    %v5141 = vpack.c.b16 %v3653, %v3637
    %v5142 = vpack.c.b16 %v3654, %v3638
    %v5143 = vpack.c.b16 %v3655, %v3639
    %v5144 = vpack.c.b16 %v3656, %v3640
    %v5145 = vpack.c.b16 %v3657, %v3641
    %v5146 = vpack.c.b16 %v3658, %v3642
    %v5147 = vpack.c.b16 %v3659, %v3643
    %v5148 = vpack.c.b16 %v3660, %v3644
    %v5149 = vpack.c.b16 %v3661, %v3645
    %v5150 = vpack.c.b16 %v3662, %v3646
    %v5151 = vpack.c.b16 %v3663, %v3647
    %v5152 = vpack.c.b16 %v3664, %v3648
    %v5153 = vpack.c.b16 %v3665, %v3649
    %v5154 = vpack.c.b16 %v3682, %v3666
    %v5155 = vpack.c.b16 %v3683, %v3667
    %v5156 = vpack.c.b16 %v3684, %v3668
    %v5157 = vpack.c.b16 %v3685, %v3669
    %v5158 = vpack.c.b16 %v3686, %v3670
    %v5159 = vpack.c.b16 %v3687, %v3671
    %v5160 = vpack.c.b16 %v3688, %v3672
    %v5161 = vpack.c.b16 %v3689, %v3673
    %v5162 = vpack.c.b16 %v3690, %v3674
    %v5163 = vpack.c.b16 %v3691, %v3675
    %v5164 = vpack.c.b16 %v3692, %v3676
    %v5165 = vpack.c.b16 %v3693, %v3677
    %v5166 = vpack.c.b16 %v3694, %v3678
    %v5167 = vpack.c.b16 %v3695, %v3679
    %v5168 = vpack.c.b16 %v3696, %v3680
    %v5169 = vpack.c.b16 %v3697, %v3681
    %v5170 = vpack.c.b16 %v3714, %v3698
    %v5171 = vpack.c.b16 %v3715, %v3699
    %v5172 = vpack.c.b16 %v3716, %v3700
    %v5173 = vpack.c.b16 %v3717, %v3701
    %v5174 = vpack.c.b16 %v3718, %v3702
    %v5175 = vpack.c.b16 %v3719, %v3703
    %v5176 = vpack.c.b16 %v3720, %v3704
    %v5177 = vpack.c.b16 %v3721, %v3705
    %v5178 = vpack.c.b16 %v3722, %v3706
    %v5179 = vpack.c.b16 %v3723, %v3707
    %v5180 = vpack.c.b16 %v3724, %v3708
    %v5181 = vpack.c.b16 %v3725, %v3709
    %v5182 = vpack.c.b16 %v3726, %v3710
    %v5183 = vpack.c.b16 %v3727, %v3711
    %v5184 = vpack.c.b16 %v3728, %v3712
    %v5185 = vpack.c.b16 %v3729, %v3713
    %v5186 = vpack.c.b16 %v3746, %v3730
    %v5187 = vpack.c.b16 %v3747, %v3731
    %v5188 = vpack.c.b16 %v3748, %v3732
    %v5189 = vpack.c.b16 %v3749, %v3733
    %v5190 = vpack.c.b16 %v3750, %v3734
    %v5191 = vpack.c.b16 %v3751, %v3735
    %v5192 = vpack.c.b16 %v3752, %v3736
    %v5193 = vpack.c.b16 %v3753, %v3737
    %v5194 = vpack.c.b16 %v3754, %v3738
    %v5195 = vpack.c.b16 %v3755, %v3739
    %v5196 = vpack.c.b16 %v3756, %v3740
    %v5197 = vpack.c.b16 %v3757, %v3741
    %v5198 = vpack.c.b16 %v3758, %v3742
    %v5199 = vpack.c.b16 %v3759, %v3743
    %v5200 = vpack.c.b16 %v3760, %v3744
    %v5201 = vpack.c.b16 %v3761, %v3745
    %v5202 = vpack.c.b16 %v3778, %v3762
    %v5203 = vpack.c.b16 %v3779, %v3763
    %v5204 = vpack.c.b16 %v3780, %v3764
    %v5205 = vpack.c.b16 %v3781, %v3765
    %v5206 = vpack.c.b16 %v3782, %v3766
    %v5207 = vpack.c.b16 %v3783, %v3767
    %v5208 = vpack.c.b16 %v3784, %v3768
    %v5209 = vpack.c.b16 %v3785, %v3769
    %v5210 = vpack.c.b16 %v3786, %v3770
    %v5211 = vpack.c.b16 %v3787, %v3771
    %v5212 = vpack.c.b16 %v3788, %v3772
    %v5213 = vpack.c.b16 %v3789, %v3773
    %v5214 = vpack.c.b16 %v3790, %v3774
    %v5215 = vpack.c.b16 %v3791, %v3775
    %v5216 = vpack.c.b16 %v3792, %v3776
    %v5217 = vpack.c.b16 %v3793, %v3777
    %v5218 = vpack.c.b16 %v3810, %v3794
    %v5219 = vpack.c.b16 %v3811, %v3795
    %v5220 = vpack.c.b16 %v3812, %v3796
    %v5221 = vpack.c.b16 %v3813, %v3797
    %v5222 = vpack.c.b16 %v3814, %v3798
    %v5223 = vpack.c.b16 %v3815, %v3799
    %v5224 = vpack.c.b16 %v3816, %v3800
    %v5225 = vpack.c.b16 %v3817, %v3801
    %v5226 = vpack.c.b16 %v3818, %v3802
    %v5227 = vpack.c.b16 %v3819, %v3803
    %v5228 = vpack.c.b16 %v3820, %v3804
    %v5229 = vpack.c.b16 %v3821, %v3805
    %v5230 = vpack.c.b16 %v3822, %v3806
    %v5231 = vpack.c.b16 %v3823, %v3807
    %v5232 = vpack.c.b16 %v3824, %v3808
    %v5233 = vpack.c.b16 %v3825, %v3809
    %v5234 = vpack.c.b16 %v3842, %v3826
    %v5235 = vpack.c.b16 %v3843, %v3827
    %v5236 = vpack.c.b16 %v3844, %v3828
    %v5237 = vpack.c.b16 %v3845, %v3829
    %v5238 = vpack.c.b16 %v3846, %v3830
    %v5239 = vpack.c.b16 %v3847, %v3831
    %v5240 = vpack.c.b16 %v3848, %v3832
    %v5241 = vpack.c.b16 %v3849, %v3833
    %v5242 = vpack.c.b16 %v3850, %v3834
    %v5243 = vpack.c.b16 %v3851, %v3835
    %v5244 = vpack.c.b16 %v3852, %v3836
    %v5245 = vpack.c.b16 %v3853, %v3837
    %v5246 = vpack.c.b16 %v3854, %v3838
    %v5247 = vpack.c.b16 %v3855, %v3839
    %v5248 = vpack.c.b16 %v3856, %v3840
    %v5249 = vpack.c.b16 %v3857, %v3841
    %v5250 = vpack.c.b16 %v3874, %v3858
    %v5251 = vpack.c.b16 %v3875, %v3859
    %v5252 = vpack.c.b16 %v3876, %v3860
    %v5253 = vpack.c.b16 %v3877, %v3861
    %v5254 = vpack.c.b16 %v3878, %v3862
    %v5255 = vpack.c.b16 %v3879, %v3863
    %v5256 = vpack.c.b16 %v3880, %v3864
    %v5257 = vpack.c.b16 %v3881, %v3865
    %v5258 = vpack.c.b16 %v3882, %v3866
    %v5259 = vpack.c.b16 %v3883, %v3867
    %v5260 = vpack.c.b16 %v3884, %v3868
    %v5261 = vpack.c.b16 %v3885, %v3869
    %v5262 = vpack.c.b16 %v3886, %v3870
    %v5263 = vpack.c.b16 %v3887, %v3871
    %v5264 = vpack.c.b16 %v3888, %v3872
    %v5265 = vpack.c.b16 %v3889, %v3873
    %v5266 = vpack.c.b16 %v3906, %v3890
    %v5267 = vpack.c.b16 %v3907, %v3891
    %v5268 = vpack.c.b16 %v3908, %v3892
    %v5269 = vpack.c.b16 %v3909, %v3893
    %v5270 = vpack.c.b16 %v3910, %v3894
    %v5271 = vpack.c.b16 %v3911, %v3895
    %v5272 = vpack.c.b16 %v3912, %v3896
    %v5273 = vpack.c.b16 %v3913, %v3897
    %v5274 = vpack.c.b16 %v3914, %v3898
    %v5275 = vpack.c.b16 %v3915, %v3899
    %v5276 = vpack.c.b16 %v3916, %v3900
    %v5277 = vpack.c.b16 %v3917, %v3901
    %v5278 = vpack.c.b16 %v3918, %v3902
    %v5279 = vpack.c.b16 %v3919, %v3903
    %v5280 = vpack.c.b16 %v3920, %v3904
    %v5281 = vpack.c.b16 %v3921, %v3905
    %v5282 = vpack.c.b16 %v3938, %v3922
    %v5283 = vpack.c.b16 %v3939, %v3923
    %v5284 = vpack.c.b16 %v3940, %v3924
    %v5285 = vpack.c.b16 %v3941, %v3925
    %v5286 = vpack.c.b16 %v3942, %v3926
    %v5287 = vpack.c.b16 %v3943, %v3927
    %v5288 = vpack.c.b16 %v3944, %v3928
    %v5289 = vpack.c.b16 %v3945, %v3929
    %v5290 = vpack.c.b16 %v3946, %v3930
    %v5291 = vpack.c.b16 %v3947, %v3931
    %v5292 = vpack.c.b16 %v3948, %v3932
    %v5293 = vpack.c.b16 %v3949, %v3933
    %v5294 = vpack.c.b16 %v3950, %v3934
    %v5295 = vpack.c.b16 %v3951, %v3935
    %v5296 = vpack.c.b16 %v3952, %v3936
    %v5297 = vpack.c.b16 %v3953, %v3937
    %v5298 = vpack.c.b16 %v3970, %v3954
    %v5299 = vpack.c.b16 %v3971, %v3955
    %v5300 = vpack.c.b16 %v3972, %v3956
    %v5301 = vpack.c.b16 %v3973, %v3957
    %v5302 = vpack.c.b16 %v3974, %v3958
    %v5303 = vpack.c.b16 %v3975, %v3959
    %v5304 = vpack.c.b16 %v3976, %v3960
    %v5305 = vpack.c.b16 %v3977, %v3961
    %v5306 = vpack.c.b16 %v3978, %v3962
    %v5307 = vpack.c.b16 %v3979, %v3963
    %v5308 = vpack.c.b16 %v3980, %v3964
    %v5309 = vpack.c.b16 %v3981, %v3965
    %v5310 = vpack.c.b16 %v3982, %v3966
    %v5311 = vpack.c.b16 %v3983, %v3967
    %v5312 = vpack.c.b16 %v3984, %v3968
    %v5313 = vpack.c.b16 %v3985, %v3969
    %v5314 = vpack.c.b16 %v4002, %v3986
    %v5315 = vpack.c.b16 %v4003, %v3987
    %v5316 = vpack.c.b16 %v4004, %v3988
    %v5317 = vpack.c.b16 %v4005, %v3989
    %v5318 = vpack.c.b16 %v4006, %v3990
    %v5319 = vpack.c.b16 %v4007, %v3991
    %v5320 = vpack.c.b16 %v4008, %v3992
    %v5321 = vpack.c.b16 %v4009, %v3993
    %v5322 = vpack.c.b16 %v4010, %v3994
    %v5323 = vpack.c.b16 %v4011, %v3995
    %v5324 = vpack.c.b16 %v4012, %v3996
    %v5325 = vpack.c.b16 %v4013, %v3997
    %v5326 = vpack.c.b16 %v4014, %v3998
    %v5327 = vpack.c.b16 %v4015, %v3999
    %v5328 = vpack.c.b16 %v4016, %v4000
    %v5329 = vpack.c.b16 %v4017, %v4001
    %v5330 = vpack.c.b16 %v4034, %v4018
    %v5331 = vpack.c.b16 %v4035, %v4019
    %v5332 = vpack.c.b16 %v4036, %v4020
    %v5333 = vpack.c.b16 %v4037, %v4021
    %v5334 = vpack.c.b16 %v4038, %v4022
    %v5335 = vpack.c.b16 %v4039, %v4023
    %v5336 = vpack.c.b16 %v4040, %v4024
    %v5337 = vpack.c.b16 %v4041, %v4025
    %v5338 = vpack.c.b16 %v4042, %v4026
    %v5339 = vpack.c.b16 %v4043, %v4027
    %v5340 = vpack.c.b16 %v4044, %v4028
    %v5341 = vpack.c.b16 %v4045, %v4029
    %v5342 = vpack.c.b16 %v4046, %v4030
    %v5343 = vpack.c.b16 %v4047, %v4031
    %v5344 = vpack.c.b16 %v4048, %v4032
    %v5345 = vpack.c.b16 %v4049, %v4033
    %v5346 = vpack.c.b16 %v4066, %v4050
    %v5347 = vpack.c.b16 %v4067, %v4051
    %v5348 = vpack.c.b16 %v4068, %v4052
    %v5349 = vpack.c.b16 %v4069, %v4053
    %v5350 = vpack.c.b16 %v4070, %v4054
    %v5351 = vpack.c.b16 %v4071, %v4055
    %v5352 = vpack.c.b16 %v4072, %v4056
    %v5353 = vpack.c.b16 %v4073, %v4057
    %v5354 = vpack.c.b16 %v4074, %v4058
    %v5355 = vpack.c.b16 %v4075, %v4059
    %v5356 = vpack.c.b16 %v4076, %v4060
    %v5357 = vpack.c.b16 %v4077, %v4061
    %v5358 = vpack.c.b16 %v4078, %v4062
    %v5359 = vpack.c.b16 %v4079, %v4063
    %v5360 = vpack.c.b16 %v4080, %v4064
    %v5361 = vpack.c.b16 %v4081, %v4065
    %v5362 = vpack.c.b16 %v4098, %v4082
    %v5363 = vpack.c.b16 %v4099, %v4083
    %v5364 = vpack.c.b16 %v4100, %v4084
    %v5365 = vpack.c.b16 %v4101, %v4085
    %v5366 = vpack.c.b16 %v4102, %v4086
    %v5367 = vpack.c.b16 %v4103, %v4087
    %v5368 = vpack.c.b16 %v4104, %v4088
    %v5369 = vpack.c.b16 %v4105, %v4089
    %v5370 = vpack.c.b16 %v4106, %v4090
    %v5371 = vpack.c.b16 %v4107, %v4091
    %v5372 = vpack.c.b16 %v4108, %v4092
    %v5373 = vpack.c.b16 %v4109, %v4093
    %v5374 = vpack.c.b16 %v4110, %v4094
    %v5375 = vpack.c.b16 %v4111, %v4095
    %v5376 = vpack.c.b16 %v4112, %v4096
    %v5377 = vpack.c.b16 %v4113, %v4097
    %v5378 = vpack.c.b16 %v4130, %v4114
    %v5379 = vpack.c.b16 %v4131, %v4115
    %v5380 = vpack.c.b16 %v4132, %v4116
    %v5381 = vpack.c.b16 %v4133, %v4117
    %v5382 = vpack.c.b16 %v4134, %v4118
    %v5383 = vpack.c.b16 %v4135, %v4119
    %v5384 = vpack.c.b16 %v4136, %v4120
    %v5385 = vpack.c.b16 %v4137, %v4121
    %v5386 = vpack.c.b16 %v4138, %v4122
    %v5387 = vpack.c.b16 %v4139, %v4123
    %v5388 = vpack.c.b16 %v4140, %v4124
    %v5389 = vpack.c.b16 %v4141, %v4125
    %v5390 = vpack.c.b16 %v4142, %v4126
    %v5391 = vpack.c.b16 %v4143, %v4127
    %v5392 = vpack.c.b16 %v4144, %v4128
    %v5393 = vpack.c.b16 %v4145, %v4129
    %v5394 = vpack.c.b16 %v4162, %v4146
    %v5395 = vpack.c.b16 %v4163, %v4147
    %v5396 = vpack.c.b16 %v4164, %v4148
    %v5397 = vpack.c.b16 %v4165, %v4149
    %v5398 = vpack.c.b16 %v4166, %v4150
    %v5399 = vpack.c.b16 %v4167, %v4151
    %v5400 = vpack.c.b16 %v4168, %v4152
    %v5401 = vpack.c.b16 %v4169, %v4153
    %v5402 = vpack.c.b16 %v4170, %v4154
    %v5403 = vpack.c.b16 %v4171, %v4155
    %v5404 = vpack.c.b16 %v4172, %v4156
    %v5405 = vpack.c.b16 %v4173, %v4157
    %v5406 = vpack.c.b16 %v4174, %v4158
    %v5407 = vpack.c.b16 %v4175, %v4159
    %v5408 = vpack.c.b16 %v4176, %v4160
    %v5409 = vpack.c.b16 %v4177, %v4161
    %v5410 = vpack.c.b16 %v4194, %v4178
    %v5411 = vpack.c.b16 %v4195, %v4179
    %v5412 = vpack.c.b16 %v4196, %v4180
    %v5413 = vpack.c.b16 %v4197, %v4181
    %v5414 = vpack.c.b16 %v4198, %v4182
    %v5415 = vpack.c.b16 %v4199, %v4183
    %v5416 = vpack.c.b16 %v4200, %v4184
    %v5417 = vpack.c.b16 %v4201, %v4185
    %v5418 = vpack.c.b16 %v4202, %v4186
    %v5419 = vpack.c.b16 %v4203, %v4187
    %v5420 = vpack.c.b16 %v4204, %v4188
    %v5421 = vpack.c.b16 %v4205, %v4189
    %v5422 = vpack.c.b16 %v4206, %v4190
    %v5423 = vpack.c.b16 %v4207, %v4191
    %v5424 = vpack.c.b16 %v4208, %v4192
    %v5425 = vpack.c.b16 %v4209, %v4193
    %v5426 = vpack.c.b16 %v4226, %v4210
    %v5427 = vpack.c.b16 %v4227, %v4211
    %v5428 = vpack.c.b16 %v4228, %v4212
    %v5429 = vpack.c.b16 %v4229, %v4213
    %v5430 = vpack.c.b16 %v4230, %v4214
    %v5431 = vpack.c.b16 %v4231, %v4215
    %v5432 = vpack.c.b16 %v4232, %v4216
    %v5433 = vpack.c.b16 %v4233, %v4217
    %v5434 = vpack.c.b16 %v4234, %v4218
    %v5435 = vpack.c.b16 %v4235, %v4219
    %v5436 = vpack.c.b16 %v4236, %v4220
    %v5437 = vpack.c.b16 %v4237, %v4221
    %v5438 = vpack.c.b16 %v4238, %v4222
    %v5439 = vpack.c.b16 %v4239, %v4223
    %v5440 = vpack.c.b16 %v4240, %v4224
    %v5441 = vpack.c.b16 %v4241, %v4225
    %v5442 = vpack.c.b16 %v4258, %v4242
    %v5443 = vpack.c.b16 %v4259, %v4243
    %v5444 = vpack.c.b16 %v4260, %v4244
    %v5445 = vpack.c.b16 %v4261, %v4245
    %v5446 = vpack.c.b16 %v4262, %v4246
    %v5447 = vpack.c.b16 %v4263, %v4247
    %v5448 = vpack.c.b16 %v4264, %v4248
    %v5449 = vpack.c.b16 %v4265, %v4249
    %v5450 = vpack.c.b16 %v4266, %v4250
    %v5451 = vpack.c.b16 %v4267, %v4251
    %v5452 = vpack.c.b16 %v4268, %v4252
    %v5453 = vpack.c.b16 %v4269, %v4253
    %v5454 = vpack.c.b16 %v4270, %v4254
    %v5455 = vpack.c.b16 %v4271, %v4255
    %v5456 = vpack.c.b16 %v4272, %v4256
    %v5457 = vpack.c.b16 %v4273, %v4257
    %v5458 = vpack.c.b16 %v4290, %v4274
    %v5459 = vpack.c.b16 %v4291, %v4275
    %v5460 = vpack.c.b16 %v4292, %v4276
    %v5461 = vpack.c.b16 %v4293, %v4277
    %v5462 = vpack.c.b16 %v4294, %v4278
    %v5463 = vpack.c.b16 %v4295, %v4279
    %v5464 = vpack.c.b16 %v4296, %v4280
    %v5465 = vpack.c.b16 %v4297, %v4281
    %v5466 = vpack.c.b16 %v4298, %v4282
    %v5467 = vpack.c.b16 %v4299, %v4283
    %v5468 = vpack.c.b16 %v4300, %v4284
    %v5469 = vpack.c.b16 %v4301, %v4285
    %v5470 = vpack.c.b16 %v4302, %v4286
    %v5471 = vpack.c.b16 %v4303, %v4287
    %v5472 = vpack.c.b16 %v4304, %v4288
    %v5473 = vpack.c.b16 %v4305, %v4289
    %v5474 = vpack.c.b16 %v4322, %v4306
    %v5475 = vpack.c.b16 %v4323, %v4307
    %v5476 = vpack.c.b16 %v4324, %v4308
    %v5477 = vpack.c.b16 %v4325, %v4309
    %v5478 = vpack.c.b16 %v4326, %v4310
    %v5479 = vpack.c.b16 %v4327, %v4311
    %v5480 = vpack.c.b16 %v4328, %v4312
    %v5481 = vpack.c.b16 %v4329, %v4313
    %v5482 = vpack.c.b16 %v4330, %v4314
    %v5483 = vpack.c.b16 %v4331, %v4315
    %v5484 = vpack.c.b16 %v4332, %v4316
    %v5485 = vpack.c.b16 %v4333, %v4317
    %v5486 = vpack.c.b16 %v4334, %v4318
    %v5487 = vpack.c.b16 %v4335, %v4319
    %v5488 = vpack.c.b16 %v4336, %v4320
    %v5489 = vpack.c.b16 %v4337, %v4321
    %v5490 = vpack.c.b16 %v4354, %v4338
    %v5491 = vpack.c.b16 %v4355, %v4339
    %v5492 = vpack.c.b16 %v4356, %v4340
    %v5493 = vpack.c.b16 %v4357, %v4341
    %v5494 = vpack.c.b16 %v4358, %v4342
    %v5495 = vpack.c.b16 %v4359, %v4343
    %v5496 = vpack.c.b16 %v4360, %v4344
    %v5497 = vpack.c.b16 %v4361, %v4345
    %v5498 = vpack.c.b16 %v4362, %v4346
    %v5499 = vpack.c.b16 %v4363, %v4347
    %v5500 = vpack.c.b16 %v4364, %v4348
    %v5501 = vpack.c.b16 %v4365, %v4349
    %v5502 = vpack.c.b16 %v4366, %v4350
    %v5503 = vpack.c.b16 %v4367, %v4351
    %v5504 = vpack.c.b16 %v4368, %v4352
    %v5505 = vpack.c.b16 %v4369, %v4353
    %v5506 = vpack.c.b16 %v4386, %v4370
    %v5507 = vpack.c.b16 %v4387, %v4371
    %v5508 = vpack.c.b16 %v4388, %v4372
    %v5509 = vpack.c.b16 %v4389, %v4373
    %v5510 = vpack.c.b16 %v4390, %v4374
    %v5511 = vpack.c.b16 %v4391, %v4375
    %v5512 = vpack.c.b16 %v4392, %v4376
    %v5513 = vpack.c.b16 %v4393, %v4377
    %v5514 = vpack.c.b16 %v4394, %v4378
    %v5515 = vpack.c.b16 %v4395, %v4379
    %v5516 = vpack.c.b16 %v4396, %v4380
    %v5517 = vpack.c.b16 %v4397, %v4381
    %v5518 = vpack.c.b16 %v4398, %v4382
    %v5519 = vpack.c.b16 %v4399, %v4383
    %v5520 = vpack.c.b16 %v4400, %v4384
    %v5521 = vpack.c.b16 %v4401, %v4385
    %v5522 = vpack.c.b16 %v4418, %v4402
    %v5523 = vpack.c.b16 %v4419, %v4403
    %v5524 = vpack.c.b16 %v4420, %v4404
    %v5525 = vpack.c.b16 %v4421, %v4405
    %v5526 = vpack.c.b16 %v4422, %v4406
    %v5527 = vpack.c.b16 %v4423, %v4407
    %v5528 = vpack.c.b16 %v4424, %v4408
    %v5529 = vpack.c.b16 %v4425, %v4409
    %v5530 = vpack.c.b16 %v4426, %v4410
    %v5531 = vpack.c.b16 %v4427, %v4411
    %v5532 = vpack.c.b16 %v4428, %v4412
    %v5533 = vpack.c.b16 %v4429, %v4413
    %v5534 = vpack.c.b16 %v4430, %v4414
    %v5535 = vpack.c.b16 %v4431, %v4415
    %v5536 = vpack.c.b16 %v4432, %v4416
    %v5537 = vpack.c.b16 %v4433, %v4417
    %v5538 = vpack.c.b16 %v4450, %v4434
    %v5539 = vpack.c.b16 %v4451, %v4435
    %v5540 = vpack.c.b16 %v4452, %v4436
    %v5541 = vpack.c.b16 %v4453, %v4437
    %v5542 = vpack.c.b16 %v4454, %v4438
    %v5543 = vpack.c.b16 %v4455, %v4439
    %v5544 = vpack.c.b16 %v4456, %v4440
    %v5545 = vpack.c.b16 %v4457, %v4441
    %v5546 = vpack.c.b16 %v4458, %v4442
    %v5547 = vpack.c.b16 %v4459, %v4443
    %v5548 = vpack.c.b16 %v4460, %v4444
    %v5549 = vpack.c.b16 %v4461, %v4445
    %v5550 = vpack.c.b16 %v4462, %v4446
    %v5551 = vpack.c.b16 %v4463, %v4447
    %v5552 = vpack.c.b16 %v4464, %v4448
    %v5553 = vpack.c.b16 %v4465, %v4449
    %v5554 = vpack.c.b16 %v4482, %v4466
    %v5555 = vpack.c.b16 %v4483, %v4467
    %v5556 = vpack.c.b16 %v4484, %v4468
    %v5557 = vpack.c.b16 %v4485, %v4469
    %v5558 = vpack.c.b16 %v4486, %v4470
    %v5559 = vpack.c.b16 %v4487, %v4471
    %v5560 = vpack.c.b16 %v4488, %v4472
    %v5561 = vpack.c.b16 %v4489, %v4473
    %v5562 = vpack.c.b16 %v4490, %v4474
    %v5563 = vpack.c.b16 %v4491, %v4475
    %v5564 = vpack.c.b16 %v4492, %v4476
    %v5565 = vpack.c.b16 %v4493, %v4477
    %v5566 = vpack.c.b16 %v4494, %v4478
    %v5567 = vpack.c.b16 %v4495, %v4479
    %v5568 = vpack.c.b16 %v4496, %v4480
    %v5569 = vpack.c.b16 %v4497, %v4481
    %v5570 = vpack.c.b16 %v4514, %v4498
    %v5571 = vpack.c.b16 %v4515, %v4499
    %v5572 = vpack.c.b16 %v4516, %v4500
    %v5573 = vpack.c.b16 %v4517, %v4501
    %v5574 = vpack.c.b16 %v4518, %v4502
    %v5575 = vpack.c.b16 %v4519, %v4503
    %v5576 = vpack.c.b16 %v4520, %v4504
    %v5577 = vpack.c.b16 %v4521, %v4505
    %v5578 = vpack.c.b16 %v4522, %v4506
    %v5579 = vpack.c.b16 %v4523, %v4507
    %v5580 = vpack.c.b16 %v4524, %v4508
    %v5581 = vpack.c.b16 %v4525, %v4509
    %v5582 = vpack.c.b16 %v4526, %v4510
    %v5583 = vpack.c.b16 %v4527, %v4511
    %v5584 = vpack.c.b16 %v4528, %v4512
    %v5585 = vpack.c.b16 %v4529, %v4513
    %v5586 = vpack.c.b16 %v4546, %v4530
    %v5587 = vpack.c.b16 %v4547, %v4531
    %v5588 = vpack.c.b16 %v4548, %v4532
    %v5589 = vpack.c.b16 %v4549, %v4533
    %v5590 = vpack.c.b16 %v4550, %v4534
    %v5591 = vpack.c.b16 %v4551, %v4535
    %v5592 = vpack.c.b16 %v4552, %v4536
    %v5593 = vpack.c.b16 %v4553, %v4537
    %v5594 = vpack.c.b16 %v4554, %v4538
    %v5595 = vpack.c.b16 %v4555, %v4539
    %v5596 = vpack.c.b16 %v4556, %v4540
    %v5597 = vpack.c.b16 %v4557, %v4541
    %v5598 = vpack.c.b16 %v4558, %v4542
    %v5599 = vpack.c.b16 %v4559, %v4543
    %v5600 = vpack.c.b16 %v4560, %v4544
    %v5601 = vpack.c.b16 %v4561, %v4545
    %v5602 = vpack.c.b16 %v4578, %v4562
    %v5603 = vpack.c.b16 %v4579, %v4563
    %v5604 = vpack.c.b16 %v4580, %v4564
    %v5605 = vpack.c.b16 %v4581, %v4565
    %v5606 = vpack.c.b16 %v4582, %v4566
    %v5607 = vpack.c.b16 %v4583, %v4567
    %v5608 = vpack.c.b16 %v4584, %v4568
    %v5609 = vpack.c.b16 %v4585, %v4569
    %v5610 = vpack.c.b16 %v4586, %v4570
    %v5611 = vpack.c.b16 %v4587, %v4571
    %v5612 = vpack.c.b16 %v4588, %v4572
    %v5613 = vpack.c.b16 %v4589, %v4573
    %v5614 = vpack.c.b16 %v4590, %v4574
    %v5615 = vpack.c.b16 %v4591, %v4575
    %v5616 = vpack.c.b16 %v4592, %v4576
    %v5617 = vpack.c.b16 %v4593, %v4577
    %6642 = vmatprep.subr.bf16.mxu0 %v4595
    %6643 = vmatpush1.bf16.msra.mxu0 %v4594
    %6644 = vmatprep.subr.bf16.mxu0 %v4611
    %6645 = vmatpush1.bf16.msra.mxu0 %v4610
    %6646 = vmatprep.subr.bf16.mxu0 %v4627
    %6647 = vmatpush1.bf16.msra.mxu0 %v4626
    %6648 = vmatprep.subr.bf16.mxu0 %v4643
    %6649 = vmatpush1.bf16.msra.mxu0 %v4642
    %6650 = vmatprep.subr.bf16.mxu0 %v4659
    %6651 = vmatpush1.bf16.msra.mxu0 %v4658
    %6652 = vmatprep.subr.bf16.mxu0 %v4675
    %6653 = vmatpush1.bf16.msra.mxu0 %v4674
    %6654 = vmatprep.subr.bf16.mxu0 %v4691
    %6655 = vmatpush1.bf16.msra.mxu0 %v4690
    %6656 = vmatprep.subr.bf16.mxu0 %v4707
    %6657 = vmatpush1.bf16.msra.mxu0 %v4706
    %6658 = vmatprep.subr.bf16.mxu0 %v4723
    %6659 = vmatpush1.bf16.msra.mxu0 %v4722
    %6660 = vmatprep.subr.bf16.mxu0 %v4739
    %6661 = vmatpush1.bf16.msra.mxu0 %v4738
    %6662 = vmatprep.subr.bf16.mxu0 %v4755
    %6663 = vmatpush1.bf16.msra.mxu0 %v4754
    %6664 = vmatprep.subr.bf16.mxu0 %v4771
    %6665 = vmatpush1.bf16.msra.mxu0 %v4770
    %6666 = vmatprep.subr.bf16.mxu0 %v4787
    %6667 = vmatpush1.bf16.msra.mxu0 %v4786
    %6668 = vmatprep.subr.bf16.mxu0 %v4803
    %6669 = vmatpush1.bf16.msra.mxu0 %v4802
    %6670 = vmatprep.subr.bf16.mxu0 %v4819
    %6671 = vmatpush1.bf16.msra.mxu0 %v4818
    %6672 = vmatprep.subr.bf16.mxu0 %v4835
    %6673 = vmatpush1.bf16.msra.mxu0 %v4834
    %6674 = vmatprep.mubr.bf16.mxu0 %v407
    %6675 = vmatmul.mubr.bf16.gmra.mrb[0].mxu0 %v406
    %v6676 = vpop.f32.mrb[0].mxu0
    %v6677 = vadd.f32 %v1445, %v6676
    %v6678 = vpop.f32.mrb[0].mxu0
    %v6679 = vadd.f32 %v1449, %v6678
    %v6680 = vpop.f32.mrb[0].mxu0
    %v6681 = vpop.f32.mrb[0].mxu0
    %6682 = vdwg.mxu0
    %6683 = vmatprep.subr.bf16.mxu0 %v4851
    %6684 = vmatpush1.bf16.msra.mxu0 %v4850
    %6685 = vmatprep.subr.bf16.mxu0 %v4867
    %6686 = vmatpush1.bf16.msra.mxu0 %v4866
    %6687 = vmatprep.subr.bf16.mxu0 %v4883
    %6688 = vmatpush1.bf16.msra.mxu0 %v4882
    %6689 = vmatprep.subr.bf16.mxu0 %v4899
    %6690 = vmatpush1.bf16.msra.mxu0 %v4898
    %6691 = vmatprep.subr.bf16.mxu0 %v4915
    %6692 = vmatpush1.bf16.msra.mxu0 %v4914
    %6693 = vmatprep.subr.bf16.mxu0 %v4931
    %6694 = vmatpush1.bf16.msra.mxu0 %v4930
    %6695 = vmatprep.subr.bf16.mxu0 %v4947
    %6696 = vmatpush1.bf16.msra.mxu0 %v4946
    %6697 = vmatprep.subr.bf16.mxu0 %v4963
    %6698 = vmatpush1.bf16.msra.mxu0 %v4962
    %6699 = vmatprep.subr.bf16.mxu0 %v4979
    %6700 = vmatpush1.bf16.msra.mxu0 %v4978
    %6701 = vmatprep.subr.bf16.mxu0 %v4995
    %6702 = vmatpush1.bf16.msra.mxu0 %v4994
    %6703 = vmatprep.subr.bf16.mxu0 %v5011
    %6704 = vmatpush1.bf16.msra.mxu0 %v5010
    %6705 = vmatprep.subr.bf16.mxu0 %v5027
    %6706 = vmatpush1.bf16.msra.mxu0 %v5026
    %6707 = vmatprep.subr.bf16.mxu0 %v5043
    %6708 = vmatpush1.bf16.msra.mxu0 %v5042
    %6709 = vmatprep.subr.bf16.mxu0 %v5059
    %6710 = vmatpush1.bf16.msra.mxu0 %v5058
    %6711 = vmatprep.subr.bf16.mxu0 %v5075
    %6712 = vmatpush1.bf16.msra.mxu0 %v5074
    %6713 = vmatprep.subr.bf16.mxu0 %v5091
    %6714 = vmatpush1.bf16.msra.mxu0 %v5090
    %6715 = vmatprep.mubr.bf16.mxu0 %v409
    %6716 = vmatmul.mubr.bf16.gmra.mrb[0].mxu0 %v408
    %v6717 = vpop.f32.mrb[0].mxu0
    %v6718 = vadd.f32 %v6677, %v6717
    %v6719 = vpop.f32.mrb[0].mxu0
    %v6720 = vadd.f32 %v6679, %v6719
    %v6721 = vpop.f32.mrb[0].mxu0
    %v6722 = vpop.f32.mrb[0].mxu0
    %6723 = vdwg.mxu0
    %6724 = vmatprep.subr.bf16.mxu0 %v5107
    %6725 = vmatpush1.bf16.msra.mxu0 %v5106
    %6726 = vmatprep.subr.bf16.mxu0 %v5123
    %6727 = vmatpush1.bf16.msra.mxu0 %v5122
    %6728 = vmatprep.subr.bf16.mxu0 %v5139
    %6729 = vmatpush1.bf16.msra.mxu0 %v5138
    %6730 = vmatprep.subr.bf16.mxu0 %v5155
    %6731 = vmatpush1.bf16.msra.mxu0 %v5154
    %6732 = vmatprep.subr.bf16.mxu0 %v5171
    %6733 = vmatpush1.bf16.msra.mxu0 %v5170
    %6734 = vmatprep.subr.bf16.mxu0 %v5187
    %6735 = vmatpush1.bf16.msra.mxu0 %v5186
    %6736 = vmatprep.subr.bf16.mxu0 %v5203
    %6737 = vmatpush1.bf16.msra.mxu0 %v5202
    %6738 = vmatprep.subr.bf16.mxu0 %v5219
    %6739 = vmatpush1.bf16.msra.mxu0 %v5218
    %6740 = vmatprep.subr.bf16.mxu0 %v5235
    %6741 = vmatpush1.bf16.msra.mxu0 %v5234
    %6742 = vmatprep.subr.bf16.mxu0 %v5251
    %6743 = vmatpush1.bf16.msra.mxu0 %v5250
    %6744 = vmatprep.subr.bf16.mxu0 %v5267
    %6745 = vmatpush1.bf16.msra.mxu0 %v5266
    %6746 = vmatprep.subr.bf16.mxu0 %v5283
    %6747 = vmatpush1.bf16.msra.mxu0 %v5282
    %6748 = vmatprep.subr.bf16.mxu0 %v5299
    %6749 = vmatpush1.bf16.msra.mxu0 %v5298
    %6750 = vmatprep.subr.bf16.mxu0 %v5315
    %6751 = vmatpush1.bf16.msra.mxu0 %v5314
    %6752 = vmatprep.subr.bf16.mxu0 %v5331
    %6753 = vmatpush1.bf16.msra.mxu0 %v5330
    %6754 = vmatprep.subr.bf16.mxu0 %v5347
    %6755 = vmatpush1.bf16.msra.mxu0 %v5346
    %6756 = vmatprep.mubr.bf16.mxu0 %v411
    %6757 = vmatmul.mubr.bf16.gmra.mrb[0].mxu0 %v410
    %v6758 = vpop.f32.mrb[0].mxu0
    %v6759 = vadd.f32 %v6718, %v6758
    %v6760 = vpop.f32.mrb[0].mxu0
    %v6761 = vadd.f32 %v6720, %v6760
    %v6762 = vpop.f32.mrb[0].mxu0
    %v6763 = vpop.f32.mrb[0].mxu0
    %6764 = vdwg.mxu0
    %6765 = vmatprep.subr.bf16.mxu0 %v5363
    %6766 = vmatpush1.bf16.msra.mxu0 %v5362
    %6767 = vmatprep.subr.bf16.mxu0 %v5379
    %6768 = vmatpush1.bf16.msra.mxu0 %v5378
    %6769 = vmatprep.subr.bf16.mxu0 %v5395
    %6770 = vmatpush1.bf16.msra.mxu0 %v5394
    %6771 = vmatprep.subr.bf16.mxu0 %v5411
    %6772 = vmatpush1.bf16.msra.mxu0 %v5410
    %6773 = vmatprep.subr.bf16.mxu0 %v5427
    %6774 = vmatpush1.bf16.msra.mxu0 %v5426
    %6775 = vmatprep.subr.bf16.mxu0 %v5443
    %6776 = vmatpush1.bf16.msra.mxu0 %v5442
    %6777 = vmatprep.subr.bf16.mxu0 %v5459
    %6778 = vmatpush1.bf16.msra.mxu0 %v5458
    %6779 = vmatprep.subr.bf16.mxu0 %v5475
    %6780 = vmatpush1.bf16.msra.mxu0 %v5474
    %6781 = vmatprep.subr.bf16.mxu0 %v5491
    %6782 = vmatpush1.bf16.msra.mxu0 %v5490
    %6783 = vmatprep.subr.bf16.mxu0 %v5507
    %6784 = vmatpush1.bf16.msra.mxu0 %v5506
    %6785 = vmatprep.subr.bf16.mxu0 %v5523
    %6786 = vmatpush1.bf16.msra.mxu0 %v5522
    %6787 = vmatprep.subr.bf16.mxu0 %v5539
    %6788 = vmatpush1.bf16.msra.mxu0 %v5538
    %6789 = vmatprep.subr.bf16.mxu0 %v5555
    %6790 = vmatpush1.bf16.msra.mxu0 %v5554
    %6791 = vmatprep.subr.bf16.mxu0 %v5571
    %6792 = vmatpush1.bf16.msra.mxu0 %v5570
    %6793 = vmatprep.subr.bf16.mxu0 %v5587
    %6794 = vmatpush1.bf16.msra.mxu0 %v5586
    %6795 = vmatprep.subr.bf16.mxu0 %v5603
    %6796 = vmatpush1.bf16.msra.mxu0 %v5602
    %6797 = vmatprep.mubr.bf16.mxu0 %v413
    %6798 = vmatmul.mubr.bf16.gmra.mrb[0].mxu0 %v412
    %v6799 = vpop.f32.mrb[0].mxu0
    %v6800 = vadd.f32 %v6759, %v6799
    %v6801 = vpop.f32.mrb[0].mxu0
    %v6802 = vadd.f32 %v6761, %v6801
    %v6803 = vpop.f32.mrb[0].mxu0
    %v6804 = vpop.f32.mrb[0].mxu0
    %6805 = vdwg.mxu0
    %6806 = vmatprep.subr.bf16.mxu0 %v4597
    %6807 = vmatpush1.bf16.msra.mxu0 %v4596
    %6808 = vmatprep.subr.bf16.mxu0 %v4613
    %6809 = vmatpush1.bf16.msra.mxu0 %v4612
    %6810 = vmatprep.subr.bf16.mxu0 %v4629
    %6811 = vmatpush1.bf16.msra.mxu0 %v4628
    %6812 = vmatprep.subr.bf16.mxu0 %v4645
    %6813 = vmatpush1.bf16.msra.mxu0 %v4644
    %6814 = vmatprep.subr.bf16.mxu0 %v4661
    %6815 = vmatpush1.bf16.msra.mxu0 %v4660
    %6816 = vmatprep.subr.bf16.mxu0 %v4677
    %6817 = vmatpush1.bf16.msra.mxu0 %v4676
    %6818 = vmatprep.subr.bf16.mxu0 %v4693
    %6819 = vmatpush1.bf16.msra.mxu0 %v4692
    %6820 = vmatprep.subr.bf16.mxu0 %v4709
    %6821 = vmatpush1.bf16.msra.mxu0 %v4708
    %6822 = vmatprep.subr.bf16.mxu0 %v4725
    %6823 = vmatpush1.bf16.msra.mxu0 %v4724
    %6824 = vmatprep.subr.bf16.mxu0 %v4741
    %6825 = vmatpush1.bf16.msra.mxu0 %v4740
    %6826 = vmatprep.subr.bf16.mxu0 %v4757
    %6827 = vmatpush1.bf16.msra.mxu0 %v4756
    %6828 = vmatprep.subr.bf16.mxu0 %v4773
    %6829 = vmatpush1.bf16.msra.mxu0 %v4772
    %6830 = vmatprep.subr.bf16.mxu0 %v4789
    %6831 = vmatpush1.bf16.msra.mxu0 %v4788
    %6832 = vmatprep.subr.bf16.mxu0 %v4805
    %6833 = vmatpush1.bf16.msra.mxu0 %v4804
    %6834 = vmatprep.subr.bf16.mxu0 %v4821
    %6835 = vmatpush1.bf16.msra.mxu0 %v4820
    %6836 = vmatprep.subr.bf16.mxu0 %v4837
    %6837 = vmatpush1.bf16.msra.mxu0 %v4836
    %6838 = vmatprep.mubr.bf16.mxu0 %v407
    %6839 = vmatmul.mubr.bf16.gmra.mrb[0].mxu0 %v406
    %v6840 = vpop.f32.mrb[0].mxu0
    %v6841 = vadd.f32 %v1453, %v6840
    %v6842 = vpop.f32.mrb[0].mxu0
    %v6843 = vadd.f32 %v1457, %v6842
    %v6844 = vpop.f32.mrb[0].mxu0
    %v6845 = vpop.f32.mrb[0].mxu0
    %6846 = vdwg.mxu0
    %6847 = vmatprep.subr.bf16.mxu0 %v4853
    %6848 = vmatpush1.bf16.msra.mxu0 %v4852
    %6849 = vmatprep.subr.bf16.mxu0 %v4869
    %6850 = vmatpush1.bf16.msra.mxu0 %v4868
    %6851 = vmatprep.subr.bf16.mxu0 %v4885
    %6852 = vmatpush1.bf16.msra.mxu0 %v4884
    %6853 = vmatprep.subr.bf16.mxu0 %v4901
    %6854 = vmatpush1.bf16.msra.mxu0 %v4900
    %6855 = vmatprep.subr.bf16.mxu0 %v4917
    %6856 = vmatpush1.bf16.msra.mxu0 %v4916
    %6857 = vmatprep.subr.bf16.mxu0 %v4933
    %6858 = vmatpush1.bf16.msra.mxu0 %v4932
    %6859 = vmatprep.subr.bf16.mxu0 %v4949
    %6860 = vmatpush1.bf16.msra.mxu0 %v4948
    %6861 = vmatprep.subr.bf16.mxu0 %v4965
    %6862 = vmatpush1.bf16.msra.mxu0 %v4964
    %6863 = vmatprep.subr.bf16.mxu0 %v4981
    %6864 = vmatpush1.bf16.msra.mxu0 %v4980
    %6865 = vmatprep.subr.bf16.mxu0 %v4997
    %6866 = vmatpush1.bf16.msra.mxu0 %v4996
    %6867 = vmatprep.subr.bf16.mxu0 %v5013
    %6868 = vmatpush1.bf16.msra.mxu0 %v5012
    %6869 = vmatprep.subr.bf16.mxu0 %v5029
    %6870 = vmatpush1.bf16.msra.mxu0 %v5028
    %6871 = vmatprep.subr.bf16.mxu0 %v5045
    %6872 = vmatpush1.bf16.msra.mxu0 %v5044
    %6873 = vmatprep.subr.bf16.mxu0 %v5061
    %6874 = vmatpush1.bf16.msra.mxu0 %v5060
    %6875 = vmatprep.subr.bf16.mxu0 %v5077
    %6876 = vmatpush1.bf16.msra.mxu0 %v5076
    %6877 = vmatprep.subr.bf16.mxu0 %v5093
    %6878 = vmatpush1.bf16.msra.mxu0 %v5092
    %6879 = vmatprep.mubr.bf16.mxu0 %v409
    %6880 = vmatmul.mubr.bf16.gmra.mrb[0].mxu0 %v408
    %v6881 = vpop.f32.mrb[0].mxu0
    %v6882 = vadd.f32 %v6841, %v6881
    %v6883 = vpop.f32.mrb[0].mxu0
    %v6884 = vadd.f32 %v6843, %v6883
    %v6885 = vpop.f32.mrb[0].mxu0
    %v6886 = vpop.f32.mrb[0].mxu0
    %6887 = vdwg.mxu0
    %6888 = vmatprep.subr.bf16.mxu0 %v5109
    %6889 = vmatpush1.bf16.msra.mxu0 %v5108
    %6890 = vmatprep.subr.bf16.mxu0 %v5125
    %6891 = vmatpush1.bf16.msra.mxu0 %v5124
    %6892 = vmatprep.subr.bf16.mxu0 %v5141
    %6893 = vmatpush1.bf16.msra.mxu0 %v5140
    %6894 = vmatprep.subr.bf16.mxu0 %v5157
    %6895 = vmatpush1.bf16.msra.mxu0 %v5156
    %6896 = vmatprep.subr.bf16.mxu0 %v5173
    %6897 = vmatpush1.bf16.msra.mxu0 %v5172
    %6898 = vmatprep.subr.bf16.mxu0 %v5189
    %6899 = vmatpush1.bf16.msra.mxu0 %v5188
    %6900 = vmatprep.subr.bf16.mxu0 %v5205
    %6901 = vmatpush1.bf16.msra.mxu0 %v5204
    %6902 = vmatprep.subr.bf16.mxu0 %v5221
    %6903 = vmatpush1.bf16.msra.mxu0 %v5220
    %6904 = vmatprep.subr.bf16.mxu0 %v5237
    %6905 = vmatpush1.bf16.msra.mxu0 %v5236
    %6906 = vmatprep.subr.bf16.mxu0 %v5253
    %6907 = vmatpush1.bf16.msra.mxu0 %v5252
    %6908 = vmatprep.subr.bf16.mxu0 %v5269
    %6909 = vmatpush1.bf16.msra.mxu0 %v5268
    %6910 = vmatprep.subr.bf16.mxu0 %v5285
    %6911 = vmatpush1.bf16.msra.mxu0 %v5284
    %6912 = vmatprep.subr.bf16.mxu0 %v5301
    %6913 = vmatpush1.bf16.msra.mxu0 %v5300
    %6914 = vmatprep.subr.bf16.mxu0 %v5317
    %6915 = vmatpush1.bf16.msra.mxu0 %v5316
    %6916 = vmatprep.subr.bf16.mxu0 %v5333
    %6917 = vmatpush1.bf16.msra.mxu0 %v5332
    %6918 = vmatprep.subr.bf16.mxu0 %v5349
    %6919 = vmatpush1.bf16.msra.mxu0 %v5348
    %6920 = vmatprep.mubr.bf16.mxu0 %v411
    %6921 = vmatmul.mubr.bf16.gmra.mrb[0].mxu0 %v410
    %v6922 = vpop.f32.mrb[0].mxu0
    %v6923 = vadd.f32 %v6882, %v6922
    %v6924 = vpop.f32.mrb[0].mxu0
    %v6925 = vadd.f32 %v6884, %v6924
    %v6926 = vpop.f32.mrb[0].mxu0
    %v6927 = vpop.f32.mrb[0].mxu0
    %6928 = vdwg.mxu0
    %6929 = vmatprep.subr.bf16.mxu0 %v5365
    %6930 = vmatpush1.bf16.msra.mxu0 %v5364
    %6931 = vmatprep.subr.bf16.mxu0 %v5381
    %6932 = vmatpush1.bf16.msra.mxu0 %v5380
    %6933 = vmatprep.subr.bf16.mxu0 %v5397
    %6934 = vmatpush1.bf16.msra.mxu0 %v5396
    %6935 = vmatprep.subr.bf16.mxu0 %v5413
    %6936 = vmatpush1.bf16.msra.mxu0 %v5412
    %6937 = vmatprep.subr.bf16.mxu0 %v5429
    %6938 = vmatpush1.bf16.msra.mxu0 %v5428
    %6939 = vmatprep.subr.bf16.mxu0 %v5445
    %6940 = vmatpush1.bf16.msra.mxu0 %v5444
    %6941 = vmatprep.subr.bf16.mxu0 %v5461
    %6942 = vmatpush1.bf16.msra.mxu0 %v5460
    %6943 = vmatprep.subr.bf16.mxu0 %v5477
    %6944 = vmatpush1.bf16.msra.mxu0 %v5476
    %6945 = vmatprep.subr.bf16.mxu0 %v5493
    %6946 = vmatpush1.bf16.msra.mxu0 %v5492
    %6947 = vmatprep.subr.bf16.mxu0 %v5509
    %6948 = vmatpush1.bf16.msra.mxu0 %v5508
    %6949 = vmatprep.subr.bf16.mxu0 %v5525
    %6950 = vmatpush1.bf16.msra.mxu0 %v5524
    %6951 = vmatprep.subr.bf16.mxu0 %v5541
    %6952 = vmatpush1.bf16.msra.mxu0 %v5540
    %6953 = vmatprep.subr.bf16.mxu0 %v5557
    %6954 = vmatpush1.bf16.msra.mxu0 %v5556
    %6955 = vmatprep.subr.bf16.mxu0 %v5573
    %6956 = vmatpush1.bf16.msra.mxu0 %v5572
    %6957 = vmatprep.subr.bf16.mxu0 %v5589
    %6958 = vmatpush1.bf16.msra.mxu0 %v5588
    %6959 = vmatprep.subr.bf16.mxu0 %v5605
    %6960 = vmatpush1.bf16.msra.mxu0 %v5604
    %6961 = vmatprep.mubr.bf16.mxu0 %v413
    %6962 = vmatmul.mubr.bf16.gmra.mrb[0].mxu0 %v412
    %v6963 = vpop.f32.mrb[0].mxu0
    %v6964 = vadd.f32 %v6923, %v6963
    %v6965 = vpop.f32.mrb[0].mxu0
    %v6966 = vadd.f32 %v6925, %v6965
    %v6967 = vpop.f32.mrb[0].mxu0
    %v6968 = vpop.f32.mrb[0].mxu0
    %6969 = vdwg.mxu0
    %6970 = vmatprep.subr.bf16.mxu0 %v4599
    %6971 = vmatpush1.bf16.msra.mxu0 %v4598
    %6972 = vmatprep.subr.bf16.mxu0 %v4615
    %6973 = vmatpush1.bf16.msra.mxu0 %v4614
    %6974 = vmatprep.subr.bf16.mxu0 %v4631
    %6975 = vmatpush1.bf16.msra.mxu0 %v4630
    %6976 = vmatprep.subr.bf16.mxu0 %v4647
    %6977 = vmatpush1.bf16.msra.mxu0 %v4646
    %6978 = vmatprep.subr.bf16.mxu0 %v4663
    %6979 = vmatpush1.bf16.msra.mxu0 %v4662
    %6980 = vmatprep.subr.bf16.mxu0 %v4679
    %6981 = vmatpush1.bf16.msra.mxu0 %v4678
    %6982 = vmatprep.subr.bf16.mxu0 %v4695
    %6983 = vmatpush1.bf16.msra.mxu0 %v4694
    %6984 = vmatprep.subr.bf16.mxu0 %v4711
    %6985 = vmatpush1.bf16.msra.mxu0 %v4710
    %6986 = vmatprep.subr.bf16.mxu0 %v4727
    %6987 = vmatpush1.bf16.msra.mxu0 %v4726
    %6988 = vmatprep.subr.bf16.mxu0 %v4743
    %6989 = vmatpush1.bf16.msra.mxu0 %v4742
    %6990 = vmatprep.subr.bf16.mxu0 %v4759
    %6991 = vmatpush1.bf16.msra.mxu0 %v4758
    %6992 = vmatprep.subr.bf16.mxu0 %v4775
    %6993 = vmatpush1.bf16.msra.mxu0 %v4774
    %6994 = vmatprep.subr.bf16.mxu0 %v4791
    %6995 = vmatpush1.bf16.msra.mxu0 %v4790
    %6996 = vmatprep.subr.bf16.mxu0 %v4807
    %6997 = vmatpush1.bf16.msra.mxu0 %v4806
    %6998 = vmatprep.subr.bf16.mxu0 %v4823
    %6999 = vmatpush1.bf16.msra.mxu0 %v4822
    %7000 = vmatprep.subr.bf16.mxu0 %v4839
    %7001 = vmatpush1.bf16.msra.mxu0 %v4838
    %7002 = vmatprep.mubr.bf16.mxu0 %v407
    %7003 = vmatmul.mubr.bf16.gmra.mrb[0].mxu0 %v406
    %v7004 = vpop.f32.mrb[0].mxu0
    %v7005 = vadd.f32 %v1461, %v7004
    %v7006 = vpop.f32.mrb[0].mxu0
    %v7007 = vadd.f32 %v1465, %v7006
    %v7008 = vpop.f32.mrb[0].mxu0
    %v7009 = vpop.f32.mrb[0].mxu0
    %7010 = vdwg.mxu0
    %7011 = vmatprep.subr.bf16.mxu0 %v4855
    %7012 = vmatpush1.bf16.msra.mxu0 %v4854
    %7013 = vmatprep.subr.bf16.mxu0 %v4871
    %7014 = vmatpush1.bf16.msra.mxu0 %v4870
    %7015 = vmatprep.subr.bf16.mxu0 %v4887
    %7016 = vmatpush1.bf16.msra.mxu0 %v4886
    %7017 = vmatprep.subr.bf16.mxu0 %v4903
    %7018 = vmatpush1.bf16.msra.mxu0 %v4902
    %7019 = vmatprep.subr.bf16.mxu0 %v4919
    %7020 = vmatpush1.bf16.msra.mxu0 %v4918
    %7021 = vmatprep.subr.bf16.mxu0 %v4935
    %7022 = vmatpush1.bf16.msra.mxu0 %v4934
    %7023 = vmatprep.subr.bf16.mxu0 %v4951
    %7024 = vmatpush1.bf16.msra.mxu0 %v4950
    %7025 = vmatprep.subr.bf16.mxu0 %v4967
    %7026 = vmatpush1.bf16.msra.mxu0 %v4966
    %7027 = vmatprep.subr.bf16.mxu0 %v4983
    %7028 = vmatpush1.bf16.msra.mxu0 %v4982
    %7029 = vmatprep.subr.bf16.mxu0 %v4999
    %7030 = vmatpush1.bf16.msra.mxu0 %v4998
    %7031 = vmatprep.subr.bf16.mxu0 %v5015
    %7032 = vmatpush1.bf16.msra.mxu0 %v5014
    %7033 = vmatprep.subr.bf16.mxu0 %v5031
    %7034 = vmatpush1.bf16.msra.mxu0 %v5030
    %7035 = vmatprep.subr.bf16.mxu0 %v5047
    %7036 = vmatpush1.bf16.msra.mxu0 %v5046
    %7037 = vmatprep.subr.bf16.mxu0 %v5063
    %7038 = vmatpush1.bf16.msra.mxu0 %v5062
    %7039 = vmatprep.subr.bf16.mxu0 %v5079
    %7040 = vmatpush1.bf16.msra.mxu0 %v5078
    %7041 = vmatprep.subr.bf16.mxu0 %v5095
    %7042 = vmatpush1.bf16.msra.mxu0 %v5094
    %7043 = vmatprep.mubr.bf16.mxu0 %v409
    %7044 = vmatmul.mubr.bf16.gmra.mrb[0].mxu0 %v408
    %v7045 = vpop.f32.mrb[0].mxu0
    %v7046 = vadd.f32 %v7005, %v7045
    %v7047 = vpop.f32.mrb[0].mxu0
    %v7048 = vadd.f32 %v7007, %v7047
    %v7049 = vpop.f32.mrb[0].mxu0
    %v7050 = vpop.f32.mrb[0].mxu0
    %7051 = vdwg.mxu0
    %7052 = vmatprep.subr.bf16.mxu0 %v5111
    %7053 = vmatpush1.bf16.msra.mxu0 %v5110
    %7054 = vmatprep.subr.bf16.mxu0 %v5127
    %7055 = vmatpush1.bf16.msra.mxu0 %v5126
    %7056 = vmatprep.subr.bf16.mxu0 %v5143
    %7057 = vmatpush1.bf16.msra.mxu0 %v5142
    %7058 = vmatprep.subr.bf16.mxu0 %v5159
    %7059 = vmatpush1.bf16.msra.mxu0 %v5158
    %7060 = vmatprep.subr.bf16.mxu0 %v5175
    %7061 = vmatpush1.bf16.msra.mxu0 %v5174
    %7062 = vmatprep.subr.bf16.mxu0 %v5191
    %7063 = vmatpush1.bf16.msra.mxu0 %v5190
    %7064 = vmatprep.subr.bf16.mxu0 %v5207
    %7065 = vmatpush1.bf16.msra.mxu0 %v5206
    %7066 = vmatprep.subr.bf16.mxu0 %v5223
    %7067 = vmatpush1.bf16.msra.mxu0 %v5222
    %7068 = vmatprep.subr.bf16.mxu0 %v5239
    %7069 = vmatpush1.bf16.msra.mxu0 %v5238
    %7070 = vmatprep.subr.bf16.mxu0 %v5255
    %7071 = vmatpush1.bf16.msra.mxu0 %v5254
    %7072 = vmatprep.subr.bf16.mxu0 %v5271
    %7073 = vmatpush1.bf16.msra.mxu0 %v5270
    %7074 = vmatprep.subr.bf16.mxu0 %v5287
    %7075 = vmatpush1.bf16.msra.mxu0 %v5286
    %7076 = vmatprep.subr.bf16.mxu0 %v5303
    %7077 = vmatpush1.bf16.msra.mxu0 %v5302
    %7078 = vmatprep.subr.bf16.mxu0 %v5319
    %7079 = vmatpush1.bf16.msra.mxu0 %v5318
    %7080 = vmatprep.subr.bf16.mxu0 %v5335
    %7081 = vmatpush1.bf16.msra.mxu0 %v5334
    %7082 = vmatprep.subr.bf16.mxu0 %v5351
    %7083 = vmatpush1.bf16.msra.mxu0 %v5350
    %7084 = vmatprep.mubr.bf16.mxu0 %v411
    %7085 = vmatmul.mubr.bf16.gmra.mrb[0].mxu0 %v410
    %v7086 = vpop.f32.mrb[0].mxu0
    %v7087 = vadd.f32 %v7046, %v7086
    %v7088 = vpop.f32.mrb[0].mxu0
    %v7089 = vadd.f32 %v7048, %v7088
    %v7090 = vpop.f32.mrb[0].mxu0
    %v7091 = vpop.f32.mrb[0].mxu0
    %7092 = vdwg.mxu0
    %7093 = vmatprep.subr.bf16.mxu0 %v5367
    %7094 = vmatpush1.bf16.msra.mxu0 %v5366
    %7095 = vmatprep.subr.bf16.mxu0 %v5383
    %7096 = vmatpush1.bf16.msra.mxu0 %v5382
    %7097 = vmatprep.subr.bf16.mxu0 %v5399
    %7098 = vmatpush1.bf16.msra.mxu0 %v5398
    %7099 = vmatprep.subr.bf16.mxu0 %v5415
    %7100 = vmatpush1.bf16.msra.mxu0 %v5414
    %7101 = vmatprep.subr.bf16.mxu0 %v5431
    %7102 = vmatpush1.bf16.msra.mxu0 %v5430
    %7103 = vmatprep.subr.bf16.mxu0 %v5447
    %7104 = vmatpush1.bf16.msra.mxu0 %v5446
    %7105 = vmatprep.subr.bf16.mxu0 %v5463
    %7106 = vmatpush1.bf16.msra.mxu0 %v5462
    %7107 = vmatprep.subr.bf16.mxu0 %v5479
    %7108 = vmatpush1.bf16.msra.mxu0 %v5478
    %7109 = vmatprep.subr.bf16.mxu0 %v5495
    %7110 = vmatpush1.bf16.msra.mxu0 %v5494
    %7111 = vmatprep.subr.bf16.mxu0 %v5511
    %7112 = vmatpush1.bf16.msra.mxu0 %v5510
    %7113 = vmatprep.subr.bf16.mxu0 %v5527
    %7114 = vmatpush1.bf16.msra.mxu0 %v5526
    %7115 = vmatprep.subr.bf16.mxu0 %v5543
    %7116 = vmatpush1.bf16.msra.mxu0 %v5542
    %7117 = vmatprep.subr.bf16.mxu0 %v5559
    %7118 = vmatpush1.bf16.msra.mxu0 %v5558
    %7119 = vmatprep.subr.bf16.mxu0 %v5575
    %7120 = vmatpush1.bf16.msra.mxu0 %v5574
    %7121 = vmatprep.subr.bf16.mxu0 %v5591
    %7122 = vmatpush1.bf16.msra.mxu0 %v5590
    %7123 = vmatprep.subr.bf16.mxu0 %v5607
    %7124 = vmatpush1.bf16.msra.mxu0 %v5606
    %7125 = vmatprep.mubr.bf16.mxu0 %v413
    %7126 = vmatmul.mubr.bf16.gmra.mrb[0].mxu0 %v412
    %v7127 = vpop.f32.mrb[0].mxu0
    %v7128 = vadd.f32 %v7087, %v7127
    %v7129 = vpop.f32.mrb[0].mxu0
    %v7130 = vadd.f32 %v7089, %v7129
    %v7131 = vpop.f32.mrb[0].mxu0
    %v7132 = vpop.f32.mrb[0].mxu0
    %7133 = vdwg.mxu0
    %7134 = vmatprep.subr.bf16.mxu0 %v4601
    %7135 = vmatpush1.bf16.msra.mxu0 %v4600
    %7136 = vmatprep.subr.bf16.mxu0 %v4617
    %7137 = vmatpush1.bf16.msra.mxu0 %v4616
    %7138 = vmatprep.subr.bf16.mxu0 %v4633
    %7139 = vmatpush1.bf16.msra.mxu0 %v4632
    %7140 = vmatprep.subr.bf16.mxu0 %v4649
    %7141 = vmatpush1.bf16.msra.mxu0 %v4648
    %7142 = vmatprep.subr.bf16.mxu0 %v4665
    %7143 = vmatpush1.bf16.msra.mxu0 %v4664
    %7144 = vmatprep.subr.bf16.mxu0 %v4681
    %7145 = vmatpush1.bf16.msra.mxu0 %v4680
    %7146 = vmatprep.subr.bf16.mxu0 %v4697
    %7147 = vmatpush1.bf16.msra.mxu0 %v4696
    %7148 = vmatprep.subr.bf16.mxu0 %v4713
    %7149 = vmatpush1.bf16.msra.mxu0 %v4712
    %7150 = vmatprep.subr.bf16.mxu0 %v4729
    %7151 = vmatpush1.bf16.msra.mxu0 %v4728
    %7152 = vmatprep.subr.bf16.mxu0 %v4745
    %7153 = vmatpush1.bf16.msra.mxu0 %v4744
    %7154 = vmatprep.subr.bf16.mxu0 %v4761
    %7155 = vmatpush1.bf16.msra.mxu0 %v4760
    %7156 = vmatprep.subr.bf16.mxu0 %v4777
    %7157 = vmatpush1.bf16.msra.mxu0 %v4776
    %7158 = vmatprep.subr.bf16.mxu0 %v4793
    %7159 = vmatpush1.bf16.msra.mxu0 %v4792
    %7160 = vmatprep.subr.bf16.mxu0 %v4809
    %7161 = vmatpush1.bf16.msra.mxu0 %v4808
    %7162 = vmatprep.subr.bf16.mxu0 %v4825
    %7163 = vmatpush1.bf16.msra.mxu0 %v4824
    %7164 = vmatprep.subr.bf16.mxu0 %v4841
    %7165 = vmatpush1.bf16.msra.mxu0 %v4840
    %7166 = vmatprep.mubr.bf16.mxu0 %v407
    %7167 = vmatmul.mubr.bf16.gmra.mrb[0].mxu0 %v406
    %v7168 = vpop.f32.mrb[0].mxu0
    %v7169 = vadd.f32 %v1469, %v7168
    %v7170 = vpop.f32.mrb[0].mxu0
    %v7171 = vadd.f32 %v1473, %v7170
    %v7172 = vpop.f32.mrb[0].mxu0
    %v7173 = vpop.f32.mrb[0].mxu0
    %7174 = vdwg.mxu0
    %7175 = vmatprep.subr.bf16.mxu0 %v4857
    %7176 = vmatpush1.bf16.msra.mxu0 %v4856
    %7177 = vmatprep.subr.bf16.mxu0 %v4873
    %7178 = vmatpush1.bf16.msra.mxu0 %v4872
    %7179 = vmatprep.subr.bf16.mxu0 %v4889
    %7180 = vmatpush1.bf16.msra.mxu0 %v4888
    %7181 = vmatprep.subr.bf16.mxu0 %v4905
    %7182 = vmatpush1.bf16.msra.mxu0 %v4904
    %7183 = vmatprep.subr.bf16.mxu0 %v4921
    %7184 = vmatpush1.bf16.msra.mxu0 %v4920
    %7185 = vmatprep.subr.bf16.mxu0 %v4937
    %7186 = vmatpush1.bf16.msra.mxu0 %v4936
    %7187 = vmatprep.subr.bf16.mxu0 %v4953
    %7188 = vmatpush1.bf16.msra.mxu0 %v4952
    %7189 = vmatprep.subr.bf16.mxu0 %v4969
    %7190 = vmatpush1.bf16.msra.mxu0 %v4968
    %7191 = vmatprep.subr.bf16.mxu0 %v4985
    %7192 = vmatpush1.bf16.msra.mxu0 %v4984
    %7193 = vmatprep.subr.bf16.mxu0 %v5001
    %7194 = vmatpush1.bf16.msra.mxu0 %v5000
    %7195 = vmatprep.subr.bf16.mxu0 %v5017
    %7196 = vmatpush1.bf16.msra.mxu0 %v5016
    %7197 = vmatprep.subr.bf16.mxu0 %v5033
    %7198 = vmatpush1.bf16.msra.mxu0 %v5032
    %7199 = vmatprep.subr.bf16.mxu0 %v5049
    %7200 = vmatpush1.bf16.msra.mxu0 %v5048
    %7201 = vmatprep.subr.bf16.mxu0 %v5065
    %7202 = vmatpush1.bf16.msra.mxu0 %v5064
    %7203 = vmatprep.subr.bf16.mxu0 %v5081
    %7204 = vmatpush1.bf16.msra.mxu0 %v5080
    %7205 = vmatprep.subr.bf16.mxu0 %v5097
    %7206 = vmatpush1.bf16.msra.mxu0 %v5096
    %7207 = vmatprep.mubr.bf16.mxu0 %v409
    %7208 = vmatmul.mubr.bf16.gmra.mrb[0].mxu0 %v408
    %v7209 = vpop.f32.mrb[0].mxu0
    %v7210 = vadd.f32 %v7169, %v7209
    %v7211 = vpop.f32.mrb[0].mxu0
    %v7212 = vadd.f32 %v7171, %v7211
    %v7213 = vpop.f32.mrb[0].mxu0
    %v7214 = vpop.f32.mrb[0].mxu0
    %7215 = vdwg.mxu0
    %7216 = vmatprep.subr.bf16.mxu0 %v5113
    %7217 = vmatpush1.bf16.msra.mxu0 %v5112
    %7218 = vmatprep.subr.bf16.mxu0 %v5129
    %7219 = vmatpush1.bf16.msra.mxu0 %v5128
    %7220 = vmatprep.subr.bf16.mxu0 %v5145
    %7221 = vmatpush1.bf16.msra.mxu0 %v5144
    %7222 = vmatprep.subr.bf16.mxu0 %v5161
    %7223 = vmatpush1.bf16.msra.mxu0 %v5160
    %7224 = vmatprep.subr.bf16.mxu0 %v5177
    %7225 = vmatpush1.bf16.msra.mxu0 %v5176
    %7226 = vmatprep.subr.bf16.mxu0 %v5193
    %7227 = vmatpush1.bf16.msra.mxu0 %v5192
    %7228 = vmatprep.subr.bf16.mxu0 %v5209
    %7229 = vmatpush1.bf16.msra.mxu0 %v5208
    %7230 = vmatprep.subr.bf16.mxu0 %v5225
    %7231 = vmatpush1.bf16.msra.mxu0 %v5224
    %7232 = vmatprep.subr.bf16.mxu0 %v5241
    %7233 = vmatpush1.bf16.msra.mxu0 %v5240
    %7234 = vmatprep.subr.bf16.mxu0 %v5257
    %7235 = vmatpush1.bf16.msra.mxu0 %v5256
    %7236 = vmatprep.subr.bf16.mxu0 %v5273
    %7237 = vmatpush1.bf16.msra.mxu0 %v5272
    %7238 = vmatprep.subr.bf16.mxu0 %v5289
    %7239 = vmatpush1.bf16.msra.mxu0 %v5288
    %7240 = vmatprep.subr.bf16.mxu0 %v5305
    %7241 = vmatpush1.bf16.msra.mxu0 %v5304
    %7242 = vmatprep.subr.bf16.mxu0 %v5321
    %7243 = vmatpush1.bf16.msra.mxu0 %v5320
    %7244 = vmatprep.subr.bf16.mxu0 %v5337
    %7245 = vmatpush1.bf16.msra.mxu0 %v5336
    %7246 = vmatprep.subr.bf16.mxu0 %v5353
    %7247 = vmatpush1.bf16.msra.mxu0 %v5352
    %7248 = vmatprep.mubr.bf16.mxu0 %v411
    %7249 = vmatmul.mubr.bf16.gmra.mrb[0].mxu0 %v410
    %v7250 = vpop.f32.mrb[0].mxu0
    %v7251 = vadd.f32 %v7210, %v7250
    %v7252 = vpop.f32.mrb[0].mxu0
    %v7253 = vadd.f32 %v7212, %v7252
    %v7254 = vpop.f32.mrb[0].mxu0
    %v7255 = vpop.f32.mrb[0].mxu0
    %7256 = vdwg.mxu0
    %7257 = vmatprep.subr.bf16.mxu0 %v5369
    %7258 = vmatpush1.bf16.msra.mxu0 %v5368
    %7259 = vmatprep.subr.bf16.mxu0 %v5385
    %7260 = vmatpush1.bf16.msra.mxu0 %v5384
    %7261 = vmatprep.subr.bf16.mxu0 %v5401
    %7262 = vmatpush1.bf16.msra.mxu0 %v5400
    %7263 = vmatprep.subr.bf16.mxu0 %v5417
    %7264 = vmatpush1.bf16.msra.mxu0 %v5416
    %7265 = vmatprep.subr.bf16.mxu0 %v5433
    %7266 = vmatpush1.bf16.msra.mxu0 %v5432
    %7267 = vmatprep.subr.bf16.mxu0 %v5449
    %7268 = vmatpush1.bf16.msra.mxu0 %v5448
    %7269 = vmatprep.subr.bf16.mxu0 %v5465
    %7270 = vmatpush1.bf16.msra.mxu0 %v5464
    %7271 = vmatprep.subr.bf16.mxu0 %v5481
    %7272 = vmatpush1.bf16.msra.mxu0 %v5480
    %7273 = vmatprep.subr.bf16.mxu0 %v5497
    %7274 = vmatpush1.bf16.msra.mxu0 %v5496
    %7275 = vmatprep.subr.bf16.mxu0 %v5513
    %7276 = vmatpush1.bf16.msra.mxu0 %v5512
    %7277 = vmatprep.subr.bf16.mxu0 %v5529
    %7278 = vmatpush1.bf16.msra.mxu0 %v5528
    %7279 = vmatprep.subr.bf16.mxu0 %v5545
    %7280 = vmatpush1.bf16.msra.mxu0 %v5544
    %7281 = vmatprep.subr.bf16.mxu0 %v5561
    %7282 = vmatpush1.bf16.msra.mxu0 %v5560
    %7283 = vmatprep.subr.bf16.mxu0 %v5577
    %7284 = vmatpush1.bf16.msra.mxu0 %v5576
    %7285 = vmatprep.subr.bf16.mxu0 %v5593
    %7286 = vmatpush1.bf16.msra.mxu0 %v5592
    %7287 = vmatprep.subr.bf16.mxu0 %v5609
    %7288 = vmatpush1.bf16.msra.mxu0 %v5608
    %7289 = vmatprep.mubr.bf16.mxu0 %v413
    %7290 = vmatmul.mubr.bf16.gmra.mrb[0].mxu0 %v412
    %v7291 = vpop.f32.mrb[0].mxu0
    %v7292 = vadd.f32 %v7251, %v7291
    %v7293 = vpop.f32.mrb[0].mxu0
    %v7294 = vadd.f32 %v7253, %v7293
    %v7295 = vpop.f32.mrb[0].mxu0
    %v7296 = vpop.f32.mrb[0].mxu0
    %7297 = vdwg.mxu0
    %7298 = vmatprep.subr.bf16.mxu0 %v4603
    %7299 = vmatpush1.bf16.msra.mxu0 %v4602
    %7300 = vmatprep.subr.bf16.mxu0 %v4619
    %7301 = vmatpush1.bf16.msra.mxu0 %v4618
    %7302 = vmatprep.subr.bf16.mxu0 %v4635
    %7303 = vmatpush1.bf16.msra.mxu0 %v4634
    %7304 = vmatprep.subr.bf16.mxu0 %v4651
    %7305 = vmatpush1.bf16.msra.mxu0 %v4650
    %7306 = vmatprep.subr.bf16.mxu0 %v4667
    %7307 = vmatpush1.bf16.msra.mxu0 %v4666
    %7308 = vmatprep.subr.bf16.mxu0 %v4683
    %7309 = vmatpush1.bf16.msra.mxu0 %v4682
    %7310 = vmatprep.subr.bf16.mxu0 %v4699
    %7311 = vmatpush1.bf16.msra.mxu0 %v4698
    %7312 = vmatprep.subr.bf16.mxu0 %v4715
    %7313 = vmatpush1.bf16.msra.mxu0 %v4714
    %7314 = vmatprep.subr.bf16.mxu0 %v4731
    %7315 = vmatpush1.bf16.msra.mxu0 %v4730
    %7316 = vmatprep.subr.bf16.mxu0 %v4747
    %7317 = vmatpush1.bf16.msra.mxu0 %v4746
    %7318 = vmatprep.subr.bf16.mxu0 %v4763
    %7319 = vmatpush1.bf16.msra.mxu0 %v4762
    %7320 = vmatprep.subr.bf16.mxu0 %v4779
    %7321 = vmatpush1.bf16.msra.mxu0 %v4778
    %7322 = vmatprep.subr.bf16.mxu0 %v4795
    %7323 = vmatpush1.bf16.msra.mxu0 %v4794
    %7324 = vmatprep.subr.bf16.mxu0 %v4811
    %7325 = vmatpush1.bf16.msra.mxu0 %v4810
    %7326 = vmatprep.subr.bf16.mxu0 %v4827
    %7327 = vmatpush1.bf16.msra.mxu0 %v4826
    %7328 = vmatprep.subr.bf16.mxu0 %v4843
    %7329 = vmatpush1.bf16.msra.mxu0 %v4842
    %7330 = vmatprep.mubr.bf16.mxu0 %v407
    %7331 = vmatmul.mubr.bf16.gmra.mrb[0].mxu0 %v406
    %v7332 = vpop.f32.mrb[0].mxu0
    %v7333 = vadd.f32 %v1477, %v7332
    %v7334 = vpop.f32.mrb[0].mxu0
    %v7335 = vadd.f32 %v1481, %v7334
    %v7336 = vpop.f32.mrb[0].mxu0
    %v7337 = vpop.f32.mrb[0].mxu0
    %7338 = vdwg.mxu0
    %7339 = vmatprep.subr.bf16.mxu0 %v4859
    %7340 = vmatpush1.bf16.msra.mxu0 %v4858
    %7341 = vmatprep.subr.bf16.mxu0 %v4875
    %7342 = vmatpush1.bf16.msra.mxu0 %v4874
    %7343 = vmatprep.subr.bf16.mxu0 %v4891
    %7344 = vmatpush1.bf16.msra.mxu0 %v4890
    %7345 = vmatprep.subr.bf16.mxu0 %v4907
    %7346 = vmatpush1.bf16.msra.mxu0 %v4906
    %7347 = vmatprep.subr.bf16.mxu0 %v4923
    %7348 = vmatpush1.bf16.msra.mxu0 %v4922
    %7349 = vmatprep.subr.bf16.mxu0 %v4939
    %7350 = vmatpush1.bf16.msra.mxu0 %v4938
    %7351 = vmatprep.subr.bf16.mxu0 %v4955
    %7352 = vmatpush1.bf16.msra.mxu0 %v4954
    %7353 = vmatprep.subr.bf16.mxu0 %v4971
    %7354 = vmatpush1.bf16.msra.mxu0 %v4970
    %7355 = vmatprep.subr.bf16.mxu0 %v4987
    %7356 = vmatpush1.bf16.msra.mxu0 %v4986
    %7357 = vmatprep.subr.bf16.mxu0 %v5003
    %7358 = vmatpush1.bf16.msra.mxu0 %v5002
    %7359 = vmatprep.subr.bf16.mxu0 %v5019
    %7360 = vmatpush1.bf16.msra.mxu0 %v5018
    %7361 = vmatprep.subr.bf16.mxu0 %v5035
    %7362 = vmatpush1.bf16.msra.mxu0 %v5034
    %7363 = vmatprep.subr.bf16.mxu0 %v5051
    %7364 = vmatpush1.bf16.msra.mxu0 %v5050
    %7365 = vmatprep.subr.bf16.mxu0 %v5067
    %7366 = vmatpush1.bf16.msra.mxu0 %v5066
    %7367 = vmatprep.subr.bf16.mxu0 %v5083
    %7368 = vmatpush1.bf16.msra.mxu0 %v5082
    %7369 = vmatprep.subr.bf16.mxu0 %v5099
    %7370 = vmatpush1.bf16.msra.mxu0 %v5098
    %7371 = vmatprep.mubr.bf16.mxu0 %v409
    %7372 = vmatmul.mubr.bf16.gmra.mrb[0].mxu0 %v408
    %v7373 = vpop.f32.mrb[0].mxu0
    %v7374 = vadd.f32 %v7333, %v7373
    %v7375 = vpop.f32.mrb[0].mxu0
    %v7376 = vadd.f32 %v7335, %v7375
    %v7377 = vpop.f32.mrb[0].mxu0
    %v7378 = vpop.f32.mrb[0].mxu0
    %7379 = vdwg.mxu0
    %7380 = vmatprep.subr.bf16.mxu0 %v5115
    %7381 = vmatpush1.bf16.msra.mxu0 %v5114
    %7382 = vmatprep.subr.bf16.mxu0 %v5131
    %7383 = vmatpush1.bf16.msra.mxu0 %v5130
    %7384 = vmatprep.subr.bf16.mxu0 %v5147
    %7385 = vmatpush1.bf16.msra.mxu0 %v5146
    %7386 = vmatprep.subr.bf16.mxu0 %v5163
    %7387 = vmatpush1.bf16.msra.mxu0 %v5162
    %7388 = vmatprep.subr.bf16.mxu0 %v5179
    %7389 = vmatpush1.bf16.msra.mxu0 %v5178
    %7390 = vmatprep.subr.bf16.mxu0 %v5195
    %7391 = vmatpush1.bf16.msra.mxu0 %v5194
    %7392 = vmatprep.subr.bf16.mxu0 %v5211
    %7393 = vmatpush1.bf16.msra.mxu0 %v5210
    %7394 = vmatprep.subr.bf16.mxu0 %v5227
    %7395 = vmatpush1.bf16.msra.mxu0 %v5226
    %7396 = vmatprep.subr.bf16.mxu0 %v5243
    %7397 = vmatpush1.bf16.msra.mxu0 %v5242
    %7398 = vmatprep.subr.bf16.mxu0 %v5259
    %7399 = vmatpush1.bf16.msra.mxu0 %v5258
    %7400 = vmatprep.subr.bf16.mxu0 %v5275
    %7401 = vmatpush1.bf16.msra.mxu0 %v5274
    %7402 = vmatprep.subr.bf16.mxu0 %v5291
    %7403 = vmatpush1.bf16.msra.mxu0 %v5290
    %7404 = vmatprep.subr.bf16.mxu0 %v5307
    %7405 = vmatpush1.bf16.msra.mxu0 %v5306
    %7406 = vmatprep.subr.bf16.mxu0 %v5323
    %7407 = vmatpush1.bf16.msra.mxu0 %v5322
    %7408 = vmatprep.subr.bf16.mxu0 %v5339
    %7409 = vmatpush1.bf16.msra.mxu0 %v5338
    %7410 = vmatprep.subr.bf16.mxu0 %v5355
    %7411 = vmatpush1.bf16.msra.mxu0 %v5354
    %7412 = vmatprep.mubr.bf16.mxu0 %v411
    %7413 = vmatmul.mubr.bf16.gmra.mrb[0].mxu0 %v410
    %v7414 = vpop.f32.mrb[0].mxu0
    %v7415 = vadd.f32 %v7374, %v7414
    %v7416 = vpop.f32.mrb[0].mxu0
    %v7417 = vadd.f32 %v7376, %v7416
    %v7418 = vpop.f32.mrb[0].mxu0
    %v7419 = vpop.f32.mrb[0].mxu0
    %7420 = vdwg.mxu0
    %7421 = vmatprep.subr.bf16.mxu0 %v5371
    %7422 = vmatpush1.bf16.msra.mxu0 %v5370
    %7423 = vmatprep.subr.bf16.mxu0 %v5387
    %7424 = vmatpush1.bf16.msra.mxu0 %v5386
    %7425 = vmatprep.subr.bf16.mxu0 %v5403
    %7426 = vmatpush1.bf16.msra.mxu0 %v5402
    %7427 = vmatprep.subr.bf16.mxu0 %v5419
    %7428 = vmatpush1.bf16.msra.mxu0 %v5418
    %7429 = vmatprep.subr.bf16.mxu0 %v5435
    %7430 = vmatpush1.bf16.msra.mxu0 %v5434
    %7431 = vmatprep.subr.bf16.mxu0 %v5451
    %7432 = vmatpush1.bf16.msra.mxu0 %v5450
    %7433 = vmatprep.subr.bf16.mxu0 %v5467
    %7434 = vmatpush1.bf16.msra.mxu0 %v5466
    %7435 = vmatprep.subr.bf16.mxu0 %v5483
    %7436 = vmatpush1.bf16.msra.mxu0 %v5482
    %7437 = vmatprep.subr.bf16.mxu0 %v5499
    %7438 = vmatpush1.bf16.msra.mxu0 %v5498
    %7439 = vmatprep.subr.bf16.mxu0 %v5515
    %7440 = vmatpush1.bf16.msra.mxu0 %v5514
    %7441 = vmatprep.subr.bf16.mxu0 %v5531
    %7442 = vmatpush1.bf16.msra.mxu0 %v5530
    %7443 = vmatprep.subr.bf16.mxu0 %v5547
    %7444 = vmatpush1.bf16.msra.mxu0 %v5546
    %7445 = vmatprep.subr.bf16.mxu0 %v5563
    %7446 = vmatpush1.bf16.msra.mxu0 %v5562
    %7447 = vmatprep.subr.bf16.mxu0 %v5579
    %7448 = vmatpush1.bf16.msra.mxu0 %v5578
    %7449 = vmatprep.subr.bf16.mxu0 %v5595
    %7450 = vmatpush1.bf16.msra.mxu0 %v5594
    %7451 = vmatprep.subr.bf16.mxu0 %v5611
    %7452 = vmatpush1.bf16.msra.mxu0 %v5610
    %7453 = vmatprep.mubr.bf16.mxu0 %v413
    %7454 = vmatmul.mubr.bf16.gmra.mrb[0].mxu0 %v412
    %v7455 = vpop.f32.mrb[0].mxu0
    %v7456 = vadd.f32 %v7415, %v7455
    %v7457 = vpop.f32.mrb[0].mxu0
    %v7458 = vadd.f32 %v7417, %v7457
    %v7459 = vpop.f32.mrb[0].mxu0
    %v7460 = vpop.f32.mrb[0].mxu0
    %7461 = vdwg.mxu0
    %7462 = vmatprep.subr.bf16.mxu0 %v4605
    %7463 = vmatpush1.bf16.msra.mxu0 %v4604
    %7464 = vmatprep.subr.bf16.mxu0 %v4621
    %7465 = vmatpush1.bf16.msra.mxu0 %v4620
    %7466 = vmatprep.subr.bf16.mxu0 %v4637
    %7467 = vmatpush1.bf16.msra.mxu0 %v4636
    %7468 = vmatprep.subr.bf16.mxu0 %v4653
    %7469 = vmatpush1.bf16.msra.mxu0 %v4652
    %7470 = vmatprep.subr.bf16.mxu0 %v4669
    %7471 = vmatpush1.bf16.msra.mxu0 %v4668
    %7472 = vmatprep.subr.bf16.mxu0 %v4685
    %7473 = vmatpush1.bf16.msra.mxu0 %v4684
    %7474 = vmatprep.subr.bf16.mxu0 %v4701
    %7475 = vmatpush1.bf16.msra.mxu0 %v4700
    %7476 = vmatprep.subr.bf16.mxu0 %v4717
    %7477 = vmatpush1.bf16.msra.mxu0 %v4716
    %7478 = vmatprep.subr.bf16.mxu0 %v4733
    %7479 = vmatpush1.bf16.msra.mxu0 %v4732
    %7480 = vmatprep.subr.bf16.mxu0 %v4749
    %7481 = vmatpush1.bf16.msra.mxu0 %v4748
    %7482 = vmatprep.subr.bf16.mxu0 %v4765
    %7483 = vmatpush1.bf16.msra.mxu0 %v4764
    %7484 = vmatprep.subr.bf16.mxu0 %v4781
    %7485 = vmatpush1.bf16.msra.mxu0 %v4780
    %7486 = vmatprep.subr.bf16.mxu0 %v4797
    %7487 = vmatpush1.bf16.msra.mxu0 %v4796
    %7488 = vmatprep.subr.bf16.mxu0 %v4813
    %7489 = vmatpush1.bf16.msra.mxu0 %v4812
    %7490 = vmatprep.subr.bf16.mxu0 %v4829
    %7491 = vmatpush1.bf16.msra.mxu0 %v4828
    %7492 = vmatprep.subr.bf16.mxu0 %v4845
    %7493 = vmatpush1.bf16.msra.mxu0 %v4844
    %7494 = vmatprep.mubr.bf16.mxu0 %v407
    %7495 = vmatmul.mubr.bf16.gmra.mrb[0].mxu0 %v406
    %v7496 = vpop.f32.mrb[0].mxu0
    %v7497 = vadd.f32 %v1485, %v7496
    %v7498 = vpop.f32.mrb[0].mxu0
    %v7499 = vadd.f32 %v1489, %v7498
    %v7500 = vpop.f32.mrb[0].mxu0
    %v7501 = vpop.f32.mrb[0].mxu0
    %7502 = vdwg.mxu0
    %7503 = vmatprep.subr.bf16.mxu0 %v4861
    %7504 = vmatpush1.bf16.msra.mxu0 %v4860
    %7505 = vmatprep.subr.bf16.mxu0 %v4877
    %7506 = vmatpush1.bf16.msra.mxu0 %v4876
    %7507 = vmatprep.subr.bf16.mxu0 %v4893
    %7508 = vmatpush1.bf16.msra.mxu0 %v4892
    %7509 = vmatprep.subr.bf16.mxu0 %v4909
    %7510 = vmatpush1.bf16.msra.mxu0 %v4908
    %7511 = vmatprep.subr.bf16.mxu0 %v4925
    %7512 = vmatpush1.bf16.msra.mxu0 %v4924
    %7513 = vmatprep.subr.bf16.mxu0 %v4941
    %7514 = vmatpush1.bf16.msra.mxu0 %v4940
    %7515 = vmatprep.subr.bf16.mxu0 %v4957
    %7516 = vmatpush1.bf16.msra.mxu0 %v4956
    %7517 = vmatprep.subr.bf16.mxu0 %v4973
    %7518 = vmatpush1.bf16.msra.mxu0 %v4972
    %7519 = vmatprep.subr.bf16.mxu0 %v4989
    %7520 = vmatpush1.bf16.msra.mxu0 %v4988
    %7521 = vmatprep.subr.bf16.mxu0 %v5005
    %7522 = vmatpush1.bf16.msra.mxu0 %v5004
    %7523 = vmatprep.subr.bf16.mxu0 %v5021
    %7524 = vmatpush1.bf16.msra.mxu0 %v5020
    %7525 = vmatprep.subr.bf16.mxu0 %v5037
    %7526 = vmatpush1.bf16.msra.mxu0 %v5036
    %7527 = vmatprep.subr.bf16.mxu0 %v5053
    %7528 = vmatpush1.bf16.msra.mxu0 %v5052
    %7529 = vmatprep.subr.bf16.mxu0 %v5069
    %7530 = vmatpush1.bf16.msra.mxu0 %v5068
    %7531 = vmatprep.subr.bf16.mxu0 %v5085
    %7532 = vmatpush1.bf16.msra.mxu0 %v5084
    %7533 = vmatprep.subr.bf16.mxu0 %v5101
    %7534 = vmatpush1.bf16.msra.mxu0 %v5100
    %7535 = vmatprep.mubr.bf16.mxu0 %v409
    %7536 = vmatmul.mubr.bf16.gmra.mrb[0].mxu0 %v408
    %v7537 = vpop.f32.mrb[0].mxu0
    %v7538 = vadd.f32 %v7497, %v7537
    %v7539 = vpop.f32.mrb[0].mxu0
    %v7540 = vadd.f32 %v7499, %v7539
    %v7541 = vpop.f32.mrb[0].mxu0
    %v7542 = vpop.f32.mrb[0].mxu0
    %7543 = vdwg.mxu0
    %7544 = vmatprep.subr.bf16.mxu0 %v5117
    %7545 = vmatpush1.bf16.msra.mxu0 %v5116
    %7546 = vmatprep.subr.bf16.mxu0 %v5133
    %7547 = vmatpush1.bf16.msra.mxu0 %v5132
    %7548 = vmatprep.subr.bf16.mxu0 %v5149
    %7549 = vmatpush1.bf16.msra.mxu0 %v5148
    %7550 = vmatprep.subr.bf16.mxu0 %v5165
    %7551 = vmatpush1.bf16.msra.mxu0 %v5164
    %7552 = vmatprep.subr.bf16.mxu0 %v5181
    %7553 = vmatpush1.bf16.msra.mxu0 %v5180
    %7554 = vmatprep.subr.bf16.mxu0 %v5197
    %7555 = vmatpush1.bf16.msra.mxu0 %v5196
    %7556 = vmatprep.subr.bf16.mxu0 %v5213
    %7557 = vmatpush1.bf16.msra.mxu0 %v5212
    %7558 = vmatprep.subr.bf16.mxu0 %v5229
    %7559 = vmatpush1.bf16.msra.mxu0 %v5228
    %7560 = vmatprep.subr.bf16.mxu0 %v5245
    %7561 = vmatpush1.bf16.msra.mxu0 %v5244
    %7562 = vmatprep.subr.bf16.mxu0 %v5261
    %7563 = vmatpush1.bf16.msra.mxu0 %v5260
    %7564 = vmatprep.subr.bf16.mxu0 %v5277
    %7565 = vmatpush1.bf16.msra.mxu0 %v5276
    %7566 = vmatprep.subr.bf16.mxu0 %v5293
    %7567 = vmatpush1.bf16.msra.mxu0 %v5292
    %7568 = vmatprep.subr.bf16.mxu0 %v5309
    %7569 = vmatpush1.bf16.msra.mxu0 %v5308
    %7570 = vmatprep.subr.bf16.mxu0 %v5325
    %7571 = vmatpush1.bf16.msra.mxu0 %v5324
    %7572 = vmatprep.subr.bf16.mxu0 %v5341
    %7573 = vmatpush1.bf16.msra.mxu0 %v5340
    %7574 = vmatprep.subr.bf16.mxu0 %v5357
    %7575 = vmatpush1.bf16.msra.mxu0 %v5356
    %7576 = vmatprep.mubr.bf16.mxu0 %v411
    %7577 = vmatmul.mubr.bf16.gmra.mrb[0].mxu0 %v410
    %v7578 = vpop.f32.mrb[0].mxu0
    %v7579 = vadd.f32 %v7538, %v7578
    %v7580 = vpop.f32.mrb[0].mxu0
    %v7581 = vadd.f32 %v7540, %v7580
    %v7582 = vpop.f32.mrb[0].mxu0
    %v7583 = vpop.f32.mrb[0].mxu0
    %7584 = vdwg.mxu0
    %7585 = vmatprep.subr.bf16.mxu0 %v5373
    %7586 = vmatpush1.bf16.msra.mxu0 %v5372
    %7587 = vmatprep.subr.bf16.mxu0 %v5389
    %7588 = vmatpush1.bf16.msra.mxu0 %v5388
    %7589 = vmatprep.subr.bf16.mxu0 %v5405
    %7590 = vmatpush1.bf16.msra.mxu0 %v5404
    %7591 = vmatprep.subr.bf16.mxu0 %v5421
    %7592 = vmatpush1.bf16.msra.mxu0 %v5420
    %7593 = vmatprep.subr.bf16.mxu0 %v5437
    %7594 = vmatpush1.bf16.msra.mxu0 %v5436
    %7595 = vmatprep.subr.bf16.mxu0 %v5453
    %7596 = vmatpush1.bf16.msra.mxu0 %v5452
    %7597 = vmatprep.subr.bf16.mxu0 %v5469
    %7598 = vmatpush1.bf16.msra.mxu0 %v5468
    %7599 = vmatprep.subr.bf16.mxu0 %v5485
    %7600 = vmatpush1.bf16.msra.mxu0 %v5484
    %7601 = vmatprep.subr.bf16.mxu0 %v5501
    %7602 = vmatpush1.bf16.msra.mxu0 %v5500
    %7603 = vmatprep.subr.bf16.mxu0 %v5517
    %7604 = vmatpush1.bf16.msra.mxu0 %v5516
    %7605 = vmatprep.subr.bf16.mxu0 %v5533
    %7606 = vmatpush1.bf16.msra.mxu0 %v5532
    %7607 = vmatprep.subr.bf16.mxu0 %v5549
    %7608 = vmatpush1.bf16.msra.mxu0 %v5548
    %7609 = vmatprep.subr.bf16.mxu0 %v5565
    %7610 = vmatpush1.bf16.msra.mxu0 %v5564
    %7611 = vmatprep.subr.bf16.mxu0 %v5581
    %7612 = vmatpush1.bf16.msra.mxu0 %v5580
    %7613 = vmatprep.subr.bf16.mxu0 %v5597
    %7614 = vmatpush1.bf16.msra.mxu0 %v5596
    %7615 = vmatprep.subr.bf16.mxu0 %v5613
    %7616 = vmatpush1.bf16.msra.mxu0 %v5612
    %7617 = vmatprep.mubr.bf16.mxu0 %v413
    %7618 = vmatmul.mubr.bf16.gmra.mrb[0].mxu0 %v412
    %v7619 = vpop.f32.mrb[0].mxu0
    %v7620 = vadd.f32 %v7579, %v7619
    %v7621 = vpop.f32.mrb[0].mxu0
    %v7622 = vadd.f32 %v7581, %v7621
    %v7623 = vpop.f32.mrb[0].mxu0
    %v7624 = vpop.f32.mrb[0].mxu0
    %7625 = vdwg.mxu0
    %7626 = vmatprep.subr.bf16.mxu0 %v4607
    %7627 = vmatpush1.bf16.msra.mxu0 %v4606
    %7628 = vmatprep.subr.bf16.mxu0 %v4623
    %7629 = vmatpush1.bf16.msra.mxu0 %v4622
    %7630 = vmatprep.subr.bf16.mxu0 %v4639
    %7631 = vmatpush1.bf16.msra.mxu0 %v4638
    %7632 = vmatprep.subr.bf16.mxu0 %v4655
    %7633 = vmatpush1.bf16.msra.mxu0 %v4654
    %7634 = vmatprep.subr.bf16.mxu0 %v4671
    %7635 = vmatpush1.bf16.msra.mxu0 %v4670
    %7636 = vmatprep.subr.bf16.mxu0 %v4687
    %7637 = vmatpush1.bf16.msra.mxu0 %v4686
    %7638 = vmatprep.subr.bf16.mxu0 %v4703
    %7639 = vmatpush1.bf16.msra.mxu0 %v4702
    %7640 = vmatprep.subr.bf16.mxu0 %v4719
    %7641 = vmatpush1.bf16.msra.mxu0 %v4718
    %7642 = vmatprep.subr.bf16.mxu0 %v4735
    %7643 = vmatpush1.bf16.msra.mxu0 %v4734
    %7644 = vmatprep.subr.bf16.mxu0 %v4751
    %7645 = vmatpush1.bf16.msra.mxu0 %v4750
    %7646 = vmatprep.subr.bf16.mxu0 %v4767
    %7647 = vmatpush1.bf16.msra.mxu0 %v4766
    %7648 = vmatprep.subr.bf16.mxu0 %v4783
    %7649 = vmatpush1.bf16.msra.mxu0 %v4782
    %7650 = vmatprep.subr.bf16.mxu0 %v4799
    %7651 = vmatpush1.bf16.msra.mxu0 %v4798
    %7652 = vmatprep.subr.bf16.mxu0 %v4815
    %7653 = vmatpush1.bf16.msra.mxu0 %v4814
    %7654 = vmatprep.subr.bf16.mxu0 %v4831
    %7655 = vmatpush1.bf16.msra.mxu0 %v4830
    %7656 = vmatprep.subr.bf16.mxu0 %v4847
    %7657 = vmatpush1.bf16.msra.mxu0 %v4846
    %7658 = vmatprep.mubr.bf16.mxu0 %v407
    %7659 = vmatmul.mubr.bf16.gmra.mrb[0].mxu0 %v406
    %v7660 = vpop.f32.mrb[0].mxu0
    %v7661 = vadd.f32 %v1493, %v7660
    %v7662 = vpop.f32.mrb[0].mxu0
    %v7663 = vadd.f32 %v1497, %v7662
    %v7664 = vpop.f32.mrb[0].mxu0
    %v7665 = vpop.f32.mrb[0].mxu0
    %7666 = vdwg.mxu0
    %7667 = vmatprep.subr.bf16.mxu0 %v4863
    %7668 = vmatpush1.bf16.msra.mxu0 %v4862
    %7669 = vmatprep.subr.bf16.mxu0 %v4879
    %7670 = vmatpush1.bf16.msra.mxu0 %v4878
    %7671 = vmatprep.subr.bf16.mxu0 %v4895
    %7672 = vmatpush1.bf16.msra.mxu0 %v4894
    %7673 = vmatprep.subr.bf16.mxu0 %v4911
    %7674 = vmatpush1.bf16.msra.mxu0 %v4910
    %7675 = vmatprep.subr.bf16.mxu0 %v4927
    %7676 = vmatpush1.bf16.msra.mxu0 %v4926
    %7677 = vmatprep.subr.bf16.mxu0 %v4943
    %7678 = vmatpush1.bf16.msra.mxu0 %v4942
    %7679 = vmatprep.subr.bf16.mxu0 %v4959
    %7680 = vmatpush1.bf16.msra.mxu0 %v4958
    %7681 = vmatprep.subr.bf16.mxu0 %v4975
    %7682 = vmatpush1.bf16.msra.mxu0 %v4974
    %7683 = vmatprep.subr.bf16.mxu0 %v4991
    %7684 = vmatpush1.bf16.msra.mxu0 %v4990
    %7685 = vmatprep.subr.bf16.mxu0 %v5007
    %7686 = vmatpush1.bf16.msra.mxu0 %v5006
    %7687 = vmatprep.subr.bf16.mxu0 %v5023
    %7688 = vmatpush1.bf16.msra.mxu0 %v5022
    %7689 = vmatprep.subr.bf16.mxu0 %v5039
    %7690 = vmatpush1.bf16.msra.mxu0 %v5038
    %7691 = vmatprep.subr.bf16.mxu0 %v5055
    %7692 = vmatpush1.bf16.msra.mxu0 %v5054
    %7693 = vmatprep.subr.bf16.mxu0 %v5071
    %7694 = vmatpush1.bf16.msra.mxu0 %v5070
    %7695 = vmatprep.subr.bf16.mxu0 %v5087
    %7696 = vmatpush1.bf16.msra.mxu0 %v5086
    %7697 = vmatprep.subr.bf16.mxu0 %v5103
    %7698 = vmatpush1.bf16.msra.mxu0 %v5102
    %7699 = vmatprep.mubr.bf16.mxu0 %v409
    %7700 = vmatmul.mubr.bf16.gmra.mrb[0].mxu0 %v408
    %v7701 = vpop.f32.mrb[0].mxu0
    %v7702 = vadd.f32 %v7661, %v7701
    %v7703 = vpop.f32.mrb[0].mxu0
    %v7704 = vadd.f32 %v7663, %v7703
    %v7705 = vpop.f32.mrb[0].mxu0
    %v7706 = vpop.f32.mrb[0].mxu0
    %7707 = vdwg.mxu0
    %7708 = vmatprep.subr.bf16.mxu0 %v5119
    %7709 = vmatpush1.bf16.msra.mxu0 %v5118
    %7710 = vmatprep.subr.bf16.mxu0 %v5135
    %7711 = vmatpush1.bf16.msra.mxu0 %v5134
    %7712 = vmatprep.subr.bf16.mxu0 %v5151
    %7713 = vmatpush1.bf16.msra.mxu0 %v5150
    %7714 = vmatprep.subr.bf16.mxu0 %v5167
    %7715 = vmatpush1.bf16.msra.mxu0 %v5166
    %7716 = vmatprep.subr.bf16.mxu0 %v5183
    %7717 = vmatpush1.bf16.msra.mxu0 %v5182
    %7718 = vmatprep.subr.bf16.mxu0 %v5199
    %7719 = vmatpush1.bf16.msra.mxu0 %v5198
    %7720 = vmatprep.subr.bf16.mxu0 %v5215
    %7721 = vmatpush1.bf16.msra.mxu0 %v5214
    %7722 = vmatprep.subr.bf16.mxu0 %v5231
    %7723 = vmatpush1.bf16.msra.mxu0 %v5230
    %7724 = vmatprep.subr.bf16.mxu0 %v5247
    %7725 = vmatpush1.bf16.msra.mxu0 %v5246
    %7726 = vmatprep.subr.bf16.mxu0 %v5263
    %7727 = vmatpush1.bf16.msra.mxu0 %v5262
    %7728 = vmatprep.subr.bf16.mxu0 %v5279
    %7729 = vmatpush1.bf16.msra.mxu0 %v5278
    %7730 = vmatprep.subr.bf16.mxu0 %v5295
    %7731 = vmatpush1.bf16.msra.mxu0 %v5294
    %7732 = vmatprep.subr.bf16.mxu0 %v5311
    %7733 = vmatpush1.bf16.msra.mxu0 %v5310
    %7734 = vmatprep.subr.bf16.mxu0 %v5327
    %7735 = vmatpush1.bf16.msra.mxu0 %v5326
    %7736 = vmatprep.subr.bf16.mxu0 %v5343
    %7737 = vmatpush1.bf16.msra.mxu0 %v5342
    %7738 = vmatprep.subr.bf16.mxu0 %v5359
    %7739 = vmatpush1.bf16.msra.mxu0 %v5358
    %7740 = vmatprep.mubr.bf16.mxu0 %v411
    %7741 = vmatmul.mubr.bf16.gmra.mrb[0].mxu0 %v410
    %v7742 = vpop.f32.mrb[0].mxu0
    %v7743 = vadd.f32 %v7702, %v7742
    %v7744 = vpop.f32.mrb[0].mxu0
    %v7745 = vadd.f32 %v7704, %v7744
    %v7746 = vpop.f32.mrb[0].mxu0
    %v7747 = vpop.f32.mrb[0].mxu0
    %7748 = vdwg.mxu0
    %7749 = vmatprep.subr.bf16.mxu0 %v5375
    %7750 = vmatpush1.bf16.msra.mxu0 %v5374
    %7751 = vmatprep.subr.bf16.mxu0 %v5391
    %7752 = vmatpush1.bf16.msra.mxu0 %v5390
    %7753 = vmatprep.subr.bf16.mxu0 %v5407
    %7754 = vmatpush1.bf16.msra.mxu0 %v5406
    %7755 = vmatprep.subr.bf16.mxu0 %v5423
    %7756 = vmatpush1.bf16.msra.mxu0 %v5422
    %7757 = vmatprep.subr.bf16.mxu0 %v5439
    %7758 = vmatpush1.bf16.msra.mxu0 %v5438
    %7759 = vmatprep.subr.bf16.mxu0 %v5455
    %7760 = vmatpush1.bf16.msra.mxu0 %v5454
    %7761 = vmatprep.subr.bf16.mxu0 %v5471
    %7762 = vmatpush1.bf16.msra.mxu0 %v5470
    %7763 = vmatprep.subr.bf16.mxu0 %v5487
    %7764 = vmatpush1.bf16.msra.mxu0 %v5486
    %7765 = vmatprep.subr.bf16.mxu0 %v5503
    %7766 = vmatpush1.bf16.msra.mxu0 %v5502
    %7767 = vmatprep.subr.bf16.mxu0 %v5519
    %7768 = vmatpush1.bf16.msra.mxu0 %v5518
    %7769 = vmatprep.subr.bf16.mxu0 %v5535
    %7770 = vmatpush1.bf16.msra.mxu0 %v5534
    %7771 = vmatprep.subr.bf16.mxu0 %v5551
    %7772 = vmatpush1.bf16.msra.mxu0 %v5550
    %7773 = vmatprep.subr.bf16.mxu0 %v5567
    %7774 = vmatpush1.bf16.msra.mxu0 %v5566
    %7775 = vmatprep.subr.bf16.mxu0 %v5583
    %7776 = vmatpush1.bf16.msra.mxu0 %v5582
    %7777 = vmatprep.subr.bf16.mxu0 %v5599
    %7778 = vmatpush1.bf16.msra.mxu0 %v5598
    %7779 = vmatprep.subr.bf16.mxu0 %v5615
    %7780 = vmatpush1.bf16.msra.mxu0 %v5614
    %7781 = vmatprep.mubr.bf16.mxu0 %v413
    %7782 = vmatmul.mubr.bf16.gmra.mrb[0].mxu0 %v412
    %v7783 = vpop.f32.mrb[0].mxu0
    %v7784 = vadd.f32 %v7743, %v7783
    %v7785 = vpop.f32.mrb[0].mxu0
    %v7786 = vadd.f32 %v7745, %v7785
    %v7787 = vpop.f32.mrb[0].mxu0
    %v7788 = vpop.f32.mrb[0].mxu0
    %7789 = vdwg.mxu0
    %7790 = vmatprep.subr.bf16.mxu0 %v4609
    %7791 = vmatpush1.bf16.msra.mxu0 %v4608
    %7792 = vmatprep.subr.bf16.mxu0 %v4625
    %7793 = vmatpush1.bf16.msra.mxu0 %v4624
    %7794 = vmatprep.subr.bf16.mxu0 %v4641
    %7795 = vmatpush1.bf16.msra.mxu0 %v4640
    %7796 = vmatprep.subr.bf16.mxu0 %v4657
    %7797 = vmatpush1.bf16.msra.mxu0 %v4656
    %7798 = vmatprep.subr.bf16.mxu0 %v4673
    %7799 = vmatpush1.bf16.msra.mxu0 %v4672
    %7800 = vmatprep.subr.bf16.mxu0 %v4689
    %7801 = vmatpush1.bf16.msra.mxu0 %v4688
    %7802 = vmatprep.subr.bf16.mxu0 %v4705
    %7803 = vmatpush1.bf16.msra.mxu0 %v4704
    %7804 = vmatprep.subr.bf16.mxu0 %v4721
    %7805 = vmatpush1.bf16.msra.mxu0 %v4720
    %7806 = vmatprep.subr.bf16.mxu0 %v4737
    %7807 = vmatpush1.bf16.msra.mxu0 %v4736
    %7808 = vmatprep.subr.bf16.mxu0 %v4753
    %7809 = vmatpush1.bf16.msra.mxu0 %v4752
    %7810 = vmatprep.subr.bf16.mxu0 %v4769
    %7811 = vmatpush1.bf16.msra.mxu0 %v4768
    %7812 = vmatprep.subr.bf16.mxu0 %v4785
    %7813 = vmatpush1.bf16.msra.mxu0 %v4784
    %7814 = vmatprep.subr.bf16.mxu0 %v4801
    %7815 = vmatpush1.bf16.msra.mxu0 %v4800
    %7816 = vmatprep.subr.bf16.mxu0 %v4817
    %7817 = vmatpush1.bf16.msra.mxu0 %v4816
    %7818 = vmatprep.subr.bf16.mxu0 %v4833
    %7819 = vmatpush1.bf16.msra.mxu0 %v4832
    %7820 = vmatprep.subr.bf16.mxu0 %v4849
    %7821 = vmatpush1.bf16.msra.mxu0 %v4848
    %7822 = vmatprep.mubr.bf16.mxu0 %v407
    %7823 = vmatmul.mubr.bf16.gmra.mrb[0].mxu0 %v406
    %v7824 = vpop.f32.mrb[0].mxu0
    %v7825 = vadd.f32 %v1501, %v7824
    %v7826 = vpop.f32.mrb[0].mxu0
    %v7827 = vadd.f32 %v1505, %v7826
    %v7828 = vpop.f32.mrb[0].mxu0
    %v7829 = vpop.f32.mrb[0].mxu0
    %7830 = vdwg.mxu0
    %7831 = vmatprep.subr.bf16.mxu0 %v4865
    %7832 = vmatpush1.bf16.msra.mxu0 %v4864
    %7833 = vmatprep.subr.bf16.mxu0 %v4881
    %7834 = vmatpush1.bf16.msra.mxu0 %v4880
    %7835 = vmatprep.subr.bf16.mxu0 %v4897
    %7836 = vmatpush1.bf16.msra.mxu0 %v4896
    %7837 = vmatprep.subr.bf16.mxu0 %v4913
    %7838 = vmatpush1.bf16.msra.mxu0 %v4912
    %7839 = vmatprep.subr.bf16.mxu0 %v4929
    %7840 = vmatpush1.bf16.msra.mxu0 %v4928
    %7841 = vmatprep.subr.bf16.mxu0 %v4945
    %7842 = vmatpush1.bf16.msra.mxu0 %v4944
    %7843 = vmatprep.subr.bf16.mxu0 %v4961
    %7844 = vmatpush1.bf16.msra.mxu0 %v4960
    %7845 = vmatprep.subr.bf16.mxu0 %v4977
    %7846 = vmatpush1.bf16.msra.mxu0 %v4976
    %7847 = vmatprep.subr.bf16.mxu0 %v4993
    %7848 = vmatpush1.bf16.msra.mxu0 %v4992
    %7849 = vmatprep.subr.bf16.mxu0 %v5009
    %7850 = vmatpush1.bf16.msra.mxu0 %v5008
    %7851 = vmatprep.subr.bf16.mxu0 %v5025
    %7852 = vmatpush1.bf16.msra.mxu0 %v5024
    %7853 = vmatprep.subr.bf16.mxu0 %v5041
    %7854 = vmatpush1.bf16.msra.mxu0 %v5040
    %7855 = vmatprep.subr.bf16.mxu0 %v5057
    %7856 = vmatpush1.bf16.msra.mxu0 %v5056
    %7857 = vmatprep.subr.bf16.mxu0 %v5073
    %7858 = vmatpush1.bf16.msra.mxu0 %v5072
    %7859 = vmatprep.subr.bf16.mxu0 %v5089
    %7860 = vmatpush1.bf16.msra.mxu0 %v5088
    %7861 = vmatprep.subr.bf16.mxu0 %v5105
    %7862 = vmatpush1.bf16.msra.mxu0 %v5104
    %7863 = vmatprep.mubr.bf16.mxu0 %v409
    %7864 = vmatmul.mubr.bf16.gmra.mrb[0].mxu0 %v408
    %v7865 = vpop.f32.mrb[0].mxu0
    %v7866 = vadd.f32 %v7825, %v7865
    %v7867 = vpop.f32.mrb[0].mxu0
    %v7868 = vadd.f32 %v7827, %v7867
    %v7869 = vpop.f32.mrb[0].mxu0
    %v7870 = vpop.f32.mrb[0].mxu0
    %7871 = vdwg.mxu0
    %7872 = vmatprep.subr.bf16.mxu0 %v5121
    %7873 = vmatpush1.bf16.msra.mxu0 %v5120
    %7874 = vmatprep.subr.bf16.mxu0 %v5137
    %7875 = vmatpush1.bf16.msra.mxu0 %v5136
    %7876 = vmatprep.subr.bf16.mxu0 %v5153
    %7877 = vmatpush1.bf16.msra.mxu0 %v5152
    %7878 = vmatprep.subr.bf16.mxu0 %v5169
    %7879 = vmatpush1.bf16.msra.mxu0 %v5168
    %7880 = vmatprep.subr.bf16.mxu0 %v5185
    %7881 = vmatpush1.bf16.msra.mxu0 %v5184
    %7882 = vmatprep.subr.bf16.mxu0 %v5201
    %7883 = vmatpush1.bf16.msra.mxu0 %v5200
    %7884 = vmatprep.subr.bf16.mxu0 %v5217
    %7885 = vmatpush1.bf16.msra.mxu0 %v5216
    %7886 = vmatprep.subr.bf16.mxu0 %v5233
    %7887 = vmatpush1.bf16.msra.mxu0 %v5232
    %7888 = vmatprep.subr.bf16.mxu0 %v5249
    %7889 = vmatpush1.bf16.msra.mxu0 %v5248
    %7890 = vmatprep.subr.bf16.mxu0 %v5265
    %7891 = vmatpush1.bf16.msra.mxu0 %v5264
    %7892 = vmatprep.subr.bf16.mxu0 %v5281
    %7893 = vmatpush1.bf16.msra.mxu0 %v5280
    %7894 = vmatprep.subr.bf16.mxu0 %v5297
    %7895 = vmatpush1.bf16.msra.mxu0 %v5296
    %7896 = vmatprep.subr.bf16.mxu0 %v5313
    %7897 = vmatpush1.bf16.msra.mxu0 %v5312
    %7898 = vmatprep.subr.bf16.mxu0 %v5329
    %7899 = vmatpush1.bf16.msra.mxu0 %v5328
    %7900 = vmatprep.subr.bf16.mxu0 %v5345
    %7901 = vmatpush1.bf16.msra.mxu0 %v5344
    %7902 = vmatprep.subr.bf16.mxu0 %v5361
    %7903 = vmatpush1.bf16.msra.mxu0 %v5360
    %7904 = vmatprep.mubr.bf16.mxu0 %v411
    %7905 = vmatmul.mubr.bf16.gmra.mrb[0].mxu0 %v410
    %v7906 = vpop.f32.mrb[0].mxu0
    %v7907 = vadd.f32 %v7866, %v7906
    %v7908 = vpop.f32.mrb[0].mxu0
    %v7909 = vadd.f32 %v7868, %v7908
    %v7910 = vpop.f32.mrb[0].mxu0
    %v7911 = vpop.f32.mrb[0].mxu0
    %7912 = vdwg.mxu0
    %7913 = vmatprep.subr.bf16.mxu0 %v5377
    %7914 = vmatpush1.bf16.msra.mxu0 %v5376
    %7915 = vmatprep.subr.bf16.mxu0 %v5393
    %7916 = vmatpush1.bf16.msra.mxu0 %v5392
    %7917 = vmatprep.subr.bf16.mxu0 %v5409
    %7918 = vmatpush1.bf16.msra.mxu0 %v5408
    %7919 = vmatprep.subr.bf16.mxu0 %v5425
    %7920 = vmatpush1.bf16.msra.mxu0 %v5424
    %7921 = vmatprep.subr.bf16.mxu0 %v5441
    %7922 = vmatpush1.bf16.msra.mxu0 %v5440
    %7923 = vmatprep.subr.bf16.mxu0 %v5457
    %7924 = vmatpush1.bf16.msra.mxu0 %v5456
    %7925 = vmatprep.subr.bf16.mxu0 %v5473
    %7926 = vmatpush1.bf16.msra.mxu0 %v5472
    %7927 = vmatprep.subr.bf16.mxu0 %v5489
    %7928 = vmatpush1.bf16.msra.mxu0 %v5488
    %7929 = vmatprep.subr.bf16.mxu0 %v5505
    %7930 = vmatpush1.bf16.msra.mxu0 %v5504
    %7931 = vmatprep.subr.bf16.mxu0 %v5521
    %7932 = vmatpush1.bf16.msra.mxu0 %v5520
    %7933 = vmatprep.subr.bf16.mxu0 %v5537
    %7934 = vmatpush1.bf16.msra.mxu0 %v5536
    %7935 = vmatprep.subr.bf16.mxu0 %v5553
    %7936 = vmatpush1.bf16.msra.mxu0 %v5552
    %7937 = vmatprep.subr.bf16.mxu0 %v5569
    %7938 = vmatpush1.bf16.msra.mxu0 %v5568
    %7939 = vmatprep.subr.bf16.mxu0 %v5585
    %7940 = vmatpush1.bf16.msra.mxu0 %v5584
    %7941 = vmatprep.subr.bf16.mxu0 %v5601
    %7942 = vmatpush1.bf16.msra.mxu0 %v5600
    %7943 = vmatprep.subr.bf16.mxu0 %v5617
    %7944 = vmatpush1.bf16.msra.mxu0 %v5616
    %7945 = vmatprep.mubr.bf16.mxu0 %v413
    %7946 = vmatmul.mubr.bf16.gmra.mrb[0].mxu0 %v412
    %v7947 = vpop.f32.mrb[0].mxu0
    %v7948 = vadd.f32 %v7907, %v7947
    %v7949 = vpop.f32.mrb[0].mxu0
    %v7950 = vadd.f32 %v7909, %v7949
    %v7951 = vpop.f32.mrb[0].mxu0
    %v7952 = vpop.f32.mrb[0].mxu0
    %7953 = vdwg.mxu0
    %v7954 = vmax.f32 %v6800, 0.0
    %v7955 = vmax.f32 %v6802, 0.0
    %v7956 = vmax.f32 %v6964, 0.0
    %v7957 = vmax.f32 %v6966, 0.0
    %v7958 = vmax.f32 %v7128, 0.0
    %v7959 = vmax.f32 %v7130, 0.0
    %v7960 = vmax.f32 %v7292, 0.0
    %v7961 = vmax.f32 %v7294, 0.0
    %v7962 = vmax.f32 %v7456, 0.0
    %v7963 = vmax.f32 %v7458, 0.0
    %v7964 = vmax.f32 %v7620, 0.0
    %v7965 = vmax.f32 %v7622, 0.0
    %v7966 = vmax.f32 %v7784, 0.0
    %v7967 = vmax.f32 %v7786, 0.0
    %v7968 = vmax.f32 %v7948, 0.0
    %v7969 = vmax.f32 %v7950, 0.0
    %v7970 = vpack.c.bf16 %v7954, %v7954
    %v7971 = vpack.c.bf16 %v7955, %v7955
    %v7972 = vpack.c.bf16 %v7956, %v7956
    %v7973 = vpack.c.bf16 %v7957, %v7957
    %v7974 = vpack.c.bf16 %v7958, %v7958
    %v7975 = vpack.c.bf16 %v7959, %v7959
    %v7976 = vpack.c.bf16 %v7960, %v7960
    %v7977 = vpack.c.bf16 %v7961, %v7961
    %v7978 = vpack.c.bf16 %v7962, %v7962
    %v7979 = vpack.c.bf16 %v7963, %v7963
    %v7980 = vpack.c.bf16 %v7964, %v7964
    %v7981 = vpack.c.bf16 %v7965, %v7965
    %v7982 = vpack.c.bf16 %v7966, %v7966
    %v7983 = vpack.c.bf16 %v7967, %v7967
    %v7984 = vpack.c.bf16 %v7968, %v7968
    %v7985 = vpack.c.bf16 %v7969, %v7969
    %v7986 = vld [vmem:[#allocation7] sm:$0xff]
    %v7987 = vld [vmem:[#allocation7 + $0x8] sm:$0xff]
    %v7988 = vld [vmem:[#allocation7 + $0x10] sm:$0xff]
    %v7989 = vld [vmem:[#allocation7 + $0x18] sm:$0xff]
    %v7990 = vld [vmem:[#allocation7 + $0x20] sm:$0xff]
    %v7991 = vld [vmem:[#allocation7 + $0x28] sm:$0xff]
    %v7992 = vld [vmem:[#allocation7 + $0x30] sm:$0xff]
    %v7993 = vld [vmem:[#allocation7 + $0x38] sm:$0xff]
    %v7994 = vld [vmem:[#allocation7 + $0x40] sm:$0xff]
    %v7995 = vld [vmem:[#allocation7 + $0x48] sm:$0xff]
    %v7996 = vld [vmem:[#allocation7 + $0x50] sm:$0xff]
    %v7997 = vld [vmem:[#allocation7 + $0x58] sm:$0xff]
    %v7998 = vld [vmem:[#allocation7 + $0x60] sm:$0xff]
    %v7999 = vld [vmem:[#allocation7 + $0x68] sm:$0xff]
    %v8000 = vld [vmem:[#allocation7 + $0x70] sm:$0xff]
    %v8001 = vld [vmem:[#allocation7 + $0x78] sm:$0xff]
    %v8002 = vld [vmem:[#allocation7 + $0x80] sm:$0xff]
    %v8003 = vld [vmem:[#allocation7 + $0x88] sm:$0xff]
    %v8004 = vld [vmem:[#allocation7 + $0x90] sm:$0xff]
    %v8005 = vld [vmem:[#allocation7 + $0x98] sm:$0xff]
    %v8006 = vld [vmem:[#allocation7 + $0xa0] sm:$0xff]
    %v8007 = vld [vmem:[#allocation7 + $0xa8] sm:$0xff]
    %v8008 = vld [vmem:[#allocation7 + $0xb0] sm:$0xff]
    %v8009 = vld [vmem:[#allocation7 + $0xb8] sm:$0xff]
    %v8010 = vld [vmem:[#allocation7 + $0xc0] sm:$0xff]
    %v8011 = vld [vmem:[#allocation7 + $0xc8] sm:$0xff]
    %v8012 = vld [vmem:[#allocation7 + $0xd0] sm:$0xff]
    %v8013 = vld [vmem:[#allocation7 + $0xd8] sm:$0xff]
    %v8014 = vld [vmem:[#allocation7 + $0xe0] sm:$0xff]
    %v8015 = vld [vmem:[#allocation7 + $0xe8] sm:$0xff]
    %v8016 = vld [vmem:[#allocation7 + $0xf0] sm:$0xff]
    %v8017 = vld [vmem:[#allocation7 + $0xf8] sm:$0xff]
    %v8018 = vld [vmem:[#allocation7 + $0x100] sm:$0xff]
    %v8019 = vld [vmem:[#allocation7 + $0x108] sm:$0xff]
    %v8020 = vld [vmem:[#allocation7 + $0x110] sm:$0xff]
    %v8021 = vld [vmem:[#allocation7 + $0x118] sm:$0xff]
    %v8022 = vld [vmem:[#allocation7 + $0x120] sm:$0xff]
    %v8023 = vld [vmem:[#allocation7 + $0x128] sm:$0xff]
    %v8024 = vld [vmem:[#allocation7 + $0x130] sm:$0xff]
    %v8025 = vld [vmem:[#allocation7 + $0x138] sm:$0xff]
    %v8026 = vld [vmem:[#allocation7 + $0x140] sm:$0xff]
    %v8027 = vld [vmem:[#allocation7 + $0x148] sm:$0xff]
    %v8028 = vld [vmem:[#allocation7 + $0x150] sm:$0xff]
    %v8029 = vld [vmem:[#allocation7 + $0x158] sm:$0xff]
    %v8030 = vld [vmem:[#allocation7 + $0x160] sm:$0xff]
    %v8031 = vld [vmem:[#allocation7 + $0x168] sm:$0xff]
    %v8032 = vld [vmem:[#allocation7 + $0x170] sm:$0xff]
    %v8033 = vld [vmem:[#allocation7 + $0x178] sm:$0xff]
    %v8034 = vld [vmem:[#allocation7 + $0x180] sm:$0xff]
    %v8035 = vld [vmem:[#allocation7 + $0x188] sm:$0xff]
    %v8036 = vld [vmem:[#allocation7 + $0x190] sm:$0xff]
    %v8037 = vld [vmem:[#allocation7 + $0x198] sm:$0xff]
    %v8038 = vld [vmem:[#allocation7 + $0x1a0] sm:$0xff]
    %v8039 = vld [vmem:[#allocation7 + $0x1a8] sm:$0xff]
    %v8040 = vld [vmem:[#allocation7 + $0x1b0] sm:$0xff]
    %v8041 = vld [vmem:[#allocation7 + $0x1b8] sm:$0xff]
    %v8042 = vld [vmem:[#allocation7 + $0x1c0] sm:$0xff]
    %v8043 = vld [vmem:[#allocation7 + $0x1c8] sm:$0xff]
    %v8044 = vld [vmem:[#allocation7 + $0x1d0] sm:$0xff]
    %v8045 = vld [vmem:[#allocation7 + $0x1d8] sm:$0xff]
    %v8046 = vld [vmem:[#allocation7 + $0x1e0] sm:$0xff]
    %v8047 = vld [vmem:[#allocation7 + $0x1e8] sm:$0xff]
    %v8048 = vld [vmem:[#allocation7 + $0x1f0] sm:$0xff]
    %v8049 = vld [vmem:[#allocation7 + $0x1f8] sm:$0xff]
    %v8050 = vld [vmem:[#allocation7 + $0x200] sm:$0xff]
    %v8051 = vld [vmem:[#allocation7 + $0x208] sm:$0xff]
    %v8052 = vld [vmem:[#allocation7 + $0x210] sm:$0xff]
    %v8053 = vld [vmem:[#allocation7 + $0x218] sm:$0xff]
    %v8054 = vld [vmem:[#allocation7 + $0x220] sm:$0xff]
    %v8055 = vld [vmem:[#allocation7 + $0x228] sm:$0xff]
    %v8056 = vld [vmem:[#allocation7 + $0x230] sm:$0xff]
    %v8057 = vld [vmem:[#allocation7 + $0x238] sm:$0xff]
    %v8058 = vld [vmem:[#allocation7 + $0x240] sm:$0xff]
    %v8059 = vld [vmem:[#allocation7 + $0x248] sm:$0xff]
    %v8060 = vld [vmem:[#allocation7 + $0x250] sm:$0xff]
    %v8061 = vld [vmem:[#allocation7 + $0x258] sm:$0xff]
    %v8062 = vld [vmem:[#allocation7 + $0x260] sm:$0xff]
    %v8063 = vld [vmem:[#allocation7 + $0x268] sm:$0xff]
    %v8064 = vld [vmem:[#allocation7 + $0x270] sm:$0xff]
    %v8065 = vld [vmem:[#allocation7 + $0x278] sm:$0xff]
    %v8066 = vld [vmem:[#allocation7 + $0x280] sm:$0xff]
    %v8067 = vld [vmem:[#allocation7 + $0x288] sm:$0xff]
    %v8068 = vld [vmem:[#allocation7 + $0x290] sm:$0xff]
    %v8069 = vld [vmem:[#allocation7 + $0x298] sm:$0xff]
    %v8070 = vld [vmem:[#allocation7 + $0x2a0] sm:$0xff]
    %v8071 = vld [vmem:[#allocation7 + $0x2a8] sm:$0xff]
    %v8072 = vld [vmem:[#allocation7 + $0x2b0] sm:$0xff]
    %v8073 = vld [vmem:[#allocation7 + $0x2b8] sm:$0xff]
    %v8074 = vld [vmem:[#allocation7 + $0x2c0] sm:$0xff]
    %v8075 = vld [vmem:[#allocation7 + $0x2c8] sm:$0xff]
    %v8076 = vld [vmem:[#allocation7 + $0x2d0] sm:$0xff]
    %v8077 = vld [vmem:[#allocation7 + $0x2d8] sm:$0xff]
    %v8078 = vld [vmem:[#allocation7 + $0x2e0] sm:$0xff]
    %v8079 = vld [vmem:[#allocation7 + $0x2e8] sm:$0xff]
    %v8080 = vld [vmem:[#allocation7 + $0x2f0] sm:$0xff]
    %v8081 = vld [vmem:[#allocation7 + $0x2f8] sm:$0xff]
    %v8082 = vld [vmem:[#allocation7 + $0x300] sm:$0xff]
    %v8083 = vld [vmem:[#allocation7 + $0x308] sm:$0xff]
    %v8084 = vld [vmem:[#allocation7 + $0x310] sm:$0xff]
    %v8085 = vld [vmem:[#allocation7 + $0x318] sm:$0xff]
    %v8086 = vld [vmem:[#allocation7 + $0x320] sm:$0xff]
    %v8087 = vld [vmem:[#allocation7 + $0x328] sm:$0xff]
    %v8088 = vld [vmem:[#allocation7 + $0x330] sm:$0xff]
    %v8089 = vld [vmem:[#allocation7 + $0x338] sm:$0xff]
    %v8090 = vld [vmem:[#allocation7 + $0x340] sm:$0xff]
    %v8091 = vld [vmem:[#allocation7 + $0x348] sm:$0xff]
    %v8092 = vld [vmem:[#allocation7 + $0x350] sm:$0xff]
    %v8093 = vld [vmem:[#allocation7 + $0x358] sm:$0xff]
    %v8094 = vld [vmem:[#allocation7 + $0x360] sm:$0xff]
    %v8095 = vld [vmem:[#allocation7 + $0x368] sm:$0xff]
    %v8096 = vld [vmem:[#allocation7 + $0x370] sm:$0xff]
    %v8097 = vld [vmem:[#allocation7 + $0x378] sm:$0xff]
    %v8098 = vld [vmem:[#allocation7 + $0x380] sm:$0xff]
    %v8099 = vld [vmem:[#allocation7 + $0x388] sm:$0xff]
    %v8100 = vld [vmem:[#allocation7 + $0x390] sm:$0xff]
    %v8101 = vld [vmem:[#allocation7 + $0x398] sm:$0xff]
    %v8102 = vld [vmem:[#allocation7 + $0x3a0] sm:$0xff]
    %v8103 = vld [vmem:[#allocation7 + $0x3a8] sm:$0xff]
    %v8104 = vld [vmem:[#allocation7 + $0x3b0] sm:$0xff]
    %v8105 = vld [vmem:[#allocation7 + $0x3b8] sm:$0xff]
    %v8106 = vld [vmem:[#allocation7 + $0x3c0] sm:$0xff]
    %v8107 = vld [vmem:[#allocation7 + $0x3c8] sm:$0xff]
    %v8108 = vld [vmem:[#allocation7 + $0x3d0] sm:$0xff]
    %v8109 = vld [vmem:[#allocation7 + $0x3d8] sm:$0xff]
    %v8110 = vld [vmem:[#allocation7 + $0x3e0] sm:$0xff]
    %v8111 = vld [vmem:[#allocation7 + $0x3e8] sm:$0xff]
    %v8112 = vld [vmem:[#allocation7 + $0x3f0] sm:$0xff]
    %v8113 = vld [vmem:[#allocation7 + $0x3f8] sm:$0xff]
    %v8114 = vld [vmem:[#allocation7 + $0x400] sm:$0xff]
    %v8115 = vld [vmem:[#allocation7 + $0x408] sm:$0xff]
    %v8116 = vld [vmem:[#allocation7 + $0x410] sm:$0xff]
    %v8117 = vld [vmem:[#allocation7 + $0x418] sm:$0xff]
    %v8118 = vld [vmem:[#allocation7 + $0x420] sm:$0xff]
    %v8119 = vld [vmem:[#allocation7 + $0x428] sm:$0xff]
    %v8120 = vld [vmem:[#allocation7 + $0x430] sm:$0xff]
    %v8121 = vld [vmem:[#allocation7 + $0x438] sm:$0xff]
    %v8122 = vld [vmem:[#allocation7 + $0x440] sm:$0xff]
    %v8123 = vld [vmem:[#allocation7 + $0x448] sm:$0xff]
    %v8124 = vld [vmem:[#allocation7 + $0x450] sm:$0xff]
    %v8125 = vld [vmem:[#allocation7 + $0x458] sm:$0xff]
    %v8126 = vld [vmem:[#allocation7 + $0x460] sm:$0xff]
    %v8127 = vld [vmem:[#allocation7 + $0x468] sm:$0xff]
    %v8128 = vld [vmem:[#allocation7 + $0x470] sm:$0xff]
    %v8129 = vld [vmem:[#allocation7 + $0x478] sm:$0xff]
    %v8130 = vld [vmem:[#allocation7 + $0x480] sm:$0xff]
    %v8131 = vld [vmem:[#allocation7 + $0x488] sm:$0xff]
    %v8132 = vld [vmem:[#allocation7 + $0x490] sm:$0xff]
    %v8133 = vld [vmem:[#allocation7 + $0x498] sm:$0xff]
    %v8134 = vld [vmem:[#allocation7 + $0x4a0] sm:$0xff]
    %v8135 = vld [vmem:[#allocation7 + $0x4a8] sm:$0xff]
    %v8136 = vld [vmem:[#allocation7 + $0x4b0] sm:$0xff]
    %v8137 = vld [vmem:[#allocation7 + $0x4b8] sm:$0xff]
    %v8138 = vld [vmem:[#allocation7 + $0x4c0] sm:$0xff]
    %v8139 = vld [vmem:[#allocation7 + $0x4c8] sm:$0xff]
    %v8140 = vld [vmem:[#allocation7 + $0x4d0] sm:$0xff]
    %v8141 = vld [vmem:[#allocation7 + $0x4d8] sm:$0xff]
    %v8142 = vld [vmem:[#allocation7 + $0x4e0] sm:$0xff]
    %v8143 = vld [vmem:[#allocation7 + $0x4e8] sm:$0xff]
    %v8144 = vld [vmem:[#allocation7 + $0x4f0] sm:$0xff]
    %v8145 = vld [vmem:[#allocation7 + $0x4f8] sm:$0xff]
    %v8146 = vld [vmem:[#allocation7 + $0x500] sm:$0xff]
    %v8147 = vld [vmem:[#allocation7 + $0x508] sm:$0xff]
    %v8148 = vld [vmem:[#allocation7 + $0x510] sm:$0xff]
    %v8149 = vld [vmem:[#allocation7 + $0x518] sm:$0xff]
    %v8150 = vld [vmem:[#allocation7 + $0x520] sm:$0xff]
    %v8151 = vld [vmem:[#allocation7 + $0x528] sm:$0xff]
    %v8152 = vld [vmem:[#allocation7 + $0x530] sm:$0xff]
    %v8153 = vld [vmem:[#allocation7 + $0x538] sm:$0xff]
    %v8154 = vld [vmem:[#allocation7 + $0x540] sm:$0xff]
    %v8155 = vld [vmem:[#allocation7 + $0x548] sm:$0xff]
    %v8156 = vld [vmem:[#allocation7 + $0x550] sm:$0xff]
    %v8157 = vld [vmem:[#allocation7 + $0x558] sm:$0xff]
    %v8158 = vld [vmem:[#allocation7 + $0x560] sm:$0xff]
    %v8159 = vld [vmem:[#allocation7 + $0x568] sm:$0xff]
    %v8160 = vld [vmem:[#allocation7 + $0x570] sm:$0xff]
    %v8161 = vld [vmem:[#allocation7 + $0x578] sm:$0xff]
    %v8162 = vld [vmem:[#allocation7 + $0x580] sm:$0xff]
    %v8163 = vld [vmem:[#allocation7 + $0x588] sm:$0xff]
    %v8164 = vld [vmem:[#allocation7 + $0x590] sm:$0xff]
    %v8165 = vld [vmem:[#allocation7 + $0x598] sm:$0xff]
    %v8166 = vld [vmem:[#allocation7 + $0x5a0] sm:$0xff]
    %v8167 = vld [vmem:[#allocation7 + $0x5a8] sm:$0xff]
    %v8168 = vld [vmem:[#allocation7 + $0x5b0] sm:$0xff]
    %v8169 = vld [vmem:[#allocation7 + $0x5b8] sm:$0xff]
    %v8170 = vld [vmem:[#allocation7 + $0x5c0] sm:$0xff]
    %v8171 = vld [vmem:[#allocation7 + $0x5c8] sm:$0xff]
    %v8172 = vld [vmem:[#allocation7 + $0x5d0] sm:$0xff]
    %v8173 = vld [vmem:[#allocation7 + $0x5d8] sm:$0xff]
    %v8174 = vld [vmem:[#allocation7 + $0x5e0] sm:$0xff]
    %v8175 = vld [vmem:[#allocation7 + $0x5e8] sm:$0xff]
    %v8176 = vld [vmem:[#allocation7 + $0x5f0] sm:$0xff]
    %v8177 = vld [vmem:[#allocation7 + $0x5f8] sm:$0xff]
    %v8178 = vld [vmem:[#allocation7 + $0x600] sm:$0xff]
    %v8179 = vld [vmem:[#allocation7 + $0x608] sm:$0xff]
    %v8180 = vld [vmem:[#allocation7 + $0x610] sm:$0xff]
    %v8181 = vld [vmem:[#allocation7 + $0x618] sm:$0xff]
    %v8182 = vld [vmem:[#allocation7 + $0x620] sm:$0xff]
    %v8183 = vld [vmem:[#allocation7 + $0x628] sm:$0xff]
    %v8184 = vld [vmem:[#allocation7 + $0x630] sm:$0xff]
    %v8185 = vld [vmem:[#allocation7 + $0x638] sm:$0xff]
    %v8186 = vld [vmem:[#allocation7 + $0x640] sm:$0xff]
    %v8187 = vld [vmem:[#allocation7 + $0x648] sm:$0xff]
    %v8188 = vld [vmem:[#allocation7 + $0x650] sm:$0xff]
    %v8189 = vld [vmem:[#allocation7 + $0x658] sm:$0xff]
    %v8190 = vld [vmem:[#allocation7 + $0x660] sm:$0xff]
    %v8191 = vld [vmem:[#allocation7 + $0x668] sm:$0xff]
    %v8192 = vld [vmem:[#allocation7 + $0x670] sm:$0xff]
    %v8193 = vld [vmem:[#allocation7 + $0x678] sm:$0xff]
    %v8194 = vld [vmem:[#allocation7 + $0x680] sm:$0xff]
    %v8195 = vld [vmem:[#allocation7 + $0x688] sm:$0xff]
    %v8196 = vld [vmem:[#allocation7 + $0x690] sm:$0xff]
    %v8197 = vld [vmem:[#allocation7 + $0x698] sm:$0xff]
    %v8198 = vld [vmem:[#allocation7 + $0x6a0] sm:$0xff]
    %v8199 = vld [vmem:[#allocation7 + $0x6a8] sm:$0xff]
    %v8200 = vld [vmem:[#allocation7 + $0x6b0] sm:$0xff]
    %v8201 = vld [vmem:[#allocation7 + $0x6b8] sm:$0xff]
    %v8202 = vld [vmem:[#allocation7 + $0x6c0] sm:$0xff]
    %v8203 = vld [vmem:[#allocation7 + $0x6c8] sm:$0xff]
    %v8204 = vld [vmem:[#allocation7 + $0x6d0] sm:$0xff]
    %v8205 = vld [vmem:[#allocation7 + $0x6d8] sm:$0xff]
    %v8206 = vld [vmem:[#allocation7 + $0x6e0] sm:$0xff]
    %v8207 = vld [vmem:[#allocation7 + $0x6e8] sm:$0xff]
    %v8208 = vld [vmem:[#allocation7 + $0x6f0] sm:$0xff]
    %v8209 = vld [vmem:[#allocation7 + $0x6f8] sm:$0xff]
    %v8210 = vld [vmem:[#allocation7 + $0x700] sm:$0xff]
    %v8211 = vld [vmem:[#allocation7 + $0x708] sm:$0xff]
    %v8212 = vld [vmem:[#allocation7 + $0x710] sm:$0xff]
    %v8213 = vld [vmem:[#allocation7 + $0x718] sm:$0xff]
    %v8214 = vld [vmem:[#allocation7 + $0x720] sm:$0xff]
    %v8215 = vld [vmem:[#allocation7 + $0x728] sm:$0xff]
    %v8216 = vld [vmem:[#allocation7 + $0x730] sm:$0xff]
    %v8217 = vld [vmem:[#allocation7 + $0x738] sm:$0xff]
    %v8218 = vld [vmem:[#allocation7 + $0x740] sm:$0xff]
    %v8219 = vld [vmem:[#allocation7 + $0x748] sm:$0xff]
    %v8220 = vld [vmem:[#allocation7 + $0x750] sm:$0xff]
    %v8221 = vld [vmem:[#allocation7 + $0x758] sm:$0xff]
    %v8222 = vld [vmem:[#allocation7 + $0x760] sm:$0xff]
    %v8223 = vld [vmem:[#allocation7 + $0x768] sm:$0xff]
    %v8224 = vld [vmem:[#allocation7 + $0x770] sm:$0xff]
    %v8225 = vld [vmem:[#allocation7 + $0x778] sm:$0xff]
    %v8226 = vld [vmem:[#allocation7 + $0x780] sm:$0xff]
    %v8227 = vld [vmem:[#allocation7 + $0x788] sm:$0xff]
    %v8228 = vld [vmem:[#allocation7 + $0x790] sm:$0xff]
    %v8229 = vld [vmem:[#allocation7 + $0x798] sm:$0xff]
    %v8230 = vld [vmem:[#allocation7 + $0x7a0] sm:$0xff]
    %v8231 = vld [vmem:[#allocation7 + $0x7a8] sm:$0xff]
    %v8232 = vld [vmem:[#allocation7 + $0x7b0] sm:$0xff]
    %v8233 = vld [vmem:[#allocation7 + $0x7b8] sm:$0xff]
    %v8234 = vld [vmem:[#allocation7 + $0x7c0] sm:$0xff]
    %v8235 = vld [vmem:[#allocation7 + $0x7c8] sm:$0xff]
    %v8236 = vld [vmem:[#allocation7 + $0x7d0] sm:$0xff]
    %v8237 = vld [vmem:[#allocation7 + $0x7d8] sm:$0xff]
    %v8238 = vld [vmem:[#allocation7 + $0x7e0] sm:$0xff]
    %v8239 = vld [vmem:[#allocation7 + $0x7e8] sm:$0xff]
    %v8240 = vld [vmem:[#allocation7 + $0x7f0] sm:$0xff]
    %v8241 = vld [vmem:[#allocation7 + $0x7f8] sm:$0xff]
    %v8242 = vld [vmem:[#allocation7 + $0x800] sm:$0xff]
    %v8243 = vld [vmem:[#allocation7 + $0x808] sm:$0xff]
    %v8244 = vld [vmem:[#allocation7 + $0x810] sm:$0xff]
    %v8245 = vld [vmem:[#allocation7 + $0x818] sm:$0xff]
    %v8246 = vld [vmem:[#allocation7 + $0x820] sm:$0xff]
    %v8247 = vld [vmem:[#allocation7 + $0x828] sm:$0xff]
    %v8248 = vld [vmem:[#allocation7 + $0x830] sm:$0xff]
    %v8249 = vld [vmem:[#allocation7 + $0x838] sm:$0xff]
    %v8250 = vld [vmem:[#allocation7 + $0x840] sm:$0xff]
    %v8251 = vld [vmem:[#allocation7 + $0x848] sm:$0xff]
    %v8252 = vld [vmem:[#allocation7 + $0x850] sm:$0xff]
    %v8253 = vld [vmem:[#allocation7 + $0x858] sm:$0xff]
    %v8254 = vld [vmem:[#allocation7 + $0x860] sm:$0xff]
    %v8255 = vld [vmem:[#allocation7 + $0x868] sm:$0xff]
    %v8256 = vld [vmem:[#allocation7 + $0x870] sm:$0xff]
    %v8257 = vld [vmem:[#allocation7 + $0x878] sm:$0xff]
    %v8258 = vld [vmem:[#allocation7 + $0x880] sm:$0xff]
    %v8259 = vld [vmem:[#allocation7 + $0x888] sm:$0xff]
    %v8260 = vld [vmem:[#allocation7 + $0x890] sm:$0xff]
    %v8261 = vld [vmem:[#allocation7 + $0x898] sm:$0xff]
    %v8262 = vld [vmem:[#allocation7 + $0x8a0] sm:$0xff]
    %v8263 = vld [vmem:[#allocation7 + $0x8a8] sm:$0xff]
    %v8264 = vld [vmem:[#allocation7 + $0x8b0] sm:$0xff]
    %v8265 = vld [vmem:[#allocation7 + $0x8b8] sm:$0xff]
    %v8266 = vld [vmem:[#allocation7 + $0x8c0] sm:$0xff]
    %v8267 = vld [vmem:[#allocation7 + $0x8c8] sm:$0xff]
    %v8268 = vld [vmem:[#allocation7 + $0x8d0] sm:$0xff]
    %v8269 = vld [vmem:[#allocation7 + $0x8d8] sm:$0xff]
    %v8270 = vld [vmem:[#allocation7 + $0x8e0] sm:$0xff]
    %v8271 = vld [vmem:[#allocation7 + $0x8e8] sm:$0xff]
    %v8272 = vld [vmem:[#allocation7 + $0x8f0] sm:$0xff]
    %v8273 = vld [vmem:[#allocation7 + $0x8f8] sm:$0xff]
    %v8274 = vld [vmem:[#allocation7 + $0x900] sm:$0xff]
    %v8275 = vld [vmem:[#allocation7 + $0x908] sm:$0xff]
    %v8276 = vld [vmem:[#allocation7 + $0x910] sm:$0xff]
    %v8277 = vld [vmem:[#allocation7 + $0x918] sm:$0xff]
    %v8278 = vld [vmem:[#allocation7 + $0x920] sm:$0xff]
    %v8279 = vld [vmem:[#allocation7 + $0x928] sm:$0xff]
    %v8280 = vld [vmem:[#allocation7 + $0x930] sm:$0xff]
    %v8281 = vld [vmem:[#allocation7 + $0x938] sm:$0xff]
    %v8282 = vld [vmem:[#allocation7 + $0x940] sm:$0xff]
    %v8283 = vld [vmem:[#allocation7 + $0x948] sm:$0xff]
    %v8284 = vld [vmem:[#allocation7 + $0x950] sm:$0xff]
    %v8285 = vld [vmem:[#allocation7 + $0x958] sm:$0xff]
    %v8286 = vld [vmem:[#allocation7 + $0x960] sm:$0xff]
    %v8287 = vld [vmem:[#allocation7 + $0x968] sm:$0xff]
    %v8288 = vld [vmem:[#allocation7 + $0x970] sm:$0xff]
    %v8289 = vld [vmem:[#allocation7 + $0x978] sm:$0xff]
    %v8290 = vld [vmem:[#allocation7 + $0x980] sm:$0xff]
    %v8291 = vld [vmem:[#allocation7 + $0x988] sm:$0xff]
    %v8292 = vld [vmem:[#allocation7 + $0x990] sm:$0xff]
    %v8293 = vld [vmem:[#allocation7 + $0x998] sm:$0xff]
    %v8294 = vld [vmem:[#allocation7 + $0x9a0] sm:$0xff]
    %v8295 = vld [vmem:[#allocation7 + $0x9a8] sm:$0xff]
    %v8296 = vld [vmem:[#allocation7 + $0x9b0] sm:$0xff]
    %v8297 = vld [vmem:[#allocation7 + $0x9b8] sm:$0xff]
    %v8298 = vld [vmem:[#allocation7 + $0x9c0] sm:$0xff]
    %v8299 = vld [vmem:[#allocation7 + $0x9c8] sm:$0xff]
    %v8300 = vld [vmem:[#allocation7 + $0x9d0] sm:$0xff]
    %v8301 = vld [vmem:[#allocation7 + $0x9d8] sm:$0xff]
    %v8302 = vld [vmem:[#allocation7 + $0x9e0] sm:$0xff]
    %v8303 = vld [vmem:[#allocation7 + $0x9e8] sm:$0xff]
    %v8304 = vld [vmem:[#allocation7 + $0x9f0] sm:$0xff]
    %v8305 = vld [vmem:[#allocation7 + $0x9f8] sm:$0xff]
    %v8306 = vld [vmem:[#allocation7 + $0xa00] sm:$0xff]
    %v8307 = vld [vmem:[#allocation7 + $0xa08] sm:$0xff]
    %v8308 = vld [vmem:[#allocation7 + $0xa10] sm:$0xff]
    %v8309 = vld [vmem:[#allocation7 + $0xa18] sm:$0xff]
    %v8310 = vld [vmem:[#allocation7 + $0xa20] sm:$0xff]
    %v8311 = vld [vmem:[#allocation7 + $0xa28] sm:$0xff]
    %v8312 = vld [vmem:[#allocation7 + $0xa30] sm:$0xff]
    %v8313 = vld [vmem:[#allocation7 + $0xa38] sm:$0xff]
    %v8314 = vld [vmem:[#allocation7 + $0xa40] sm:$0xff]
    %v8315 = vld [vmem:[#allocation7 + $0xa48] sm:$0xff]
    %v8316 = vld [vmem:[#allocation7 + $0xa50] sm:$0xff]
    %v8317 = vld [vmem:[#allocation7 + $0xa58] sm:$0xff]
    %v8318 = vld [vmem:[#allocation7 + $0xa60] sm:$0xff]
    %v8319 = vld [vmem:[#allocation7 + $0xa68] sm:$0xff]
    %v8320 = vld [vmem:[#allocation7 + $0xa70] sm:$0xff]
    %v8321 = vld [vmem:[#allocation7 + $0xa78] sm:$0xff]
    %v8322 = vld [vmem:[#allocation7 + $0xa80] sm:$0xff]
    %v8323 = vld [vmem:[#allocation7 + $0xa88] sm:$0xff]
    %v8324 = vld [vmem:[#allocation7 + $0xa90] sm:$0xff]
    %v8325 = vld [vmem:[#allocation7 + $0xa98] sm:$0xff]
    %v8326 = vld [vmem:[#allocation7 + $0xaa0] sm:$0xff]
    %v8327 = vld [vmem:[#allocation7 + $0xaa8] sm:$0xff]
    %v8328 = vld [vmem:[#allocation7 + $0xab0] sm:$0xff]
    %v8329 = vld [vmem:[#allocation7 + $0xab8] sm:$0xff]
    %v8330 = vld [vmem:[#allocation7 + $0xac0] sm:$0xff]
    %v8331 = vld [vmem:[#allocation7 + $0xac8] sm:$0xff]
    %v8332 = vld [vmem:[#allocation7 + $0xad0] sm:$0xff]
    %v8333 = vld [vmem:[#allocation7 + $0xad8] sm:$0xff]
    %v8334 = vld [vmem:[#allocation7 + $0xae0] sm:$0xff]
    %v8335 = vld [vmem:[#allocation7 + $0xae8] sm:$0xff]
    %v8336 = vld [vmem:[#allocation7 + $0xaf0] sm:$0xff]
    %v8337 = vld [vmem:[#allocation7 + $0xaf8] sm:$0xff]
    %v8338 = vld [vmem:[#allocation7 + $0xb00] sm:$0xff]
    %v8339 = vld [vmem:[#allocation7 + $0xb08] sm:$0xff]
    %v8340 = vld [vmem:[#allocation7 + $0xb10] sm:$0xff]
    %v8341 = vld [vmem:[#allocation7 + $0xb18] sm:$0xff]
    %v8342 = vld [vmem:[#allocation7 + $0xb20] sm:$0xff]
    %v8343 = vld [vmem:[#allocation7 + $0xb28] sm:$0xff]
    %v8344 = vld [vmem:[#allocation7 + $0xb30] sm:$0xff]
    %v8345 = vld [vmem:[#allocation7 + $0xb38] sm:$0xff]
    %v8346 = vld [vmem:[#allocation7 + $0xb40] sm:$0xff]
    %v8347 = vld [vmem:[#allocation7 + $0xb48] sm:$0xff]
    %v8348 = vld [vmem:[#allocation7 + $0xb50] sm:$0xff]
    %v8349 = vld [vmem:[#allocation7 + $0xb58] sm:$0xff]
    %v8350 = vld [vmem:[#allocation7 + $0xb60] sm:$0xff]
    %v8351 = vld [vmem:[#allocation7 + $0xb68] sm:$0xff]
    %v8352 = vld [vmem:[#allocation7 + $0xb70] sm:$0xff]
    %v8353 = vld [vmem:[#allocation7 + $0xb78] sm:$0xff]
    %v8354 = vld [vmem:[#allocation7 + $0xb80] sm:$0xff]
    %v8355 = vld [vmem:[#allocation7 + $0xb88] sm:$0xff]
    %v8356 = vld [vmem:[#allocation7 + $0xb90] sm:$0xff]
    %v8357 = vld [vmem:[#allocation7 + $0xb98] sm:$0xff]
    %v8358 = vld [vmem:[#allocation7 + $0xba0] sm:$0xff]
    %v8359 = vld [vmem:[#allocation7 + $0xba8] sm:$0xff]
    %v8360 = vld [vmem:[#allocation7 + $0xbb0] sm:$0xff]
    %v8361 = vld [vmem:[#allocation7 + $0xbb8] sm:$0xff]
    %v8362 = vld [vmem:[#allocation7 + $0xbc0] sm:$0xff]
    %v8363 = vld [vmem:[#allocation7 + $0xbc8] sm:$0xff]
    %v8364 = vld [vmem:[#allocation7 + $0xbd0] sm:$0xff]
    %v8365 = vld [vmem:[#allocation7 + $0xbd8] sm:$0xff]
    %v8366 = vld [vmem:[#allocation7 + $0xbe0] sm:$0xff]
    %v8367 = vld [vmem:[#allocation7 + $0xbe8] sm:$0xff]
    %v8368 = vld [vmem:[#allocation7 + $0xbf0] sm:$0xff]
    %v8369 = vld [vmem:[#allocation7 + $0xbf8] sm:$0xff]
    %v8370 = vld [vmem:[#allocation7 + $0xc00] sm:$0xff]
    %v8371 = vld [vmem:[#allocation7 + $0xc08] sm:$0xff]
    %v8372 = vld [vmem:[#allocation7 + $0xc10] sm:$0xff]
    %v8373 = vld [vmem:[#allocation7 + $0xc18] sm:$0xff]
    %v8374 = vld [vmem:[#allocation7 + $0xc20] sm:$0xff]
    %v8375 = vld [vmem:[#allocation7 + $0xc28] sm:$0xff]
    %v8376 = vld [vmem:[#allocation7 + $0xc30] sm:$0xff]
    %v8377 = vld [vmem:[#allocation7 + $0xc38] sm:$0xff]
    %v8378 = vld [vmem:[#allocation7 + $0xc40] sm:$0xff]
    %v8379 = vld [vmem:[#allocation7 + $0xc48] sm:$0xff]
    %v8380 = vld [vmem:[#allocation7 + $0xc50] sm:$0xff]
    %v8381 = vld [vmem:[#allocation7 + $0xc58] sm:$0xff]
    %v8382 = vld [vmem:[#allocation7 + $0xc60] sm:$0xff]
    %v8383 = vld [vmem:[#allocation7 + $0xc68] sm:$0xff]
    %v8384 = vld [vmem:[#allocation7 + $0xc70] sm:$0xff]
    %v8385 = vld [vmem:[#allocation7 + $0xc78] sm:$0xff]
    %v8386 = vld [vmem:[#allocation7 + $0xc80] sm:$0xff]
    %v8387 = vld [vmem:[#allocation7 + $0xc88] sm:$0xff]
    %v8388 = vld [vmem:[#allocation7 + $0xc90] sm:$0xff]
    %v8389 = vld [vmem:[#allocation7 + $0xc98] sm:$0xff]
    %v8390 = vld [vmem:[#allocation7 + $0xca0] sm:$0xff]
    %v8391 = vld [vmem:[#allocation7 + $0xca8] sm:$0xff]
    %v8392 = vld [vmem:[#allocation7 + $0xcb0] sm:$0xff]
    %v8393 = vld [vmem:[#allocation7 + $0xcb8] sm:$0xff]
    %v8394 = vld [vmem:[#allocation7 + $0xcc0] sm:$0xff]
    %v8395 = vld [vmem:[#allocation7 + $0xcc8] sm:$0xff]
    %v8396 = vld [vmem:[#allocation7 + $0xcd0] sm:$0xff]
    %v8397 = vld [vmem:[#allocation7 + $0xcd8] sm:$0xff]
    %v8398 = vld [vmem:[#allocation7 + $0xce0] sm:$0xff]
    %v8399 = vld [vmem:[#allocation7 + $0xce8] sm:$0xff]
    %v8400 = vld [vmem:[#allocation7 + $0xcf0] sm:$0xff]
    %v8401 = vld [vmem:[#allocation7 + $0xcf8] sm:$0xff]
    %v8402 = vld [vmem:[#allocation7 + $0xd00] sm:$0xff]
    %v8403 = vld [vmem:[#allocation7 + $0xd08] sm:$0xff]
    %v8404 = vld [vmem:[#allocation7 + $0xd10] sm:$0xff]
    %v8405 = vld [vmem:[#allocation7 + $0xd18] sm:$0xff]
    %v8406 = vld [vmem:[#allocation7 + $0xd20] sm:$0xff]
    %v8407 = vld [vmem:[#allocation7 + $0xd28] sm:$0xff]
    %v8408 = vld [vmem:[#allocation7 + $0xd30] sm:$0xff]
    %v8409 = vld [vmem:[#allocation7 + $0xd38] sm:$0xff]
    %v8410 = vld [vmem:[#allocation7 + $0xd40] sm:$0xff]
    %v8411 = vld [vmem:[#allocation7 + $0xd48] sm:$0xff]
    %v8412 = vld [vmem:[#allocation7 + $0xd50] sm:$0xff]
    %v8413 = vld [vmem:[#allocation7 + $0xd58] sm:$0xff]
    %v8414 = vld [vmem:[#allocation7 + $0xd60] sm:$0xff]
    %v8415 = vld [vmem:[#allocation7 + $0xd68] sm:$0xff]
    %v8416 = vld [vmem:[#allocation7 + $0xd70] sm:$0xff]
    %v8417 = vld [vmem:[#allocation7 + $0xd78] sm:$0xff]
    %v8418 = vld [vmem:[#allocation7 + $0xd80] sm:$0xff]
    %v8419 = vld [vmem:[#allocation7 + $0xd88] sm:$0xff]
    %v8420 = vld [vmem:[#allocation7 + $0xd90] sm:$0xff]
    %v8421 = vld [vmem:[#allocation7 + $0xd98] sm:$0xff]
    %v8422 = vld [vmem:[#allocation7 + $0xda0] sm:$0xff]
    %v8423 = vld [vmem:[#allocation7 + $0xda8] sm:$0xff]
    %v8424 = vld [vmem:[#allocation7 + $0xdb0] sm:$0xff]
    %v8425 = vld [vmem:[#allocation7 + $0xdb8] sm:$0xff]
    %v8426 = vld [vmem:[#allocation7 + $0xdc0] sm:$0xff]
    %v8427 = vld [vmem:[#allocation7 + $0xdc8] sm:$0xff]
    %v8428 = vld [vmem:[#allocation7 + $0xdd0] sm:$0xff]
    %v8429 = vld [vmem:[#allocation7 + $0xdd8] sm:$0xff]
    %v8430 = vld [vmem:[#allocation7 + $0xde0] sm:$0xff]
    %v8431 = vld [vmem:[#allocation7 + $0xde8] sm:$0xff]
    %v8432 = vld [vmem:[#allocation7 + $0xdf0] sm:$0xff]
    %v8433 = vld [vmem:[#allocation7 + $0xdf8] sm:$0xff]
    %v8434 = vld [vmem:[#allocation7 + $0xe00] sm:$0xff]
    %v8435 = vld [vmem:[#allocation7 + $0xe08] sm:$0xff]
    %v8436 = vld [vmem:[#allocation7 + $0xe10] sm:$0xff]
    %v8437 = vld [vmem:[#allocation7 + $0xe18] sm:$0xff]
    %v8438 = vld [vmem:[#allocation7 + $0xe20] sm:$0xff]
    %v8439 = vld [vmem:[#allocation7 + $0xe28] sm:$0xff]
    %v8440 = vld [vmem:[#allocation7 + $0xe30] sm:$0xff]
    %v8441 = vld [vmem:[#allocation7 + $0xe38] sm:$0xff]
    %v8442 = vld [vmem:[#allocation7 + $0xe40] sm:$0xff]
    %v8443 = vld [vmem:[#allocation7 + $0xe48] sm:$0xff]
    %v8444 = vld [vmem:[#allocation7 + $0xe50] sm:$0xff]
    %v8445 = vld [vmem:[#allocation7 + $0xe58] sm:$0xff]
    %v8446 = vld [vmem:[#allocation7 + $0xe60] sm:$0xff]
    %v8447 = vld [vmem:[#allocation7 + $0xe68] sm:$0xff]
    %v8448 = vld [vmem:[#allocation7 + $0xe70] sm:$0xff]
    %v8449 = vld [vmem:[#allocation7 + $0xe78] sm:$0xff]
    %v8450 = vld [vmem:[#allocation7 + $0xe80] sm:$0xff]
    %v8451 = vld [vmem:[#allocation7 + $0xe88] sm:$0xff]
    %v8452 = vld [vmem:[#allocation7 + $0xe90] sm:$0xff]
    %v8453 = vld [vmem:[#allocation7 + $0xe98] sm:$0xff]
    %v8454 = vld [vmem:[#allocation7 + $0xea0] sm:$0xff]
    %v8455 = vld [vmem:[#allocation7 + $0xea8] sm:$0xff]
    %v8456 = vld [vmem:[#allocation7 + $0xeb0] sm:$0xff]
    %v8457 = vld [vmem:[#allocation7 + $0xeb8] sm:$0xff]
    %v8458 = vld [vmem:[#allocation7 + $0xec0] sm:$0xff]
    %v8459 = vld [vmem:[#allocation7 + $0xec8] sm:$0xff]
    %v8460 = vld [vmem:[#allocation7 + $0xed0] sm:$0xff]
    %v8461 = vld [vmem:[#allocation7 + $0xed8] sm:$0xff]
    %v8462 = vld [vmem:[#allocation7 + $0xee0] sm:$0xff]
    %v8463 = vld [vmem:[#allocation7 + $0xee8] sm:$0xff]
    %v8464 = vld [vmem:[#allocation7 + $0xef0] sm:$0xff]
    %v8465 = vld [vmem:[#allocation7 + $0xef8] sm:$0xff]
    %v8466 = vld [vmem:[#allocation7 + $0xf00] sm:$0xff]
    %v8467 = vld [vmem:[#allocation7 + $0xf08] sm:$0xff]
    %v8468 = vld [vmem:[#allocation7 + $0xf10] sm:$0xff]
    %v8469 = vld [vmem:[#allocation7 + $0xf18] sm:$0xff]
    %v8470 = vld [vmem:[#allocation7 + $0xf20] sm:$0xff]
    %v8471 = vld [vmem:[#allocation7 + $0xf28] sm:$0xff]
    %v8472 = vld [vmem:[#allocation7 + $0xf30] sm:$0xff]
    %v8473 = vld [vmem:[#allocation7 + $0xf38] sm:$0xff]
    %v8474 = vld [vmem:[#allocation7 + $0xf40] sm:$0xff]
    %v8475 = vld [vmem:[#allocation7 + $0xf48] sm:$0xff]
    %v8476 = vld [vmem:[#allocation7 + $0xf50] sm:$0xff]
    %v8477 = vld [vmem:[#allocation7 + $0xf58] sm:$0xff]
    %v8478 = vld [vmem:[#allocation7 + $0xf60] sm:$0xff]
    %v8479 = vld [vmem:[#allocation7 + $0xf68] sm:$0xff]
    %v8480 = vld [vmem:[#allocation7 + $0xf70] sm:$0xff]
    %v8481 = vld [vmem:[#allocation7 + $0xf78] sm:$0xff]
    %v8482 = vld [vmem:[#allocation7 + $0xf80] sm:$0xff]
    %v8483 = vld [vmem:[#allocation7 + $0xf88] sm:$0xff]
    %v8484 = vld [vmem:[#allocation7 + $0xf90] sm:$0xff]
    %v8485 = vld [vmem:[#allocation7 + $0xf98] sm:$0xff]
    %v8486 = vld [vmem:[#allocation7 + $0xfa0] sm:$0xff]
    %v8487 = vld [vmem:[#allocation7 + $0xfa8] sm:$0xff]
    %v8488 = vld [vmem:[#allocation7 + $0xfb0] sm:$0xff]
    %v8489 = vld [vmem:[#allocation7 + $0xfb8] sm:$0xff]
    %v8490 = vld [vmem:[#allocation7 + $0xfc0] sm:$0xff]
    %v8491 = vld [vmem:[#allocation7 + $0xfc8] sm:$0xff]
    %v8492 = vld [vmem:[#allocation7 + $0xfd0] sm:$0xff]
    %v8493 = vld [vmem:[#allocation7 + $0xfd8] sm:$0xff]
    %v8494 = vld [vmem:[#allocation7 + $0xfe0] sm:$0xff]
    %v8495 = vld [vmem:[#allocation7 + $0xfe8] sm:$0xff]
    %v8496 = vld [vmem:[#allocation7 + $0xff0] sm:$0xff]
    %v8497 = vld [vmem:[#allocation7 + $0xff8] sm:$0xff]
    %v8498 = vld [vmem:[#allocation10 + $0x18] sm:$0xf]
    %v8500 = vlaneseq
    %v8501 = vshrl.u32 %v8500, 7
    %v8502 = vsub.s32 0, %v8501
    %v8503 = vrot.slane %v8498, %v8502
    %v8504 = vlaneseq
    %v8505 = vshrl.u32 %v8504, 7
    %v8506 = vsub.s32 1, %v8505
    %v8507 = vrot.slane %v8498, %v8506
    %v8508 = vlaneseq
    %v8509 = vshrl.u32 %v8508, 7
    %v8510 = vsub.s32 2, %v8509
    %v8511 = vrot.slane %v8498, %v8510
    %v8512 = vlaneseq
    %v8513 = vshrl.u32 %v8512, 7
    %v8514 = vsub.s32 3, %v8513
    %v8515 = vrot.slane %v8498, %v8514
    %v9032 = vunpack.c.l.b16 %v7986
    %v9033 = vunpack.c.h.b16 %v7986
    %v9034 = vunpack.c.l.b16 %v7987
    %v9035 = vunpack.c.h.b16 %v7987
    %v9036 = vunpack.c.l.b16 %v7988
    %v9037 = vunpack.c.h.b16 %v7988
    %v9038 = vunpack.c.l.b16 %v7989
    %v9039 = vunpack.c.h.b16 %v7989
    %v9040 = vunpack.c.l.b16 %v7990
    %v9041 = vunpack.c.h.b16 %v7990
    %v9042 = vunpack.c.l.b16 %v7991
    %v9043 = vunpack.c.h.b16 %v7991
    %v9044 = vunpack.c.l.b16 %v7992
    %v9045 = vunpack.c.h.b16 %v7992
    %v9046 = vunpack.c.l.b16 %v7993
    %v9047 = vunpack.c.h.b16 %v7993
    %v9048 = vunpack.c.l.b16 %v7994
    %v9049 = vunpack.c.h.b16 %v7994
    %v9050 = vunpack.c.l.b16 %v7995
    %v9051 = vunpack.c.h.b16 %v7995
    %v9052 = vunpack.c.l.b16 %v7996
    %v9053 = vunpack.c.h.b16 %v7996
    %v9054 = vunpack.c.l.b16 %v7997
    %v9055 = vunpack.c.h.b16 %v7997
    %v9056 = vunpack.c.l.b16 %v7998
    %v9057 = vunpack.c.h.b16 %v7998
    %v9058 = vunpack.c.l.b16 %v7999
    %v9059 = vunpack.c.h.b16 %v7999
    %v9060 = vunpack.c.l.b16 %v8000
    %v9061 = vunpack.c.h.b16 %v8000
    %v9062 = vunpack.c.l.b16 %v8001
    %v9063 = vunpack.c.h.b16 %v8001
    %v9064 = vunpack.c.l.b16 %v8002
    %v9065 = vunpack.c.h.b16 %v8002
    %v9066 = vunpack.c.l.b16 %v8003
    %v9067 = vunpack.c.h.b16 %v8003
    %v9068 = vunpack.c.l.b16 %v8004
    %v9069 = vunpack.c.h.b16 %v8004
    %v9070 = vunpack.c.l.b16 %v8005
    %v9071 = vunpack.c.h.b16 %v8005
    %v9072 = vunpack.c.l.b16 %v8006
    %v9073 = vunpack.c.h.b16 %v8006
    %v9074 = vunpack.c.l.b16 %v8007
    %v9075 = vunpack.c.h.b16 %v8007
    %v9076 = vunpack.c.l.b16 %v8008
    %v9077 = vunpack.c.h.b16 %v8008
    %v9078 = vunpack.c.l.b16 %v8009
    %v9079 = vunpack.c.h.b16 %v8009
    %v9080 = vunpack.c.l.b16 %v8010
    %v9081 = vunpack.c.h.b16 %v8010
    %v9082 = vunpack.c.l.b16 %v8011
    %v9083 = vunpack.c.h.b16 %v8011
    %v9084 = vunpack.c.l.b16 %v8012
    %v9085 = vunpack.c.h.b16 %v8012
    %v9086 = vunpack.c.l.b16 %v8013
    %v9087 = vunpack.c.h.b16 %v8013
    %v9088 = vunpack.c.l.b16 %v8014
    %v9089 = vunpack.c.h.b16 %v8014
    %v9090 = vunpack.c.l.b16 %v8015
    %v9091 = vunpack.c.h.b16 %v8015
    %v9092 = vunpack.c.l.b16 %v8016
    %v9093 = vunpack.c.h.b16 %v8016
    %v9094 = vunpack.c.l.b16 %v8017
    %v9095 = vunpack.c.h.b16 %v8017
    %v9096 = vunpack.c.l.b16 %v8018
    %v9097 = vunpack.c.h.b16 %v8018
    %v9098 = vunpack.c.l.b16 %v8019
    %v9099 = vunpack.c.h.b16 %v8019
    %v9100 = vunpack.c.l.b16 %v8020
    %v9101 = vunpack.c.h.b16 %v8020
    %v9102 = vunpack.c.l.b16 %v8021
    %v9103 = vunpack.c.h.b16 %v8021
    %v9104 = vunpack.c.l.b16 %v8022
    %v9105 = vunpack.c.h.b16 %v8022
    %v9106 = vunpack.c.l.b16 %v8023
    %v9107 = vunpack.c.h.b16 %v8023
    %v9108 = vunpack.c.l.b16 %v8024
    %v9109 = vunpack.c.h.b16 %v8024
    %v9110 = vunpack.c.l.b16 %v8025
    %v9111 = vunpack.c.h.b16 %v8025
    %v9112 = vunpack.c.l.b16 %v8026
    %v9113 = vunpack.c.h.b16 %v8026
    %v9114 = vunpack.c.l.b16 %v8027
    %v9115 = vunpack.c.h.b16 %v8027
    %v9116 = vunpack.c.l.b16 %v8028
    %v9117 = vunpack.c.h.b16 %v8028
    %v9118 = vunpack.c.l.b16 %v8029
    %v9119 = vunpack.c.h.b16 %v8029
    %v9120 = vunpack.c.l.b16 %v8030
    %v9121 = vunpack.c.h.b16 %v8030
    %v9122 = vunpack.c.l.b16 %v8031
    %v9123 = vunpack.c.h.b16 %v8031
    %v9124 = vunpack.c.l.b16 %v8032
    %v9125 = vunpack.c.h.b16 %v8032
    %v9126 = vunpack.c.l.b16 %v8033
    %v9127 = vunpack.c.h.b16 %v8033
    %v9128 = vunpack.c.l.b16 %v8034
    %v9129 = vunpack.c.h.b16 %v8034
    %v9130 = vunpack.c.l.b16 %v8035
    %v9131 = vunpack.c.h.b16 %v8035
    %v9132 = vunpack.c.l.b16 %v8036
    %v9133 = vunpack.c.h.b16 %v8036
    %v9134 = vunpack.c.l.b16 %v8037
    %v9135 = vunpack.c.h.b16 %v8037
    %v9136 = vunpack.c.l.b16 %v8038
    %v9137 = vunpack.c.h.b16 %v8038
    %v9138 = vunpack.c.l.b16 %v8039
    %v9139 = vunpack.c.h.b16 %v8039
    %v9140 = vunpack.c.l.b16 %v8040
    %v9141 = vunpack.c.h.b16 %v8040
    %v9142 = vunpack.c.l.b16 %v8041
    %v9143 = vunpack.c.h.b16 %v8041
    %v9144 = vunpack.c.l.b16 %v8042
    %v9145 = vunpack.c.h.b16 %v8042
    %v9146 = vunpack.c.l.b16 %v8043
    %v9147 = vunpack.c.h.b16 %v8043
    %v9148 = vunpack.c.l.b16 %v8044
    %v9149 = vunpack.c.h.b16 %v8044
    %v9150 = vunpack.c.l.b16 %v8045
    %v9151 = vunpack.c.h.b16 %v8045
    %v9152 = vunpack.c.l.b16 %v8046
    %v9153 = vunpack.c.h.b16 %v8046
    %v9154 = vunpack.c.l.b16 %v8047
    %v9155 = vunpack.c.h.b16 %v8047
    %v9156 = vunpack.c.l.b16 %v8048
    %v9157 = vunpack.c.h.b16 %v8048
    %v9158 = vunpack.c.l.b16 %v8049
    %v9159 = vunpack.c.h.b16 %v8049
    %v9160 = vunpack.c.l.b16 %v8050
    %v9161 = vunpack.c.h.b16 %v8050
    %v9162 = vunpack.c.l.b16 %v8051
    %v9163 = vunpack.c.h.b16 %v8051
    %v9164 = vunpack.c.l.b16 %v8052
    %v9165 = vunpack.c.h.b16 %v8052
    %v9166 = vunpack.c.l.b16 %v8053
    %v9167 = vunpack.c.h.b16 %v8053
    %v9168 = vunpack.c.l.b16 %v8054
    %v9169 = vunpack.c.h.b16 %v8054
    %v9170 = vunpack.c.l.b16 %v8055
    %v9171 = vunpack.c.h.b16 %v8055
    %v9172 = vunpack.c.l.b16 %v8056
    %v9173 = vunpack.c.h.b16 %v8056
    %v9174 = vunpack.c.l.b16 %v8057
    %v9175 = vunpack.c.h.b16 %v8057
    %v9176 = vunpack.c.l.b16 %v8058
    %v9177 = vunpack.c.h.b16 %v8058
    %v9178 = vunpack.c.l.b16 %v8059
    %v9179 = vunpack.c.h.b16 %v8059
    %v9180 = vunpack.c.l.b16 %v8060
    %v9181 = vunpack.c.h.b16 %v8060
    %v9182 = vunpack.c.l.b16 %v8061
    %v9183 = vunpack.c.h.b16 %v8061
    %v9184 = vunpack.c.l.b16 %v8062
    %v9185 = vunpack.c.h.b16 %v8062
    %v9186 = vunpack.c.l.b16 %v8063
    %v9187 = vunpack.c.h.b16 %v8063
    %v9188 = vunpack.c.l.b16 %v8064
    %v9189 = vunpack.c.h.b16 %v8064
    %v9190 = vunpack.c.l.b16 %v8065
    %v9191 = vunpack.c.h.b16 %v8065
    %v9192 = vunpack.c.l.b16 %v8066
    %v9193 = vunpack.c.h.b16 %v8066
    %v9194 = vunpack.c.l.b16 %v8067
    %v9195 = vunpack.c.h.b16 %v8067
    %v9196 = vunpack.c.l.b16 %v8068
    %v9197 = vunpack.c.h.b16 %v8068
    %v9198 = vunpack.c.l.b16 %v8069
    %v9199 = vunpack.c.h.b16 %v8069
    %v9200 = vunpack.c.l.b16 %v8070
    %v9201 = vunpack.c.h.b16 %v8070
    %v9202 = vunpack.c.l.b16 %v8071
    %v9203 = vunpack.c.h.b16 %v8071
    %v9204 = vunpack.c.l.b16 %v8072
    %v9205 = vunpack.c.h.b16 %v8072
    %v9206 = vunpack.c.l.b16 %v8073
    %v9207 = vunpack.c.h.b16 %v8073
    %v9208 = vunpack.c.l.b16 %v8074
    %v9209 = vunpack.c.h.b16 %v8074
    %v9210 = vunpack.c.l.b16 %v8075
    %v9211 = vunpack.c.h.b16 %v8075
    %v9212 = vunpack.c.l.b16 %v8076
    %v9213 = vunpack.c.h.b16 %v8076
    %v9214 = vunpack.c.l.b16 %v8077
    %v9215 = vunpack.c.h.b16 %v8077
    %v9216 = vunpack.c.l.b16 %v8078
    %v9217 = vunpack.c.h.b16 %v8078
    %v9218 = vunpack.c.l.b16 %v8079
    %v9219 = vunpack.c.h.b16 %v8079
    %v9220 = vunpack.c.l.b16 %v8080
    %v9221 = vunpack.c.h.b16 %v8080
    %v9222 = vunpack.c.l.b16 %v8081
    %v9223 = vunpack.c.h.b16 %v8081
    %v9224 = vunpack.c.l.b16 %v8082
    %v9225 = vunpack.c.h.b16 %v8082
    %v9226 = vunpack.c.l.b16 %v8083
    %v9227 = vunpack.c.h.b16 %v8083
    %v9228 = vunpack.c.l.b16 %v8084
    %v9229 = vunpack.c.h.b16 %v8084
    %v9230 = vunpack.c.l.b16 %v8085
    %v9231 = vunpack.c.h.b16 %v8085
    %v9232 = vunpack.c.l.b16 %v8086
    %v9233 = vunpack.c.h.b16 %v8086
    %v9234 = vunpack.c.l.b16 %v8087
    %v9235 = vunpack.c.h.b16 %v8087
    %v9236 = vunpack.c.l.b16 %v8088
    %v9237 = vunpack.c.h.b16 %v8088
    %v9238 = vunpack.c.l.b16 %v8089
    %v9239 = vunpack.c.h.b16 %v8089
    %v9240 = vunpack.c.l.b16 %v8090
    %v9241 = vunpack.c.h.b16 %v8090
    %v9242 = vunpack.c.l.b16 %v8091
    %v9243 = vunpack.c.h.b16 %v8091
    %v9244 = vunpack.c.l.b16 %v8092
    %v9245 = vunpack.c.h.b16 %v8092
    %v9246 = vunpack.c.l.b16 %v8093
    %v9247 = vunpack.c.h.b16 %v8093
    %v9248 = vunpack.c.l.b16 %v8094
    %v9249 = vunpack.c.h.b16 %v8094
    %v9250 = vunpack.c.l.b16 %v8095
    %v9251 = vunpack.c.h.b16 %v8095
    %v9252 = vunpack.c.l.b16 %v8096
    %v9253 = vunpack.c.h.b16 %v8096
    %v9254 = vunpack.c.l.b16 %v8097
    %v9255 = vunpack.c.h.b16 %v8097
    %v9256 = vunpack.c.l.b16 %v8098
    %v9257 = vunpack.c.h.b16 %v8098
    %v9258 = vunpack.c.l.b16 %v8099
    %v9259 = vunpack.c.h.b16 %v8099
    %v9260 = vunpack.c.l.b16 %v8100
    %v9261 = vunpack.c.h.b16 %v8100
    %v9262 = vunpack.c.l.b16 %v8101
    %v9263 = vunpack.c.h.b16 %v8101
    %v9264 = vunpack.c.l.b16 %v8102
    %v9265 = vunpack.c.h.b16 %v8102
    %v9266 = vunpack.c.l.b16 %v8103
    %v9267 = vunpack.c.h.b16 %v8103
    %v9268 = vunpack.c.l.b16 %v8104
    %v9269 = vunpack.c.h.b16 %v8104
    %v9270 = vunpack.c.l.b16 %v8105
    %v9271 = vunpack.c.h.b16 %v8105
    %v9272 = vunpack.c.l.b16 %v8106
    %v9273 = vunpack.c.h.b16 %v8106
    %v9274 = vunpack.c.l.b16 %v8107
    %v9275 = vunpack.c.h.b16 %v8107
    %v9276 = vunpack.c.l.b16 %v8108
    %v9277 = vunpack.c.h.b16 %v8108
    %v9278 = vunpack.c.l.b16 %v8109
    %v9279 = vunpack.c.h.b16 %v8109
    %v9280 = vunpack.c.l.b16 %v8110
    %v9281 = vunpack.c.h.b16 %v8110
    %v9282 = vunpack.c.l.b16 %v8111
    %v9283 = vunpack.c.h.b16 %v8111
    %v9284 = vunpack.c.l.b16 %v8112
    %v9285 = vunpack.c.h.b16 %v8112
    %v9286 = vunpack.c.l.b16 %v8113
    %v9287 = vunpack.c.h.b16 %v8113
    %v9288 = vunpack.c.l.b16 %v8114
    %v9289 = vunpack.c.h.b16 %v8114
    %v9290 = vunpack.c.l.b16 %v8115
    %v9291 = vunpack.c.h.b16 %v8115
    %v9292 = vunpack.c.l.b16 %v8116
    %v9293 = vunpack.c.h.b16 %v8116
    %v9294 = vunpack.c.l.b16 %v8117
    %v9295 = vunpack.c.h.b16 %v8117
    %v9296 = vunpack.c.l.b16 %v8118
    %v9297 = vunpack.c.h.b16 %v8118
    %v9298 = vunpack.c.l.b16 %v8119
    %v9299 = vunpack.c.h.b16 %v8119
    %v9300 = vunpack.c.l.b16 %v8120
    %v9301 = vunpack.c.h.b16 %v8120
    %v9302 = vunpack.c.l.b16 %v8121
    %v9303 = vunpack.c.h.b16 %v8121
    %v9304 = vunpack.c.l.b16 %v8122
    %v9305 = vunpack.c.h.b16 %v8122
    %v9306 = vunpack.c.l.b16 %v8123
    %v9307 = vunpack.c.h.b16 %v8123
    %v9308 = vunpack.c.l.b16 %v8124
    %v9309 = vunpack.c.h.b16 %v8124
    %v9310 = vunpack.c.l.b16 %v8125
    %v9311 = vunpack.c.h.b16 %v8125
    %v9312 = vunpack.c.l.b16 %v8126
    %v9313 = vunpack.c.h.b16 %v8126
    %v9314 = vunpack.c.l.b16 %v8127
    %v9315 = vunpack.c.h.b16 %v8127
    %v9316 = vunpack.c.l.b16 %v8128
    %v9317 = vunpack.c.h.b16 %v8128
    %v9318 = vunpack.c.l.b16 %v8129
    %v9319 = vunpack.c.h.b16 %v8129
    %v9320 = vunpack.c.l.b16 %v8130
    %v9321 = vunpack.c.h.b16 %v8130
    %v9322 = vunpack.c.l.b16 %v8131
    %v9323 = vunpack.c.h.b16 %v8131
    %v9324 = vunpack.c.l.b16 %v8132
    %v9325 = vunpack.c.h.b16 %v8132
    %v9326 = vunpack.c.l.b16 %v8133
    %v9327 = vunpack.c.h.b16 %v8133
    %v9328 = vunpack.c.l.b16 %v8134
    %v9329 = vunpack.c.h.b16 %v8134
    %v9330 = vunpack.c.l.b16 %v8135
    %v9331 = vunpack.c.h.b16 %v8135
    %v9332 = vunpack.c.l.b16 %v8136
    %v9333 = vunpack.c.h.b16 %v8136
    %v9334 = vunpack.c.l.b16 %v8137
    %v9335 = vunpack.c.h.b16 %v8137
    %v9336 = vunpack.c.l.b16 %v8138
    %v9337 = vunpack.c.h.b16 %v8138
    %v9338 = vunpack.c.l.b16 %v8139
    %v9339 = vunpack.c.h.b16 %v8139
    %v9340 = vunpack.c.l.b16 %v8140
    %v9341 = vunpack.c.h.b16 %v8140
    %v9342 = vunpack.c.l.b16 %v8141
    %v9343 = vunpack.c.h.b16 %v8141
    %v9344 = vunpack.c.l.b16 %v8142
    %v9345 = vunpack.c.h.b16 %v8142
    %v9346 = vunpack.c.l.b16 %v8143
    %v9347 = vunpack.c.h.b16 %v8143
    %v9348 = vunpack.c.l.b16 %v8144
    %v9349 = vunpack.c.h.b16 %v8144
    %v9350 = vunpack.c.l.b16 %v8145
    %v9351 = vunpack.c.h.b16 %v8145
    %v9352 = vunpack.c.l.b16 %v8146
    %v9353 = vunpack.c.h.b16 %v8146
    %v9354 = vunpack.c.l.b16 %v8147
    %v9355 = vunpack.c.h.b16 %v8147
    %v9356 = vunpack.c.l.b16 %v8148
    %v9357 = vunpack.c.h.b16 %v8148
    %v9358 = vunpack.c.l.b16 %v8149
    %v9359 = vunpack.c.h.b16 %v8149
    %v9360 = vunpack.c.l.b16 %v8150
    %v9361 = vunpack.c.h.b16 %v8150
    %v9362 = vunpack.c.l.b16 %v8151
    %v9363 = vunpack.c.h.b16 %v8151
    %v9364 = vunpack.c.l.b16 %v8152
    %v9365 = vunpack.c.h.b16 %v8152
    %v9366 = vunpack.c.l.b16 %v8153
    %v9367 = vunpack.c.h.b16 %v8153
    %v9368 = vunpack.c.l.b16 %v8154
    %v9369 = vunpack.c.h.b16 %v8154
    %v9370 = vunpack.c.l.b16 %v8155
    %v9371 = vunpack.c.h.b16 %v8155
    %v9372 = vunpack.c.l.b16 %v8156
    %v9373 = vunpack.c.h.b16 %v8156
    %v9374 = vunpack.c.l.b16 %v8157
    %v9375 = vunpack.c.h.b16 %v8157
    %v9376 = vunpack.c.l.b16 %v8158
    %v9377 = vunpack.c.h.b16 %v8158
    %v9378 = vunpack.c.l.b16 %v8159
    %v9379 = vunpack.c.h.b16 %v8159
    %v9380 = vunpack.c.l.b16 %v8160
    %v9381 = vunpack.c.h.b16 %v8160
    %v9382 = vunpack.c.l.b16 %v8161
    %v9383 = vunpack.c.h.b16 %v8161
    %v9384 = vunpack.c.l.b16 %v8162
    %v9385 = vunpack.c.h.b16 %v8162
    %v9386 = vunpack.c.l.b16 %v8163
    %v9387 = vunpack.c.h.b16 %v8163
    %v9388 = vunpack.c.l.b16 %v8164
    %v9389 = vunpack.c.h.b16 %v8164
    %v9390 = vunpack.c.l.b16 %v8165
    %v9391 = vunpack.c.h.b16 %v8165
    %v9392 = vunpack.c.l.b16 %v8166
    %v9393 = vunpack.c.h.b16 %v8166
    %v9394 = vunpack.c.l.b16 %v8167
    %v9395 = vunpack.c.h.b16 %v8167
    %v9396 = vunpack.c.l.b16 %v8168
    %v9397 = vunpack.c.h.b16 %v8168
    %v9398 = vunpack.c.l.b16 %v8169
    %v9399 = vunpack.c.h.b16 %v8169
    %v9400 = vunpack.c.l.b16 %v8170
    %v9401 = vunpack.c.h.b16 %v8170
    %v9402 = vunpack.c.l.b16 %v8171
    %v9403 = vunpack.c.h.b16 %v8171
    %v9404 = vunpack.c.l.b16 %v8172
    %v9405 = vunpack.c.h.b16 %v8172
    %v9406 = vunpack.c.l.b16 %v8173
    %v9407 = vunpack.c.h.b16 %v8173
    %v9408 = vunpack.c.l.b16 %v8174
    %v9409 = vunpack.c.h.b16 %v8174
    %v9410 = vunpack.c.l.b16 %v8175
    %v9411 = vunpack.c.h.b16 %v8175
    %v9412 = vunpack.c.l.b16 %v8176
    %v9413 = vunpack.c.h.b16 %v8176
    %v9414 = vunpack.c.l.b16 %v8177
    %v9415 = vunpack.c.h.b16 %v8177
    %v9416 = vunpack.c.l.b16 %v8178
    %v9417 = vunpack.c.h.b16 %v8178
    %v9418 = vunpack.c.l.b16 %v8179
    %v9419 = vunpack.c.h.b16 %v8179
    %v9420 = vunpack.c.l.b16 %v8180
    %v9421 = vunpack.c.h.b16 %v8180
    %v9422 = vunpack.c.l.b16 %v8181
    %v9423 = vunpack.c.h.b16 %v8181
    %v9424 = vunpack.c.l.b16 %v8182
    %v9425 = vunpack.c.h.b16 %v8182
    %v9426 = vunpack.c.l.b16 %v8183
    %v9427 = vunpack.c.h.b16 %v8183
    %v9428 = vunpack.c.l.b16 %v8184
    %v9429 = vunpack.c.h.b16 %v8184
    %v9430 = vunpack.c.l.b16 %v8185
    %v9431 = vunpack.c.h.b16 %v8185
    %v9432 = vunpack.c.l.b16 %v8186
    %v9433 = vunpack.c.h.b16 %v8186
    %v9434 = vunpack.c.l.b16 %v8187
    %v9435 = vunpack.c.h.b16 %v8187
    %v9436 = vunpack.c.l.b16 %v8188
    %v9437 = vunpack.c.h.b16 %v8188
    %v9438 = vunpack.c.l.b16 %v8189
    %v9439 = vunpack.c.h.b16 %v8189
    %v9440 = vunpack.c.l.b16 %v8190
    %v9441 = vunpack.c.h.b16 %v8190
    %v9442 = vunpack.c.l.b16 %v8191
    %v9443 = vunpack.c.h.b16 %v8191
    %v9444 = vunpack.c.l.b16 %v8192
    %v9445 = vunpack.c.h.b16 %v8192
    %v9446 = vunpack.c.l.b16 %v8193
    %v9447 = vunpack.c.h.b16 %v8193
    %v9448 = vunpack.c.l.b16 %v8194
    %v9449 = vunpack.c.h.b16 %v8194
    %v9450 = vunpack.c.l.b16 %v8195
    %v9451 = vunpack.c.h.b16 %v8195
    %v9452 = vunpack.c.l.b16 %v8196
    %v9453 = vunpack.c.h.b16 %v8196
    %v9454 = vunpack.c.l.b16 %v8197
    %v9455 = vunpack.c.h.b16 %v8197
    %v9456 = vunpack.c.l.b16 %v8198
    %v9457 = vunpack.c.h.b16 %v8198
    %v9458 = vunpack.c.l.b16 %v8199
    %v9459 = vunpack.c.h.b16 %v8199
    %v9460 = vunpack.c.l.b16 %v8200
    %v9461 = vunpack.c.h.b16 %v8200
    %v9462 = vunpack.c.l.b16 %v8201
    %v9463 = vunpack.c.h.b16 %v8201
    %v9464 = vunpack.c.l.b16 %v8202
    %v9465 = vunpack.c.h.b16 %v8202
    %v9466 = vunpack.c.l.b16 %v8203
    %v9467 = vunpack.c.h.b16 %v8203
    %v9468 = vunpack.c.l.b16 %v8204
    %v9469 = vunpack.c.h.b16 %v8204
    %v9470 = vunpack.c.l.b16 %v8205
    %v9471 = vunpack.c.h.b16 %v8205
    %v9472 = vunpack.c.l.b16 %v8206
    %v9473 = vunpack.c.h.b16 %v8206
    %v9474 = vunpack.c.l.b16 %v8207
    %v9475 = vunpack.c.h.b16 %v8207
    %v9476 = vunpack.c.l.b16 %v8208
    %v9477 = vunpack.c.h.b16 %v8208
    %v9478 = vunpack.c.l.b16 %v8209
    %v9479 = vunpack.c.h.b16 %v8209
    %v9480 = vunpack.c.l.b16 %v8210
    %v9481 = vunpack.c.h.b16 %v8210
    %v9482 = vunpack.c.l.b16 %v8211
    %v9483 = vunpack.c.h.b16 %v8211
    %v9484 = vunpack.c.l.b16 %v8212
    %v9485 = vunpack.c.h.b16 %v8212
    %v9486 = vunpack.c.l.b16 %v8213
    %v9487 = vunpack.c.h.b16 %v8213
    %v9488 = vunpack.c.l.b16 %v8214
    %v9489 = vunpack.c.h.b16 %v8214
    %v9490 = vunpack.c.l.b16 %v8215
    %v9491 = vunpack.c.h.b16 %v8215
    %v9492 = vunpack.c.l.b16 %v8216
    %v9493 = vunpack.c.h.b16 %v8216
    %v9494 = vunpack.c.l.b16 %v8217
    %v9495 = vunpack.c.h.b16 %v8217
    %v9496 = vunpack.c.l.b16 %v8218
    %v9497 = vunpack.c.h.b16 %v8218
    %v9498 = vunpack.c.l.b16 %v8219
    %v9499 = vunpack.c.h.b16 %v8219
    %v9500 = vunpack.c.l.b16 %v8220
    %v9501 = vunpack.c.h.b16 %v8220
    %v9502 = vunpack.c.l.b16 %v8221
    %v9503 = vunpack.c.h.b16 %v8221
    %v9504 = vunpack.c.l.b16 %v8222
    %v9505 = vunpack.c.h.b16 %v8222
    %v9506 = vunpack.c.l.b16 %v8223
    %v9507 = vunpack.c.h.b16 %v8223
    %v9508 = vunpack.c.l.b16 %v8224
    %v9509 = vunpack.c.h.b16 %v8224
    %v9510 = vunpack.c.l.b16 %v8225
    %v9511 = vunpack.c.h.b16 %v8225
    %v9512 = vunpack.c.l.b16 %v8226
    %v9513 = vunpack.c.h.b16 %v8226
    %v9514 = vunpack.c.l.b16 %v8227
    %v9515 = vunpack.c.h.b16 %v8227
    %v9516 = vunpack.c.l.b16 %v8228
    %v9517 = vunpack.c.h.b16 %v8228
    %v9518 = vunpack.c.l.b16 %v8229
    %v9519 = vunpack.c.h.b16 %v8229
    %v9520 = vunpack.c.l.b16 %v8230
    %v9521 = vunpack.c.h.b16 %v8230
    %v9522 = vunpack.c.l.b16 %v8231
    %v9523 = vunpack.c.h.b16 %v8231
    %v9524 = vunpack.c.l.b16 %v8232
    %v9525 = vunpack.c.h.b16 %v8232
    %v9526 = vunpack.c.l.b16 %v8233
    %v9527 = vunpack.c.h.b16 %v8233
    %v9528 = vunpack.c.l.b16 %v8234
    %v9529 = vunpack.c.h.b16 %v8234
    %v9530 = vunpack.c.l.b16 %v8235
    %v9531 = vunpack.c.h.b16 %v8235
    %v9532 = vunpack.c.l.b16 %v8236
    %v9533 = vunpack.c.h.b16 %v8236
    %v9534 = vunpack.c.l.b16 %v8237
    %v9535 = vunpack.c.h.b16 %v8237
    %v9536 = vunpack.c.l.b16 %v8238
    %v9537 = vunpack.c.h.b16 %v8238
    %v9538 = vunpack.c.l.b16 %v8239
    %v9539 = vunpack.c.h.b16 %v8239
    %v9540 = vunpack.c.l.b16 %v8240
    %v9541 = vunpack.c.h.b16 %v8240
    %v9542 = vunpack.c.l.b16 %v8241
    %v9543 = vunpack.c.h.b16 %v8241
    %v9544 = vunpack.c.l.b16 %v8242
    %v9545 = vunpack.c.h.b16 %v8242
    %v9546 = vunpack.c.l.b16 %v8243
    %v9547 = vunpack.c.h.b16 %v8243
    %v9548 = vunpack.c.l.b16 %v8244
    %v9549 = vunpack.c.h.b16 %v8244
    %v9550 = vunpack.c.l.b16 %v8245
    %v9551 = vunpack.c.h.b16 %v8245
    %v9552 = vunpack.c.l.b16 %v8246
    %v9553 = vunpack.c.h.b16 %v8246
    %v9554 = vunpack.c.l.b16 %v8247
    %v9555 = vunpack.c.h.b16 %v8247
    %v9556 = vunpack.c.l.b16 %v8248
    %v9557 = vunpack.c.h.b16 %v8248
    %v9558 = vunpack.c.l.b16 %v8249
    %v9559 = vunpack.c.h.b16 %v8249
    %v9560 = vunpack.c.l.b16 %v8250
    %v9561 = vunpack.c.h.b16 %v8250
    %v9562 = vunpack.c.l.b16 %v8251
    %v9563 = vunpack.c.h.b16 %v8251
    %v9564 = vunpack.c.l.b16 %v8252
    %v9565 = vunpack.c.h.b16 %v8252
    %v9566 = vunpack.c.l.b16 %v8253
    %v9567 = vunpack.c.h.b16 %v8253
    %v9568 = vunpack.c.l.b16 %v8254
    %v9569 = vunpack.c.h.b16 %v8254
    %v9570 = vunpack.c.l.b16 %v8255
    %v9571 = vunpack.c.h.b16 %v8255
    %v9572 = vunpack.c.l.b16 %v8256
    %v9573 = vunpack.c.h.b16 %v8256
    %v9574 = vunpack.c.l.b16 %v8257
    %v9575 = vunpack.c.h.b16 %v8257
    %v9576 = vunpack.c.l.b16 %v8258
    %v9577 = vunpack.c.h.b16 %v8258
    %v9578 = vunpack.c.l.b16 %v8259
    %v9579 = vunpack.c.h.b16 %v8259
    %v9580 = vunpack.c.l.b16 %v8260
    %v9581 = vunpack.c.h.b16 %v8260
    %v9582 = vunpack.c.l.b16 %v8261
    %v9583 = vunpack.c.h.b16 %v8261
    %v9584 = vunpack.c.l.b16 %v8262
    %v9585 = vunpack.c.h.b16 %v8262
    %v9586 = vunpack.c.l.b16 %v8263
    %v9587 = vunpack.c.h.b16 %v8263
    %v9588 = vunpack.c.l.b16 %v8264
    %v9589 = vunpack.c.h.b16 %v8264
    %v9590 = vunpack.c.l.b16 %v8265
    %v9591 = vunpack.c.h.b16 %v8265
    %v9592 = vunpack.c.l.b16 %v8266
    %v9593 = vunpack.c.h.b16 %v8266
    %v9594 = vunpack.c.l.b16 %v8267
    %v9595 = vunpack.c.h.b16 %v8267
    %v9596 = vunpack.c.l.b16 %v8268
    %v9597 = vunpack.c.h.b16 %v8268
    %v9598 = vunpack.c.l.b16 %v8269
    %v9599 = vunpack.c.h.b16 %v8269
    %v9600 = vunpack.c.l.b16 %v8270
    %v9601 = vunpack.c.h.b16 %v8270
    %v9602 = vunpack.c.l.b16 %v8271
    %v9603 = vunpack.c.h.b16 %v8271
    %v9604 = vunpack.c.l.b16 %v8272
    %v9605 = vunpack.c.h.b16 %v8272
    %v9606 = vunpack.c.l.b16 %v8273
    %v9607 = vunpack.c.h.b16 %v8273
    %v9608 = vunpack.c.l.b16 %v8274
    %v9609 = vunpack.c.h.b16 %v8274
    %v9610 = vunpack.c.l.b16 %v8275
    %v9611 = vunpack.c.h.b16 %v8275
    %v9612 = vunpack.c.l.b16 %v8276
    %v9613 = vunpack.c.h.b16 %v8276
    %v9614 = vunpack.c.l.b16 %v8277
    %v9615 = vunpack.c.h.b16 %v8277
    %v9616 = vunpack.c.l.b16 %v8278
    %v9617 = vunpack.c.h.b16 %v8278
    %v9618 = vunpack.c.l.b16 %v8279
    %v9619 = vunpack.c.h.b16 %v8279
    %v9620 = vunpack.c.l.b16 %v8280
    %v9621 = vunpack.c.h.b16 %v8280
    %v9622 = vunpack.c.l.b16 %v8281
    %v9623 = vunpack.c.h.b16 %v8281
    %v9624 = vunpack.c.l.b16 %v8282
    %v9625 = vunpack.c.h.b16 %v8282
    %v9626 = vunpack.c.l.b16 %v8283
    %v9627 = vunpack.c.h.b16 %v8283
    %v9628 = vunpack.c.l.b16 %v8284
    %v9629 = vunpack.c.h.b16 %v8284
    %v9630 = vunpack.c.l.b16 %v8285
    %v9631 = vunpack.c.h.b16 %v8285
    %v9632 = vunpack.c.l.b16 %v8286
    %v9633 = vunpack.c.h.b16 %v8286
    %v9634 = vunpack.c.l.b16 %v8287
    %v9635 = vunpack.c.h.b16 %v8287
    %v9636 = vunpack.c.l.b16 %v8288
    %v9637 = vunpack.c.h.b16 %v8288
    %v9638 = vunpack.c.l.b16 %v8289
    %v9639 = vunpack.c.h.b16 %v8289
    %v9640 = vunpack.c.l.b16 %v8290
    %v9641 = vunpack.c.h.b16 %v8290
    %v9642 = vunpack.c.l.b16 %v8291
    %v9643 = vunpack.c.h.b16 %v8291
    %v9644 = vunpack.c.l.b16 %v8292
    %v9645 = vunpack.c.h.b16 %v8292
    %v9646 = vunpack.c.l.b16 %v8293
    %v9647 = vunpack.c.h.b16 %v8293
    %v9648 = vunpack.c.l.b16 %v8294
    %v9649 = vunpack.c.h.b16 %v8294
    %v9650 = vunpack.c.l.b16 %v8295
    %v9651 = vunpack.c.h.b16 %v8295
    %v9652 = vunpack.c.l.b16 %v8296
    %v9653 = vunpack.c.h.b16 %v8296
    %v9654 = vunpack.c.l.b16 %v8297
    %v9655 = vunpack.c.h.b16 %v8297
    %v9656 = vunpack.c.l.b16 %v8298
    %v9657 = vunpack.c.h.b16 %v8298
    %v9658 = vunpack.c.l.b16 %v8299
    %v9659 = vunpack.c.h.b16 %v8299
    %v9660 = vunpack.c.l.b16 %v8300
    %v9661 = vunpack.c.h.b16 %v8300
    %v9662 = vunpack.c.l.b16 %v8301
    %v9663 = vunpack.c.h.b16 %v8301
    %v9664 = vunpack.c.l.b16 %v8302
    %v9665 = vunpack.c.h.b16 %v8302
    %v9666 = vunpack.c.l.b16 %v8303
    %v9667 = vunpack.c.h.b16 %v8303
    %v9668 = vunpack.c.l.b16 %v8304
    %v9669 = vunpack.c.h.b16 %v8304
    %v9670 = vunpack.c.l.b16 %v8305
    %v9671 = vunpack.c.h.b16 %v8305
    %v9672 = vunpack.c.l.b16 %v8306
    %v9673 = vunpack.c.h.b16 %v8306
    %v9674 = vunpack.c.l.b16 %v8307
    %v9675 = vunpack.c.h.b16 %v8307
    %v9676 = vunpack.c.l.b16 %v8308
    %v9677 = vunpack.c.h.b16 %v8308
    %v9678 = vunpack.c.l.b16 %v8309
    %v9679 = vunpack.c.h.b16 %v8309
    %v9680 = vunpack.c.l.b16 %v8310
    %v9681 = vunpack.c.h.b16 %v8310
    %v9682 = vunpack.c.l.b16 %v8311
    %v9683 = vunpack.c.h.b16 %v8311
    %v9684 = vunpack.c.l.b16 %v8312
    %v9685 = vunpack.c.h.b16 %v8312
    %v9686 = vunpack.c.l.b16 %v8313
    %v9687 = vunpack.c.h.b16 %v8313
    %v9688 = vunpack.c.l.b16 %v8314
    %v9689 = vunpack.c.h.b16 %v8314
    %v9690 = vunpack.c.l.b16 %v8315
    %v9691 = vunpack.c.h.b16 %v8315
    %v9692 = vunpack.c.l.b16 %v8316
    %v9693 = vunpack.c.h.b16 %v8316
    %v9694 = vunpack.c.l.b16 %v8317
    %v9695 = vunpack.c.h.b16 %v8317
    %v9696 = vunpack.c.l.b16 %v8318
    %v9697 = vunpack.c.h.b16 %v8318
    %v9698 = vunpack.c.l.b16 %v8319
    %v9699 = vunpack.c.h.b16 %v8319
    %v9700 = vunpack.c.l.b16 %v8320
    %v9701 = vunpack.c.h.b16 %v8320
    %v9702 = vunpack.c.l.b16 %v8321
    %v9703 = vunpack.c.h.b16 %v8321
    %v9704 = vunpack.c.l.b16 %v8322
    %v9705 = vunpack.c.h.b16 %v8322
    %v9706 = vunpack.c.l.b16 %v8323
    %v9707 = vunpack.c.h.b16 %v8323
    %v9708 = vunpack.c.l.b16 %v8324
    %v9709 = vunpack.c.h.b16 %v8324
    %v9710 = vunpack.c.l.b16 %v8325
    %v9711 = vunpack.c.h.b16 %v8325
    %v9712 = vunpack.c.l.b16 %v8326
    %v9713 = vunpack.c.h.b16 %v8326
    %v9714 = vunpack.c.l.b16 %v8327
    %v9715 = vunpack.c.h.b16 %v8327
    %v9716 = vunpack.c.l.b16 %v8328
    %v9717 = vunpack.c.h.b16 %v8328
    %v9718 = vunpack.c.l.b16 %v8329
    %v9719 = vunpack.c.h.b16 %v8329
    %v9720 = vunpack.c.l.b16 %v8330
    %v9721 = vunpack.c.h.b16 %v8330
    %v9722 = vunpack.c.l.b16 %v8331
    %v9723 = vunpack.c.h.b16 %v8331
    %v9724 = vunpack.c.l.b16 %v8332
    %v9725 = vunpack.c.h.b16 %v8332
    %v9726 = vunpack.c.l.b16 %v8333
    %v9727 = vunpack.c.h.b16 %v8333
    %v9728 = vunpack.c.l.b16 %v8334
    %v9729 = vunpack.c.h.b16 %v8334
    %v9730 = vunpack.c.l.b16 %v8335
    %v9731 = vunpack.c.h.b16 %v8335
    %v9732 = vunpack.c.l.b16 %v8336
    %v9733 = vunpack.c.h.b16 %v8336
    %v9734 = vunpack.c.l.b16 %v8337
    %v9735 = vunpack.c.h.b16 %v8337
    %v9736 = vunpack.c.l.b16 %v8338
    %v9737 = vunpack.c.h.b16 %v8338
    %v9738 = vunpack.c.l.b16 %v8339
    %v9739 = vunpack.c.h.b16 %v8339
    %v9740 = vunpack.c.l.b16 %v8340
    %v9741 = vunpack.c.h.b16 %v8340
    %v9742 = vunpack.c.l.b16 %v8341
    %v9743 = vunpack.c.h.b16 %v8341
    %v9744 = vunpack.c.l.b16 %v8342
    %v9745 = vunpack.c.h.b16 %v8342
    %v9746 = vunpack.c.l.b16 %v8343
    %v9747 = vunpack.c.h.b16 %v8343
    %v9748 = vunpack.c.l.b16 %v8344
    %v9749 = vunpack.c.h.b16 %v8344
    %v9750 = vunpack.c.l.b16 %v8345
    %v9751 = vunpack.c.h.b16 %v8345
    %v9752 = vunpack.c.l.b16 %v8346
    %v9753 = vunpack.c.h.b16 %v8346
    %v9754 = vunpack.c.l.b16 %v8347
    %v9755 = vunpack.c.h.b16 %v8347
    %v9756 = vunpack.c.l.b16 %v8348
    %v9757 = vunpack.c.h.b16 %v8348
    %v9758 = vunpack.c.l.b16 %v8349
    %v9759 = vunpack.c.h.b16 %v8349
    %v9760 = vunpack.c.l.b16 %v8350
    %v9761 = vunpack.c.h.b16 %v8350
    %v9762 = vunpack.c.l.b16 %v8351
    %v9763 = vunpack.c.h.b16 %v8351
    %v9764 = vunpack.c.l.b16 %v8352
    %v9765 = vunpack.c.h.b16 %v8352
    %v9766 = vunpack.c.l.b16 %v8353
    %v9767 = vunpack.c.h.b16 %v8353
    %v9768 = vunpack.c.l.b16 %v8354
    %v9769 = vunpack.c.h.b16 %v8354
    %v9770 = vunpack.c.l.b16 %v8355
    %v9771 = vunpack.c.h.b16 %v8355
    %v9772 = vunpack.c.l.b16 %v8356
    %v9773 = vunpack.c.h.b16 %v8356
    %v9774 = vunpack.c.l.b16 %v8357
    %v9775 = vunpack.c.h.b16 %v8357
    %v9776 = vunpack.c.l.b16 %v8358
    %v9777 = vunpack.c.h.b16 %v8358
    %v9778 = vunpack.c.l.b16 %v8359
    %v9779 = vunpack.c.h.b16 %v8359
    %v9780 = vunpack.c.l.b16 %v8360
    %v9781 = vunpack.c.h.b16 %v8360
    %v9782 = vunpack.c.l.b16 %v8361
    %v9783 = vunpack.c.h.b16 %v8361
    %v9784 = vunpack.c.l.b16 %v8362
    %v9785 = vunpack.c.h.b16 %v8362
    %v9786 = vunpack.c.l.b16 %v8363
    %v9787 = vunpack.c.h.b16 %v8363
    %v9788 = vunpack.c.l.b16 %v8364
    %v9789 = vunpack.c.h.b16 %v8364
    %v9790 = vunpack.c.l.b16 %v8365
    %v9791 = vunpack.c.h.b16 %v8365
    %v9792 = vunpack.c.l.b16 %v8366
    %v9793 = vunpack.c.h.b16 %v8366
    %v9794 = vunpack.c.l.b16 %v8367
    %v9795 = vunpack.c.h.b16 %v8367
    %v9796 = vunpack.c.l.b16 %v8368
    %v9797 = vunpack.c.h.b16 %v8368
    %v9798 = vunpack.c.l.b16 %v8369
    %v9799 = vunpack.c.h.b16 %v8369
    %v9800 = vunpack.c.l.b16 %v8370
    %v9801 = vunpack.c.h.b16 %v8370
    %v9802 = vunpack.c.l.b16 %v8371
    %v9803 = vunpack.c.h.b16 %v8371
    %v9804 = vunpack.c.l.b16 %v8372
    %v9805 = vunpack.c.h.b16 %v8372
    %v9806 = vunpack.c.l.b16 %v8373
    %v9807 = vunpack.c.h.b16 %v8373
    %v9808 = vunpack.c.l.b16 %v8374
    %v9809 = vunpack.c.h.b16 %v8374
    %v9810 = vunpack.c.l.b16 %v8375
    %v9811 = vunpack.c.h.b16 %v8375
    %v9812 = vunpack.c.l.b16 %v8376
    %v9813 = vunpack.c.h.b16 %v8376
    %v9814 = vunpack.c.l.b16 %v8377
    %v9815 = vunpack.c.h.b16 %v8377
    %v9816 = vunpack.c.l.b16 %v8378
    %v9817 = vunpack.c.h.b16 %v8378
    %v9818 = vunpack.c.l.b16 %v8379
    %v9819 = vunpack.c.h.b16 %v8379
    %v9820 = vunpack.c.l.b16 %v8380
    %v9821 = vunpack.c.h.b16 %v8380
    %v9822 = vunpack.c.l.b16 %v8381
    %v9823 = vunpack.c.h.b16 %v8381
    %v9824 = vunpack.c.l.b16 %v8382
    %v9825 = vunpack.c.h.b16 %v8382
    %v9826 = vunpack.c.l.b16 %v8383
    %v9827 = vunpack.c.h.b16 %v8383
    %v9828 = vunpack.c.l.b16 %v8384
    %v9829 = vunpack.c.h.b16 %v8384
    %v9830 = vunpack.c.l.b16 %v8385
    %v9831 = vunpack.c.h.b16 %v8385
    %v9832 = vunpack.c.l.b16 %v8386
    %v9833 = vunpack.c.h.b16 %v8386
    %v9834 = vunpack.c.l.b16 %v8387
    %v9835 = vunpack.c.h.b16 %v8387
    %v9836 = vunpack.c.l.b16 %v8388
    %v9837 = vunpack.c.h.b16 %v8388
    %v9838 = vunpack.c.l.b16 %v8389
    %v9839 = vunpack.c.h.b16 %v8389
    %v9840 = vunpack.c.l.b16 %v8390
    %v9841 = vunpack.c.h.b16 %v8390
    %v9842 = vunpack.c.l.b16 %v8391
    %v9843 = vunpack.c.h.b16 %v8391
    %v9844 = vunpack.c.l.b16 %v8392
    %v9845 = vunpack.c.h.b16 %v8392
    %v9846 = vunpack.c.l.b16 %v8393
    %v9847 = vunpack.c.h.b16 %v8393
    %v9848 = vunpack.c.l.b16 %v8394
    %v9849 = vunpack.c.h.b16 %v8394
    %v9850 = vunpack.c.l.b16 %v8395
    %v9851 = vunpack.c.h.b16 %v8395
    %v9852 = vunpack.c.l.b16 %v8396
    %v9853 = vunpack.c.h.b16 %v8396
    %v9854 = vunpack.c.l.b16 %v8397
    %v9855 = vunpack.c.h.b16 %v8397
    %v9856 = vunpack.c.l.b16 %v8398
    %v9857 = vunpack.c.h.b16 %v8398
    %v9858 = vunpack.c.l.b16 %v8399
    %v9859 = vunpack.c.h.b16 %v8399
    %v9860 = vunpack.c.l.b16 %v8400
    %v9861 = vunpack.c.h.b16 %v8400
    %v9862 = vunpack.c.l.b16 %v8401
    %v9863 = vunpack.c.h.b16 %v8401
    %v9864 = vunpack.c.l.b16 %v8402
    %v9865 = vunpack.c.h.b16 %v8402
    %v9866 = vunpack.c.l.b16 %v8403
    %v9867 = vunpack.c.h.b16 %v8403
    %v9868 = vunpack.c.l.b16 %v8404
    %v9869 = vunpack.c.h.b16 %v8404
    %v9870 = vunpack.c.l.b16 %v8405
    %v9871 = vunpack.c.h.b16 %v8405
    %v9872 = vunpack.c.l.b16 %v8406
    %v9873 = vunpack.c.h.b16 %v8406
    %v9874 = vunpack.c.l.b16 %v8407
    %v9875 = vunpack.c.h.b16 %v8407
    %v9876 = vunpack.c.l.b16 %v8408
    %v9877 = vunpack.c.h.b16 %v8408
    %v9878 = vunpack.c.l.b16 %v8409
    %v9879 = vunpack.c.h.b16 %v8409
    %v9880 = vunpack.c.l.b16 %v8410
    %v9881 = vunpack.c.h.b16 %v8410
    %v9882 = vunpack.c.l.b16 %v8411
    %v9883 = vunpack.c.h.b16 %v8411
    %v9884 = vunpack.c.l.b16 %v8412
    %v9885 = vunpack.c.h.b16 %v8412
    %v9886 = vunpack.c.l.b16 %v8413
    %v9887 = vunpack.c.h.b16 %v8413
    %v9888 = vunpack.c.l.b16 %v8414
    %v9889 = vunpack.c.h.b16 %v8414
    %v9890 = vunpack.c.l.b16 %v8415
    %v9891 = vunpack.c.h.b16 %v8415
    %v9892 = vunpack.c.l.b16 %v8416
    %v9893 = vunpack.c.h.b16 %v8416
    %v9894 = vunpack.c.l.b16 %v8417
    %v9895 = vunpack.c.h.b16 %v8417
    %v9896 = vunpack.c.l.b16 %v8418
    %v9897 = vunpack.c.h.b16 %v8418
    %v9898 = vunpack.c.l.b16 %v8419
    %v9899 = vunpack.c.h.b16 %v8419
    %v9900 = vunpack.c.l.b16 %v8420
    %v9901 = vunpack.c.h.b16 %v8420
    %v9902 = vunpack.c.l.b16 %v8421
    %v9903 = vunpack.c.h.b16 %v8421
    %v9904 = vunpack.c.l.b16 %v8422
    %v9905 = vunpack.c.h.b16 %v8422
    %v9906 = vunpack.c.l.b16 %v8423
    %v9907 = vunpack.c.h.b16 %v8423
    %v9908 = vunpack.c.l.b16 %v8424
    %v9909 = vunpack.c.h.b16 %v8424
    %v9910 = vunpack.c.l.b16 %v8425
    %v9911 = vunpack.c.h.b16 %v8425
    %v9912 = vunpack.c.l.b16 %v8426
    %v9913 = vunpack.c.h.b16 %v8426
    %v9914 = vunpack.c.l.b16 %v8427
    %v9915 = vunpack.c.h.b16 %v8427
    %v9916 = vunpack.c.l.b16 %v8428
    %v9917 = vunpack.c.h.b16 %v8428
    %v9918 = vunpack.c.l.b16 %v8429
    %v9919 = vunpack.c.h.b16 %v8429
    %v9920 = vunpack.c.l.b16 %v8430
    %v9921 = vunpack.c.h.b16 %v8430
    %v9922 = vunpack.c.l.b16 %v8431
    %v9923 = vunpack.c.h.b16 %v8431
    %v9924 = vunpack.c.l.b16 %v8432
    %v9925 = vunpack.c.h.b16 %v8432
    %v9926 = vunpack.c.l.b16 %v8433
    %v9927 = vunpack.c.h.b16 %v8433
    %v9928 = vunpack.c.l.b16 %v8434
    %v9929 = vunpack.c.h.b16 %v8434
    %v9930 = vunpack.c.l.b16 %v8435
    %v9931 = vunpack.c.h.b16 %v8435
    %v9932 = vunpack.c.l.b16 %v8436
    %v9933 = vunpack.c.h.b16 %v8436
    %v9934 = vunpack.c.l.b16 %v8437
    %v9935 = vunpack.c.h.b16 %v8437
    %v9936 = vunpack.c.l.b16 %v8438
    %v9937 = vunpack.c.h.b16 %v8438
    %v9938 = vunpack.c.l.b16 %v8439
    %v9939 = vunpack.c.h.b16 %v8439
    %v9940 = vunpack.c.l.b16 %v8440
    %v9941 = vunpack.c.h.b16 %v8440
    %v9942 = vunpack.c.l.b16 %v8441
    %v9943 = vunpack.c.h.b16 %v8441
    %v9944 = vunpack.c.l.b16 %v8442
    %v9945 = vunpack.c.h.b16 %v8442
    %v9946 = vunpack.c.l.b16 %v8443
    %v9947 = vunpack.c.h.b16 %v8443
    %v9948 = vunpack.c.l.b16 %v8444
    %v9949 = vunpack.c.h.b16 %v8444
    %v9950 = vunpack.c.l.b16 %v8445
    %v9951 = vunpack.c.h.b16 %v8445
    %v9952 = vunpack.c.l.b16 %v8446
    %v9953 = vunpack.c.h.b16 %v8446
    %v9954 = vunpack.c.l.b16 %v8447
    %v9955 = vunpack.c.h.b16 %v8447
    %v9956 = vunpack.c.l.b16 %v8448
    %v9957 = vunpack.c.h.b16 %v8448
    %v9958 = vunpack.c.l.b16 %v8449
    %v9959 = vunpack.c.h.b16 %v8449
    %v9960 = vunpack.c.l.b16 %v8450
    %v9961 = vunpack.c.h.b16 %v8450
    %v9962 = vunpack.c.l.b16 %v8451
    %v9963 = vunpack.c.h.b16 %v8451
    %v9964 = vunpack.c.l.b16 %v8452
    %v9965 = vunpack.c.h.b16 %v8452
    %v9966 = vunpack.c.l.b16 %v8453
    %v9967 = vunpack.c.h.b16 %v8453
    %v9968 = vunpack.c.l.b16 %v8454
    %v9969 = vunpack.c.h.b16 %v8454
    %v9970 = vunpack.c.l.b16 %v8455
    %v9971 = vunpack.c.h.b16 %v8455
    %v9972 = vunpack.c.l.b16 %v8456
    %v9973 = vunpack.c.h.b16 %v8456
    %v9974 = vunpack.c.l.b16 %v8457
    %v9975 = vunpack.c.h.b16 %v8457
    %v9976 = vunpack.c.l.b16 %v8458
    %v9977 = vunpack.c.h.b16 %v8458
    %v9978 = vunpack.c.l.b16 %v8459
    %v9979 = vunpack.c.h.b16 %v8459
    %v9980 = vunpack.c.l.b16 %v8460
    %v9981 = vunpack.c.h.b16 %v8460
    %v9982 = vunpack.c.l.b16 %v8461
    %v9983 = vunpack.c.h.b16 %v8461
    %v9984 = vunpack.c.l.b16 %v8462
    %v9985 = vunpack.c.h.b16 %v8462
    %v9986 = vunpack.c.l.b16 %v8463
    %v9987 = vunpack.c.h.b16 %v8463
    %v9988 = vunpack.c.l.b16 %v8464
    %v9989 = vunpack.c.h.b16 %v8464
    %v9990 = vunpack.c.l.b16 %v8465
    %v9991 = vunpack.c.h.b16 %v8465
    %v9992 = vunpack.c.l.b16 %v8466
    %v9993 = vunpack.c.h.b16 %v8466
    %v9994 = vunpack.c.l.b16 %v8467
    %v9995 = vunpack.c.h.b16 %v8467
    %v9996 = vunpack.c.l.b16 %v8468
    %v9997 = vunpack.c.h.b16 %v8468
    %v9998 = vunpack.c.l.b16 %v8469
    %v9999 = vunpack.c.h.b16 %v8469
    %v10000 = vunpack.c.l.b16 %v8470
    %v10001 = vunpack.c.h.b16 %v8470
    %v10002 = vunpack.c.l.b16 %v8471
    %v10003 = vunpack.c.h.b16 %v8471
    %v10004 = vunpack.c.l.b16 %v8472
    %v10005 = vunpack.c.h.b16 %v8472
    %v10006 = vunpack.c.l.b16 %v8473
    %v10007 = vunpack.c.h.b16 %v8473
    %v10008 = vunpack.c.l.b16 %v8474
    %v10009 = vunpack.c.h.b16 %v8474
    %v10010 = vunpack.c.l.b16 %v8475
    %v10011 = vunpack.c.h.b16 %v8475
    %v10012 = vunpack.c.l.b16 %v8476
    %v10013 = vunpack.c.h.b16 %v8476
    %v10014 = vunpack.c.l.b16 %v8477
    %v10015 = vunpack.c.h.b16 %v8477
    %v10016 = vunpack.c.l.b16 %v8478
    %v10017 = vunpack.c.h.b16 %v8478
    %v10018 = vunpack.c.l.b16 %v8479
    %v10019 = vunpack.c.h.b16 %v8479
    %v10020 = vunpack.c.l.b16 %v8480
    %v10021 = vunpack.c.h.b16 %v8480
    %v10022 = vunpack.c.l.b16 %v8481
    %v10023 = vunpack.c.h.b16 %v8481
    %v10024 = vunpack.c.l.b16 %v8482
    %v10025 = vunpack.c.h.b16 %v8482
    %v10026 = vunpack.c.l.b16 %v8483
    %v10027 = vunpack.c.h.b16 %v8483
    %v10028 = vunpack.c.l.b16 %v8484
    %v10029 = vunpack.c.h.b16 %v8484
    %v10030 = vunpack.c.l.b16 %v8485
    %v10031 = vunpack.c.h.b16 %v8485
    %v10032 = vunpack.c.l.b16 %v8486
    %v10033 = vunpack.c.h.b16 %v8486
    %v10034 = vunpack.c.l.b16 %v8487
    %v10035 = vunpack.c.h.b16 %v8487
    %v10036 = vunpack.c.l.b16 %v8488
    %v10037 = vunpack.c.h.b16 %v8488
    %v10038 = vunpack.c.l.b16 %v8489
    %v10039 = vunpack.c.h.b16 %v8489
    %v10040 = vunpack.c.l.b16 %v8490
    %v10041 = vunpack.c.h.b16 %v8490
    %v10042 = vunpack.c.l.b16 %v8491
    %v10043 = vunpack.c.h.b16 %v8491
    %v10044 = vunpack.c.l.b16 %v8492
    %v10045 = vunpack.c.h.b16 %v8492
    %v10046 = vunpack.c.l.b16 %v8493
    %v10047 = vunpack.c.h.b16 %v8493
    %v10048 = vunpack.c.l.b16 %v8494
    %v10049 = vunpack.c.h.b16 %v8494
    %v10050 = vunpack.c.l.b16 %v8495
    %v10051 = vunpack.c.h.b16 %v8495
    %v10052 = vunpack.c.l.b16 %v8496
    %v10053 = vunpack.c.h.b16 %v8496
    %v10054 = vunpack.c.l.b16 %v8497
    %v10055 = vunpack.c.h.b16 %v8497
    %v10056 = vpack.c.b16 %v9036, %v9032
    %v10057 = vpack.c.b16 %v9037, %v9033
    %v10058 = vpack.c.b16 %v9038, %v9034
    %v10059 = vpack.c.b16 %v9039, %v9035
    %v10060 = vpack.c.b16 %v9044, %v9040
    %v10061 = vpack.c.b16 %v9045, %v9041
    %v10062 = vpack.c.b16 %v9046, %v9042
    %v10063 = vpack.c.b16 %v9047, %v9043
    %v10064 = vpack.c.b16 %v9052, %v9048
    %v10065 = vpack.c.b16 %v9053, %v9049
    %v10066 = vpack.c.b16 %v9054, %v9050
    %v10067 = vpack.c.b16 %v9055, %v9051
    %v10068 = vpack.c.b16 %v9060, %v9056
    %v10069 = vpack.c.b16 %v9061, %v9057
    %v10070 = vpack.c.b16 %v9062, %v9058
    %v10071 = vpack.c.b16 %v9063, %v9059
    %v10072 = vpack.c.b16 %v9068, %v9064
    %v10073 = vpack.c.b16 %v9069, %v9065
    %v10074 = vpack.c.b16 %v9070, %v9066
    %v10075 = vpack.c.b16 %v9071, %v9067
    %v10076 = vpack.c.b16 %v9076, %v9072
    %v10077 = vpack.c.b16 %v9077, %v9073
    %v10078 = vpack.c.b16 %v9078, %v9074
    %v10079 = vpack.c.b16 %v9079, %v9075
    %v10080 = vpack.c.b16 %v9084, %v9080
    %v10081 = vpack.c.b16 %v9085, %v9081
    %v10082 = vpack.c.b16 %v9086, %v9082
    %v10083 = vpack.c.b16 %v9087, %v9083
    %v10084 = vpack.c.b16 %v9092, %v9088
    %v10085 = vpack.c.b16 %v9093, %v9089
    %v10086 = vpack.c.b16 %v9094, %v9090
    %v10087 = vpack.c.b16 %v9095, %v9091
    %v10088 = vpack.c.b16 %v9100, %v9096
    %v10089 = vpack.c.b16 %v9101, %v9097
    %v10090 = vpack.c.b16 %v9102, %v9098
    %v10091 = vpack.c.b16 %v9103, %v9099
    %v10092 = vpack.c.b16 %v9108, %v9104
    %v10093 = vpack.c.b16 %v9109, %v9105
    %v10094 = vpack.c.b16 %v9110, %v9106
    %v10095 = vpack.c.b16 %v9111, %v9107
    %v10096 = vpack.c.b16 %v9116, %v9112
    %v10097 = vpack.c.b16 %v9117, %v9113
    %v10098 = vpack.c.b16 %v9118, %v9114
    %v10099 = vpack.c.b16 %v9119, %v9115
    %v10100 = vpack.c.b16 %v9124, %v9120
    %v10101 = vpack.c.b16 %v9125, %v9121
    %v10102 = vpack.c.b16 %v9126, %v9122
    %v10103 = vpack.c.b16 %v9127, %v9123
    %v10104 = vpack.c.b16 %v9132, %v9128
    %v10105 = vpack.c.b16 %v9133, %v9129
    %v10106 = vpack.c.b16 %v9134, %v9130
    %v10107 = vpack.c.b16 %v9135, %v9131
    %v10108 = vpack.c.b16 %v9140, %v9136
    %v10109 = vpack.c.b16 %v9141, %v9137
    %v10110 = vpack.c.b16 %v9142, %v9138
    %v10111 = vpack.c.b16 %v9143, %v9139
    %v10112 = vpack.c.b16 %v9148, %v9144
    %v10113 = vpack.c.b16 %v9149, %v9145
    %v10114 = vpack.c.b16 %v9150, %v9146
    %v10115 = vpack.c.b16 %v9151, %v9147
    %v10116 = vpack.c.b16 %v9156, %v9152
    %v10117 = vpack.c.b16 %v9157, %v9153
    %v10118 = vpack.c.b16 %v9158, %v9154
    %v10119 = vpack.c.b16 %v9159, %v9155
    %v10120 = vpack.c.b16 %v9164, %v9160
    %v10121 = vpack.c.b16 %v9165, %v9161
    %v10122 = vpack.c.b16 %v9166, %v9162
    %v10123 = vpack.c.b16 %v9167, %v9163
    %v10124 = vpack.c.b16 %v9172, %v9168
    %v10125 = vpack.c.b16 %v9173, %v9169
    %v10126 = vpack.c.b16 %v9174, %v9170
    %v10127 = vpack.c.b16 %v9175, %v9171
    %v10128 = vpack.c.b16 %v9180, %v9176
    %v10129 = vpack.c.b16 %v9181, %v9177
    %v10130 = vpack.c.b16 %v9182, %v9178
    %v10131 = vpack.c.b16 %v9183, %v9179
    %v10132 = vpack.c.b16 %v9188, %v9184
    %v10133 = vpack.c.b16 %v9189, %v9185
    %v10134 = vpack.c.b16 %v9190, %v9186
    %v10135 = vpack.c.b16 %v9191, %v9187
    %v10136 = vpack.c.b16 %v9196, %v9192
    %v10137 = vpack.c.b16 %v9197, %v9193
    %v10138 = vpack.c.b16 %v9198, %v9194
    %v10139 = vpack.c.b16 %v9199, %v9195
    %v10140 = vpack.c.b16 %v9204, %v9200
    %v10141 = vpack.c.b16 %v9205, %v9201
    %v10142 = vpack.c.b16 %v9206, %v9202
    %v10143 = vpack.c.b16 %v9207, %v9203
    %v10144 = vpack.c.b16 %v9212, %v9208
    %v10145 = vpack.c.b16 %v9213, %v9209
    %v10146 = vpack.c.b16 %v9214, %v9210
    %v10147 = vpack.c.b16 %v9215, %v9211
    %v10148 = vpack.c.b16 %v9220, %v9216
    %v10149 = vpack.c.b16 %v9221, %v9217
    %v10150 = vpack.c.b16 %v9222, %v9218
    %v10151 = vpack.c.b16 %v9223, %v9219
    %v10152 = vpack.c.b16 %v9228, %v9224
    %v10153 = vpack.c.b16 %v9229, %v9225
    %v10154 = vpack.c.b16 %v9230, %v9226
    %v10155 = vpack.c.b16 %v9231, %v9227
    %v10156 = vpack.c.b16 %v9236, %v9232
    %v10157 = vpack.c.b16 %v9237, %v9233
    %v10158 = vpack.c.b16 %v9238, %v9234
    %v10159 = vpack.c.b16 %v9239, %v9235
    %v10160 = vpack.c.b16 %v9244, %v9240
    %v10161 = vpack.c.b16 %v9245, %v9241
    %v10162 = vpack.c.b16 %v9246, %v9242
    %v10163 = vpack.c.b16 %v9247, %v9243
    %v10164 = vpack.c.b16 %v9252, %v9248
    %v10165 = vpack.c.b16 %v9253, %v9249
    %v10166 = vpack.c.b16 %v9254, %v9250
    %v10167 = vpack.c.b16 %v9255, %v9251
    %v10168 = vpack.c.b16 %v9260, %v9256
    %v10169 = vpack.c.b16 %v9261, %v9257
    %v10170 = vpack.c.b16 %v9262, %v9258
    %v10171 = vpack.c.b16 %v9263, %v9259
    %v10172 = vpack.c.b16 %v9268, %v9264
    %v10173 = vpack.c.b16 %v9269, %v9265
    %v10174 = vpack.c.b16 %v9270, %v9266
    %v10175 = vpack.c.b16 %v9271, %v9267
    %v10176 = vpack.c.b16 %v9276, %v9272
    %v10177 = vpack.c.b16 %v9277, %v9273
    %v10178 = vpack.c.b16 %v9278, %v9274
    %v10179 = vpack.c.b16 %v9279, %v9275
    %v10180 = vpack.c.b16 %v9284, %v9280
    %v10181 = vpack.c.b16 %v9285, %v9281
    %v10182 = vpack.c.b16 %v9286, %v9282
    %v10183 = vpack.c.b16 %v9287, %v9283
    %v10184 = vpack.c.b16 %v9292, %v9288
    %v10185 = vpack.c.b16 %v9293, %v9289
    %v10186 = vpack.c.b16 %v9294, %v9290
    %v10187 = vpack.c.b16 %v9295, %v9291
    %v10188 = vpack.c.b16 %v9300, %v9296
    %v10189 = vpack.c.b16 %v9301, %v9297
    %v10190 = vpack.c.b16 %v9302, %v9298
    %v10191 = vpack.c.b16 %v9303, %v9299
    %v10192 = vpack.c.b16 %v9308, %v9304
    %v10193 = vpack.c.b16 %v9309, %v9305
    %v10194 = vpack.c.b16 %v9310, %v9306
    %v10195 = vpack.c.b16 %v9311, %v9307
    %v10196 = vpack.c.b16 %v9316, %v9312
    %v10197 = vpack.c.b16 %v9317, %v9313
    %v10198 = vpack.c.b16 %v9318, %v9314
    %v10199 = vpack.c.b16 %v9319, %v9315
    %v10200 = vpack.c.b16 %v9324, %v9320
    %v10201 = vpack.c.b16 %v9325, %v9321
    %v10202 = vpack.c.b16 %v9326, %v9322
    %v10203 = vpack.c.b16 %v9327, %v9323
    %v10204 = vpack.c.b16 %v9332, %v9328
    %v10205 = vpack.c.b16 %v9333, %v9329
    %v10206 = vpack.c.b16 %v9334, %v9330
    %v10207 = vpack.c.b16 %v9335, %v9331
    %v10208 = vpack.c.b16 %v9340, %v9336
    %v10209 = vpack.c.b16 %v9341, %v9337
    %v10210 = vpack.c.b16 %v9342, %v9338
    %v10211 = vpack.c.b16 %v9343, %v9339
    %v10212 = vpack.c.b16 %v9348, %v9344
    %v10213 = vpack.c.b16 %v9349, %v9345
    %v10214 = vpack.c.b16 %v9350, %v9346
    %v10215 = vpack.c.b16 %v9351, %v9347
    %v10216 = vpack.c.b16 %v9356, %v9352
    %v10217 = vpack.c.b16 %v9357, %v9353
    %v10218 = vpack.c.b16 %v9358, %v9354
    %v10219 = vpack.c.b16 %v9359, %v9355
    %v10220 = vpack.c.b16 %v9364, %v9360
    %v10221 = vpack.c.b16 %v9365, %v9361
    %v10222 = vpack.c.b16 %v9366, %v9362
    %v10223 = vpack.c.b16 %v9367, %v9363
    %v10224 = vpack.c.b16 %v9372, %v9368
    %v10225 = vpack.c.b16 %v9373, %v9369
    %v10226 = vpack.c.b16 %v9374, %v9370
    %v10227 = vpack.c.b16 %v9375, %v9371
    %v10228 = vpack.c.b16 %v9380, %v9376
    %v10229 = vpack.c.b16 %v9381, %v9377
    %v10230 = vpack.c.b16 %v9382, %v9378
    %v10231 = vpack.c.b16 %v9383, %v9379
    %v10232 = vpack.c.b16 %v9388, %v9384
    %v10233 = vpack.c.b16 %v9389, %v9385
    %v10234 = vpack.c.b16 %v9390, %v9386
    %v10235 = vpack.c.b16 %v9391, %v9387
    %v10236 = vpack.c.b16 %v9396, %v9392
    %v10237 = vpack.c.b16 %v9397, %v9393
    %v10238 = vpack.c.b16 %v9398, %v9394
    %v10239 = vpack.c.b16 %v9399, %v9395
    %v10240 = vpack.c.b16 %v9404, %v9400
    %v10241 = vpack.c.b16 %v9405, %v9401
    %v10242 = vpack.c.b16 %v9406, %v9402
    %v10243 = vpack.c.b16 %v9407, %v9403
    %v10244 = vpack.c.b16 %v9412, %v9408
    %v10245 = vpack.c.b16 %v9413, %v9409
    %v10246 = vpack.c.b16 %v9414, %v9410
    %v10247 = vpack.c.b16 %v9415, %v9411
    %v10248 = vpack.c.b16 %v9420, %v9416
    %v10249 = vpack.c.b16 %v9421, %v9417
    %v10250 = vpack.c.b16 %v9422, %v9418
    %v10251 = vpack.c.b16 %v9423, %v9419
    %v10252 = vpack.c.b16 %v9428, %v9424
    %v10253 = vpack.c.b16 %v9429, %v9425
    %v10254 = vpack.c.b16 %v9430, %v9426
    %v10255 = vpack.c.b16 %v9431, %v9427
    %v10256 = vpack.c.b16 %v9436, %v9432
    %v10257 = vpack.c.b16 %v9437, %v9433
    %v10258 = vpack.c.b16 %v9438, %v9434
    %v10259 = vpack.c.b16 %v9439, %v9435
    %v10260 = vpack.c.b16 %v9444, %v9440
    %v10261 = vpack.c.b16 %v9445, %v9441
    %v10262 = vpack.c.b16 %v9446, %v9442
    %v10263 = vpack.c.b16 %v9447, %v9443
    %v10264 = vpack.c.b16 %v9452, %v9448
    %v10265 = vpack.c.b16 %v9453, %v9449
    %v10266 = vpack.c.b16 %v9454, %v9450
    %v10267 = vpack.c.b16 %v9455, %v9451
    %v10268 = vpack.c.b16 %v9460, %v9456
    %v10269 = vpack.c.b16 %v9461, %v9457
    %v10270 = vpack.c.b16 %v9462, %v9458
    %v10271 = vpack.c.b16 %v9463, %v9459
    %v10272 = vpack.c.b16 %v9468, %v9464
    %v10273 = vpack.c.b16 %v9469, %v9465
    %v10274 = vpack.c.b16 %v9470, %v9466
    %v10275 = vpack.c.b16 %v9471, %v9467
    %v10276 = vpack.c.b16 %v9476, %v9472
    %v10277 = vpack.c.b16 %v9477, %v9473
    %v10278 = vpack.c.b16 %v9478, %v9474
    %v10279 = vpack.c.b16 %v9479, %v9475
    %v10280 = vpack.c.b16 %v9484, %v9480
    %v10281 = vpack.c.b16 %v9485, %v9481
    %v10282 = vpack.c.b16 %v9486, %v9482
    %v10283 = vpack.c.b16 %v9487, %v9483
    %v10284 = vpack.c.b16 %v9492, %v9488
    %v10285 = vpack.c.b16 %v9493, %v9489
    %v10286 = vpack.c.b16 %v9494, %v9490
    %v10287 = vpack.c.b16 %v9495, %v9491
    %v10288 = vpack.c.b16 %v9500, %v9496
    %v10289 = vpack.c.b16 %v9501, %v9497
    %v10290 = vpack.c.b16 %v9502, %v9498
    %v10291 = vpack.c.b16 %v9503, %v9499
    %v10292 = vpack.c.b16 %v9508, %v9504
    %v10293 = vpack.c.b16 %v9509, %v9505
    %v10294 = vpack.c.b16 %v9510, %v9506
    %v10295 = vpack.c.b16 %v9511, %v9507
    %v10296 = vpack.c.b16 %v9516, %v9512
    %v10297 = vpack.c.b16 %v9517, %v9513
    %v10298 = vpack.c.b16 %v9518, %v9514
    %v10299 = vpack.c.b16 %v9519, %v9515
    %v10300 = vpack.c.b16 %v9524, %v9520
    %v10301 = vpack.c.b16 %v9525, %v9521
    %v10302 = vpack.c.b16 %v9526, %v9522
    %v10303 = vpack.c.b16 %v9527, %v9523
    %v10304 = vpack.c.b16 %v9532, %v9528
    %v10305 = vpack.c.b16 %v9533, %v9529
    %v10306 = vpack.c.b16 %v9534, %v9530
    %v10307 = vpack.c.b16 %v9535, %v9531
    %v10308 = vpack.c.b16 %v9540, %v9536
    %v10309 = vpack.c.b16 %v9541, %v9537
    %v10310 = vpack.c.b16 %v9542, %v9538
    %v10311 = vpack.c.b16 %v9543, %v9539
    %v10312 = vpack.c.b16 %v9548, %v9544
    %v10313 = vpack.c.b16 %v9549, %v9545
    %v10314 = vpack.c.b16 %v9550, %v9546
    %v10315 = vpack.c.b16 %v9551, %v9547
    %v10316 = vpack.c.b16 %v9556, %v9552
    %v10317 = vpack.c.b16 %v9557, %v9553
    %v10318 = vpack.c.b16 %v9558, %v9554
    %v10319 = vpack.c.b16 %v9559, %v9555
    %v10320 = vpack.c.b16 %v9564, %v9560
    %v10321 = vpack.c.b16 %v9565, %v9561
    %v10322 = vpack.c.b16 %v9566, %v9562
    %v10323 = vpack.c.b16 %v9567, %v9563
    %v10324 = vpack.c.b16 %v9572, %v9568
    %v10325 = vpack.c.b16 %v9573, %v9569
    %v10326 = vpack.c.b16 %v9574, %v9570
    %v10327 = vpack.c.b16 %v9575, %v9571
    %v10328 = vpack.c.b16 %v9580, %v9576
    %v10329 = vpack.c.b16 %v9581, %v9577
    %v10330 = vpack.c.b16 %v9582, %v9578
    %v10331 = vpack.c.b16 %v9583, %v9579
    %v10332 = vpack.c.b16 %v9588, %v9584
    %v10333 = vpack.c.b16 %v9589, %v9585
    %v10334 = vpack.c.b16 %v9590, %v9586
    %v10335 = vpack.c.b16 %v9591, %v9587
    %v10336 = vpack.c.b16 %v9596, %v9592
    %v10337 = vpack.c.b16 %v9597, %v9593
    %v10338 = vpack.c.b16 %v9598, %v9594
    %v10339 = vpack.c.b16 %v9599, %v9595
    %v10340 = vpack.c.b16 %v9604, %v9600
    %v10341 = vpack.c.b16 %v9605, %v9601
    %v10342 = vpack.c.b16 %v9606, %v9602
    %v10343 = vpack.c.b16 %v9607, %v9603
    %v10344 = vpack.c.b16 %v9612, %v9608
    %v10345 = vpack.c.b16 %v9613, %v9609
    %v10346 = vpack.c.b16 %v9614, %v9610
    %v10347 = vpack.c.b16 %v9615, %v9611
    %v10348 = vpack.c.b16 %v9620, %v9616
    %v10349 = vpack.c.b16 %v9621, %v9617
    %v10350 = vpack.c.b16 %v9622, %v9618
    %v10351 = vpack.c.b16 %v9623, %v9619
    %v10352 = vpack.c.b16 %v9628, %v9624
    %v10353 = vpack.c.b16 %v9629, %v9625
    %v10354 = vpack.c.b16 %v9630, %v9626
    %v10355 = vpack.c.b16 %v9631, %v9627
    %v10356 = vpack.c.b16 %v9636, %v9632
    %v10357 = vpack.c.b16 %v9637, %v9633
    %v10358 = vpack.c.b16 %v9638, %v9634
    %v10359 = vpack.c.b16 %v9639, %v9635
    %v10360 = vpack.c.b16 %v9644, %v9640
    %v10361 = vpack.c.b16 %v9645, %v9641
    %v10362 = vpack.c.b16 %v9646, %v9642
    %v10363 = vpack.c.b16 %v9647, %v9643
    %v10364 = vpack.c.b16 %v9652, %v9648
    %v10365 = vpack.c.b16 %v9653, %v9649
    %v10366 = vpack.c.b16 %v9654, %v9650
    %v10367 = vpack.c.b16 %v9655, %v9651
    %v10368 = vpack.c.b16 %v9660, %v9656
    %v10369 = vpack.c.b16 %v9661, %v9657
    %v10370 = vpack.c.b16 %v9662, %v9658
    %v10371 = vpack.c.b16 %v9663, %v9659
    %v10372 = vpack.c.b16 %v9668, %v9664
    %v10373 = vpack.c.b16 %v9669, %v9665
    %v10374 = vpack.c.b16 %v9670, %v9666
    %v10375 = vpack.c.b16 %v9671, %v9667
    %v10376 = vpack.c.b16 %v9676, %v9672
    %v10377 = vpack.c.b16 %v9677, %v9673
    %v10378 = vpack.c.b16 %v9678, %v9674
    %v10379 = vpack.c.b16 %v9679, %v9675
    %v10380 = vpack.c.b16 %v9684, %v9680
    %v10381 = vpack.c.b16 %v9685, %v9681
    %v10382 = vpack.c.b16 %v9686, %v9682
    %v10383 = vpack.c.b16 %v9687, %v9683
    %v10384 = vpack.c.b16 %v9692, %v9688
    %v10385 = vpack.c.b16 %v9693, %v9689
    %v10386 = vpack.c.b16 %v9694, %v9690
    %v10387 = vpack.c.b16 %v9695, %v9691
    %v10388 = vpack.c.b16 %v9700, %v9696
    %v10389 = vpack.c.b16 %v9701, %v9697
    %v10390 = vpack.c.b16 %v9702, %v9698
    %v10391 = vpack.c.b16 %v9703, %v9699
    %v10392 = vpack.c.b16 %v9708, %v9704
    %v10393 = vpack.c.b16 %v9709, %v9705
    %v10394 = vpack.c.b16 %v9710, %v9706
    %v10395 = vpack.c.b16 %v9711, %v9707
    %v10396 = vpack.c.b16 %v9716, %v9712
    %v10397 = vpack.c.b16 %v9717, %v9713
    %v10398 = vpack.c.b16 %v9718, %v9714
    %v10399 = vpack.c.b16 %v9719, %v9715
    %v10400 = vpack.c.b16 %v9724, %v9720
    %v10401 = vpack.c.b16 %v9725, %v9721
    %v10402 = vpack.c.b16 %v9726, %v9722
    %v10403 = vpack.c.b16 %v9727, %v9723
    %v10404 = vpack.c.b16 %v9732, %v9728
    %v10405 = vpack.c.b16 %v9733, %v9729
    %v10406 = vpack.c.b16 %v9734, %v9730
    %v10407 = vpack.c.b16 %v9735, %v9731
    %v10408 = vpack.c.b16 %v9740, %v9736
    %v10409 = vpack.c.b16 %v9741, %v9737
    %v10410 = vpack.c.b16 %v9742, %v9738
    %v10411 = vpack.c.b16 %v9743, %v9739
    %v10412 = vpack.c.b16 %v9748, %v9744
    %v10413 = vpack.c.b16 %v9749, %v9745
    %v10414 = vpack.c.b16 %v9750, %v9746
    %v10415 = vpack.c.b16 %v9751, %v9747
    %v10416 = vpack.c.b16 %v9756, %v9752
    %v10417 = vpack.c.b16 %v9757, %v9753
    %v10418 = vpack.c.b16 %v9758, %v9754
    %v10419 = vpack.c.b16 %v9759, %v9755
    %v10420 = vpack.c.b16 %v9764, %v9760
    %v10421 = vpack.c.b16 %v9765, %v9761
    %v10422 = vpack.c.b16 %v9766, %v9762
    %v10423 = vpack.c.b16 %v9767, %v9763
    %v10424 = vpack.c.b16 %v9772, %v9768
    %v10425 = vpack.c.b16 %v9773, %v9769
    %v10426 = vpack.c.b16 %v9774, %v9770
    %v10427 = vpack.c.b16 %v9775, %v9771
    %v10428 = vpack.c.b16 %v9780, %v9776
    %v10429 = vpack.c.b16 %v9781, %v9777
    %v10430 = vpack.c.b16 %v9782, %v9778
    %v10431 = vpack.c.b16 %v9783, %v9779
    %v10432 = vpack.c.b16 %v9788, %v9784
    %v10433 = vpack.c.b16 %v9789, %v9785
    %v10434 = vpack.c.b16 %v9790, %v9786
    %v10435 = vpack.c.b16 %v9791, %v9787
    %v10436 = vpack.c.b16 %v9796, %v9792
    %v10437 = vpack.c.b16 %v9797, %v9793
    %v10438 = vpack.c.b16 %v9798, %v9794
    %v10439 = vpack.c.b16 %v9799, %v9795
    %v10440 = vpack.c.b16 %v9804, %v9800
    %v10441 = vpack.c.b16 %v9805, %v9801
    %v10442 = vpack.c.b16 %v9806, %v9802
    %v10443 = vpack.c.b16 %v9807, %v9803
    %v10444 = vpack.c.b16 %v9812, %v9808
    %v10445 = vpack.c.b16 %v9813, %v9809
    %v10446 = vpack.c.b16 %v9814, %v9810
    %v10447 = vpack.c.b16 %v9815, %v9811
    %v10448 = vpack.c.b16 %v9820, %v9816
    %v10449 = vpack.c.b16 %v9821, %v9817
    %v10450 = vpack.c.b16 %v9822, %v9818
    %v10451 = vpack.c.b16 %v9823, %v9819
    %v10452 = vpack.c.b16 %v9828, %v9824
    %v10453 = vpack.c.b16 %v9829, %v9825
    %v10454 = vpack.c.b16 %v9830, %v9826
    %v10455 = vpack.c.b16 %v9831, %v9827
    %v10456 = vpack.c.b16 %v9836, %v9832
    %v10457 = vpack.c.b16 %v9837, %v9833
    %v10458 = vpack.c.b16 %v9838, %v9834
    %v10459 = vpack.c.b16 %v9839, %v9835
    %v10460 = vpack.c.b16 %v9844, %v9840
    %v10461 = vpack.c.b16 %v9845, %v9841
    %v10462 = vpack.c.b16 %v9846, %v9842
    %v10463 = vpack.c.b16 %v9847, %v9843
    %v10464 = vpack.c.b16 %v9852, %v9848
    %v10465 = vpack.c.b16 %v9853, %v9849
    %v10466 = vpack.c.b16 %v9854, %v9850
    %v10467 = vpack.c.b16 %v9855, %v9851
    %v10468 = vpack.c.b16 %v9860, %v9856
    %v10469 = vpack.c.b16 %v9861, %v9857
    %v10470 = vpack.c.b16 %v9862, %v9858
    %v10471 = vpack.c.b16 %v9863, %v9859
    %v10472 = vpack.c.b16 %v9868, %v9864
    %v10473 = vpack.c.b16 %v9869, %v9865
    %v10474 = vpack.c.b16 %v9870, %v9866
    %v10475 = vpack.c.b16 %v9871, %v9867
    %v10476 = vpack.c.b16 %v9876, %v9872
    %v10477 = vpack.c.b16 %v9877, %v9873
    %v10478 = vpack.c.b16 %v9878, %v9874
    %v10479 = vpack.c.b16 %v9879, %v9875
    %v10480 = vpack.c.b16 %v9884, %v9880
    %v10481 = vpack.c.b16 %v9885, %v9881
    %v10482 = vpack.c.b16 %v9886, %v9882
    %v10483 = vpack.c.b16 %v9887, %v9883
    %v10484 = vpack.c.b16 %v9892, %v9888
    %v10485 = vpack.c.b16 %v9893, %v9889
    %v10486 = vpack.c.b16 %v9894, %v9890
    %v10487 = vpack.c.b16 %v9895, %v9891
    %v10488 = vpack.c.b16 %v9900, %v9896
    %v10489 = vpack.c.b16 %v9901, %v9897
    %v10490 = vpack.c.b16 %v9902, %v9898
    %v10491 = vpack.c.b16 %v9903, %v9899
    %v10492 = vpack.c.b16 %v9908, %v9904
    %v10493 = vpack.c.b16 %v9909, %v9905
    %v10494 = vpack.c.b16 %v9910, %v9906
    %v10495 = vpack.c.b16 %v9911, %v9907
    %v10496 = vpack.c.b16 %v9916, %v9912
    %v10497 = vpack.c.b16 %v9917, %v9913
    %v10498 = vpack.c.b16 %v9918, %v9914
    %v10499 = vpack.c.b16 %v9919, %v9915
    %v10500 = vpack.c.b16 %v9924, %v9920
    %v10501 = vpack.c.b16 %v9925, %v9921
    %v10502 = vpack.c.b16 %v9926, %v9922
    %v10503 = vpack.c.b16 %v9927, %v9923
    %v10504 = vpack.c.b16 %v9932, %v9928
    %v10505 = vpack.c.b16 %v9933, %v9929
    %v10506 = vpack.c.b16 %v9934, %v9930
    %v10507 = vpack.c.b16 %v9935, %v9931
    %v10508 = vpack.c.b16 %v9940, %v9936
    %v10509 = vpack.c.b16 %v9941, %v9937
    %v10510 = vpack.c.b16 %v9942, %v9938
    %v10511 = vpack.c.b16 %v9943, %v9939
    %v10512 = vpack.c.b16 %v9948, %v9944
    %v10513 = vpack.c.b16 %v9949, %v9945
    %v10514 = vpack.c.b16 %v9950, %v9946
    %v10515 = vpack.c.b16 %v9951, %v9947
    %v10516 = vpack.c.b16 %v9956, %v9952
    %v10517 = vpack.c.b16 %v9957, %v9953
    %v10518 = vpack.c.b16 %v9958, %v9954
    %v10519 = vpack.c.b16 %v9959, %v9955
    %v10520 = vpack.c.b16 %v9964, %v9960
    %v10521 = vpack.c.b16 %v9965, %v9961
    %v10522 = vpack.c.b16 %v9966, %v9962
    %v10523 = vpack.c.b16 %v9967, %v9963
    %v10524 = vpack.c.b16 %v9972, %v9968
    %v10525 = vpack.c.b16 %v9973, %v9969
    %v10526 = vpack.c.b16 %v9974, %v9970
    %v10527 = vpack.c.b16 %v9975, %v9971
    %v10528 = vpack.c.b16 %v9980, %v9976
    %v10529 = vpack.c.b16 %v9981, %v9977
    %v10530 = vpack.c.b16 %v9982, %v9978
    %v10531 = vpack.c.b16 %v9983, %v9979
    %v10532 = vpack.c.b16 %v9988, %v9984
    %v10533 = vpack.c.b16 %v9989, %v9985
    %v10534 = vpack.c.b16 %v9990, %v9986
    %v10535 = vpack.c.b16 %v9991, %v9987
    %v10536 = vpack.c.b16 %v9996, %v9992
    %v10537 = vpack.c.b16 %v9997, %v9993
    %v10538 = vpack.c.b16 %v9998, %v9994
    %v10539 = vpack.c.b16 %v9999, %v9995
    %v10540 = vpack.c.b16 %v10004, %v10000
    %v10541 = vpack.c.b16 %v10005, %v10001
    %v10542 = vpack.c.b16 %v10006, %v10002
    %v10543 = vpack.c.b16 %v10007, %v10003
    %v10544 = vpack.c.b16 %v10012, %v10008
    %v10545 = vpack.c.b16 %v10013, %v10009
    %v10546 = vpack.c.b16 %v10014, %v10010
    %v10547 = vpack.c.b16 %v10015, %v10011
    %v10548 = vpack.c.b16 %v10020, %v10016
    %v10549 = vpack.c.b16 %v10021, %v10017
    %v10550 = vpack.c.b16 %v10022, %v10018
    %v10551 = vpack.c.b16 %v10023, %v10019
    %v10552 = vpack.c.b16 %v10028, %v10024
    %v10553 = vpack.c.b16 %v10029, %v10025
    %v10554 = vpack.c.b16 %v10030, %v10026
    %v10555 = vpack.c.b16 %v10031, %v10027
    %v10556 = vpack.c.b16 %v10036, %v10032
    %v10557 = vpack.c.b16 %v10037, %v10033
    %v10558 = vpack.c.b16 %v10038, %v10034
    %v10559 = vpack.c.b16 %v10039, %v10035
    %v10560 = vpack.c.b16 %v10044, %v10040
    %v10561 = vpack.c.b16 %v10045, %v10041
    %v10562 = vpack.c.b16 %v10046, %v10042
    %v10563 = vpack.c.b16 %v10047, %v10043
    %v10564 = vpack.c.b16 %v10052, %v10048
    %v10565 = vpack.c.b16 %v10053, %v10049
    %v10566 = vpack.c.b16 %v10054, %v10050
    %v10567 = vpack.c.b16 %v10055, %v10051
    %11080 = vmatprep.subr.bf16.mxu0 %v10057
    %11081 = vmatpush1.bf16.msra.mxu0 %v10056
    %11082 = vmatprep.subr.bf16.mxu0 %v10061
    %11083 = vmatpush1.bf16.msra.mxu0 %v10060
    %11084 = vmatprep.subr.bf16.mxu0 %v10065
    %11085 = vmatpush1.bf16.msra.mxu0 %v10064
    %11086 = vmatprep.subr.bf16.mxu0 %v10069
    %11087 = vmatpush1.bf16.msra.mxu0 %v10068
    %11088 = vmatprep.subr.bf16.mxu0 %v10073
    %11089 = vmatpush1.bf16.msra.mxu0 %v10072
    %11090 = vmatprep.subr.bf16.mxu0 %v10077
    %11091 = vmatpush1.bf16.msra.mxu0 %v10076
    %11092 = vmatprep.subr.bf16.mxu0 %v10081
    %11093 = vmatpush1.bf16.msra.mxu0 %v10080
    %11094 = vmatprep.subr.bf16.mxu0 %v10085
    %11095 = vmatpush1.bf16.msra.mxu0 %v10084
    %11096 = vmatprep.subr.bf16.mxu0 %v10089
    %11097 = vmatpush1.bf16.msra.mxu0 %v10088
    %11098 = vmatprep.subr.bf16.mxu0 %v10093
    %11099 = vmatpush1.bf16.msra.mxu0 %v10092
    %11100 = vmatprep.subr.bf16.mxu0 %v10097
    %11101 = vmatpush1.bf16.msra.mxu0 %v10096
    %11102 = vmatprep.subr.bf16.mxu0 %v10101
    %11103 = vmatpush1.bf16.msra.mxu0 %v10100
    %11104 = vmatprep.subr.bf16.mxu0 %v10105
    %11105 = vmatpush1.bf16.msra.mxu0 %v10104
    %11106 = vmatprep.subr.bf16.mxu0 %v10109
    %11107 = vmatpush1.bf16.msra.mxu0 %v10108
    %11108 = vmatprep.subr.bf16.mxu0 %v10113
    %11109 = vmatpush1.bf16.msra.mxu0 %v10112
    %11110 = vmatprep.subr.bf16.mxu0 %v10117
    %11111 = vmatpush1.bf16.msra.mxu0 %v10116
    %11112 = vmatprep.mubr.bf16.mxu0 %v7971
    %11113 = vmatmul.mubr.bf16.gmra.mrb[0].mxu0 %v7970
    %v11114 = vpop.f32.mrb[0].mxu0
    %v11115 = vadd.f32 %v8503, %v11114
    %v11116 = vpop.f32.mrb[0].mxu0
    %v11117 = vadd.f32 %v8507, %v11116
    %v11118 = vpop.f32.mrb[0].mxu0
    %v11119 = vpop.f32.mrb[0].mxu0
    %11120 = vdwg.mxu0
    %11121 = vmatprep.subr.bf16.mxu0 %v10121
    %11122 = vmatpush1.bf16.msra.mxu0 %v10120
    %11123 = vmatprep.subr.bf16.mxu0 %v10125
    %11124 = vmatpush1.bf16.msra.mxu0 %v10124
    %11125 = vmatprep.subr.bf16.mxu0 %v10129
    %11126 = vmatpush1.bf16.msra.mxu0 %v10128
    %11127 = vmatprep.subr.bf16.mxu0 %v10133
    %11128 = vmatpush1.bf16.msra.mxu0 %v10132
    %11129 = vmatprep.subr.bf16.mxu0 %v10137
    %11130 = vmatpush1.bf16.msra.mxu0 %v10136
    %11131 = vmatprep.subr.bf16.mxu0 %v10141
    %11132 = vmatpush1.bf16.msra.mxu0 %v10140
    %11133 = vmatprep.subr.bf16.mxu0 %v10145
    %11134 = vmatpush1.bf16.msra.mxu0 %v10144
    %11135 = vmatprep.subr.bf16.mxu0 %v10149
    %11136 = vmatpush1.bf16.msra.mxu0 %v10148
    %11137 = vmatprep.subr.bf16.mxu0 %v10153
    %11138 = vmatpush1.bf16.msra.mxu0 %v10152
    %11139 = vmatprep.subr.bf16.mxu0 %v10157
    %11140 = vmatpush1.bf16.msra.mxu0 %v10156
    %11141 = vmatprep.subr.bf16.mxu0 %v10161
    %11142 = vmatpush1.bf16.msra.mxu0 %v10160
    %11143 = vmatprep.subr.bf16.mxu0 %v10165
    %11144 = vmatpush1.bf16.msra.mxu0 %v10164
    %11145 = vmatprep.subr.bf16.mxu0 %v10169
    %11146 = vmatpush1.bf16.msra.mxu0 %v10168
    %11147 = vmatprep.subr.bf16.mxu0 %v10173
    %11148 = vmatpush1.bf16.msra.mxu0 %v10172
    %11149 = vmatprep.subr.bf16.mxu0 %v10177
    %11150 = vmatpush1.bf16.msra.mxu0 %v10176
    %11151 = vmatprep.subr.bf16.mxu0 %v10181
    %11152 = vmatpush1.bf16.msra.mxu0 %v10180
    %11153 = vmatprep.mubr.bf16.mxu0 %v7973
    %11154 = vmatmul.mubr.bf16.gmra.mrb[0].mxu0 %v7972
    %v11155 = vpop.f32.mrb[0].mxu0
    %v11156 = vadd.f32 %v11115, %v11155
    %v11157 = vpop.f32.mrb[0].mxu0
    %v11158 = vadd.f32 %v11117, %v11157
    %v11159 = vpop.f32.mrb[0].mxu0
    %v11160 = vpop.f32.mrb[0].mxu0
    %11161 = vdwg.mxu0
    %11162 = vmatprep.subr.bf16.mxu0 %v10185
    %11163 = vmatpush1.bf16.msra.mxu0 %v10184
    %11164 = vmatprep.subr.bf16.mxu0 %v10189
    %11165 = vmatpush1.bf16.msra.mxu0 %v10188
    %11166 = vmatprep.subr.bf16.mxu0 %v10193
    %11167 = vmatpush1.bf16.msra.mxu0 %v10192
    %11168 = vmatprep.subr.bf16.mxu0 %v10197
    %11169 = vmatpush1.bf16.msra.mxu0 %v10196
    %11170 = vmatprep.subr.bf16.mxu0 %v10201
    %11171 = vmatpush1.bf16.msra.mxu0 %v10200
    %11172 = vmatprep.subr.bf16.mxu0 %v10205
    %11173 = vmatpush1.bf16.msra.mxu0 %v10204
    %11174 = vmatprep.subr.bf16.mxu0 %v10209
    %11175 = vmatpush1.bf16.msra.mxu0 %v10208
    %11176 = vmatprep.subr.bf16.mxu0 %v10213
    %11177 = vmatpush1.bf16.msra.mxu0 %v10212
    %11178 = vmatprep.subr.bf16.mxu0 %v10217
    %11179 = vmatpush1.bf16.msra.mxu0 %v10216
    %11180 = vmatprep.subr.bf16.mxu0 %v10221
    %11181 = vmatpush1.bf16.msra.mxu0 %v10220
    %11182 = vmatprep.subr.bf16.mxu0 %v10225
    %11183 = vmatpush1.bf16.msra.mxu0 %v10224
    %11184 = vmatprep.subr.bf16.mxu0 %v10229
    %11185 = vmatpush1.bf16.msra.mxu0 %v10228
    %11186 = vmatprep.subr.bf16.mxu0 %v10233
    %11187 = vmatpush1.bf16.msra.mxu0 %v10232
    %11188 = vmatprep.subr.bf16.mxu0 %v10237
    %11189 = vmatpush1.bf16.msra.mxu0 %v10236
    %11190 = vmatprep.subr.bf16.mxu0 %v10241
    %11191 = vmatpush1.bf16.msra.mxu0 %v10240
    %11192 = vmatprep.subr.bf16.mxu0 %v10245
    %11193 = vmatpush1.bf16.msra.mxu0 %v10244
    %11194 = vmatprep.mubr.bf16.mxu0 %v7975
    %11195 = vmatmul.mubr.bf16.gmra.mrb[0].mxu0 %v7974
    %v11196 = vpop.f32.mrb[0].mxu0
    %v11197 = vadd.f32 %v11156, %v11196
    %v11198 = vpop.f32.mrb[0].mxu0
    %v11199 = vadd.f32 %v11158, %v11198
    %v11200 = vpop.f32.mrb[0].mxu0
    %v11201 = vpop.f32.mrb[0].mxu0
    %11202 = vdwg.mxu0
    %11203 = vmatprep.subr.bf16.mxu0 %v10249
    %11204 = vmatpush1.bf16.msra.mxu0 %v10248
    %11205 = vmatprep.subr.bf16.mxu0 %v10253
    %11206 = vmatpush1.bf16.msra.mxu0 %v10252
    %11207 = vmatprep.subr.bf16.mxu0 %v10257
    %11208 = vmatpush1.bf16.msra.mxu0 %v10256
    %11209 = vmatprep.subr.bf16.mxu0 %v10261
    %11210 = vmatpush1.bf16.msra.mxu0 %v10260
    %11211 = vmatprep.subr.bf16.mxu0 %v10265
    %11212 = vmatpush1.bf16.msra.mxu0 %v10264
    %11213 = vmatprep.subr.bf16.mxu0 %v10269
    %11214 = vmatpush1.bf16.msra.mxu0 %v10268
    %11215 = vmatprep.subr.bf16.mxu0 %v10273
    %11216 = vmatpush1.bf16.msra.mxu0 %v10272
    %11217 = vmatprep.subr.bf16.mxu0 %v10277
    %11218 = vmatpush1.bf16.msra.mxu0 %v10276
    %11219 = vmatprep.subr.bf16.mxu0 %v10281
    %11220 = vmatpush1.bf16.msra.mxu0 %v10280
    %11221 = vmatprep.subr.bf16.mxu0 %v10285
    %11222 = vmatpush1.bf16.msra.mxu0 %v10284
    %11223 = vmatprep.subr.bf16.mxu0 %v10289
    %11224 = vmatpush1.bf16.msra.mxu0 %v10288
    %11225 = vmatprep.subr.bf16.mxu0 %v10293
    %11226 = vmatpush1.bf16.msra.mxu0 %v10292
    %11227 = vmatprep.subr.bf16.mxu0 %v10297
    %11228 = vmatpush1.bf16.msra.mxu0 %v10296
    %11229 = vmatprep.subr.bf16.mxu0 %v10301
    %11230 = vmatpush1.bf16.msra.mxu0 %v10300
    %11231 = vmatprep.subr.bf16.mxu0 %v10305
    %11232 = vmatpush1.bf16.msra.mxu0 %v10304
    %11233 = vmatprep.subr.bf16.mxu0 %v10309
    %11234 = vmatpush1.bf16.msra.mxu0 %v10308
    %11235 = vmatprep.mubr.bf16.mxu0 %v7977
    %11236 = vmatmul.mubr.bf16.gmra.mrb[0].mxu0 %v7976
    %v11237 = vpop.f32.mrb[0].mxu0
    %v11238 = vadd.f32 %v11197, %v11237
    %v11239 = vpop.f32.mrb[0].mxu0
    %v11240 = vadd.f32 %v11199, %v11239
    %v11241 = vpop.f32.mrb[0].mxu0
    %v11242 = vpop.f32.mrb[0].mxu0
    %11243 = vdwg.mxu0
    %11244 = vmatprep.subr.bf16.mxu0 %v10313
    %11245 = vmatpush1.bf16.msra.mxu0 %v10312
    %11246 = vmatprep.subr.bf16.mxu0 %v10317
    %11247 = vmatpush1.bf16.msra.mxu0 %v10316
    %11248 = vmatprep.subr.bf16.mxu0 %v10321
    %11249 = vmatpush1.bf16.msra.mxu0 %v10320
    %11250 = vmatprep.subr.bf16.mxu0 %v10325
    %11251 = vmatpush1.bf16.msra.mxu0 %v10324
    %11252 = vmatprep.subr.bf16.mxu0 %v10329
    %11253 = vmatpush1.bf16.msra.mxu0 %v10328
    %11254 = vmatprep.subr.bf16.mxu0 %v10333
    %11255 = vmatpush1.bf16.msra.mxu0 %v10332
    %11256 = vmatprep.subr.bf16.mxu0 %v10337
    %11257 = vmatpush1.bf16.msra.mxu0 %v10336
    %11258 = vmatprep.subr.bf16.mxu0 %v10341
    %11259 = vmatpush1.bf16.msra.mxu0 %v10340
    %11260 = vmatprep.subr.bf16.mxu0 %v10345
    %11261 = vmatpush1.bf16.msra.mxu0 %v10344
    %11262 = vmatprep.subr.bf16.mxu0 %v10349
    %11263 = vmatpush1.bf16.msra.mxu0 %v10348
    %11264 = vmatprep.subr.bf16.mxu0 %v10353
    %11265 = vmatpush1.bf16.msra.mxu0 %v10352
    %11266 = vmatprep.subr.bf16.mxu0 %v10357
    %11267 = vmatpush1.bf16.msra.mxu0 %v10356
    %11268 = vmatprep.subr.bf16.mxu0 %v10361
    %11269 = vmatpush1.bf16.msra.mxu0 %v10360
    %11270 = vmatprep.subr.bf16.mxu0 %v10365
    %11271 = vmatpush1.bf16.msra.mxu0 %v10364
    %11272 = vmatprep.subr.bf16.mxu0 %v10369
    %11273 = vmatpush1.bf16.msra.mxu0 %v10368
    %11274 = vmatprep.subr.bf16.mxu0 %v10373
    %11275 = vmatpush1.bf16.msra.mxu0 %v10372
    %11276 = vmatprep.mubr.bf16.mxu0 %v7979
    %11277 = vmatmul.mubr.bf16.gmra.mrb[0].mxu0 %v7978
    %v11278 = vpop.f32.mrb[0].mxu0
    %v11279 = vadd.f32 %v11238, %v11278
    %v11280 = vpop.f32.mrb[0].mxu0
    %v11281 = vadd.f32 %v11240, %v11280
    %v11282 = vpop.f32.mrb[0].mxu0
    %v11283 = vpop.f32.mrb[0].mxu0
    %11284 = vdwg.mxu0
    %11285 = vmatprep.subr.bf16.mxu0 %v10377
    %11286 = vmatpush1.bf16.msra.mxu0 %v10376
    %11287 = vmatprep.subr.bf16.mxu0 %v10381
    %11288 = vmatpush1.bf16.msra.mxu0 %v10380
    %11289 = vmatprep.subr.bf16.mxu0 %v10385
    %11290 = vmatpush1.bf16.msra.mxu0 %v10384
    %11291 = vmatprep.subr.bf16.mxu0 %v10389
    %11292 = vmatpush1.bf16.msra.mxu0 %v10388
    %11293 = vmatprep.subr.bf16.mxu0 %v10393
    %11294 = vmatpush1.bf16.msra.mxu0 %v10392
    %11295 = vmatprep.subr.bf16.mxu0 %v10397
    %11296 = vmatpush1.bf16.msra.mxu0 %v10396
    %11297 = vmatprep.subr.bf16.mxu0 %v10401
    %11298 = vmatpush1.bf16.msra.mxu0 %v10400
    %11299 = vmatprep.subr.bf16.mxu0 %v10405
    %11300 = vmatpush1.bf16.msra.mxu0 %v10404
    %11301 = vmatprep.subr.bf16.mxu0 %v10409
    %11302 = vmatpush1.bf16.msra.mxu0 %v10408
    %11303 = vmatprep.subr.bf16.mxu0 %v10413
    %11304 = vmatpush1.bf16.msra.mxu0 %v10412
    %11305 = vmatprep.subr.bf16.mxu0 %v10417
    %11306 = vmatpush1.bf16.msra.mxu0 %v10416
    %11307 = vmatprep.subr.bf16.mxu0 %v10421
    %11308 = vmatpush1.bf16.msra.mxu0 %v10420
    %11309 = vmatprep.subr.bf16.mxu0 %v10425
    %11310 = vmatpush1.bf16.msra.mxu0 %v10424
    %11311 = vmatprep.subr.bf16.mxu0 %v10429
    %11312 = vmatpush1.bf16.msra.mxu0 %v10428
    %11313 = vmatprep.subr.bf16.mxu0 %v10433
    %11314 = vmatpush1.bf16.msra.mxu0 %v10432
    %11315 = vmatprep.subr.bf16.mxu0 %v10437
    %11316 = vmatpush1.bf16.msra.mxu0 %v10436
    %11317 = vmatprep.mubr.bf16.mxu0 %v7981
    %11318 = vmatmul.mubr.bf16.gmra.mrb[0].mxu0 %v7980
    %v11319 = vpop.f32.mrb[0].mxu0
    %v11320 = vadd.f32 %v11279, %v11319
    %v11321 = vpop.f32.mrb[0].mxu0
    %v11322 = vadd.f32 %v11281, %v11321
    %v11323 = vpop.f32.mrb[0].mxu0
    %v11324 = vpop.f32.mrb[0].mxu0
    %11325 = vdwg.mxu0
    %11326 = vmatprep.subr.bf16.mxu0 %v10441
    %11327 = vmatpush1.bf16.msra.mxu0 %v10440
    %11328 = vmatprep.subr.bf16.mxu0 %v10445
    %11329 = vmatpush1.bf16.msra.mxu0 %v10444
    %11330 = vmatprep.subr.bf16.mxu0 %v10449
    %11331 = vmatpush1.bf16.msra.mxu0 %v10448
    %11332 = vmatprep.subr.bf16.mxu0 %v10453
    %11333 = vmatpush1.bf16.msra.mxu0 %v10452
    %11334 = vmatprep.subr.bf16.mxu0 %v10457
    %11335 = vmatpush1.bf16.msra.mxu0 %v10456
    %11336 = vmatprep.subr.bf16.mxu0 %v10461
    %11337 = vmatpush1.bf16.msra.mxu0 %v10460
    %11338 = vmatprep.subr.bf16.mxu0 %v10465
    %11339 = vmatpush1.bf16.msra.mxu0 %v10464
    %11340 = vmatprep.subr.bf16.mxu0 %v10469
    %11341 = vmatpush1.bf16.msra.mxu0 %v10468
    %11342 = vmatprep.subr.bf16.mxu0 %v10473
    %11343 = vmatpush1.bf16.msra.mxu0 %v10472
    %11344 = vmatprep.subr.bf16.mxu0 %v10477
    %11345 = vmatpush1.bf16.msra.mxu0 %v10476
    %11346 = vmatprep.subr.bf16.mxu0 %v10481
    %11347 = vmatpush1.bf16.msra.mxu0 %v10480
    %11348 = vmatprep.subr.bf16.mxu0 %v10485
    %11349 = vmatpush1.bf16.msra.mxu0 %v10484
    %11350 = vmatprep.subr.bf16.mxu0 %v10489
    %11351 = vmatpush1.bf16.msra.mxu0 %v10488
    %11352 = vmatprep.subr.bf16.mxu0 %v10493
    %11353 = vmatpush1.bf16.msra.mxu0 %v10492
    %11354 = vmatprep.subr.bf16.mxu0 %v10497
    %11355 = vmatpush1.bf16.msra.mxu0 %v10496
    %11356 = vmatprep.subr.bf16.mxu0 %v10501
    %11357 = vmatpush1.bf16.msra.mxu0 %v10500
    %11358 = vmatprep.mubr.bf16.mxu0 %v7983
    %11359 = vmatmul.mubr.bf16.gmra.mrb[0].mxu0 %v7982
    %v11360 = vpop.f32.mrb[0].mxu0
    %v11361 = vadd.f32 %v11320, %v11360
    %v11362 = vpop.f32.mrb[0].mxu0
    %v11363 = vadd.f32 %v11322, %v11362
    %v11364 = vpop.f32.mrb[0].mxu0
    %v11365 = vpop.f32.mrb[0].mxu0
    %11366 = vdwg.mxu0
    %11367 = vmatprep.subr.bf16.mxu0 %v10505
    %11368 = vmatpush1.bf16.msra.mxu0 %v10504
    %11369 = vmatprep.subr.bf16.mxu0 %v10509
    %11370 = vmatpush1.bf16.msra.mxu0 %v10508
    %11371 = vmatprep.subr.bf16.mxu0 %v10513
    %11372 = vmatpush1.bf16.msra.mxu0 %v10512
    %11373 = vmatprep.subr.bf16.mxu0 %v10517
    %11374 = vmatpush1.bf16.msra.mxu0 %v10516
    %11375 = vmatprep.subr.bf16.mxu0 %v10521
    %11376 = vmatpush1.bf16.msra.mxu0 %v10520
    %11377 = vmatprep.subr.bf16.mxu0 %v10525
    %11378 = vmatpush1.bf16.msra.mxu0 %v10524
    %11379 = vmatprep.subr.bf16.mxu0 %v10529
    %11380 = vmatpush1.bf16.msra.mxu0 %v10528
    %11381 = vmatprep.subr.bf16.mxu0 %v10533
    %11382 = vmatpush1.bf16.msra.mxu0 %v10532
    %11383 = vmatprep.subr.bf16.mxu0 %v10537
    %11384 = vmatpush1.bf16.msra.mxu0 %v10536
    %11385 = vmatprep.subr.bf16.mxu0 %v10541
    %11386 = vmatpush1.bf16.msra.mxu0 %v10540
    %11387 = vmatprep.subr.bf16.mxu0 %v10545
    %11388 = vmatpush1.bf16.msra.mxu0 %v10544
    %11389 = vmatprep.subr.bf16.mxu0 %v10549
    %11390 = vmatpush1.bf16.msra.mxu0 %v10548
    %11391 = vmatprep.subr.bf16.mxu0 %v10553
    %11392 = vmatpush1.bf16.msra.mxu0 %v10552
    %11393 = vmatprep.subr.bf16.mxu0 %v10557
    %11394 = vmatpush1.bf16.msra.mxu0 %v10556
    %11395 = vmatprep.subr.bf16.mxu0 %v10561
    %11396 = vmatpush1.bf16.msra.mxu0 %v10560
    %11397 = vmatprep.subr.bf16.mxu0 %v10565
    %11398 = vmatpush1.bf16.msra.mxu0 %v10564
    %11399 = vmatprep.mubr.bf16.mxu0 %v7985
    %11400 = vmatmul.mubr.bf16.gmra.mrb[0].mxu0 %v7984
    %v11401 = vpop.f32.mrb[0].mxu0
    %v11402 = vadd.f32 %v11361, %v11401
    %v11403 = vpop.f32.mrb[0].mxu0
    %v11404 = vadd.f32 %v11363, %v11403
    %v11405 = vpop.f32.mrb[0].mxu0
    %v11406 = vpop.f32.mrb[0].mxu0
    %11407 = vdwg.mxu0
    %11408 = vmatprep.subr.bf16.mxu0 %v10059
    %11409 = vmatpush1.bf16.msra.mxu0 %v10058
    %11410 = vmatprep.subr.bf16.mxu0 %v10063
    %11411 = vmatpush1.bf16.msra.mxu0 %v10062
    %11412 = vmatprep.subr.bf16.mxu0 %v10067
    %11413 = vmatpush1.bf16.msra.mxu0 %v10066
    %11414 = vmatprep.subr.bf16.mxu0 %v10071
    %11415 = vmatpush1.bf16.msra.mxu0 %v10070
    %11416 = vmatprep.subr.bf16.mxu0 %v10075
    %11417 = vmatpush1.bf16.msra.mxu0 %v10074
    %11418 = vmatprep.subr.bf16.mxu0 %v10079
    %11419 = vmatpush1.bf16.msra.mxu0 %v10078
    %11420 = vmatprep.subr.bf16.mxu0 %v10083
    %11421 = vmatpush1.bf16.msra.mxu0 %v10082
    %11422 = vmatprep.subr.bf16.mxu0 %v10087
    %11423 = vmatpush1.bf16.msra.mxu0 %v10086
    %11424 = vmatprep.subr.bf16.mxu0 %v10091
    %11425 = vmatpush1.bf16.msra.mxu0 %v10090
    %11426 = vmatprep.subr.bf16.mxu0 %v10095
    %11427 = vmatpush1.bf16.msra.mxu0 %v10094
    %11428 = vmatprep.subr.bf16.mxu0 %v10099
    %11429 = vmatpush1.bf16.msra.mxu0 %v10098
    %11430 = vmatprep.subr.bf16.mxu0 %v10103
    %11431 = vmatpush1.bf16.msra.mxu0 %v10102
    %11432 = vmatprep.subr.bf16.mxu0 %v10107
    %11433 = vmatpush1.bf16.msra.mxu0 %v10106
    %11434 = vmatprep.subr.bf16.mxu0 %v10111
    %11435 = vmatpush1.bf16.msra.mxu0 %v10110
    %11436 = vmatprep.subr.bf16.mxu0 %v10115
    %11437 = vmatpush1.bf16.msra.mxu0 %v10114
    %11438 = vmatprep.subr.bf16.mxu0 %v10119
    %11439 = vmatpush1.bf16.msra.mxu0 %v10118
    %11440 = vmatprep.mubr.bf16.mxu0 %v7971
    %11441 = vmatmul.mubr.bf16.gmra.mrb[0].mxu0 %v7970
    %v11442 = vpop.f32.mrb[0].mxu0
    %v11443 = vadd.f32 %v8511, %v11442
    %v11444 = vpop.f32.mrb[0].mxu0
    %v11445 = vadd.f32 %v8515, %v11444
    %v11446 = vpop.f32.mrb[0].mxu0
    %v11447 = vpop.f32.mrb[0].mxu0
    %11448 = vdwg.mxu0
    %11449 = vmatprep.subr.bf16.mxu0 %v10123
    %11450 = vmatpush1.bf16.msra.mxu0 %v10122
    %11451 = vmatprep.subr.bf16.mxu0 %v10127
    %11452 = vmatpush1.bf16.msra.mxu0 %v10126
    %11453 = vmatprep.subr.bf16.mxu0 %v10131
    %11454 = vmatpush1.bf16.msra.mxu0 %v10130
    %11455 = vmatprep.subr.bf16.mxu0 %v10135
    %11456 = vmatpush1.bf16.msra.mxu0 %v10134
    %11457 = vmatprep.subr.bf16.mxu0 %v10139
    %11458 = vmatpush1.bf16.msra.mxu0 %v10138
    %11459 = vmatprep.subr.bf16.mxu0 %v10143
    %11460 = vmatpush1.bf16.msra.mxu0 %v10142
    %11461 = vmatprep.subr.bf16.mxu0 %v10147
    %11462 = vmatpush1.bf16.msra.mxu0 %v10146
    %11463 = vmatprep.subr.bf16.mxu0 %v10151
    %11464 = vmatpush1.bf16.msra.mxu0 %v10150
    %11465 = vmatprep.subr.bf16.mxu0 %v10155
    %11466 = vmatpush1.bf16.msra.mxu0 %v10154
    %11467 = vmatprep.subr.bf16.mxu0 %v10159
    %11468 = vmatpush1.bf16.msra.mxu0 %v10158
    %11469 = vmatprep.subr.bf16.mxu0 %v10163
    %11470 = vmatpush1.bf16.msra.mxu0 %v10162
    %11471 = vmatprep.subr.bf16.mxu0 %v10167
    %11472 = vmatpush1.bf16.msra.mxu0 %v10166
    %11473 = vmatprep.subr.bf16.mxu0 %v10171
    %11474 = vmatpush1.bf16.msra.mxu0 %v10170
    %11475 = vmatprep.subr.bf16.mxu0 %v10175
    %11476 = vmatpush1.bf16.msra.mxu0 %v10174
    %11477 = vmatprep.subr.bf16.mxu0 %v10179
    %11478 = vmatpush1.bf16.msra.mxu0 %v10178
    %11479 = vmatprep.subr.bf16.mxu0 %v10183
    %11480 = vmatpush1.bf16.msra.mxu0 %v10182
    %11481 = vmatprep.mubr.bf16.mxu0 %v7973
    %11482 = vmatmul.mubr.bf16.gmra.mrb[0].mxu0 %v7972
    %v11483 = vpop.f32.mrb[0].mxu0
    %v11484 = vadd.f32 %v11443, %v11483
    %v11485 = vpop.f32.mrb[0].mxu0
    %v11486 = vadd.f32 %v11445, %v11485
    %v11487 = vpop.f32.mrb[0].mxu0
    %v11488 = vpop.f32.mrb[0].mxu0
    %11489 = vdwg.mxu0
    %11490 = vmatprep.subr.bf16.mxu0 %v10187
    %11491 = vmatpush1.bf16.msra.mxu0 %v10186
    %11492 = vmatprep.subr.bf16.mxu0 %v10191
    %11493 = vmatpush1.bf16.msra.mxu0 %v10190
    %11494 = vmatprep.subr.bf16.mxu0 %v10195
    %11495 = vmatpush1.bf16.msra.mxu0 %v10194
    %11496 = vmatprep.subr.bf16.mxu0 %v10199
    %11497 = vmatpush1.bf16.msra.mxu0 %v10198
    %11498 = vmatprep.subr.bf16.mxu0 %v10203
    %11499 = vmatpush1.bf16.msra.mxu0 %v10202
    %11500 = vmatprep.subr.bf16.mxu0 %v10207
    %11501 = vmatpush1.bf16.msra.mxu0 %v10206
    %11502 = vmatprep.subr.bf16.mxu0 %v10211
    %11503 = vmatpush1.bf16.msra.mxu0 %v10210
    %11504 = vmatprep.subr.bf16.mxu0 %v10215
    %11505 = vmatpush1.bf16.msra.mxu0 %v10214
    %11506 = vmatprep.subr.bf16.mxu0 %v10219
    %11507 = vmatpush1.bf16.msra.mxu0 %v10218
    %11508 = vmatprep.subr.bf16.mxu0 %v10223
    %11509 = vmatpush1.bf16.msra.mxu0 %v10222
    %11510 = vmatprep.subr.bf16.mxu0 %v10227
    %11511 = vmatpush1.bf16.msra.mxu0 %v10226
    %11512 = vmatprep.subr.bf16.mxu0 %v10231
    %11513 = vmatpush1.bf16.msra.mxu0 %v10230
    %11514 = vmatprep.subr.bf16.mxu0 %v10235
    %11515 = vmatpush1.bf16.msra.mxu0 %v10234
    %11516 = vmatprep.subr.bf16.mxu0 %v10239
    %11517 = vmatpush1.bf16.msra.mxu0 %v10238
    %11518 = vmatprep.subr.bf16.mxu0 %v10243
    %11519 = vmatpush1.bf16.msra.mxu0 %v10242
    %11520 = vmatprep.subr.bf16.mxu0 %v10247
    %11521 = vmatpush1.bf16.msra.mxu0 %v10246
    %11522 = vmatprep.mubr.bf16.mxu0 %v7975
    %11523 = vmatmul.mubr.bf16.gmra.mrb[0].mxu0 %v7974
    %v11524 = vpop.f32.mrb[0].mxu0
    %v11525 = vadd.f32 %v11484, %v11524
    %v11526 = vpop.f32.mrb[0].mxu0
    %v11527 = vadd.f32 %v11486, %v11526
    %v11528 = vpop.f32.mrb[0].mxu0
    %v11529 = vpop.f32.mrb[0].mxu0
    %11530 = vdwg.mxu0
    %11531 = vmatprep.subr.bf16.mxu0 %v10251
    %11532 = vmatpush1.bf16.msra.mxu0 %v10250
    %11533 = vmatprep.subr.bf16.mxu0 %v10255
    %11534 = vmatpush1.bf16.msra.mxu0 %v10254
    %11535 = vmatprep.subr.bf16.mxu0 %v10259
    %11536 = vmatpush1.bf16.msra.mxu0 %v10258
    %11537 = vmatprep.subr.bf16.mxu0 %v10263
    %11538 = vmatpush1.bf16.msra.mxu0 %v10262
    %11539 = vmatprep.subr.bf16.mxu0 %v10267
    %11540 = vmatpush1.bf16.msra.mxu0 %v10266
    %11541 = vmatprep.subr.bf16.mxu0 %v10271
    %11542 = vmatpush1.bf16.msra.mxu0 %v10270
    %11543 = vmatprep.subr.bf16.mxu0 %v10275
    %11544 = vmatpush1.bf16.msra.mxu0 %v10274
    %11545 = vmatprep.subr.bf16.mxu0 %v10279
    %11546 = vmatpush1.bf16.msra.mxu0 %v10278
    %11547 = vmatprep.subr.bf16.mxu0 %v10283
    %11548 = vmatpush1.bf16.msra.mxu0 %v10282
    %11549 = vmatprep.subr.bf16.mxu0 %v10287
    %11550 = vmatpush1.bf16.msra.mxu0 %v10286
    %11551 = vmatprep.subr.bf16.mxu0 %v10291
    %11552 = vmatpush1.bf16.msra.mxu0 %v10290
    %11553 = vmatprep.subr.bf16.mxu0 %v10295
    %11554 = vmatpush1.bf16.msra.mxu0 %v10294
    %11555 = vmatprep.subr.bf16.mxu0 %v10299
    %11556 = vmatpush1.bf16.msra.mxu0 %v10298
    %11557 = vmatprep.subr.bf16.mxu0 %v10303
    %11558 = vmatpush1.bf16.msra.mxu0 %v10302
    %11559 = vmatprep.subr.bf16.mxu0 %v10307
    %11560 = vmatpush1.bf16.msra.mxu0 %v10306
    %11561 = vmatprep.subr.bf16.mxu0 %v10311
    %11562 = vmatpush1.bf16.msra.mxu0 %v10310
    %11563 = vmatprep.mubr.bf16.mxu0 %v7977
    %11564 = vmatmul.mubr.bf16.gmra.mrb[0].mxu0 %v7976
    %v11565 = vpop.f32.mrb[0].mxu0
    %v11566 = vadd.f32 %v11525, %v11565
    %v11567 = vpop.f32.mrb[0].mxu0
    %v11568 = vadd.f32 %v11527, %v11567
    %v11569 = vpop.f32.mrb[0].mxu0
    %v11570 = vpop.f32.mrb[0].mxu0
    %11571 = vdwg.mxu0
    %11572 = vmatprep.subr.bf16.mxu0 %v10315
    %11573 = vmatpush1.bf16.msra.mxu0 %v10314
    %11574 = vmatprep.subr.bf16.mxu0 %v10319
    %11575 = vmatpush1.bf16.msra.mxu0 %v10318
    %11576 = vmatprep.subr.bf16.mxu0 %v10323
    %11577 = vmatpush1.bf16.msra.mxu0 %v10322
    %11578 = vmatprep.subr.bf16.mxu0 %v10327
    %11579 = vmatpush1.bf16.msra.mxu0 %v10326
    %11580 = vmatprep.subr.bf16.mxu0 %v10331
    %11581 = vmatpush1.bf16.msra.mxu0 %v10330
    %11582 = vmatprep.subr.bf16.mxu0 %v10335
    %11583 = vmatpush1.bf16.msra.mxu0 %v10334
    %11584 = vmatprep.subr.bf16.mxu0 %v10339
    %11585 = vmatpush1.bf16.msra.mxu0 %v10338
    %11586 = vmatprep.subr.bf16.mxu0 %v10343
    %11587 = vmatpush1.bf16.msra.mxu0 %v10342
    %11588 = vmatprep.subr.bf16.mxu0 %v10347
    %11589 = vmatpush1.bf16.msra.mxu0 %v10346
    %11590 = vmatprep.subr.bf16.mxu0 %v10351
    %11591 = vmatpush1.bf16.msra.mxu0 %v10350
    %11592 = vmatprep.subr.bf16.mxu0 %v10355
    %11593 = vmatpush1.bf16.msra.mxu0 %v10354
    %11594 = vmatprep.subr.bf16.mxu0 %v10359
    %11595 = vmatpush1.bf16.msra.mxu0 %v10358
    %11596 = vmatprep.subr.bf16.mxu0 %v10363
    %11597 = vmatpush1.bf16.msra.mxu0 %v10362
    %11598 = vmatprep.subr.bf16.mxu0 %v10367
    %11599 = vmatpush1.bf16.msra.mxu0 %v10366
    %11600 = vmatprep.subr.bf16.mxu0 %v10371
    %11601 = vmatpush1.bf16.msra.mxu0 %v10370
    %11602 = vmatprep.subr.bf16.mxu0 %v10375
    %11603 = vmatpush1.bf16.msra.mxu0 %v10374
    %11604 = vmatprep.mubr.bf16.mxu0 %v7979
    %11605 = vmatmul.mubr.bf16.gmra.mrb[0].mxu0 %v7978
    %v11606 = vpop.f32.mrb[0].mxu0
    %v11607 = vadd.f32 %v11566, %v11606
    %v11608 = vpop.f32.mrb[0].mxu0
    %v11609 = vadd.f32 %v11568, %v11608
    %v11610 = vpop.f32.mrb[0].mxu0
    %v11611 = vpop.f32.mrb[0].mxu0
    %11612 = vdwg.mxu0
    %11613 = vmatprep.subr.bf16.mxu0 %v10379
    %11614 = vmatpush1.bf16.msra.mxu0 %v10378
    %11615 = vmatprep.subr.bf16.mxu0 %v10383
    %11616 = vmatpush1.bf16.msra.mxu0 %v10382
    %11617 = vmatprep.subr.bf16.mxu0 %v10387
    %11618 = vmatpush1.bf16.msra.mxu0 %v10386
    %11619 = vmatprep.subr.bf16.mxu0 %v10391
    %11620 = vmatpush1.bf16.msra.mxu0 %v10390
    %11621 = vmatprep.subr.bf16.mxu0 %v10395
    %11622 = vmatpush1.bf16.msra.mxu0 %v10394
    %11623 = vmatprep.subr.bf16.mxu0 %v10399
    %11624 = vmatpush1.bf16.msra.mxu0 %v10398
    %11625 = vmatprep.subr.bf16.mxu0 %v10403
    %11626 = vmatpush1.bf16.msra.mxu0 %v10402
    %11627 = vmatprep.subr.bf16.mxu0 %v10407
    %11628 = vmatpush1.bf16.msra.mxu0 %v10406
    %11629 = vmatprep.subr.bf16.mxu0 %v10411
    %11630 = vmatpush1.bf16.msra.mxu0 %v10410
    %11631 = vmatprep.subr.bf16.mxu0 %v10415
    %11632 = vmatpush1.bf16.msra.mxu0 %v10414
    %11633 = vmatprep.subr.bf16.mxu0 %v10419
    %11634 = vmatpush1.bf16.msra.mxu0 %v10418
    %11635 = vmatprep.subr.bf16.mxu0 %v10423
    %11636 = vmatpush1.bf16.msra.mxu0 %v10422
    %11637 = vmatprep.subr.bf16.mxu0 %v10427
    %11638 = vmatpush1.bf16.msra.mxu0 %v10426
    %11639 = vmatprep.subr.bf16.mxu0 %v10431
    %11640 = vmatpush1.bf16.msra.mxu0 %v10430
    %11641 = vmatprep.subr.bf16.mxu0 %v10435
    %11642 = vmatpush1.bf16.msra.mxu0 %v10434
    %11643 = vmatprep.subr.bf16.mxu0 %v10439
    %11644 = vmatpush1.bf16.msra.mxu0 %v10438
    %11645 = vmatprep.mubr.bf16.mxu0 %v7981
    %11646 = vmatmul.mubr.bf16.gmra.mrb[0].mxu0 %v7980
    %v11647 = vpop.f32.mrb[0].mxu0
    %v11648 = vadd.f32 %v11607, %v11647
    %v11649 = vpop.f32.mrb[0].mxu0
    %v11650 = vadd.f32 %v11609, %v11649
    %v11651 = vpop.f32.mrb[0].mxu0
    %v11652 = vpop.f32.mrb[0].mxu0
    %11653 = vdwg.mxu0
    %11654 = vmatprep.subr.bf16.mxu0 %v10443
    %11655 = vmatpush1.bf16.msra.mxu0 %v10442
    %11656 = vmatprep.subr.bf16.mxu0 %v10447
    %11657 = vmatpush1.bf16.msra.mxu0 %v10446
    %11658 = vmatprep.subr.bf16.mxu0 %v10451
    %11659 = vmatpush1.bf16.msra.mxu0 %v10450
    %11660 = vmatprep.subr.bf16.mxu0 %v10455
    %11661 = vmatpush1.bf16.msra.mxu0 %v10454
    %11662 = vmatprep.subr.bf16.mxu0 %v10459
    %11663 = vmatpush1.bf16.msra.mxu0 %v10458
    %11664 = vmatprep.subr.bf16.mxu0 %v10463
    %11665 = vmatpush1.bf16.msra.mxu0 %v10462
    %11666 = vmatprep.subr.bf16.mxu0 %v10467
    %11667 = vmatpush1.bf16.msra.mxu0 %v10466
    %11668 = vmatprep.subr.bf16.mxu0 %v10471
    %11669 = vmatpush1.bf16.msra.mxu0 %v10470
    %11670 = vmatprep.subr.bf16.mxu0 %v10475
    %11671 = vmatpush1.bf16.msra.mxu0 %v10474
    %11672 = vmatprep.subr.bf16.mxu0 %v10479
    %11673 = vmatpush1.bf16.msra.mxu0 %v10478
    %11674 = vmatprep.subr.bf16.mxu0 %v10483
    %11675 = vmatpush1.bf16.msra.mxu0 %v10482
    %11676 = vmatprep.subr.bf16.mxu0 %v10487
    %11677 = vmatpush1.bf16.msra.mxu0 %v10486
    %11678 = vmatprep.subr.bf16.mxu0 %v10491
    %11679 = vmatpush1.bf16.msra.mxu0 %v10490
    %11680 = vmatprep.subr.bf16.mxu0 %v10495
    %11681 = vmatpush1.bf16.msra.mxu0 %v10494
    %11682 = vmatprep.subr.bf16.mxu0 %v10499
    %11683 = vmatpush1.bf16.msra.mxu0 %v10498
    %11684 = vmatprep.subr.bf16.mxu0 %v10503
    %11685 = vmatpush1.bf16.msra.mxu0 %v10502
    %11686 = vmatprep.mubr.bf16.mxu0 %v7983
    %11687 = vmatmul.mubr.bf16.gmra.mrb[0].mxu0 %v7982
    %v11688 = vpop.f32.mrb[0].mxu0
    %v11689 = vadd.f32 %v11648, %v11688
    %v11690 = vpop.f32.mrb[0].mxu0
    %v11691 = vadd.f32 %v11650, %v11690
    %v11692 = vpop.f32.mrb[0].mxu0
    %v11693 = vpop.f32.mrb[0].mxu0
    %11694 = vdwg.mxu0
    %11695 = vmatprep.subr.bf16.mxu0 %v10507
    %11696 = vmatpush1.bf16.msra.mxu0 %v10506
    %11697 = vmatprep.subr.bf16.mxu0 %v10511
    %11698 = vmatpush1.bf16.msra.mxu0 %v10510
    %11699 = vmatprep.subr.bf16.mxu0 %v10515
    %11700 = vmatpush1.bf16.msra.mxu0 %v10514
    %11701 = vmatprep.subr.bf16.mxu0 %v10519
    %11702 = vmatpush1.bf16.msra.mxu0 %v10518
    %11703 = vmatprep.subr.bf16.mxu0 %v10523
    %11704 = vmatpush1.bf16.msra.mxu0 %v10522
    %11705 = vmatprep.subr.bf16.mxu0 %v10527
    %11706 = vmatpush1.bf16.msra.mxu0 %v10526
    %11707 = vmatprep.subr.bf16.mxu0 %v10531
    %11708 = vmatpush1.bf16.msra.mxu0 %v10530
    %11709 = vmatprep.subr.bf16.mxu0 %v10535
    %11710 = vmatpush1.bf16.msra.mxu0 %v10534
    %11711 = vmatprep.subr.bf16.mxu0 %v10539
    %11712 = vmatpush1.bf16.msra.mxu0 %v10538
    %11713 = vmatprep.subr.bf16.mxu0 %v10543
    %11714 = vmatpush1.bf16.msra.mxu0 %v10542
    %11715 = vmatprep.subr.bf16.mxu0 %v10547
    %11716 = vmatpush1.bf16.msra.mxu0 %v10546
    %11717 = vmatprep.subr.bf16.mxu0 %v10551
    %11718 = vmatpush1.bf16.msra.mxu0 %v10550
    %11719 = vmatprep.subr.bf16.mxu0 %v10555
    %11720 = vmatpush1.bf16.msra.mxu0 %v10554
    %11721 = vmatprep.subr.bf16.mxu0 %v10559
    %11722 = vmatpush1.bf16.msra.mxu0 %v10558
    %11723 = vmatprep.subr.bf16.mxu0 %v10563
    %11724 = vmatpush1.bf16.msra.mxu0 %v10562
    %11725 = vmatprep.subr.bf16.mxu0 %v10567
    %11726 = vmatpush1.bf16.msra.mxu0 %v10566
    %11727 = vmatprep.mubr.bf16.mxu0 %v7985
    %11728 = vmatmul.mubr.bf16.gmra.mrb[0].mxu0 %v7984
    %v11729 = vpop.f32.mrb[0].mxu0
    %v11730 = vadd.f32 %v11689, %v11729
    %v11731 = vpop.f32.mrb[0].mxu0
    %v11732 = vadd.f32 %v11691, %v11731
    %v11733 = vpop.f32.mrb[0].mxu0
    %v11734 = vpop.f32.mrb[0].mxu0
    %11735 = vdwg.mxu0
    %v11736 = vmax.f32 %v11402, 0.0
    %v11737 = vmax.f32 %v11404, 0.0
    %v11738 = vmax.f32 %v11730, 0.0
    %v11739 = vmax.f32 %v11732, 0.0
    %v11740 = vpack.c.bf16 %v11736, %v11736
    %v11741 = vpack.c.bf16 %v11737, %v11737
    %v11742 = vpack.c.bf16 %v11738, %v11738
    %v11743 = vpack.c.bf16 %v11739, %v11739
    %v11744 = vld [vmem:[#allocation8] sm:$0xf]
    %v11745 = vld [vmem:[#allocation8 + $0x4] sm:$0xf]
    %v11746 = vld [vmem:[#allocation8 + $0x8] sm:$0xf]
    %v11747 = vld [vmem:[#allocation8 + $0xc] sm:$0xf]
    %v11748 = vld [vmem:[#allocation8 + $0x10] sm:$0xf]
    %v11749 = vld [vmem:[#allocation8 + $0x14] sm:$0xf]
    %v11750 = vld [vmem:[#allocation8 + $0x18] sm:$0xf]
    %v11751 = vld [vmem:[#allocation8 + $0x1c] sm:$0xf]
    %v11752 = vld [vmem:[#allocation8 + $0x20] sm:$0xf]
    %v11753 = vld [vmem:[#allocation8 + $0x24] sm:$0xf]
    %v11754 = vld [vmem:[#allocation8 + $0x28] sm:$0xf]
    %v11755 = vld [vmem:[#allocation8 + $0x2c] sm:$0xf]
    %v11756 = vld [vmem:[#allocation8 + $0x30] sm:$0xf]
    %v11757 = vld [vmem:[#allocation8 + $0x34] sm:$0xf]
    %v11758 = vld [vmem:[#allocation8 + $0x38] sm:$0xf]
    %v11759 = vld [vmem:[#allocation8 + $0x3c] sm:$0xf]
    %v11760 = vld [vmem:[#allocation8 + $0x40] sm:$0xf]
    %v11761 = vld [vmem:[#allocation8 + $0x44] sm:$0xf]
    %v11762 = vld [vmem:[#allocation8 + $0x48] sm:$0xf]
    %v11763 = vld [vmem:[#allocation8 + $0x4c] sm:$0xf]
    %v11764 = vld [vmem:[#allocation8 + $0x50] sm:$0xf]
    %v11765 = vld [vmem:[#allocation8 + $0x54] sm:$0xf]
    %v11766 = vld [vmem:[#allocation8 + $0x58] sm:$0xf]
    %v11767 = vld [vmem:[#allocation8 + $0x5c] sm:$0xf]
    %v11768 = vld [vmem:[#allocation8 + $0x60] sm:$0xf]
    %v11769 = vld [vmem:[#allocation8 + $0x64] sm:$0xf]
    %v11770 = vld [vmem:[#allocation8 + $0x68] sm:$0xf]
    %v11771 = vld [vmem:[#allocation8 + $0x6c] sm:$0xf]
    %v11772 = vld [vmem:[#allocation8 + $0x70] sm:$0xf]
    %v11773 = vld [vmem:[#allocation8 + $0x74] sm:$0xf]
    %v11774 = vld [vmem:[#allocation8 + $0x78] sm:$0xf]
    %v11775 = vld [vmem:[#allocation8 + $0x7c] sm:$0xf]
    %v11776 = vld [vmem:[#allocation8 + $0x80] sm:$0xf]
    %v11777 = vld [vmem:[#allocation8 + $0x84] sm:$0xf]
    %v11778 = vld [vmem:[#allocation8 + $0x88] sm:$0xf]
    %v11779 = vld [vmem:[#allocation8 + $0x8c] sm:$0xf]
    %v11780 = vld [vmem:[#allocation8 + $0x90] sm:$0xf]
    %v11781 = vld [vmem:[#allocation8 + $0x94] sm:$0xf]
    %v11782 = vld [vmem:[#allocation8 + $0x98] sm:$0xf]
    %v11783 = vld [vmem:[#allocation8 + $0x9c] sm:$0xf]
    %v11784 = vld [vmem:[#allocation8 + $0xa0] sm:$0xf]
    %v11785 = vld [vmem:[#allocation8 + $0xa4] sm:$0xf]
    %v11786 = vld [vmem:[#allocation8 + $0xa8] sm:$0xf]
    %v11787 = vld [vmem:[#allocation8 + $0xac] sm:$0xf]
    %v11788 = vld [vmem:[#allocation8 + $0xb0] sm:$0xf]
    %v11789 = vld [vmem:[#allocation8 + $0xb4] sm:$0xf]
    %v11790 = vld [vmem:[#allocation8 + $0xb8] sm:$0xf]
    %v11791 = vld [vmem:[#allocation8 + $0xbc] sm:$0xf]
    %v11792 = vld [vmem:[#allocation8 + $0xc0] sm:$0xf]
    %v11793 = vld [vmem:[#allocation8 + $0xc4] sm:$0xf]
    %v11794 = vld [vmem:[#allocation8 + $0xc8] sm:$0xf]
    %v11795 = vld [vmem:[#allocation8 + $0xcc] sm:$0xf]
    %v11796 = vld [vmem:[#allocation8 + $0xd0] sm:$0xf]
    %v11797 = vld [vmem:[#allocation8 + $0xd4] sm:$0xf]
    %v11798 = vld [vmem:[#allocation8 + $0xd8] sm:$0xf]
    %v11799 = vld [vmem:[#allocation8 + $0xdc] sm:$0xf]
    %v11800 = vld [vmem:[#allocation8 + $0xe0] sm:$0xf]
    %v11801 = vld [vmem:[#allocation8 + $0xe4] sm:$0xf]
    %v11802 = vld [vmem:[#allocation8 + $0xe8] sm:$0xf]
    %v11803 = vld [vmem:[#allocation8 + $0xec] sm:$0xf]
    %v11804 = vld [vmem:[#allocation8 + $0xf0] sm:$0xf]
    %v11805 = vld [vmem:[#allocation8 + $0xf4] sm:$0xf]
    %v11806 = vld [vmem:[#allocation8 + $0xf8] sm:$0xf]
    %v11807 = vld [vmem:[#allocation8 + $0xfc] sm:$0xf]
    %v11808 = vld [vmem:[#allocation10 + $0x1c] sm:$0x1]
    %v11810 = vlaneseq
    %v11811 = vshrl.u32 %v11810, 7
    %v11812 = vsub.s32 0, %v11811
    %v11813 = vrot.slane %v11808, %v11812
    %v11879 = vunpack.c.l.b16 %v11744
    %v11880 = vunpack.c.l.b16 %v11745
    %v11881 = vunpack.c.l.b16 %v11746
    %v11882 = vunpack.c.l.b16 %v11747
    %v11883 = vunpack.c.l.b16 %v11748
    %v11884 = vunpack.c.l.b16 %v11749
    %v11885 = vunpack.c.l.b16 %v11750
    %v11886 = vunpack.c.l.b16 %v11751
    %v11887 = vunpack.c.l.b16 %v11752
    %v11888 = vunpack.c.l.b16 %v11753
    %v11889 = vunpack.c.l.b16 %v11754
    %v11890 = vunpack.c.l.b16 %v11755
    %v11891 = vunpack.c.l.b16 %v11756
    %v11892 = vunpack.c.l.b16 %v11757
    %v11893 = vunpack.c.l.b16 %v11758
    %v11894 = vunpack.c.l.b16 %v11759
    %v11895 = vunpack.c.l.b16 %v11760
    %v11896 = vunpack.c.l.b16 %v11761
    %v11897 = vunpack.c.l.b16 %v11762
    %v11898 = vunpack.c.l.b16 %v11763
    %v11899 = vunpack.c.l.b16 %v11764
    %v11900 = vunpack.c.l.b16 %v11765
    %v11901 = vunpack.c.l.b16 %v11766
    %v11902 = vunpack.c.l.b16 %v11767
    %v11903 = vunpack.c.l.b16 %v11768
    %v11904 = vunpack.c.l.b16 %v11769
    %v11905 = vunpack.c.l.b16 %v11770
    %v11906 = vunpack.c.l.b16 %v11771
    %v11907 = vunpack.c.l.b16 %v11772
    %v11908 = vunpack.c.l.b16 %v11773
    %v11909 = vunpack.c.l.b16 %v11774
    %v11910 = vunpack.c.l.b16 %v11775
    %v11911 = vunpack.c.l.b16 %v11776
    %v11912 = vunpack.c.l.b16 %v11777
    %v11913 = vunpack.c.l.b16 %v11778
    %v11914 = vunpack.c.l.b16 %v11779
    %v11915 = vunpack.c.l.b16 %v11780
    %v11916 = vunpack.c.l.b16 %v11781
    %v11917 = vunpack.c.l.b16 %v11782
    %v11918 = vunpack.c.l.b16 %v11783
    %v11919 = vunpack.c.l.b16 %v11784
    %v11920 = vunpack.c.l.b16 %v11785
    %v11921 = vunpack.c.l.b16 %v11786
    %v11922 = vunpack.c.l.b16 %v11787
    %v11923 = vunpack.c.l.b16 %v11788
    %v11924 = vunpack.c.l.b16 %v11789
    %v11925 = vunpack.c.l.b16 %v11790
    %v11926 = vunpack.c.l.b16 %v11791
    %v11927 = vunpack.c.l.b16 %v11792
    %v11928 = vunpack.c.l.b16 %v11793
    %v11929 = vunpack.c.l.b16 %v11794
    %v11930 = vunpack.c.l.b16 %v11795
    %v11931 = vunpack.c.l.b16 %v11796
    %v11932 = vunpack.c.l.b16 %v11797
    %v11933 = vunpack.c.l.b16 %v11798
    %v11934 = vunpack.c.l.b16 %v11799
    %v11935 = vunpack.c.l.b16 %v11800
    %v11936 = vunpack.c.l.b16 %v11801
    %v11937 = vunpack.c.l.b16 %v11802
    %v11938 = vunpack.c.l.b16 %v11803
    %v11939 = vunpack.c.l.b16 %v11804
    %v11940 = vunpack.c.l.b16 %v11805
    %v11941 = vunpack.c.l.b16 %v11806
    %v11942 = vunpack.c.l.b16 %v11807
    %v11943 = vpack.c.b16 %v11880, %v11879
    %v11944 = vpack.c.b16 %v11882, %v11881
    %v11945 = vpack.c.b16 %v11884, %v11883
    %v11946 = vpack.c.b16 %v11886, %v11885
    %v11947 = vpack.c.b16 %v11888, %v11887
    %v11948 = vpack.c.b16 %v11890, %v11889
    %v11949 = vpack.c.b16 %v11892, %v11891
    %v11950 = vpack.c.b16 %v11894, %v11893
    %v11951 = vpack.c.b16 %v11896, %v11895
    %v11952 = vpack.c.b16 %v11898, %v11897
    %v11953 = vpack.c.b16 %v11900, %v11899
    %v11954 = vpack.c.b16 %v11902, %v11901
    %v11955 = vpack.c.b16 %v11904, %v11903
    %v11956 = vpack.c.b16 %v11906, %v11905
    %v11957 = vpack.c.b16 %v11908, %v11907
    %v11958 = vpack.c.b16 %v11910, %v11909
    %v11959 = vpack.c.b16 %v11912, %v11911
    %v11960 = vpack.c.b16 %v11914, %v11913
    %v11961 = vpack.c.b16 %v11916, %v11915
    %v11962 = vpack.c.b16 %v11918, %v11917
    %v11963 = vpack.c.b16 %v11920, %v11919
    %v11964 = vpack.c.b16 %v11922, %v11921
    %v11965 = vpack.c.b16 %v11924, %v11923
    %v11966 = vpack.c.b16 %v11926, %v11925
    %v11967 = vpack.c.b16 %v11928, %v11927
    %v11968 = vpack.c.b16 %v11930, %v11929
    %v11969 = vpack.c.b16 %v11932, %v11931
    %v11970 = vpack.c.b16 %v11934, %v11933
    %v11971 = vpack.c.b16 %v11936, %v11935
    %v11972 = vpack.c.b16 %v11938, %v11937
    %v11973 = vpack.c.b16 %v11940, %v11939
    %v11974 = vpack.c.b16 %v11942, %v11941
    %12007 = vmatprep.subr.bf16.mxu0 0
    %12008 = vmatpush1.bf16.msra.mxu0 %v11943
    %12009 = vmatprep.subr.bf16.mxu0 0
    %12010 = vmatpush1.bf16.msra.mxu0 %v11944
    %12011 = vmatprep.subr.bf16.mxu0 0
    %12012 = vmatpush1.bf16.msra.mxu0 %v11945
    %12013 = vmatprep.subr.bf16.mxu0 0
    %12014 = vmatpush1.bf16.msra.mxu0 %v11946
    %12015 = vmatprep.subr.bf16.mxu0 0
    %12016 = vmatpush1.bf16.msra.mxu0 %v11947
    %12017 = vmatprep.subr.bf16.mxu0 0
    %12018 = vmatpush1.bf16.msra.mxu0 %v11948
    %12019 = vmatprep.subr.bf16.mxu0 0
    %12020 = vmatpush1.bf16.msra.mxu0 %v11949
    %12021 = vmatprep.subr.bf16.mxu0 0
    %12022 = vmatpush1.bf16.msra.mxu0 %v11950
    %12023 = vmatprep.subr.bf16.mxu0 0
    %12024 = vmatpush1.bf16.msra.mxu0 %v11951
    %12025 = vmatprep.subr.bf16.mxu0 0
    %12026 = vmatpush1.bf16.msra.mxu0 %v11952
    %12027 = vmatprep.subr.bf16.mxu0 0
    %12028 = vmatpush1.bf16.msra.mxu0 %v11953
    %12029 = vmatprep.subr.bf16.mxu0 0
    %12030 = vmatpush1.bf16.msra.mxu0 %v11954
    %12031 = vmatprep.subr.bf16.mxu0 0
    %12032 = vmatpush1.bf16.msra.mxu0 %v11955
    %12033 = vmatprep.subr.bf16.mxu0 0
    %12034 = vmatpush1.bf16.msra.mxu0 %v11956
    %12035 = vmatprep.subr.bf16.mxu0 0
    %12036 = vmatpush1.bf16.msra.mxu0 %v11957
    %12037 = vmatprep.subr.bf16.mxu0 0
    %12038 = vmatpush1.bf16.msra.mxu0 %v11958
    %12039 = vmatprep.mubr.bf16.mxu0 %v11741
    %12040 = vmatmul.mubr.bf16.gmra.mrb[0].mxu0 %v11740
    %v12041 = vpop.f32.mrb[0].mxu0
    %v12042 = vadd.f32 %v11813, %v12041
    %v12043 = vpop.f32.mrb[0].mxu0
    %v12044 = vpop.f32.mrb[0].mxu0
    %v12045 = vpop.f32.mrb[0].mxu0
    %12046 = vdwg.mxu0
    %12047 = vmatprep.subr.bf16.mxu0 0
    %12048 = vmatpush1.bf16.msra.mxu0 %v11959
    %12049 = vmatprep.subr.bf16.mxu0 0
    %12050 = vmatpush1.bf16.msra.mxu0 %v11960
    %12051 = vmatprep.subr.bf16.mxu0 0
    %12052 = vmatpush1.bf16.msra.mxu0 %v11961
    %12053 = vmatprep.subr.bf16.mxu0 0
    %12054 = vmatpush1.bf16.msra.mxu0 %v11962
    %12055 = vmatprep.subr.bf16.mxu0 0
    %12056 = vmatpush1.bf16.msra.mxu0 %v11963
    %12057 = vmatprep.subr.bf16.mxu0 0
    %12058 = vmatpush1.bf16.msra.mxu0 %v11964
    %12059 = vmatprep.subr.bf16.mxu0 0
    %12060 = vmatpush1.bf16.msra.mxu0 %v11965
    %12061 = vmatprep.subr.bf16.mxu0 0
    %12062 = vmatpush1.bf16.msra.mxu0 %v11966
    %12063 = vmatprep.subr.bf16.mxu0 0
    %12064 = vmatpush1.bf16.msra.mxu0 %v11967
    %12065 = vmatprep.subr.bf16.mxu0 0
    %12066 = vmatpush1.bf16.msra.mxu0 %v11968
    %12067 = vmatprep.subr.bf16.mxu0 0
    %12068 = vmatpush1.bf16.msra.mxu0 %v11969
    %12069 = vmatprep.subr.bf16.mxu0 0
    %12070 = vmatpush1.bf16.msra.mxu0 %v11970
    %12071 = vmatprep.subr.bf16.mxu0 0
    %12072 = vmatpush1.bf16.msra.mxu0 %v11971
    %12073 = vmatprep.subr.bf16.mxu0 0
    %12074 = vmatpush1.bf16.msra.mxu0 %v11972
    %12075 = vmatprep.subr.bf16.mxu0 0
    %12076 = vmatpush1.bf16.msra.mxu0 %v11973
    %12077 = vmatprep.subr.bf16.mxu0 0
    %12078 = vmatpush1.bf16.msra.mxu0 %v11974
    %12079 = vmatprep.mubr.bf16.mxu0 %v11743
    %12080 = vmatmul.mubr.bf16.gmra.mrb[0].mxu0 %v11742
    %v12081 = vpop.f32.mrb[0].mxu0
    %v12082 = vadd.f32 %v12042, %v12081
    %v12083 = vpop.f32.mrb[0].mxu0
    %v12084 = vpop.f32.mrb[0].mxu0
    %v12085 = vpop.f32.mrb[0].mxu0
    %12086 = vdwg.mxu0
    %12087 = vst [vmem:[#allocation11] sm:$0xff] %v12082
    // Predicated region
    $region46: #{classifier_forward.1} parent=1 // pred_check
      _
    $region47: #{classifier_forward.1} parent=1 // pred_check_branch
      %12089 = sbr.rel (0) target = $region49
    $region48: #{classifier_forward.1} parent=1 // pred_region
      %s12091 = ssub.s32 128, 128
      %12092 = vsyncadd [#allocation4], %s12091
      %s12094 = sshll.u32 [#allocation11], 4
      %s12095 = int_to_ptr.vmem [resolvable:$true] %s12094
      %12097 = dma.vmem_to_hbm [thread:$0]  %s12095, 128, %s6, [#allocation4]
    $region49: #{classifier_forward.1} parent=1 // pred_fallthru
      _
    // Predicated region
    $region50: #{classifier_forward.1} parent=1 // pred_check
      _
    $region51: #{classifier_forward.1} parent=1 // pred_check_branch
      %12099 = sbr.rel (0) target = $region53
    $region52: #{classifier_forward.1} parent=1 // pred_region
      %12100 = dma.done [#allocation4], 128
    $region53: #{classifier_forward.1} parent=1 // pred_fallthru
      _
    %12101 = vsyncpa [#allocation3], 1
    %12102 = vsyncpa [#allocation6], 1
    %12103 = vsyncpa [#allocation9], 1
    %12104 = vsyncpa [#allocation4], 1

</llo_original>
